<compile_context>
chip_gen: v6e
topology: v6e:2x2x1
jax: 0.10.0
libtpu: 0.0.40
codegen_flags: <defaults>
</compile_context>

<pallas_src>
import functools

import jax
import jax.numpy as jnp
from jax.experimental import pallas as pl
from jax.experimental.pallas import tpu as pltpu

EPS = 1e-5                     # PyTorch GroupNorm default eps
OUT_DIMS = (30, 3, 1)          # trajectory points produced by heads 0, 1, 2


# --------------------------------------------------------- in-kernel helpers --

def _gn1(y, g, b):
    """GroupNorm(num_groups=1) on [rows, C]: one-pass per-row normalization."""
    c = y.shape[-1]
    s1 = jnp.sum(y, axis=-1, keepdims=True)
    s2 = jnp.sum(y * y, axis=-1, keepdims=True)
    mean = s1 * (1.0 / c)
    var = jnp.maximum(s2 * (1.0 / c) - mean * mean, 0.0)   # clamp cancellation
    return (y - mean) * jax.lax.rsqrt(var + EPS) * g + b


def _lin_gn_relu(x, q):
    """Custom Linear(cin, cout, ng=1): matmul (no bias) -> GroupNorm(1) -> ReLU."""
    y = jnp.dot(x, q['w'], preferred_element_type=jnp.float32)
    return jnp.maximum(_gn1(y, q['g'], q['b']), 0.0)


def _lin_res(x, q):
    """LinearRes(c, c, ng=1): relu(gn(lin2(relu(gn(lin1(x))))) + x)."""
    h = _lin_gn_relu(x, q['l1'])
    y = _gn1(jnp.dot(h, q['l2']['w'], preferred_element_type=jnp.float32),
             q['l2']['g'], q['l2']['b']) + x
    return jnp.maximum(y, 0.0)


def _read_tree(tree):
    return jax.tree_util.tree_map(lambda r: r[...], tree)


def _read_mod(tree, m):
    return jax.tree_util.tree_map(lambda r: r[m], tree)


# --------------------------------------------------------------- fused kernel --

def _pyramid_kernel(treedef, num_mods, slab_w,
                    agents_ref, ctrs_ref, actrs_ref, *rest):
    out_ref = rest[-1]
    p = jax.tree_util.tree_unflatten(treedef, rest[:-1])

    agents = agents_ref[...]        # (rows, n_agt)
    ctrs = ctrs_ref[...]            # (rows, 2) dense per-agent centers
    actrs = actrs_ref[...]          # (rows, 2) torch.cat(agent_ctrs, 0)

    att = _read_tree(p['att'])
    clsp = _read_tree(p['cls'])

    kp0s, kpcats, logit_cols = [], [], []
    for m in range(num_mods):                          # static, unrolled
        q = _read_mod(p['pred'], m)

        # --- TrajectoryDecoder encoder: three Linear(GN+ReLU) stages ---------
        r = agents
        pd_in = []
        for i in range(3):
            r = _lin_gn_relu(r, q[f'lin{i}'])
            pd_in.append(r)

        # --- pyramid heads, coarse-to-fine (i = 2, 1, 0) ----------------------
        kps = {}
        for i in (2, 1, 0):
            h = _lin_res(pd_in[i], q[f'head{i}_res'])
            kp = (jnp.dot(h, q[f'head{i}_out']['w'],
                          preferred_element_type=jnp.float32)
                  + q[f'head{i}_out']['b'])
            kps[i] = kp
            if i != 0:
                kpf = _lin_gn_relu(kp, q[f'kp{i}'])
                pd_in[i - 1] = jnp.concatenate([pd_in[i - 1], kpf], axis=-1)

        kp0s.append(kps[0])                                          # (rows, 60)
        kpcats.append(jnp.concatenate([kps[2], kps[1]], axis=-1))    # (rows, 8)

        # --- AttDest + cls head for this mode (no repeat/concat in HBM) ------
        dest = kps[0][:, -2:] + ctrs                  # centered endpoint (dest_ctrs)
        dist = actrs - dest
        d = jnp.maximum(jnp.dot(dist, att['dist0']['w'],
                                preferred_element_type=jnp.float32)
                        + att['dist0']['b'], 0.0)
        d = _lin_gn_relu(d, att['dist1'])
        y = (jnp.dot(d, att['agt_wd'], preferred_element_type=jnp.float32)
             + jnp.dot(agents, att['agt_wa'], preferred_element_type=jnp.float32))
        feats = jnp.maximum(_gn1(y, att['agt_g'], att['agt_b']), 0.0)
        c = _lin_res(feats, clsp['res'])
        logit_cols.append(jnp.dot(c, clsp['out']['w'],
                                  preferred_element_type=jnp.float32)
                          + clsp['out']['b'])                        # (rows, 1)

    # --- softmax over modes (folded in; approx recip preserves ordering) -----
    logits = jnp.concatenate(logit_cols, axis=-1)                    # (rows, M)
    mx = jnp.max(logits, axis=-1, keepdims=True)
    e = jnp.exp(logits - mx)
    cls = e * pl.reciprocal(jnp.sum(e, axis=-1, keepdims=True), approx=True)

    # --- single lane-dense packed store ---------------------------------------
    pieces = kp0s + kpcats + [cls]
    used = sum(x.shape[-1] for x in pieces)
    if used < slab_w:
        pieces.append(jnp.zeros((agents.shape[0], slab_w - used), jnp.float32))
    out_ref[...] = jnp.concatenate(pieces, axis=-1)


# ----------------------------------------------------------- parameter setup --

class KeyGen:
    def __init__(self, seed):
        self.key = jax.random.PRNGKey(seed)

    def __call__(self):
        self.key, sub = jax.random.split(self.key)
        return sub


def init_linear_gn(kg, cin, cout):
    return dict(
        w=jax.random.normal(kg(), (cin, cout), jnp.float32) / jnp.sqrt(cin),
        g=1.0 + 0.1 * jax.random.normal(kg(), (1, cout), jnp.float32),
        b=0.1 * jax.random.normal(kg(), (1, cout), jnp.float32),
    )


def init_linear_res(kg, c):
    return dict(l1=init_linear_gn(kg, c, c), l2=init_linear_gn(kg, c, c))


def init_linear_bias(kg, cin, cout):
    return dict(
        w=jax.random.normal(kg(), (cin, cout), jnp.float32) / jnp.sqrt(cin),
        b=0.1 * jax.random.normal(kg(), (1, cout), jnp.float32),
    )


def init_traj_decoder(kg, in_dims, out_dims):
    p = {}
    for i in range(3):
        p[f'lin{i}'] = init_linear_gn(kg, in_dims[i], in_dims[i + 1])
        width = in_dims[i + 1] if i == 2 else in_dims[i + 1] + in_dims[i + 2]
        p[f'head{i}_res'] = init_linear_res(kg, width)
        p[f'head{i}_out'] = init_linear_bias(kg, width, 2 * out_dims[i])
        p[f'kp{i}'] = init_linear_gn(kg, 2 * out_dims[i], in_dims[i + 1])
    return p


def init_pyramid_decoder(kg, config):
    n_agt = config['n_agent']
    in_dims = [n_agt, 64, 32, 16]
    return {
        'pred': [init_traj_decoder(kg, in_dims, list(OUT_DIMS))
                 for _ in range(config['num_mods'])],
        'att_dest': {
            'dist0': init_linear_bias(kg, 2, n_agt),        # nn.Linear(2, n_agt)
            'dist1': init_linear_gn(kg, n_agt, n_agt),      # Linear(n_agt, n_agt, ng=1)
            'agt': init_linear_gn(kg, 2 * n_agt, n_agt),    # Linear(2*n_agt, n_agt, ng=1)
        },
        'cls_res': init_linear_res(kg, n_agt),              # LinearRes(n_agt, n_agt)
        'cls_out': init_linear_bias(kg, n_agt, 1),          # nn.Linear(n_agt, 1)
    }


def _pack_kernel_params(params, n_agt):
    # Stack per-mod decoder weights on a leading [num_mods, ...] axis; drop the
    # kp0 layer (constructed by the PyTorch module but never used in forward).
    def strip(d):
        return {k: v for k, v in d.items() if k != 'kp0'}

    pred_stacked = jax.tree_util.tree_map(
        lambda *xs: jnp.stack(xs, axis=0), *[strip(p) for p in params['pred']])

    att = params['att_dest']
    w_agt = att['agt']['w']                        # (2*n_agt, n_agt)
    return {
        'pred': pred_stacked,
        'att': {
            'dist0': att['dist0'],
            'dist1': att['dist1'],
            'agt_wd': w_agt[:n_agt],               # multiplies dist features
            'agt_wa': w_agt[n_agt:],               # multiplies (virtually repeated) agents
            'agt_g': att['agt']['g'],
            'agt_b': att['agt']['b'],
        },
        'cls': {'res': params['cls_res'], 'out': params['cls_out']},
    }


# --------------------------------------------------------------------- forward --

def pyramid_decoder_fwd(params, config, agents, agent_ids, agent_ctrs):
    num_mods = config['num_mods']
    n_agt = config['n_agent']
    N = agents.shape[0]

    # Dense per-agent centers: one tiny scatter replaces the per-group
    # read-modify-write scatters on the 4-D reg / key_points tensors.
    ids_all = jnp.concatenate(agent_ids, axis=0)
    ctrs_cat = jnp.concatenate(agent_ctrs, axis=0).astype(jnp.float32)
    ctrs_dense = jnp.zeros((N, 2), jnp.float32).at[ids_all].set(ctrs_cat)

    # Row padding / tiling: sublane multiple; row grid scales to large N and
    # gives a "parallel" axis for the second TensorCore on v7x.
    n8 = ((N + 7) // 8) * 8
    row_tile = n8 if n8 <= 128 else 128
    n_pad = ((n8 + row_tile - 1) // row_tile) * row_tile

    def pad_rows(x):
        return jnp.pad(x, ((0, n_pad - x.shape[0]), (0, 0)))

    agents_p = pad_rows(agents.astype(jnp.float32))
    ctrs_p = pad_rows(ctrs_dense)
    actrs_p = pad_rows(ctrs_cat)

    kparams = _pack_kernel_params(params, n_agt)
    flat_w, treedef = jax.tree_util.tree_flatten(kparams)

    # Packed lane-dense output slab: [reg | key_points | softmax(cls) | pad]
    n_kp = OUT_DIMS[1] + OUT_DIMS[2]                       # 4 key points / mode
    used = num_mods * (2 * OUT_DIMS[0] + 2 * n_kp + 1)
    slab_w = ((used + 127) // 128) * 128

    def row_spec(c):
        return pl.BlockSpec((row_tile, c), lambda i: (i, 0))

    def full_spec(a):
        nd = a.ndim
        return pl.BlockSpec(a.shape, lambda i, _nd=nd: (0,) * _nd)

    slab = pl.pallas_call(
        functools.partial(_pyramid_kernel, treedef, num_mods, slab_w),
        out_shape=jax.ShapeDtypeStruct((n_pad, slab_w), jnp.float32),
        grid=(n_pad // row_tile,),
        in_specs=[row_spec(n_agt), row_spec(2), row_spec(2)]
                 + [full_spec(w) for w in flat_w],
        out_specs=pl.BlockSpec((row_tile, slab_w), lambda i: (i, 0)),
        compiler_params=pltpu.CompilerParams(dimension_semantics=("parallel",)),
    )(agents_p, ctrs_p, actrs_p, *flat_w)

    slab = slab[:N]
    o = 0
    reg = slab[:, o:o + num_mods * 2 * OUT_DIMS[0]].reshape(N, num_mods, OUT_DIMS[0], 2)
    o += num_mods * 2 * OUT_DIMS[0]
    key_points = slab[:, o:o + num_mods * 2 * n_kp].reshape(N, num_mods, n_kp, 2)
    o += num_mods * 2 * n_kp
    cls = slab[:, o:o + num_mods]                          # (N, M), already softmaxed

    # Center addition (plain broadcast adds; dest_ctrs already centered in-kernel).
    reg = reg + ctrs_dense[:, None, None, :]
    key_points = key_points + ctrs_dense[:, None, None, :]

    # TODO(synk): torch.sort / fancy gather / ragged per-scene split stay in JAX glue.
    sort_ids = jnp.argsort(-cls, axis=1)
    cls_sorted = jnp.take_along_axis(cls, sort_ids, axis=1)
    reg = jnp.take_along_axis(reg, sort_ids[:, :, None, None], axis=1)
    key_points = jnp.take_along_axis(key_points, sort_ids[:, :, None, None], axis=1)

    result = {'cls': [], 'reg': [], 'key_points': []}
    for ids in agent_ids:
        result['cls'].append(cls_sorted[ids])
        result['reg'].append(reg[ids])
        result['key_points'].append(key_points[ids])
    return result


# ------------------------------------------------------------------------ main --

if __name__ == "__main__":
    config = {'n_agent': 32, 'num_mods': 3}

    # deterministic parameters
    params = init_pyramid_decoder(KeyGen(1), config)

    # deterministic small inputs: 6 agents total, 2 "scenes" of 3 agents each
    k1, k2, k3 = jax.random.split(jax.random.PRNGKey(0), 3)
    N = 6
    agents = jax.random.normal(k1, (N, config['n_agent']), jnp.float32)
    agent_ids = [jnp.array([0, 1, 2], jnp.int32), jnp.array([3, 4, 5], jnp.int32)]
    agent_ctrs = [jax.random.normal(k2, (3, 2), jnp.float32),
                  jax.random.normal(k3, (3, 2), jnp.float32)]

    out = pyramid_decoder_fwd(params, config, agents, agent_ids, agent_ctrs)
    jax.block_until_ready(out)

    # sanity checks
    assert out['reg'][0].shape == (3, config['num_mods'], 30, 2)
    assert out['key_points'][0].shape == (3, config['num_mods'], 4, 2)
    assert out['cls'][0].shape == (3, config['num_mods'])
    assert all(bool(jnp.all(jnp.isfinite(x))) for v in out.values() for x in v)

    print("KERNEL_OK")
</pallas_src>

<mosaic_0001>
module attributes {stable_mosaic.version = 11 : i64} {
  func.func @_pyramid_kernel(%arg0: i32, %arg1: memref<8x32xf32, #tpu.memory_space<vmem>>, %arg2: memref<8x2xf32, #tpu.memory_space<vmem>>, %arg3: memref<8x2xf32, #tpu.memory_space<vmem>>, %arg4: memref<1x32xf32, #tpu.memory_space<vmem>>, %arg5: memref<1x32xf32, #tpu.memory_space<vmem>>, %arg6: memref<32x32xf32, #tpu.memory_space<vmem>>, %arg7: memref<32x32xf32, #tpu.memory_space<vmem>>, %arg8: memref<1x32xf32, #tpu.memory_space<vmem>>, %arg9: memref<2x32xf32, #tpu.memory_space<vmem>>, %arg10: memref<1x32xf32, #tpu.memory_space<vmem>>, %arg11: memref<1x32xf32, #tpu.memory_space<vmem>>, %arg12: memref<32x32xf32, #tpu.memory_space<vmem>>, %arg13: memref<1x1xf32, #tpu.memory_space<vmem>>, %arg14: memref<32x1xf32, #tpu.memory_space<vmem>>, %arg15: memref<1x32xf32, #tpu.memory_space<vmem>>, %arg16: memref<1x32xf32, #tpu.memory_space<vmem>>, %arg17: memref<32x32xf32, #tpu.memory_space<vmem>>, %arg18: memref<1x32xf32, #tpu.memory_space<vmem>>, %arg19: memref<1x32xf32, #tpu.memory_space<vmem>>, %arg20: memref<32x32xf32, #tpu.memory_space<vmem>>, %arg21: memref<3x1x60xf32, #tpu.memory_space<vmem>>, %arg22: memref<3x96x60xf32, #tpu.memory_space<vmem>>, %arg23: memref<3x1x96xf32, #tpu.memory_space<vmem>>, %arg24: memref<3x1x96xf32, #tpu.memory_space<vmem>>, %arg25: memref<3x96x96xf32, #tpu.memory_space<vmem>>, %arg26: memref<3x1x96xf32, #tpu.memory_space<vmem>>, %arg27: memref<3x1x96xf32, #tpu.memory_space<vmem>>, %arg28: memref<3x96x96xf32, #tpu.memory_space<vmem>>, %arg29: memref<3x1x6xf32, #tpu.memory_space<vmem>>, %arg30: memref<3x48x6xf32, #tpu.memory_space<vmem>>, %arg31: memref<3x1x48xf32, #tpu.memory_space<vmem>>, %arg32: memref<3x1x48xf32, #tpu.memory_space<vmem>>, %arg33: memref<3x48x48xf32, #tpu.memory_space<vmem>>, %arg34: memref<3x1x48xf32, #tpu.memory_space<vmem>>, %arg35: memref<3x1x48xf32, #tpu.memory_space<vmem>>, %arg36: memref<3x48x48xf32, #tpu.memory_space<vmem>>, %arg37: memref<3x1x2xf32, #tpu.memory_space<vmem>>, %arg38: memref<3x16x2xf32, #tpu.memory_space<vmem>>, %arg39: memref<3x1x16xf32, #tpu.memory_space<vmem>>, %arg40: memref<3x1x16xf32, #tpu.memory_space<vmem>>, %arg41: memref<3x16x16xf32, #tpu.memory_space<vmem>>, %arg42: memref<3x1x16xf32, #tpu.memory_space<vmem>>, %arg43: memref<3x1x16xf32, #tpu.memory_space<vmem>>, %arg44: memref<3x16x16xf32, #tpu.memory_space<vmem>>, %arg45: memref<3x1x32xf32, #tpu.memory_space<vmem>>, %arg46: memref<3x1x32xf32, #tpu.memory_space<vmem>>, %arg47: memref<3x6x32xf32, #tpu.memory_space<vmem>>, %arg48: memref<3x1x16xf32, #tpu.memory_space<vmem>>, %arg49: memref<3x1x16xf32, #tpu.memory_space<vmem>>, %arg50: memref<3x2x16xf32, #tpu.memory_space<vmem>>, %arg51: memref<3x1x64xf32, #tpu.memory_space<vmem>>, %arg52: memref<3x1x64xf32, #tpu.memory_space<vmem>>, %arg53: memref<3x32x64xf32, #tpu.memory_space<vmem>>, %arg54: memref<3x1x32xf32, #tpu.memory_space<vmem>>, %arg55: memref<3x1x32xf32, #tpu.memory_space<vmem>>, %arg56: memref<3x64x32xf32, #tpu.memory_space<vmem>>, %arg57: memref<3x1x16xf32, #tpu.memory_space<vmem>>, %arg58: memref<3x1x16xf32, #tpu.memory_space<vmem>>, %arg59: memref<3x32x16xf32, #tpu.memory_space<vmem>>, %arg60: memref<8x256xf32, #tpu.memory_space<vmem>>) attributes {dimension_semantics = [#tpu.dimension_semantics<parallel>], iteration_bounds = array<i64: 1>, scalar_prefetch = 0 : i64, scratch_operands = 0 : i64, tpu.core_type = #tpu.core_type<tc>, window_params = [{transform_indices = @transform_0, window_bounds = array<i64: 8, 32>}, {transform_indices = @transform_1, window_bounds = array<i64: 8, 2>}, {transform_indices = @transform_2, window_bounds = array<i64: 8, 2>}, {pipeline_mode = #tpu.pipeline_mode<synchronous>, transform_indices = @transform_3, window_bounds = array<i64: 1, 32>}, {pipeline_mode = #tpu.pipeline_mode<synchronous>, transform_indices = @transform_4, window_bounds = array<i64: 1, 32>}, {pipeline_mode = #tpu.pipeline_mode<synchronous>, transform_indices = @transform_5, window_bounds = array<i64: 32, 32>}, {pipeline_mode = #tpu.pipeline_mode<synchronous>, transform_indices = @transform_6, window_bounds = array<i64: 32, 32>}, {pipeline_mode = #tpu.pipeline_mode<synchronous>, transform_indices = @transform_7, window_bounds = array<i64: 1, 32>}, {pipeline_mode = #tpu.pipeline_mode<synchronous>, transform_indices = @transform_8, window_bounds = array<i64: 2, 32>}, {pipeline_mode = #tpu.pipeline_mode<synchronous>, transform_indices = @transform_9, window_bounds = array<i64: 1, 32>}, {pipeline_mode = #tpu.pipeline_mode<synchronous>, transform_indices = @transform_10, window_bounds = array<i64: 1, 32>}, {pipeline_mode = #tpu.pipeline_mode<synchronous>, transform_indices = @transform_11, window_bounds = array<i64: 32, 32>}, {pipeline_mode = #tpu.pipeline_mode<synchronous>, transform_indices = @transform_12, window_bounds = array<i64: 1, 1>}, {pipeline_mode = #tpu.pipeline_mode<synchronous>, transform_indices = @transform_13, window_bounds = array<i64: 32, 1>}, {pipeline_mode = #tpu.pipeline_mode<synchronous>, transform_indices = @transform_14, window_bounds = array<i64: 1, 32>}, {pipeline_mode = #tpu.pipeline_mode<synchronous>, transform_indices = @transform_15, window_bounds = array<i64: 1, 32>}, {pipeline_mode = #tpu.pipeline_mode<synchronous>, transform_indices = @transform_16, window_bounds = array<i64: 32, 32>}, {pipeline_mode = #tpu.pipeline_mode<synchronous>, transform_indices = @transform_17, window_bounds = array<i64: 1, 32>}, {pipeline_mode = #tpu.pipeline_mode<synchronous>, transform_indices = @transform_18, window_bounds = array<i64: 1, 32>}, {pipeline_mode = #tpu.pipeline_mode<synchronous>, transform_indices = @transform_19, window_bounds = array<i64: 32, 32>}, {pipeline_mode = #tpu.pipeline_mode<synchronous>, transform_indices = @transform_20, window_bounds = array<i64: 3, 1, 60>}, {pipeline_mode = #tpu.pipeline_mode<synchronous>, transform_indices = @transform_21, window_bounds = array<i64: 3, 96, 60>}, {pipeline_mode = #tpu.pipeline_mode<synchronous>, transform_indices = @transform_22, window_bounds = array<i64: 3, 1, 96>}, {pipeline_mode = #tpu.pipeline_mode<synchronous>, transform_indices = @transform_23, window_bounds = array<i64: 3, 1, 96>}, {pipeline_mode = #tpu.pipeline_mode<synchronous>, transform_indices = @transform_24, window_bounds = array<i64: 3, 96, 96>}, {pipeline_mode = #tpu.pipeline_mode<synchronous>, transform_indices = @transform_25, window_bounds = array<i64: 3, 1, 96>}, {pipeline_mode = #tpu.pipeline_mode<synchronous>, transform_indices = @transform_26, window_bounds = array<i64: 3, 1, 96>}, {pipeline_mode = #tpu.pipeline_mode<synchronous>, transform_indices = @transform_27, window_bounds = array<i64: 3, 96, 96>}, {pipeline_mode = #tpu.pipeline_mode<synchronous>, transform_indices = @transform_28, window_bounds = array<i64: 3, 1, 6>}, {pipeline_mode = #tpu.pipeline_mode<synchronous>, transform_indices = @transform_29, window_bounds = array<i64: 3, 48, 6>}, {pipeline_mode = #tpu.pipeline_mode<synchronous>, transform_indices = @transform_30, window_bounds = array<i64: 3, 1, 48>}, {pipeline_mode = #tpu.pipeline_mode<synchronous>, transform_indices = @transform_31, window_bounds = array<i64: 3, 1, 48>}, {pipeline_mode = #tpu.pipeline_mode<synchronous>, transform_indices = @transform_32, window_bounds = array<i64: 3, 48, 48>}, {pipeline_mode = #tpu.pipeline_mode<synchronous>, transform_indices = @transform_33, window_bounds = array<i64: 3, 1, 48>}, {pipeline_mode = #tpu.pipeline_mode<synchronous>, transform_indices = @transform_34, window_bounds = array<i64: 3, 1, 48>}, {pipeline_mode = #tpu.pipeline_mode<synchronous>, transform_indices = @transform_35, window_bounds = array<i64: 3, 48, 48>}, {pipeline_mode = #tpu.pipeline_mode<synchronous>, transform_indices = @transform_36, window_bounds = array<i64: 3, 1, 2>}, {pipeline_mode = #tpu.pipeline_mode<synchronous>, transform_indices = @transform_37, window_bounds = array<i64: 3, 16, 2>}, {pipeline_mode = #tpu.pipeline_mode<synchronous>, transform_indices = @transform_38, window_bounds = array<i64: 3, 1, 16>}, {pipeline_mode = #tpu.pipeline_mode<synchronous>, transform_indices = @transform_39, window_bounds = array<i64: 3, 1, 16>}, {pipeline_mode = #tpu.pipeline_mode<synchronous>, transform_indices = @transform_40, window_bounds = array<i64: 3, 16, 16>}, {pipeline_mode = #tpu.pipeline_mode<synchronous>, transform_indices = @transform_41, window_bounds = array<i64: 3, 1, 16>}, {pipeline_mode = #tpu.pipeline_mode<synchronous>, transform_indices = @transform_42, window_bounds = array<i64: 3, 1, 16>}, {pipeline_mode = #tpu.pipeline_mode<synchronous>, transform_indices = @transform_43, window_bounds = array<i64: 3, 16, 16>}, {pipeline_mode = #tpu.pipeline_mode<synchronous>, transform_indices = @transform_44, window_bounds = array<i64: 3, 1, 32>}, {pipeline_mode = #tpu.pipeline_mode<synchronous>, transform_indices = @transform_45, window_bounds = array<i64: 3, 1, 32>}, {pipeline_mode = #tpu.pipeline_mode<synchronous>, transform_indices = @transform_46, window_bounds = array<i64: 3, 6, 32>}, {pipeline_mode = #tpu.pipeline_mode<synchronous>, transform_indices = @transform_47, window_bounds = array<i64: 3, 1, 16>}, {pipeline_mode = #tpu.pipeline_mode<synchronous>, transform_indices = @transform_48, window_bounds = array<i64: 3, 1, 16>}, {pipeline_mode = #tpu.pipeline_mode<synchronous>, transform_indices = @transform_49, window_bounds = array<i64: 3, 2, 16>}, {pipeline_mode = #tpu.pipeline_mode<synchronous>, transform_indices = @transform_50, window_bounds = array<i64: 3, 1, 64>}, {pipeline_mode = #tpu.pipeline_mode<synchronous>, transform_indices = @transform_51, window_bounds = array<i64: 3, 1, 64>}, {pipeline_mode = #tpu.pipeline_mode<synchronous>, transform_indices = @transform_52, window_bounds = array<i64: 3, 32, 64>}, {pipeline_mode = #tpu.pipeline_mode<synchronous>, transform_indices = @transform_53, window_bounds = array<i64: 3, 1, 32>}, {pipeline_mode = #tpu.pipeline_mode<synchronous>, transform_indices = @transform_54, window_bounds = array<i64: 3, 1, 32>}, {pipeline_mode = #tpu.pipeline_mode<synchronous>, transform_indices = @transform_55, window_bounds = array<i64: 3, 64, 32>}, {pipeline_mode = #tpu.pipeline_mode<synchronous>, transform_indices = @transform_56, window_bounds = array<i64: 3, 1, 16>}, {pipeline_mode = #tpu.pipeline_mode<synchronous>, transform_indices = @transform_57, window_bounds = array<i64: 3, 1, 16>}, {pipeline_mode = #tpu.pipeline_mode<synchronous>, transform_indices = @transform_58, window_bounds = array<i64: 3, 32, 16>}, {transform_indices = @transform_59, window_bounds = array<i64: 8, 256>}]} {
    %c0 = arith.constant 0 : index
    %c0_0 = arith.constant 0 : index
    %0 = vector.load %arg1[%c0, %c0_0] : memref<8x32xf32, #tpu.memory_space<vmem>>, vector<8x32xf32>
    %c0_1 = arith.constant 0 : index
    %c0_2 = arith.constant 0 : index
    %1 = vector.load %arg2[%c0_1, %c0_2] : memref<8x2xf32, #tpu.memory_space<vmem>>, vector<8x2xf32>
    %c0_3 = arith.constant 0 : index
    %c0_4 = arith.constant 0 : index
    %2 = vector.load %arg3[%c0_3, %c0_4] : memref<8x2xf32, #tpu.memory_space<vmem>>, vector<8x2xf32>
    %c0_5 = arith.constant 0 : index
    %c0_6 = arith.constant 0 : index
    %3 = vector.load %arg4[%c0_5, %c0_6] : memref<1x32xf32, #tpu.memory_space<vmem>>, vector<1x32xf32>
    %c0_7 = arith.constant 0 : index
    %c0_8 = arith.constant 0 : index
    %4 = vector.load %arg5[%c0_7, %c0_8] : memref<1x32xf32, #tpu.memory_space<vmem>>, vector<1x32xf32>
    %c0_9 = arith.constant 0 : index
    %c0_10 = arith.constant 0 : index
    %5 = vector.load %arg6[%c0_9, %c0_10] : memref<32x32xf32, #tpu.memory_space<vmem>>, vector<32x32xf32>
    %c0_11 = arith.constant 0 : index
    %c0_12 = arith.constant 0 : index
    %6 = vector.load %arg7[%c0_11, %c0_12] : memref<32x32xf32, #tpu.memory_space<vmem>>, vector<32x32xf32>
    %c0_13 = arith.constant 0 : index
    %c0_14 = arith.constant 0 : index
    %7 = vector.load %arg8[%c0_13, %c0_14] : memref<1x32xf32, #tpu.memory_space<vmem>>, vector<1x32xf32>
    %c0_15 = arith.constant 0 : index
    %c0_16 = arith.constant 0 : index
    %8 = vector.load %arg9[%c0_15, %c0_16] : memref<2x32xf32, #tpu.memory_space<vmem>>, vector<2x32xf32>
    %c0_17 = arith.constant 0 : index
    %c0_18 = arith.constant 0 : index
    %9 = vector.load %arg10[%c0_17, %c0_18] : memref<1x32xf32, #tpu.memory_space<vmem>>, vector<1x32xf32>
    %c0_19 = arith.constant 0 : index
    %c0_20 = arith.constant 0 : index
    %10 = vector.load %arg11[%c0_19, %c0_20] : memref<1x32xf32, #tpu.memory_space<vmem>>, vector<1x32xf32>
    %c0_21 = arith.constant 0 : index
    %c0_22 = arith.constant 0 : index
    %11 = vector.load %arg12[%c0_21, %c0_22] : memref<32x32xf32, #tpu.memory_space<vmem>>, vector<32x32xf32>
    %c0_23 = arith.constant 0 : index
    %c0_24 = arith.constant 0 : index
    %12 = vector.load %arg13[%c0_23, %c0_24] : memref<1x1xf32, #tpu.memory_space<vmem>>, vector<1x1xf32>
    %c0_25 = arith.constant 0 : index
    %c0_26 = arith.constant 0 : index
    %13 = vector.load %arg14[%c0_25, %c0_26] : memref<32x1xf32, #tpu.memory_space<vmem>>, vector<32x1xf32>
    %c0_27 = arith.constant 0 : index
    %c0_28 = arith.constant 0 : index
    %14 = vector.load %arg15[%c0_27, %c0_28] : memref<1x32xf32, #tpu.memory_space<vmem>>, vector<1x32xf32>
    %c0_29 = arith.constant 0 : index
    %c0_30 = arith.constant 0 : index
    %15 = vector.load %arg16[%c0_29, %c0_30] : memref<1x32xf32, #tpu.memory_space<vmem>>, vector<1x32xf32>
    %c0_31 = arith.constant 0 : index
    %c0_32 = arith.constant 0 : index
    %16 = vector.load %arg17[%c0_31, %c0_32] : memref<32x32xf32, #tpu.memory_space<vmem>>, vector<32x32xf32>
    %c0_33 = arith.constant 0 : index
    %c0_34 = arith.constant 0 : index
    %17 = vector.load %arg18[%c0_33, %c0_34] : memref<1x32xf32, #tpu.memory_space<vmem>>, vector<1x32xf32>
    %c0_35 = arith.constant 0 : index
    %c0_36 = arith.constant 0 : index
    %18 = vector.load %arg19[%c0_35, %c0_36] : memref<1x32xf32, #tpu.memory_space<vmem>>, vector<1x32xf32>
    %c0_37 = arith.constant 0 : index
    %c0_38 = arith.constant 0 : index
    %19 = vector.load %arg20[%c0_37, %c0_38] : memref<32x32xf32, #tpu.memory_space<vmem>>, vector<32x32xf32>
    %c0_39 = arith.constant 0 : index
    %c0_40 = arith.constant 0 : index
    %c0_41 = arith.constant 0 : index
    %20 = vector.load %arg21[%c0_39, %c0_40, %c0_41] : memref<3x1x60xf32, #tpu.memory_space<vmem>>, vector<1x1x60xf32>
    %21 = vector.shape_cast %20 : vector<1x1x60xf32> to vector<1x60xf32>
    %c0_42 = arith.constant 0 : index
    %c0_43 = arith.constant 0 : index
    %c0_44 = arith.constant 0 : index
    %22 = vector.load %arg22[%c0_42, %c0_43, %c0_44] : memref<3x96x60xf32, #tpu.memory_space<vmem>>, vector<1x96x60xf32>
    %23 = vector.shape_cast %22 : vector<1x96x60xf32> to vector<96x60xf32>
    %c0_45 = arith.constant 0 : index
    %c0_46 = arith.constant 0 : index
    %c0_47 = arith.constant 0 : index
    %24 = vector.load %arg23[%c0_45, %c0_46, %c0_47] : memref<3x1x96xf32, #tpu.memory_space<vmem>>, vector<1x1x96xf32>
    %25 = vector.shape_cast %24 : vector<1x1x96xf32> to vector<1x96xf32>
    %c0_48 = arith.constant 0 : index
    %c0_49 = arith.constant 0 : index
    %c0_50 = arith.constant 0 : index
    %26 = vector.load %arg24[%c0_48, %c0_49, %c0_50] : memref<3x1x96xf32, #tpu.memory_space<vmem>>, vector<1x1x96xf32>
    %27 = vector.shape_cast %26 : vector<1x1x96xf32> to vector<1x96xf32>
    %c0_51 = arith.constant 0 : index
    %c0_52 = arith.constant 0 : index
    %c0_53 = arith.constant 0 : index
    %28 = vector.load %arg25[%c0_51, %c0_52, %c0_53] : memref<3x96x96xf32, #tpu.memory_space<vmem>>, vector<1x96x96xf32>
    %29 = vector.shape_cast %28 : vector<1x96x96xf32> to vector<96x96xf32>
    %c0_54 = arith.constant 0 : index
    %c0_55 = arith.constant 0 : index
    %c0_56 = arith.constant 0 : index
    %30 = vector.load %arg26[%c0_54, %c0_55, %c0_56] : memref<3x1x96xf32, #tpu.memory_space<vmem>>, vector<1x1x96xf32>
    %31 = vector.shape_cast %30 : vector<1x1x96xf32> to vector<1x96xf32>
    %c0_57 = arith.constant 0 : index
    %c0_58 = arith.constant 0 : index
    %c0_59 = arith.constant 0 : index
    %32 = vector.load %arg27[%c0_57, %c0_58, %c0_59] : memref<3x1x96xf32, #tpu.memory_space<vmem>>, vector<1x1x96xf32>
    %33 = vector.shape_cast %32 : vector<1x1x96xf32> to vector<1x96xf32>
    %c0_60 = arith.constant 0 : index
    %c0_61 = arith.constant 0 : index
    %c0_62 = arith.constant 0 : index
    %34 = vector.load %arg28[%c0_60, %c0_61, %c0_62] : memref<3x96x96xf32, #tpu.memory_space<vmem>>, vector<1x96x96xf32>
    %35 = vector.shape_cast %34 : vector<1x96x96xf32> to vector<96x96xf32>
    %c0_63 = arith.constant 0 : index
    %c0_64 = arith.constant 0 : index
    %c0_65 = arith.constant 0 : index
    %36 = vector.load %arg29[%c0_63, %c0_64, %c0_65] : memref<3x1x6xf32, #tpu.memory_space<vmem>>, vector<1x1x6xf32>
    %37 = vector.shape_cast %36 : vector<1x1x6xf32> to vector<1x6xf32>
    %c0_66 = arith.constant 0 : index
    %c0_67 = arith.constant 0 : index
    %c0_68 = arith.constant 0 : index
    %38 = vector.load %arg30[%c0_66, %c0_67, %c0_68] : memref<3x48x6xf32, #tpu.memory_space<vmem>>, vector<1x48x6xf32>
    %39 = vector.shape_cast %38 : vector<1x48x6xf32> to vector<48x6xf32>
    %c0_69 = arith.constant 0 : index
    %c0_70 = arith.constant 0 : index
    %c0_71 = arith.constant 0 : index
    %40 = vector.load %arg31[%c0_69, %c0_70, %c0_71] : memref<3x1x48xf32, #tpu.memory_space<vmem>>, vector<1x1x48xf32>
    %41 = vector.shape_cast %40 : vector<1x1x48xf32> to vector<1x48xf32>
    %c0_72 = arith.constant 0 : index
    %c0_73 = arith.constant 0 : index
    %c0_74 = arith.constant 0 : index
    %42 = vector.load %arg32[%c0_72, %c0_73, %c0_74] : memref<3x1x48xf32, #tpu.memory_space<vmem>>, vector<1x1x48xf32>
    %43 = vector.shape_cast %42 : vector<1x1x48xf32> to vector<1x48xf32>
    %c0_75 = arith.constant 0 : index
    %c0_76 = arith.constant 0 : index
    %c0_77 = arith.constant 0 : index
    %44 = vector.load %arg33[%c0_75, %c0_76, %c0_77] : memref<3x48x48xf32, #tpu.memory_space<vmem>>, vector<1x48x48xf32>
    %45 = vector.shape_cast %44 : vector<1x48x48xf32> to vector<48x48xf32>
    %c0_78 = arith.constant 0 : index
    %c0_79 = arith.constant 0 : index
    %c0_80 = arith.constant 0 : index
    %46 = vector.load %arg34[%c0_78, %c0_79, %c0_80] : memref<3x1x48xf32, #tpu.memory_space<vmem>>, vector<1x1x48xf32>
    %47 = vector.shape_cast %46 : vector<1x1x48xf32> to vector<1x48xf32>
    %c0_81 = arith.constant 0 : index
    %c0_82 = arith.constant 0 : index
    %c0_83 = arith.constant 0 : index
    %48 = vector.load %arg35[%c0_81, %c0_82, %c0_83] : memref<3x1x48xf32, #tpu.memory_space<vmem>>, vector<1x1x48xf32>
    %49 = vector.shape_cast %48 : vector<1x1x48xf32> to vector<1x48xf32>
    %c0_84 = arith.constant 0 : index
    %c0_85 = arith.constant 0 : index
    %c0_86 = arith.constant 0 : index
    %50 = vector.load %arg36[%c0_84, %c0_85, %c0_86] : memref<3x48x48xf32, #tpu.memory_space<vmem>>, vector<1x48x48xf32>
    %51 = vector.shape_cast %50 : vector<1x48x48xf32> to vector<48x48xf32>
    %c0_87 = arith.constant 0 : index
    %c0_88 = arith.constant 0 : index
    %c0_89 = arith.constant 0 : index
    %52 = vector.load %arg37[%c0_87, %c0_88, %c0_89] : memref<3x1x2xf32, #tpu.memory_space<vmem>>, vector<1x1x2xf32>
    %53 = vector.shape_cast %52 : vector<1x1x2xf32> to vector<1x2xf32>
    %c0_90 = arith.constant 0 : index
    %c0_91 = arith.constant 0 : index
    %c0_92 = arith.constant 0 : index
    %54 = vector.load %arg38[%c0_90, %c0_91, %c0_92] : memref<3x16x2xf32, #tpu.memory_space<vmem>>, vector<1x16x2xf32>
    %55 = vector.shape_cast %54 : vector<1x16x2xf32> to vector<16x2xf32>
    %c0_93 = arith.constant 0 : index
    %c0_94 = arith.constant 0 : index
    %c0_95 = arith.constant 0 : index
    %56 = vector.load %arg39[%c0_93, %c0_94, %c0_95] : memref<3x1x16xf32, #tpu.memory_space<vmem>>, vector<1x1x16xf32>
    %57 = vector.shape_cast %56 : vector<1x1x16xf32> to vector<1x16xf32>
    %c0_96 = arith.constant 0 : index
    %c0_97 = arith.constant 0 : index
    %c0_98 = arith.constant 0 : index
    %58 = vector.load %arg40[%c0_96, %c0_97, %c0_98] : memref<3x1x16xf32, #tpu.memory_space<vmem>>, vector<1x1x16xf32>
    %59 = vector.shape_cast %58 : vector<1x1x16xf32> to vector<1x16xf32>
    %c0_99 = arith.constant 0 : index
    %c0_100 = arith.constant 0 : index
    %c0_101 = arith.constant 0 : index
    %60 = vector.load %arg41[%c0_99, %c0_100, %c0_101] : memref<3x16x16xf32, #tpu.memory_space<vmem>>, vector<1x16x16xf32>
    %61 = vector.shape_cast %60 : vector<1x16x16xf32> to vector<16x16xf32>
    %c0_102 = arith.constant 0 : index
    %c0_103 = arith.constant 0 : index
    %c0_104 = arith.constant 0 : index
    %62 = vector.load %arg42[%c0_102, %c0_103, %c0_104] : memref<3x1x16xf32, #tpu.memory_space<vmem>>, vector<1x1x16xf32>
    %63 = vector.shape_cast %62 : vector<1x1x16xf32> to vector<1x16xf32>
    %c0_105 = arith.constant 0 : index
    %c0_106 = arith.constant 0 : index
    %c0_107 = arith.constant 0 : index
    %64 = vector.load %arg43[%c0_105, %c0_106, %c0_107] : memref<3x1x16xf32, #tpu.memory_space<vmem>>, vector<1x1x16xf32>
    %65 = vector.shape_cast %64 : vector<1x1x16xf32> to vector<1x16xf32>
    %c0_108 = arith.constant 0 : index
    %c0_109 = arith.constant 0 : index
    %c0_110 = arith.constant 0 : index
    %66 = vector.load %arg44[%c0_108, %c0_109, %c0_110] : memref<3x16x16xf32, #tpu.memory_space<vmem>>, vector<1x16x16xf32>
    %67 = vector.shape_cast %66 : vector<1x16x16xf32> to vector<16x16xf32>
    %c0_111 = arith.constant 0 : index
    %c0_112 = arith.constant 0 : index
    %c0_113 = arith.constant 0 : index
    %68 = vector.load %arg45[%c0_111, %c0_112, %c0_113] : memref<3x1x32xf32, #tpu.memory_space<vmem>>, vector<1x1x32xf32>
    %69 = vector.shape_cast %68 : vector<1x1x32xf32> to vector<1x32xf32>
    %c0_114 = arith.constant 0 : index
    %c0_115 = arith.constant 0 : index
    %c0_116 = arith.constant 0 : index
    %70 = vector.load %arg46[%c0_114, %c0_115, %c0_116] : memref<3x1x32xf32, #tpu.memory_space<vmem>>, vector<1x1x32xf32>
    %71 = vector.shape_cast %70 : vector<1x1x32xf32> to vector<1x32xf32>
    %c0_117 = arith.constant 0 : index
    %c0_118 = arith.constant 0 : index
    %c0_119 = arith.constant 0 : index
    %72 = vector.load %arg47[%c0_117, %c0_118, %c0_119] : memref<3x6x32xf32, #tpu.memory_space<vmem>>, vector<1x6x32xf32>
    %73 = vector.shape_cast %72 : vector<1x6x32xf32> to vector<6x32xf32>
    %c0_120 = arith.constant 0 : index
    %c0_121 = arith.constant 0 : index
    %c0_122 = arith.constant 0 : index
    %74 = vector.load %arg48[%c0_120, %c0_121, %c0_122] : memref<3x1x16xf32, #tpu.memory_space<vmem>>, vector<1x1x16xf32>
    %75 = vector.shape_cast %74 : vector<1x1x16xf32> to vector<1x16xf32>
    %c0_123 = arith.constant 0 : index
    %c0_124 = arith.constant 0 : index
    %c0_125 = arith.constant 0 : index
    %76 = vector.load %arg49[%c0_123, %c0_124, %c0_125] : memref<3x1x16xf32, #tpu.memory_space<vmem>>, vector<1x1x16xf32>
    %77 = vector.shape_cast %76 : vector<1x1x16xf32> to vector<1x16xf32>
    %c0_126 = arith.constant 0 : index
    %c0_127 = arith.constant 0 : index
    %c0_128 = arith.constant 0 : index
    %78 = vector.load %arg50[%c0_126, %c0_127, %c0_128] : memref<3x2x16xf32, #tpu.memory_space<vmem>>, vector<1x2x16xf32>
    %79 = vector.shape_cast %78 : vector<1x2x16xf32> to vector<2x16xf32>
    %c0_129 = arith.constant 0 : index
    %c0_130 = arith.constant 0 : index
    %c0_131 = arith.constant 0 : index
    %80 = vector.load %arg51[%c0_129, %c0_130, %c0_131] : memref<3x1x64xf32, #tpu.memory_space<vmem>>, vector<1x1x64xf32>
    %81 = vector.shape_cast %80 : vector<1x1x64xf32> to vector<1x64xf32>
    %c0_132 = arith.constant 0 : index
    %c0_133 = arith.constant 0 : index
    %c0_134 = arith.constant 0 : index
    %82 = vector.load %arg52[%c0_132, %c0_133, %c0_134] : memref<3x1x64xf32, #tpu.memory_space<vmem>>, vector<1x1x64xf32>
    %83 = vector.shape_cast %82 : vector<1x1x64xf32> to vector<1x64xf32>
    %c0_135 = arith.constant 0 : index
    %c0_136 = arith.constant 0 : index
    %c0_137 = arith.constant 0 : index
    %84 = vector.load %arg53[%c0_135, %c0_136, %c0_137] : memref<3x32x64xf32, #tpu.memory_space<vmem>>, vector<1x32x64xf32>
    %85 = vector.shape_cast %84 : vector<1x32x64xf32> to vector<32x64xf32>
    %c0_138 = arith.constant 0 : index
    %c0_139 = arith.constant 0 : index
    %c0_140 = arith.constant 0 : index
    %86 = vector.load %arg54[%c0_138, %c0_139, %c0_140] : memref<3x1x32xf32, #tpu.memory_space<vmem>>, vector<1x1x32xf32>
    %87 = vector.shape_cast %86 : vector<1x1x32xf32> to vector<1x32xf32>
    %c0_141 = arith.constant 0 : index
    %c0_142 = arith.constant 0 : index
    %c0_143 = arith.constant 0 : index
    %88 = vector.load %arg55[%c0_141, %c0_142, %c0_143] : memref<3x1x32xf32, #tpu.memory_space<vmem>>, vector<1x1x32xf32>
    %89 = vector.shape_cast %88 : vector<1x1x32xf32> to vector<1x32xf32>
    %c0_144 = arith.constant 0 : index
    %c0_145 = arith.constant 0 : index
    %c0_146 = arith.constant 0 : index
    %90 = vector.load %arg56[%c0_144, %c0_145, %c0_146] : memref<3x64x32xf32, #tpu.memory_space<vmem>>, vector<1x64x32xf32>
    %91 = vector.shape_cast %90 : vector<1x64x32xf32> to vector<64x32xf32>
    %c0_147 = arith.constant 0 : index
    %c0_148 = arith.constant 0 : index
    %c0_149 = arith.constant 0 : index
    %92 = vector.load %arg57[%c0_147, %c0_148, %c0_149] : memref<3x1x16xf32, #tpu.memory_space<vmem>>, vector<1x1x16xf32>
    %93 = vector.shape_cast %92 : vector<1x1x16xf32> to vector<1x16xf32>
    %c0_150 = arith.constant 0 : index
    %c0_151 = arith.constant 0 : index
    %c0_152 = arith.constant 0 : index
    %94 = vector.load %arg58[%c0_150, %c0_151, %c0_152] : memref<3x1x16xf32, #tpu.memory_space<vmem>>, vector<1x1x16xf32>
    %95 = vector.shape_cast %94 : vector<1x1x16xf32> to vector<1x16xf32>
    %c0_153 = arith.constant 0 : index
    %c0_154 = arith.constant 0 : index
    %c0_155 = arith.constant 0 : index
    %96 = vector.load %arg59[%c0_153, %c0_154, %c0_155] : memref<3x32x16xf32, #tpu.memory_space<vmem>>, vector<1x32x16xf32>
    %97 = vector.shape_cast %96 : vector<1x32x16xf32> to vector<32x16xf32>
    %cst = arith.constant dense<0.000000e+00> : vector<8x64xf32>
    %98 = tpu.matmul %0, %85, %cst {dimension_numbers = #tpu.dot_dimension_numbers<[1], [0], [0], [1], [0, 0, 1, 1], [], []>} : vector<8x32xf32>, vector<32x64xf32>, vector<8x64xf32> -> vector<8x64xf32>
    %cst_156 = arith.constant dense<0.000000e+00> : vector<8xf32>
    %99 = vector.multi_reduction <add>, %98, %cst_156 [1] : vector<8x64xf32> to vector<8xf32>
    %100 = vector.shape_cast %99 : vector<8xf32> to vector<8x1xf32>
    %101 = arith.mulf %98, %98 : vector<8x64xf32>
    %cst_157 = arith.constant dense<0.000000e+00> : vector<8xf32>
    %102 = vector.multi_reduction <add>, %101, %cst_157 [1] : vector<8x64xf32> to vector<8xf32>
    %103 = vector.shape_cast %102 : vector<8xf32> to vector<8x1xf32>
    %cst_158 = arith.constant 1.562500e-02 : f32
    %104 = vector.broadcast %cst_158 : f32 to vector<8x1xf32>
    %105 = arith.mulf %100, %104 : vector<8x1xf32>
    %cst_159 = arith.constant 1.562500e-02 : f32
    %106 = vector.broadcast %cst_159 : f32 to vector<8x1xf32>
    %107 = arith.mulf %103, %106 : vector<8x1xf32>
    %108 = arith.mulf %105, %105 : vector<8x1xf32>
    %109 = arith.subf %107, %108 : vector<8x1xf32>
    %cst_160 = arith.constant 0.000000e+00 : f32
    %110 = vector.broadcast %cst_160 : f32 to vector<8x1xf32>
    %111 = arith.maximumf %109, %110 : vector<8x1xf32>
    %112 = vector.broadcast %105 : vector<8x1xf32> to vector<8x64xf32>
    %113 = arith.subf %98, %112 : vector<8x64xf32>
    %cst_161 = arith.constant 9.99999974E-6 : f32
    %114 = vector.broadcast %cst_161 : f32 to vector<8x1xf32>
    %115 = arith.addf %111, %114 : vector<8x1xf32>
    %116 = math.rsqrt %115 : vector<8x1xf32>
    %117 = vector.broadcast %116 : vector<8x1xf32> to vector<8x64xf32>
    %118 = arith.mulf %113, %117 : vector<8x64xf32>
    %119 = vector.broadcast %83 : vector<1x64xf32> to vector<8x64xf32>
    %120 = arith.mulf %118, %119 : vector<8x64xf32>
    %121 = vector.broadcast %81 : vector<1x64xf32> to vector<8x64xf32>
    %122 = arith.addf %120, %121 : vector<8x64xf32>
    %cst_162 = arith.constant 0.000000e+00 : f32
    %123 = vector.broadcast %cst_162 : f32 to vector<8x64xf32>
    %124 = arith.maximumf %122, %123 : vector<8x64xf32>
    %cst_163 = arith.constant dense<0.000000e+00> : vector<8x32xf32>
    %125 = tpu.matmul %124, %91, %cst_163 {dimension_numbers = #tpu.dot_dimension_numbers<[1], [0], [0], [1], [0, 0, 1, 1], [], []>} : vector<8x64xf32>, vector<64x32xf32>, vector<8x32xf32> -> vector<8x32xf32>
    %cst_164 = arith.constant dense<0.000000e+00> : vector<8xf32>
    %126 = vector.multi_reduction <add>, %125, %cst_164 [1] : vector<8x32xf32> to vector<8xf32>
    %127 = vector.shape_cast %126 : vector<8xf32> to vector<8x1xf32>
    %128 = arith.mulf %125, %125 : vector<8x32xf32>
    %cst_165 = arith.constant dense<0.000000e+00> : vector<8xf32>
    %129 = vector.multi_reduction <add>, %128, %cst_165 [1] : vector<8x32xf32> to vector<8xf32>
    %130 = vector.shape_cast %129 : vector<8xf32> to vector<8x1xf32>
    %cst_166 = arith.constant 3.125000e-02 : f32
    %131 = vector.broadcast %cst_166 : f32 to vector<8x1xf32>
    %132 = arith.mulf %127, %131 : vector<8x1xf32>
    %cst_167 = arith.constant 3.125000e-02 : f32
    %133 = vector.broadcast %cst_167 : f32 to vector<8x1xf32>
    %134 = arith.mulf %130, %133 : vector<8x1xf32>
    %135 = arith.mulf %132, %132 : vector<8x1xf32>
    %136 = arith.subf %134, %135 : vector<8x1xf32>
    %cst_168 = arith.constant 0.000000e+00 : f32
    %137 = vector.broadcast %cst_168 : f32 to vector<8x1xf32>
    %138 = arith.maximumf %136, %137 : vector<8x1xf32>
    %139 = vector.broadcast %132 : vector<8x1xf32> to vector<8x32xf32>
    %140 = arith.subf %125, %139 : vector<8x32xf32>
    %cst_169 = arith.constant 9.99999974E-6 : f32
    %141 = vector.broadcast %cst_169 : f32 to vector<8x1xf32>
    %142 = arith.addf %138, %141 : vector<8x1xf32>
    %143 = math.rsqrt %142 : vector<8x1xf32>
    %144 = vector.broadcast %143 : vector<8x1xf32> to vector<8x32xf32>
    %145 = arith.mulf %140, %144 : vector<8x32xf32>
    %146 = vector.broadcast %89 : vector<1x32xf32> to vector<8x32xf32>
    %147 = arith.mulf %145, %146 : vector<8x32xf32>
    %148 = vector.broadcast %87 : vector<1x32xf32> to vector<8x32xf32>
    %149 = arith.addf %147, %148 : vector<8x32xf32>
    %cst_170 = arith.constant 0.000000e+00 : f32
    %150 = vector.broadcast %cst_170 : f32 to vector<8x32xf32>
    %151 = arith.maximumf %149, %150 : vector<8x32xf32>
    %cst_171 = arith.constant dense<0.000000e+00> : vector<8x16xf32>
    %152 = tpu.matmul %151, %97, %cst_171 {dimension_numbers = #tpu.dot_dimension_numbers<[1], [0], [0], [1], [0, 0, 1, 1], [], []>} : vector<8x32xf32>, vector<32x16xf32>, vector<8x16xf32> -> vector<8x16xf32>
    %cst_172 = arith.constant dense<0.000000e+00> : vector<8xf32>
    %153 = vector.multi_reduction <add>, %152, %cst_172 [1] : vector<8x16xf32> to vector<8xf32>
    %154 = vector.shape_cast %153 : vector<8xf32> to vector<8x1xf32>
    %155 = arith.mulf %152, %152 : vector<8x16xf32>
    %cst_173 = arith.constant dense<0.000000e+00> : vector<8xf32>
    %156 = vector.multi_reduction <add>, %155, %cst_173 [1] : vector<8x16xf32> to vector<8xf32>
    %157 = vector.shape_cast %156 : vector<8xf32> to vector<8x1xf32>
    %cst_174 = arith.constant 6.250000e-02 : f32
    %158 = vector.broadcast %cst_174 : f32 to vector<8x1xf32>
    %159 = arith.mulf %154, %158 : vector<8x1xf32>
    %cst_175 = arith.constant 6.250000e-02 : f32
    %160 = vector.broadcast %cst_175 : f32 to vector<8x1xf32>
    %161 = arith.mulf %157, %160 : vector<8x1xf32>
    %162 = arith.mulf %159, %159 : vector<8x1xf32>
    %163 = arith.subf %161, %162 : vector<8x1xf32>
    %cst_176 = arith.constant 0.000000e+00 : f32
    %164 = vector.broadcast %cst_176 : f32 to vector<8x1xf32>
    %165 = arith.maximumf %163, %164 : vector<8x1xf32>
    %166 = vector.broadcast %159 : vector<8x1xf32> to vector<8x16xf32>
    %167 = arith.subf %152, %166 : vector<8x16xf32>
    %cst_177 = arith.constant 9.99999974E-6 : f32
    %168 = vector.broadcast %cst_177 : f32 to vector<8x1xf32>
    %169 = arith.addf %165, %168 : vector<8x1xf32>
    %170 = math.rsqrt %169 : vector<8x1xf32>
    %171 = vector.broadcast %170 : vector<8x1xf32> to vector<8x16xf32>
    %172 = arith.mulf %167, %171 : vector<8x16xf32>
    %173 = vector.broadcast %95 : vector<1x16xf32> to vector<8x16xf32>
    %174 = arith.mulf %172, %173 : vector<8x16xf32>
    %175 = vector.broadcast %93 : vector<1x16xf32> to vector<8x16xf32>
    %176 = arith.addf %174, %175 : vector<8x16xf32>
    %cst_178 = arith.constant 0.000000e+00 : f32
    %177 = vector.broadcast %cst_178 : f32 to vector<8x16xf32>
    %178 = arith.maximumf %176, %177 : vector<8x16xf32>
    %cst_179 = arith.constant dense<0.000000e+00> : vector<8x16xf32>
    %179 = tpu.matmul %178, %61, %cst_179 {dimension_numbers = #tpu.dot_dimension_numbers<[1], [0], [0], [1], [0, 0, 1, 1], [], []>} : vector<8x16xf32>, vector<16x16xf32>, vector<8x16xf32> -> vector<8x16xf32>
    %cst_180 = arith.constant dense<0.000000e+00> : vector<8xf32>
    %180 = vector.multi_reduction <add>, %179, %cst_180 [1] : vector<8x16xf32> to vector<8xf32>
    %181 = vector.shape_cast %180 : vector<8xf32> to vector<8x1xf32>
    %182 = arith.mulf %179, %179 : vector<8x16xf32>
    %cst_181 = arith.constant dense<0.000000e+00> : vector<8xf32>
    %183 = vector.multi_reduction <add>, %182, %cst_181 [1] : vector<8x16xf32> to vector<8xf32>
    %184 = vector.shape_cast %183 : vector<8xf32> to vector<8x1xf32>
    %cst_182 = arith.constant 6.250000e-02 : f32
    %185 = vector.broadcast %cst_182 : f32 to vector<8x1xf32>
    %186 = arith.mulf %181, %185 : vector<8x1xf32>
    %cst_183 = arith.constant 6.250000e-02 : f32
    %187 = vector.broadcast %cst_183 : f32 to vector<8x1xf32>
    %188 = arith.mulf %184, %187 : vector<8x1xf32>
    %189 = arith.mulf %186, %186 : vector<8x1xf32>
    %190 = arith.subf %188, %189 : vector<8x1xf32>
    %cst_184 = arith.constant 0.000000e+00 : f32
    %191 = vector.broadcast %cst_184 : f32 to vector<8x1xf32>
    %192 = arith.maximumf %190, %191 : vector<8x1xf32>
    %193 = vector.broadcast %186 : vector<8x1xf32> to vector<8x16xf32>
    %194 = arith.subf %179, %193 : vector<8x16xf32>
    %cst_185 = arith.constant 9.99999974E-6 : f32
    %195 = vector.broadcast %cst_185 : f32 to vector<8x1xf32>
    %196 = arith.addf %192, %195 : vector<8x1xf32>
    %197 = math.rsqrt %196 : vector<8x1xf32>
    %198 = vector.broadcast %197 : vector<8x1xf32> to vector<8x16xf32>
    %199 = arith.mulf %194, %198 : vector<8x16xf32>
    %200 = vector.broadcast %59 : vector<1x16xf32> to vector<8x16xf32>
    %201 = arith.mulf %199, %200 : vector<8x16xf32>
    %202 = vector.broadcast %57 : vector<1x16xf32> to vector<8x16xf32>
    %203 = arith.addf %201, %202 : vector<8x16xf32>
    %cst_186 = arith.constant 0.000000e+00 : f32
    %204 = vector.broadcast %cst_186 : f32 to vector<8x16xf32>
    %205 = arith.maximumf %203, %204 : vector<8x16xf32>
    %cst_187 = arith.constant dense<0.000000e+00> : vector<8x16xf32>
    %206 = tpu.matmul %205, %67, %cst_187 {dimension_numbers = #tpu.dot_dimension_numbers<[1], [0], [0], [1], [0, 0, 1, 1], [], []>} : vector<8x16xf32>, vector<16x16xf32>, vector<8x16xf32> -> vector<8x16xf32>
    %cst_188 = arith.constant dense<0.000000e+00> : vector<8xf32>
    %207 = vector.multi_reduction <add>, %206, %cst_188 [1] : vector<8x16xf32> to vector<8xf32>
    %208 = vector.shape_cast %207 : vector<8xf32> to vector<8x1xf32>
    %209 = arith.mulf %206, %206 : vector<8x16xf32>
    %cst_189 = arith.constant dense<0.000000e+00> : vector<8xf32>
    %210 = vector.multi_reduction <add>, %209, %cst_189 [1] : vector<8x16xf32> to vector<8xf32>
    %211 = vector.shape_cast %210 : vector<8xf32> to vector<8x1xf32>
    %cst_190 = arith.constant 6.250000e-02 : f32
    %212 = vector.broadcast %cst_190 : f32 to vector<8x1xf32>
    %213 = arith.mulf %208, %212 : vector<8x1xf32>
    %cst_191 = arith.constant 6.250000e-02 : f32
    %214 = vector.broadcast %cst_191 : f32 to vector<8x1xf32>
    %215 = arith.mulf %211, %214 : vector<8x1xf32>
    %216 = arith.mulf %213, %213 : vector<8x1xf32>
    %217 = arith.subf %215, %216 : vector<8x1xf32>
    %cst_192 = arith.constant 0.000000e+00 : f32
    %218 = vector.broadcast %cst_192 : f32 to vector<8x1xf32>
    %219 = arith.maximumf %217, %218 : vector<8x1xf32>
    %220 = vector.broadcast %213 : vector<8x1xf32> to vector<8x16xf32>
    %221 = arith.subf %206, %220 : vector<8x16xf32>
    %cst_193 = arith.constant 9.99999974E-6 : f32
    %222 = vector.broadcast %cst_193 : f32 to vector<8x1xf32>
    %223 = arith.addf %219, %222 : vector<8x1xf32>
    %224 = math.rsqrt %223 : vector<8x1xf32>
    %225 = vector.broadcast %224 : vector<8x1xf32> to vector<8x16xf32>
    %226 = arith.mulf %221, %225 : vector<8x16xf32>
    %227 = vector.broadcast %65 : vector<1x16xf32> to vector<8x16xf32>
    %228 = arith.mulf %226, %227 : vector<8x16xf32>
    %229 = vector.broadcast %63 : vector<1x16xf32> to vector<8x16xf32>
    %230 = arith.addf %228, %229 : vector<8x16xf32>
    %231 = arith.addf %230, %178 : vector<8x16xf32>
    %cst_194 = arith.constant 0.000000e+00 : f32
    %232 = vector.broadcast %cst_194 : f32 to vector<8x16xf32>
    %233 = arith.maximumf %231, %232 : vector<8x16xf32>
    %cst_195 = arith.constant dense<0.000000e+00> : vector<8x2xf32>
    %234 = tpu.matmul %233, %55, %cst_195 {dimension_numbers = #tpu.dot_dimension_numbers<[1], [0], [0], [1], [0, 0, 1, 1], [], []>} : vector<8x16xf32>, vector<16x2xf32>, vector<8x2xf32> -> vector<8x2xf32>
    %235 = vector.broadcast %53 : vector<1x2xf32> to vector<8x2xf32>
    %236 = arith.addf %234, %235 : vector<8x2xf32>
    %cst_196 = arith.constant dense<0.000000e+00> : vector<8x16xf32>
    %237 = tpu.matmul %236, %79, %cst_196 {dimension_numbers = #tpu.dot_dimension_numbers<[1], [0], [0], [1], [0, 0, 1, 1], [], []>} : vector<8x2xf32>, vector<2x16xf32>, vector<8x16xf32> -> vector<8x16xf32>
    %cst_197 = arith.constant dense<0.000000e+00> : vector<8xf32>
    %238 = vector.multi_reduction <add>, %237, %cst_197 [1] : vector<8x16xf32> to vector<8xf32>
    %239 = vector.shape_cast %238 : vector<8xf32> to vector<8x1xf32>
    %240 = arith.mulf %237, %237 : vector<8x16xf32>
    %cst_198 = arith.constant dense<0.000000e+00> : vector<8xf32>
    %241 = vector.multi_reduction <add>, %240, %cst_198 [1] : vector<8x16xf32> to vector<8xf32>
    %242 = vector.shape_cast %241 : vector<8xf32> to vector<8x1xf32>
    %cst_199 = arith.constant 6.250000e-02 : f32
    %243 = vector.broadcast %cst_199 : f32 to vector<8x1xf32>
    %244 = arith.mulf %239, %243 : vector<8x1xf32>
    %cst_200 = arith.constant 6.250000e-02 : f32
    %245 = vector.broadcast %cst_200 : f32 to vector<8x1xf32>
    %246 = arith.mulf %242, %245 : vector<8x1xf32>
    %247 = arith.mulf %244, %244 : vector<8x1xf32>
    %248 = arith.subf %246, %247 : vector<8x1xf32>
    %cst_201 = arith.constant 0.000000e+00 : f32
    %249 = vector.broadcast %cst_201 : f32 to vector<8x1xf32>
    %250 = arith.maximumf %248, %249 : vector<8x1xf32>
    %251 = vector.broadcast %244 : vector<8x1xf32> to vector<8x16xf32>
    %252 = arith.subf %237, %251 : vector<8x16xf32>
    %cst_202 = arith.constant 9.99999974E-6 : f32
    %253 = vector.broadcast %cst_202 : f32 to vector<8x1xf32>
    %254 = arith.addf %250, %253 : vector<8x1xf32>
    %255 = math.rsqrt %254 : vector<8x1xf32>
    %256 = vector.broadcast %255 : vector<8x1xf32> to vector<8x16xf32>
    %257 = arith.mulf %252, %256 : vector<8x16xf32>
    %258 = vector.broadcast %77 : vector<1x16xf32> to vector<8x16xf32>
    %259 = arith.mulf %257, %258 : vector<8x16xf32>
    %260 = vector.broadcast %75 : vector<1x16xf32> to vector<8x16xf32>
    %261 = arith.addf %259, %260 : vector<8x16xf32>
    %cst_203 = arith.constant 0.000000e+00 : f32
    %262 = vector.broadcast %cst_203 : f32 to vector<8x16xf32>
    %263 = arith.maximumf %261, %262 : vector<8x16xf32>
    %264 = tpu.concatenate %151, %263 in 1 : vector<8x32xf32>, vector<8x16xf32> -> vector<8x48xf32>
    %cst_204 = arith.constant dense<0.000000e+00> : vector<8x48xf32>
    %265 = tpu.matmul %264, %45, %cst_204 {dimension_numbers = #tpu.dot_dimension_numbers<[1], [0], [0], [1], [0, 0, 1, 1], [], []>} : vector<8x48xf32>, vector<48x48xf32>, vector<8x48xf32> -> vector<8x48xf32>
    %cst_205 = arith.constant dense<0.000000e+00> : vector<8xf32>
    %266 = vector.multi_reduction <add>, %265, %cst_205 [1] : vector<8x48xf32> to vector<8xf32>
    %267 = vector.shape_cast %266 : vector<8xf32> to vector<8x1xf32>
    %268 = arith.mulf %265, %265 : vector<8x48xf32>
    %cst_206 = arith.constant dense<0.000000e+00> : vector<8xf32>
    %269 = vector.multi_reduction <add>, %268, %cst_206 [1] : vector<8x48xf32> to vector<8xf32>
    %270 = vector.shape_cast %269 : vector<8xf32> to vector<8x1xf32>
    %cst_207 = arith.constant 0.020833334 : f32
    %271 = vector.broadcast %cst_207 : f32 to vector<8x1xf32>
    %272 = arith.mulf %267, %271 : vector<8x1xf32>
    %cst_208 = arith.constant 0.020833334 : f32
    %273 = vector.broadcast %cst_208 : f32 to vector<8x1xf32>
    %274 = arith.mulf %270, %273 : vector<8x1xf32>
    %275 = arith.mulf %272, %272 : vector<8x1xf32>
    %276 = arith.subf %274, %275 : vector<8x1xf32>
    %cst_209 = arith.constant 0.000000e+00 : f32
    %277 = vector.broadcast %cst_209 : f32 to vector<8x1xf32>
    %278 = arith.maximumf %276, %277 : vector<8x1xf32>
    %279 = vector.broadcast %272 : vector<8x1xf32> to vector<8x48xf32>
    %280 = arith.subf %265, %279 : vector<8x48xf32>
    %cst_210 = arith.constant 9.99999974E-6 : f32
    %281 = vector.broadcast %cst_210 : f32 to vector<8x1xf32>
    %282 = arith.addf %278, %281 : vector<8x1xf32>
    %283 = math.rsqrt %282 : vector<8x1xf32>
    %284 = vector.broadcast %283 : vector<8x1xf32> to vector<8x48xf32>
    %285 = arith.mulf %280, %284 : vector<8x48xf32>
    %286 = vector.broadcast %43 : vector<1x48xf32> to vector<8x48xf32>
    %287 = arith.mulf %285, %286 : vector<8x48xf32>
    %288 = vector.broadcast %41 : vector<1x48xf32> to vector<8x48xf32>
    %289 = arith.addf %287, %288 : vector<8x48xf32>
    %cst_211 = arith.constant 0.000000e+00 : f32
    %290 = vector.broadcast %cst_211 : f32 to vector<8x48xf32>
    %291 = arith.maximumf %289, %290 : vector<8x48xf32>
    %cst_212 = arith.constant dense<0.000000e+00> : vector<8x48xf32>
    %292 = tpu.matmul %291, %51, %cst_212 {dimension_numbers = #tpu.dot_dimension_numbers<[1], [0], [0], [1], [0, 0, 1, 1], [], []>} : vector<8x48xf32>, vector<48x48xf32>, vector<8x48xf32> -> vector<8x48xf32>
    %cst_213 = arith.constant dense<0.000000e+00> : vector<8xf32>
    %293 = vector.multi_reduction <add>, %292, %cst_213 [1] : vector<8x48xf32> to vector<8xf32>
    %294 = vector.shape_cast %293 : vector<8xf32> to vector<8x1xf32>
    %295 = arith.mulf %292, %292 : vector<8x48xf32>
    %cst_214 = arith.constant dense<0.000000e+00> : vector<8xf32>
    %296 = vector.multi_reduction <add>, %295, %cst_214 [1] : vector<8x48xf32> to vector<8xf32>
    %297 = vector.shape_cast %296 : vector<8xf32> to vector<8x1xf32>
    %cst_215 = arith.constant 0.020833334 : f32
    %298 = vector.broadcast %cst_215 : f32 to vector<8x1xf32>
    %299 = arith.mulf %294, %298 : vector<8x1xf32>
    %cst_216 = arith.constant 0.020833334 : f32
    %300 = vector.broadcast %cst_216 : f32 to vector<8x1xf32>
    %301 = arith.mulf %297, %300 : vector<8x1xf32>
    %302 = arith.mulf %299, %299 : vector<8x1xf32>
    %303 = arith.subf %301, %302 : vector<8x1xf32>
    %cst_217 = arith.constant 0.000000e+00 : f32
    %304 = vector.broadcast %cst_217 : f32 to vector<8x1xf32>
    %305 = arith.maximumf %303, %304 : vector<8x1xf32>
    %306 = vector.broadcast %299 : vector<8x1xf32> to vector<8x48xf32>
    %307 = arith.subf %292, %306 : vector<8x48xf32>
    %cst_218 = arith.constant 9.99999974E-6 : f32
    %308 = vector.broadcast %cst_218 : f32 to vector<8x1xf32>
    %309 = arith.addf %305, %308 : vector<8x1xf32>
    %310 = math.rsqrt %309 : vector<8x1xf32>
    %311 = vector.broadcast %310 : vector<8x1xf32> to vector<8x48xf32>
    %312 = arith.mulf %307, %311 : vector<8x48xf32>
    %313 = vector.broadcast %49 : vector<1x48xf32> to vector<8x48xf32>
    %314 = arith.mulf %312, %313 : vector<8x48xf32>
    %315 = vector.broadcast %47 : vector<1x48xf32> to vector<8x48xf32>
    %316 = arith.addf %314, %315 : vector<8x48xf32>
    %317 = arith.addf %316, %264 : vector<8x48xf32>
    %cst_219 = arith.constant 0.000000e+00 : f32
    %318 = vector.broadcast %cst_219 : f32 to vector<8x48xf32>
    %319 = arith.maximumf %317, %318 : vector<8x48xf32>
    %cst_220 = arith.constant dense<0.000000e+00> : vector<8x6xf32>
    %320 = tpu.matmul %319, %39, %cst_220 {dimension_numbers = #tpu.dot_dimension_numbers<[1], [0], [0], [1], [0, 0, 1, 1], [], []>} : vector<8x48xf32>, vector<48x6xf32>, vector<8x6xf32> -> vector<8x6xf32>
    %321 = vector.broadcast %37 : vector<1x6xf32> to vector<8x6xf32>
    %322 = arith.addf %320, %321 : vector<8x6xf32>
    %cst_221 = arith.constant dense<0.000000e+00> : vector<8x32xf32>
    %323 = tpu.matmul %322, %73, %cst_221 {dimension_numbers = #tpu.dot_dimension_numbers<[1], [0], [0], [1], [0, 0, 1, 1], [], []>} : vector<8x6xf32>, vector<6x32xf32>, vector<8x32xf32> -> vector<8x32xf32>
    %cst_222 = arith.constant dense<0.000000e+00> : vector<8xf32>
    %324 = vector.multi_reduction <add>, %323, %cst_222 [1] : vector<8x32xf32> to vector<8xf32>
    %325 = vector.shape_cast %324 : vector<8xf32> to vector<8x1xf32>
    %326 = arith.mulf %323, %323 : vector<8x32xf32>
    %cst_223 = arith.constant dense<0.000000e+00> : vector<8xf32>
    %327 = vector.multi_reduction <add>, %326, %cst_223 [1] : vector<8x32xf32> to vector<8xf32>
    %328 = vector.shape_cast %327 : vector<8xf32> to vector<8x1xf32>
    %cst_224 = arith.constant 3.125000e-02 : f32
    %329 = vector.broadcast %cst_224 : f32 to vector<8x1xf32>
    %330 = arith.mulf %325, %329 : vector<8x1xf32>
    %cst_225 = arith.constant 3.125000e-02 : f32
    %331 = vector.broadcast %cst_225 : f32 to vector<8x1xf32>
    %332 = arith.mulf %328, %331 : vector<8x1xf32>
    %333 = arith.mulf %330, %330 : vector<8x1xf32>
    %334 = arith.subf %332, %333 : vector<8x1xf32>
    %cst_226 = arith.constant 0.000000e+00 : f32
    %335 = vector.broadcast %cst_226 : f32 to vector<8x1xf32>
    %336 = arith.maximumf %334, %335 : vector<8x1xf32>
    %337 = vector.broadcast %330 : vector<8x1xf32> to vector<8x32xf32>
    %338 = arith.subf %323, %337 : vector<8x32xf32>
    %cst_227 = arith.constant 9.99999974E-6 : f32
    %339 = vector.broadcast %cst_227 : f32 to vector<8x1xf32>
    %340 = arith.addf %336, %339 : vector<8x1xf32>
    %341 = math.rsqrt %340 : vector<8x1xf32>
    %342 = vector.broadcast %341 : vector<8x1xf32> to vector<8x32xf32>
    %343 = arith.mulf %338, %342 : vector<8x32xf32>
    %344 = vector.broadcast %71 : vector<1x32xf32> to vector<8x32xf32>
    %345 = arith.mulf %343, %344 : vector<8x32xf32>
    %346 = vector.broadcast %69 : vector<1x32xf32> to vector<8x32xf32>
    %347 = arith.addf %345, %346 : vector<8x32xf32>
    %cst_228 = arith.constant 0.000000e+00 : f32
    %348 = vector.broadcast %cst_228 : f32 to vector<8x32xf32>
    %349 = arith.maximumf %347, %348 : vector<8x32xf32>
    %350 = tpu.concatenate %124, %349 in 1 : vector<8x64xf32>, vector<8x32xf32> -> vector<8x96xf32>
    %cst_229 = arith.constant dense<0.000000e+00> : vector<8x96xf32>
    %351 = tpu.matmul %350, %29, %cst_229 {dimension_numbers = #tpu.dot_dimension_numbers<[1], [0], [0], [1], [0, 0, 1, 1], [], []>} : vector<8x96xf32>, vector<96x96xf32>, vector<8x96xf32> -> vector<8x96xf32>
    %cst_230 = arith.constant dense<0.000000e+00> : vector<8xf32>
    %352 = vector.multi_reduction <add>, %351, %cst_230 [1] : vector<8x96xf32> to vector<8xf32>
    %353 = vector.shape_cast %352 : vector<8xf32> to vector<8x1xf32>
    %354 = arith.mulf %351, %351 : vector<8x96xf32>
    %cst_231 = arith.constant dense<0.000000e+00> : vector<8xf32>
    %355 = vector.multi_reduction <add>, %354, %cst_231 [1] : vector<8x96xf32> to vector<8xf32>
    %356 = vector.shape_cast %355 : vector<8xf32> to vector<8x1xf32>
    %cst_232 = arith.constant 0.010416667 : f32
    %357 = vector.broadcast %cst_232 : f32 to vector<8x1xf32>
    %358 = arith.mulf %353, %357 : vector<8x1xf32>
    %cst_233 = arith.constant 0.010416667 : f32
    %359 = vector.broadcast %cst_233 : f32 to vector<8x1xf32>
    %360 = arith.mulf %356, %359 : vector<8x1xf32>
    %361 = arith.mulf %358, %358 : vector<8x1xf32>
    %362 = arith.subf %360, %361 : vector<8x1xf32>
    %cst_234 = arith.constant 0.000000e+00 : f32
    %363 = vector.broadcast %cst_234 : f32 to vector<8x1xf32>
    %364 = arith.maximumf %362, %363 : vector<8x1xf32>
    %365 = vector.broadcast %358 : vector<8x1xf32> to vector<8x96xf32>
    %366 = arith.subf %351, %365 : vector<8x96xf32>
    %cst_235 = arith.constant 9.99999974E-6 : f32
    %367 = vector.broadcast %cst_235 : f32 to vector<8x1xf32>
    %368 = arith.addf %364, %367 : vector<8x1xf32>
    %369 = math.rsqrt %368 : vector<8x1xf32>
    %370 = vector.broadcast %369 : vector<8x1xf32> to vector<8x96xf32>
    %371 = arith.mulf %366, %370 : vector<8x96xf32>
    %372 = vector.broadcast %27 : vector<1x96xf32> to vector<8x96xf32>
    %373 = arith.mulf %371, %372 : vector<8x96xf32>
    %374 = vector.broadcast %25 : vector<1x96xf32> to vector<8x96xf32>
    %375 = arith.addf %373, %374 : vector<8x96xf32>
    %cst_236 = arith.constant 0.000000e+00 : f32
    %376 = vector.broadcast %cst_236 : f32 to vector<8x96xf32>
    %377 = arith.maximumf %375, %376 : vector<8x96xf32>
    %cst_237 = arith.constant dense<0.000000e+00> : vector<8x96xf32>
    %378 = tpu.matmul %377, %35, %cst_237 {dimension_numbers = #tpu.dot_dimension_numbers<[1], [0], [0], [1], [0, 0, 1, 1], [], []>} : vector<8x96xf32>, vector<96x96xf32>, vector<8x96xf32> -> vector<8x96xf32>
    %cst_238 = arith.constant dense<0.000000e+00> : vector<8xf32>
    %379 = vector.multi_reduction <add>, %378, %cst_238 [1] : vector<8x96xf32> to vector<8xf32>
    %380 = vector.shape_cast %379 : vector<8xf32> to vector<8x1xf32>
    %381 = arith.mulf %378, %378 : vector<8x96xf32>
    %cst_239 = arith.constant dense<0.000000e+00> : vector<8xf32>
    %382 = vector.multi_reduction <add>, %381, %cst_239 [1] : vector<8x96xf32> to vector<8xf32>
    %383 = vector.shape_cast %382 : vector<8xf32> to vector<8x1xf32>
    %cst_240 = arith.constant 0.010416667 : f32
    %384 = vector.broadcast %cst_240 : f32 to vector<8x1xf32>
    %385 = arith.mulf %380, %384 : vector<8x1xf32>
    %cst_241 = arith.constant 0.010416667 : f32
    %386 = vector.broadcast %cst_241 : f32 to vector<8x1xf32>
    %387 = arith.mulf %383, %386 : vector<8x1xf32>
    %388 = arith.mulf %385, %385 : vector<8x1xf32>
    %389 = arith.subf %387, %388 : vector<8x1xf32>
    %cst_242 = arith.constant 0.000000e+00 : f32
    %390 = vector.broadcast %cst_242 : f32 to vector<8x1xf32>
    %391 = arith.maximumf %389, %390 : vector<8x1xf32>
    %392 = vector.broadcast %385 : vector<8x1xf32> to vector<8x96xf32>
    %393 = arith.subf %378, %392 : vector<8x96xf32>
    %cst_243 = arith.constant 9.99999974E-6 : f32
    %394 = vector.broadcast %cst_243 : f32 to vector<8x1xf32>
    %395 = arith.addf %391, %394 : vector<8x1xf32>
    %396 = math.rsqrt %395 : vector<8x1xf32>
    %397 = vector.broadcast %396 : vector<8x1xf32> to vector<8x96xf32>
    %398 = arith.mulf %393, %397 : vector<8x96xf32>
    %399 = vector.broadcast %33 : vector<1x96xf32> to vector<8x96xf32>
    %400 = arith.mulf %398, %399 : vector<8x96xf32>
    %401 = vector.broadcast %31 : vector<1x96xf32> to vector<8x96xf32>
    %402 = arith.addf %400, %401 : vector<8x96xf32>
    %403 = arith.addf %402, %350 : vector<8x96xf32>
    %cst_244 = arith.constant 0.000000e+00 : f32
    %404 = vector.broadcast %cst_244 : f32 to vector<8x96xf32>
    %405 = arith.maximumf %403, %404 : vector<8x96xf32>
    %cst_245 = arith.constant dense<0.000000e+00> : vector<8x60xf32>
    %406 = tpu.matmul %405, %23, %cst_245 {dimension_numbers = #tpu.dot_dimension_numbers<[1], [0], [0], [1], [0, 0, 1, 1], [], []>} : vector<8x96xf32>, vector<96x60xf32>, vector<8x60xf32> -> vector<8x60xf32>
    %407 = vector.broadcast %21 : vector<1x60xf32> to vector<8x60xf32>
    %408 = arith.addf %406, %407 : vector<8x60xf32>
    %409 = tpu.concatenate %236, %322 in 1 : vector<8x2xf32>, vector<8x6xf32> -> vector<8x8xf32>
    %410 = vector.extract_strided_slice %408 {offsets = [0, 58], sizes = [8, 2], strides = [1, 1]} : vector<8x60xf32> to vector<8x2xf32>
    %411 = arith.addf %410, %1 : vector<8x2xf32>
    %412 = arith.subf %2, %411 : vector<8x2xf32>
    %cst_246 = arith.constant dense<0.000000e+00> : vector<8x32xf32>
    %413 = tpu.matmul %412, %8, %cst_246 {dimension_numbers = #tpu.dot_dimension_numbers<[1], [0], [0], [1], [0, 0, 1, 1], [], []>} : vector<8x2xf32>, vector<2x32xf32>, vector<8x32xf32> -> vector<8x32xf32>
    %414 = vector.broadcast %7 : vector<1x32xf32> to vector<8x32xf32>
    %415 = arith.addf %413, %414 : vector<8x32xf32>
    %cst_247 = arith.constant 0.000000e+00 : f32
    %416 = vector.broadcast %cst_247 : f32 to vector<8x32xf32>
    %417 = arith.maximumf %415, %416 : vector<8x32xf32>
    %cst_248 = arith.constant dense<0.000000e+00> : vector<8x32xf32>
    %418 = tpu.matmul %417, %11, %cst_248 {dimension_numbers = #tpu.dot_dimension_numbers<[1], [0], [0], [1], [0, 0, 1, 1], [], []>} : vector<8x32xf32>, vector<32x32xf32>, vector<8x32xf32> -> vector<8x32xf32>
    %cst_249 = arith.constant dense<0.000000e+00> : vector<8xf32>
    %419 = vector.multi_reduction <add>, %418, %cst_249 [1] : vector<8x32xf32> to vector<8xf32>
    %420 = vector.shape_cast %419 : vector<8xf32> to vector<8x1xf32>
    %421 = arith.mulf %418, %418 : vector<8x32xf32>
    %cst_250 = arith.constant dense<0.000000e+00> : vector<8xf32>
    %422 = vector.multi_reduction <add>, %421, %cst_250 [1] : vector<8x32xf32> to vector<8xf32>
    %423 = vector.shape_cast %422 : vector<8xf32> to vector<8x1xf32>
    %cst_251 = arith.constant 3.125000e-02 : f32
    %424 = vector.broadcast %cst_251 : f32 to vector<8x1xf32>
    %425 = arith.mulf %420, %424 : vector<8x1xf32>
    %cst_252 = arith.constant 3.125000e-02 : f32
    %426 = vector.broadcast %cst_252 : f32 to vector<8x1xf32>
    %427 = arith.mulf %423, %426 : vector<8x1xf32>
    %428 = arith.mulf %425, %425 : vector<8x1xf32>
    %429 = arith.subf %427, %428 : vector<8x1xf32>
    %cst_253 = arith.constant 0.000000e+00 : f32
    %430 = vector.broadcast %cst_253 : f32 to vector<8x1xf32>
    %431 = arith.maximumf %429, %430 : vector<8x1xf32>
    %432 = vector.broadcast %425 : vector<8x1xf32> to vector<8x32xf32>
    %433 = arith.subf %418, %432 : vector<8x32xf32>
    %cst_254 = arith.constant 9.99999974E-6 : f32
    %434 = vector.broadcast %cst_254 : f32 to vector<8x1xf32>
    %435 = arith.addf %431, %434 : vector<8x1xf32>
    %436 = math.rsqrt %435 : vector<8x1xf32>
    %437 = vector.broadcast %436 : vector<8x1xf32> to vector<8x32xf32>
    %438 = arith.mulf %433, %437 : vector<8x32xf32>
    %439 = vector.broadcast %10 : vector<1x32xf32> to vector<8x32xf32>
    %440 = arith.mulf %438, %439 : vector<8x32xf32>
    %441 = vector.broadcast %9 : vector<1x32xf32> to vector<8x32xf32>
    %442 = arith.addf %440, %441 : vector<8x32xf32>
    %cst_255 = arith.constant 0.000000e+00 : f32
    %443 = vector.broadcast %cst_255 : f32 to vector<8x32xf32>
    %444 = arith.maximumf %442, %443 : vector<8x32xf32>
    %cst_256 = arith.constant dense<0.000000e+00> : vector<8x32xf32>
    %445 = tpu.matmul %444, %6, %cst_256 {dimension_numbers = #tpu.dot_dimension_numbers<[1], [0], [0], [1], [0, 0, 1, 1], [], []>} : vector<8x32xf32>, vector<32x32xf32>, vector<8x32xf32> -> vector<8x32xf32>
    %cst_257 = arith.constant dense<0.000000e+00> : vector<8x32xf32>
    %446 = tpu.matmul %0, %5, %cst_257 {dimension_numbers = #tpu.dot_dimension_numbers<[1], [0], [0], [1], [0, 0, 1, 1], [], []>} : vector<8x32xf32>, vector<32x32xf32>, vector<8x32xf32> -> vector<8x32xf32>
    %447 = arith.addf %445, %446 : vector<8x32xf32>
    %cst_258 = arith.constant dense<0.000000e+00> : vector<8xf32>
    %448 = vector.multi_reduction <add>, %447, %cst_258 [1] : vector<8x32xf32> to vector<8xf32>
    %449 = vector.shape_cast %448 : vector<8xf32> to vector<8x1xf32>
    %450 = arith.mulf %447, %447 : vector<8x32xf32>
    %cst_259 = arith.constant dense<0.000000e+00> : vector<8xf32>
    %451 = vector.multi_reduction <add>, %450, %cst_259 [1] : vector<8x32xf32> to vector<8xf32>
    %452 = vector.shape_cast %451 : vector<8xf32> to vector<8x1xf32>
    %cst_260 = arith.constant 3.125000e-02 : f32
    %453 = vector.broadcast %cst_260 : f32 to vector<8x1xf32>
    %454 = arith.mulf %449, %453 : vector<8x1xf32>
    %cst_261 = arith.constant 3.125000e-02 : f32
    %455 = vector.broadcast %cst_261 : f32 to vector<8x1xf32>
    %456 = arith.mulf %452, %455 : vector<8x1xf32>
    %457 = arith.mulf %454, %454 : vector<8x1xf32>
    %458 = arith.subf %456, %457 : vector<8x1xf32>
    %cst_262 = arith.constant 0.000000e+00 : f32
    %459 = vector.broadcast %cst_262 : f32 to vector<8x1xf32>
    %460 = arith.maximumf %458, %459 : vector<8x1xf32>
    %461 = vector.broadcast %454 : vector<8x1xf32> to vector<8x32xf32>
    %462 = arith.subf %447, %461 : vector<8x32xf32>
    %cst_263 = arith.constant 9.99999974E-6 : f32
    %463 = vector.broadcast %cst_263 : f32 to vector<8x1xf32>
    %464 = arith.addf %460, %463 : vector<8x1xf32>
    %465 = math.rsqrt %464 : vector<8x1xf32>
    %466 = vector.broadcast %465 : vector<8x1xf32> to vector<8x32xf32>
    %467 = arith.mulf %462, %466 : vector<8x32xf32>
    %468 = vector.broadcast %4 : vector<1x32xf32> to vector<8x32xf32>
    %469 = arith.mulf %467, %468 : vector<8x32xf32>
    %470 = vector.broadcast %3 : vector<1x32xf32> to vector<8x32xf32>
    %471 = arith.addf %469, %470 : vector<8x32xf32>
    %cst_264 = arith.constant 0.000000e+00 : f32
    %472 = vector.broadcast %cst_264 : f32 to vector<8x32xf32>
    %473 = arith.maximumf %471, %472 : vector<8x32xf32>
    %cst_265 = arith.constant dense<0.000000e+00> : vector<8x32xf32>
    %474 = tpu.matmul %473, %16, %cst_265 {dimension_numbers = #tpu.dot_dimension_numbers<[1], [0], [0], [1], [0, 0, 1, 1], [], []>} : vector<8x32xf32>, vector<32x32xf32>, vector<8x32xf32> -> vector<8x32xf32>
    %cst_266 = arith.constant dense<0.000000e+00> : vector<8xf32>
    %475 = vector.multi_reduction <add>, %474, %cst_266 [1] : vector<8x32xf32> to vector<8xf32>
    %476 = vector.shape_cast %475 : vector<8xf32> to vector<8x1xf32>
    %477 = arith.mulf %474, %474 : vector<8x32xf32>
    %cst_267 = arith.constant dense<0.000000e+00> : vector<8xf32>
    %478 = vector.multi_reduction <add>, %477, %cst_267 [1] : vector<8x32xf32> to vector<8xf32>
    %479 = vector.shape_cast %478 : vector<8xf32> to vector<8x1xf32>
    %cst_268 = arith.constant 3.125000e-02 : f32
    %480 = vector.broadcast %cst_268 : f32 to vector<8x1xf32>
    %481 = arith.mulf %476, %480 : vector<8x1xf32>
    %cst_269 = arith.constant 3.125000e-02 : f32
    %482 = vector.broadcast %cst_269 : f32 to vector<8x1xf32>
    %483 = arith.mulf %479, %482 : vector<8x1xf32>
    %484 = arith.mulf %481, %481 : vector<8x1xf32>
    %485 = arith.subf %483, %484 : vector<8x1xf32>
    %cst_270 = arith.constant 0.000000e+00 : f32
    %486 = vector.broadcast %cst_270 : f32 to vector<8x1xf32>
    %487 = arith.maximumf %485, %486 : vector<8x1xf32>
    %488 = vector.broadcast %481 : vector<8x1xf32> to vector<8x32xf32>
    %489 = arith.subf %474, %488 : vector<8x32xf32>
    %cst_271 = arith.constant 9.99999974E-6 : f32
    %490 = vector.broadcast %cst_271 : f32 to vector<8x1xf32>
    %491 = arith.addf %487, %490 : vector<8x1xf32>
    %492 = math.rsqrt %491 : vector<8x1xf32>
    %493 = vector.broadcast %492 : vector<8x1xf32> to vector<8x32xf32>
    %494 = arith.mulf %489, %493 : vector<8x32xf32>
    %495 = vector.broadcast %15 : vector<1x32xf32> to vector<8x32xf32>
    %496 = arith.mulf %494, %495 : vector<8x32xf32>
    %497 = vector.broadcast %14 : vector<1x32xf32> to vector<8x32xf32>
    %498 = arith.addf %496, %497 : vector<8x32xf32>
    %cst_272 = arith.constant 0.000000e+00 : f32
    %499 = vector.broadcast %cst_272 : f32 to vector<8x32xf32>
    %500 = arith.maximumf %498, %499 : vector<8x32xf32>
    %cst_273 = arith.constant dense<0.000000e+00> : vector<8x32xf32>
    %501 = tpu.matmul %500, %19, %cst_273 {dimension_numbers = #tpu.dot_dimension_numbers<[1], [0], [0], [1], [0, 0, 1, 1], [], []>} : vector<8x32xf32>, vector<32x32xf32>, vector<8x32xf32> -> vector<8x32xf32>
    %cst_274 = arith.constant dense<0.000000e+00> : vector<8xf32>
    %502 = vector.multi_reduction <add>, %501, %cst_274 [1] : vector<8x32xf32> to vector<8xf32>
    %503 = vector.shape_cast %502 : vector<8xf32> to vector<8x1xf32>
    %504 = arith.mulf %501, %501 : vector<8x32xf32>
    %cst_275 = arith.constant dense<0.000000e+00> : vector<8xf32>
    %505 = vector.multi_reduction <add>, %504, %cst_275 [1] : vector<8x32xf32> to vector<8xf32>
    %506 = vector.shape_cast %505 : vector<8xf32> to vector<8x1xf32>
    %cst_276 = arith.constant 3.125000e-02 : f32
    %507 = vector.broadcast %cst_276 : f32 to vector<8x1xf32>
    %508 = arith.mulf %503, %507 : vector<8x1xf32>
    %cst_277 = arith.constant 3.125000e-02 : f32
    %509 = vector.broadcast %cst_277 : f32 to vector<8x1xf32>
    %510 = arith.mulf %506, %509 : vector<8x1xf32>
    %511 = arith.mulf %508, %508 : vector<8x1xf32>
    %512 = arith.subf %510, %511 : vector<8x1xf32>
    %cst_278 = arith.constant 0.000000e+00 : f32
    %513 = vector.broadcast %cst_278 : f32 to vector<8x1xf32>
    %514 = arith.maximumf %512, %513 : vector<8x1xf32>
    %515 = vector.broadcast %508 : vector<8x1xf32> to vector<8x32xf32>
    %516 = arith.subf %501, %515 : vector<8x32xf32>
    %cst_279 = arith.constant 9.99999974E-6 : f32
    %517 = vector.broadcast %cst_279 : f32 to vector<8x1xf32>
    %518 = arith.addf %514, %517 : vector<8x1xf32>
    %519 = math.rsqrt %518 : vector<8x1xf32>
    %520 = vector.broadcast %519 : vector<8x1xf32> to vector<8x32xf32>
    %521 = arith.mulf %516, %520 : vector<8x32xf32>
    %522 = vector.broadcast %18 : vector<1x32xf32> to vector<8x32xf32>
    %523 = arith.mulf %521, %522 : vector<8x32xf32>
    %524 = vector.broadcast %17 : vector<1x32xf32> to vector<8x32xf32>
    %525 = arith.addf %523, %524 : vector<8x32xf32>
    %526 = arith.addf %525, %473 : vector<8x32xf32>
    %cst_280 = arith.constant 0.000000e+00 : f32
    %527 = vector.broadcast %cst_280 : f32 to vector<8x32xf32>
    %528 = arith.maximumf %526, %527 : vector<8x32xf32>
    %cst_281 = arith.constant dense<0.000000e+00> : vector<8x1xf32>
    %529 = tpu.matmul %528, %13, %cst_281 {dimension_numbers = #tpu.dot_dimension_numbers<[1], [0], [0], [1], [0, 0, 1, 1], [], []>} : vector<8x32xf32>, vector<32x1xf32>, vector<8x1xf32> -> vector<8x1xf32>
    %530 = vector.broadcast %12 : vector<1x1xf32> to vector<8x1xf32>
    %531 = arith.addf %529, %530 : vector<8x1xf32>
    %c1 = arith.constant 1 : index
    %c0_282 = arith.constant 0 : index
    %c0_283 = arith.constant 0 : index
    %532 = vector.load %arg21[%c1, %c0_282, %c0_283] : memref<3x1x60xf32, #tpu.memory_space<vmem>>, vector<1x1x60xf32>
    %533 = vector.shape_cast %532 : vector<1x1x60xf32> to vector<1x60xf32>
    %c1_284 = arith.constant 1 : index
    %c0_285 = arith.constant 0 : index
    %c0_286 = arith.constant 0 : index
    %534 = vector.load %arg22[%c1_284, %c0_285, %c0_286] : memref<3x96x60xf32, #tpu.memory_space<vmem>>, vector<1x96x60xf32>
    %535 = vector.shape_cast %534 : vector<1x96x60xf32> to vector<96x60xf32>
    %c1_287 = arith.constant 1 : index
    %c0_288 = arith.constant 0 : index
    %c0_289 = arith.constant 0 : index
    %536 = vector.load %arg23[%c1_287, %c0_288, %c0_289] : memref<3x1x96xf32, #tpu.memory_space<vmem>>, vector<1x1x96xf32>
    %537 = vector.shape_cast %536 : vector<1x1x96xf32> to vector<1x96xf32>
    %c1_290 = arith.constant 1 : index
    %c0_291 = arith.constant 0 : index
    %c0_292 = arith.constant 0 : index
    %538 = vector.load %arg24[%c1_290, %c0_291, %c0_292] : memref<3x1x96xf32, #tpu.memory_space<vmem>>, vector<1x1x96xf32>
    %539 = vector.shape_cast %538 : vector<1x1x96xf32> to vector<1x96xf32>
    %c1_293 = arith.constant 1 : index
    %c0_294 = arith.constant 0 : index
    %c0_295 = arith.constant 0 : index
    %540 = vector.load %arg25[%c1_293, %c0_294, %c0_295] : memref<3x96x96xf32, #tpu.memory_space<vmem>>, vector<1x96x96xf32>
    %541 = vector.shape_cast %540 : vector<1x96x96xf32> to vector<96x96xf32>
    %c1_296 = arith.constant 1 : index
    %c0_297 = arith.constant 0 : index
    %c0_298 = arith.constant 0 : index
    %542 = vector.load %arg26[%c1_296, %c0_297, %c0_298] : memref<3x1x96xf32, #tpu.memory_space<vmem>>, vector<1x1x96xf32>
    %543 = vector.shape_cast %542 : vector<1x1x96xf32> to vector<1x96xf32>
    %c1_299 = arith.constant 1 : index
    %c0_300 = arith.constant 0 : index
    %c0_301 = arith.constant 0 : index
    %544 = vector.load %arg27[%c1_299, %c0_300, %c0_301] : memref<3x1x96xf32, #tpu.memory_space<vmem>>, vector<1x1x96xf32>
    %545 = vector.shape_cast %544 : vector<1x1x96xf32> to vector<1x96xf32>
    %c1_302 = arith.constant 1 : index
    %c0_303 = arith.constant 0 : index
    %c0_304 = arith.constant 0 : index
    %546 = vector.load %arg28[%c1_302, %c0_303, %c0_304] : memref<3x96x96xf32, #tpu.memory_space<vmem>>, vector<1x96x96xf32>
    %547 = vector.shape_cast %546 : vector<1x96x96xf32> to vector<96x96xf32>
    %c1_305 = arith.constant 1 : index
    %c0_306 = arith.constant 0 : index
    %c0_307 = arith.constant 0 : index
    %548 = vector.load %arg29[%c1_305, %c0_306, %c0_307] : memref<3x1x6xf32, #tpu.memory_space<vmem>>, vector<1x1x6xf32>
    %549 = vector.shape_cast %548 : vector<1x1x6xf32> to vector<1x6xf32>
    %c1_308 = arith.constant 1 : index
    %c0_309 = arith.constant 0 : index
    %c0_310 = arith.constant 0 : index
    %550 = vector.load %arg30[%c1_308, %c0_309, %c0_310] : memref<3x48x6xf32, #tpu.memory_space<vmem>>, vector<1x48x6xf32>
    %551 = vector.shape_cast %550 : vector<1x48x6xf32> to vector<48x6xf32>
    %c1_311 = arith.constant 1 : index
    %c0_312 = arith.constant 0 : index
    %c0_313 = arith.constant 0 : index
    %552 = vector.load %arg31[%c1_311, %c0_312, %c0_313] : memref<3x1x48xf32, #tpu.memory_space<vmem>>, vector<1x1x48xf32>
    %553 = vector.shape_cast %552 : vector<1x1x48xf32> to vector<1x48xf32>
    %c1_314 = arith.constant 1 : index
    %c0_315 = arith.constant 0 : index
    %c0_316 = arith.constant 0 : index
    %554 = vector.load %arg32[%c1_314, %c0_315, %c0_316] : memref<3x1x48xf32, #tpu.memory_space<vmem>>, vector<1x1x48xf32>
    %555 = vector.shape_cast %554 : vector<1x1x48xf32> to vector<1x48xf32>
    %c1_317 = arith.constant 1 : index
    %c0_318 = arith.constant 0 : index
    %c0_319 = arith.constant 0 : index
    %556 = vector.load %arg33[%c1_317, %c0_318, %c0_319] : memref<3x48x48xf32, #tpu.memory_space<vmem>>, vector<1x48x48xf32>
    %557 = vector.shape_cast %556 : vector<1x48x48xf32> to vector<48x48xf32>
    %c1_320 = arith.constant 1 : index
    %c0_321 = arith.constant 0 : index
    %c0_322 = arith.constant 0 : index
    %558 = vector.load %arg34[%c1_320, %c0_321, %c0_322] : memref<3x1x48xf32, #tpu.memory_space<vmem>>, vector<1x1x48xf32>
    %559 = vector.shape_cast %558 : vector<1x1x48xf32> to vector<1x48xf32>
    %c1_323 = arith.constant 1 : index
    %c0_324 = arith.constant 0 : index
    %c0_325 = arith.constant 0 : index
    %560 = vector.load %arg35[%c1_323, %c0_324, %c0_325] : memref<3x1x48xf32, #tpu.memory_space<vmem>>, vector<1x1x48xf32>
    %561 = vector.shape_cast %560 : vector<1x1x48xf32> to vector<1x48xf32>
    %c1_326 = arith.constant 1 : index
    %c0_327 = arith.constant 0 : index
    %c0_328 = arith.constant 0 : index
    %562 = vector.load %arg36[%c1_326, %c0_327, %c0_328] : memref<3x48x48xf32, #tpu.memory_space<vmem>>, vector<1x48x48xf32>
    %563 = vector.shape_cast %562 : vector<1x48x48xf32> to vector<48x48xf32>
    %c1_329 = arith.constant 1 : index
    %c0_330 = arith.constant 0 : index
    %c0_331 = arith.constant 0 : index
    %564 = vector.load %arg37[%c1_329, %c0_330, %c0_331] : memref<3x1x2xf32, #tpu.memory_space<vmem>>, vector<1x1x2xf32>
    %565 = vector.shape_cast %564 : vector<1x1x2xf32> to vector<1x2xf32>
    %c1_332 = arith.constant 1 : index
    %c0_333 = arith.constant 0 : index
    %c0_334 = arith.constant 0 : index
    %566 = vector.load %arg38[%c1_332, %c0_333, %c0_334] : memref<3x16x2xf32, #tpu.memory_space<vmem>>, vector<1x16x2xf32>
    %567 = vector.shape_cast %566 : vector<1x16x2xf32> to vector<16x2xf32>
    %c1_335 = arith.constant 1 : index
    %c0_336 = arith.constant 0 : index
    %c0_337 = arith.constant 0 : index
    %568 = vector.load %arg39[%c1_335, %c0_336, %c0_337] : memref<3x1x16xf32, #tpu.memory_space<vmem>>, vector<1x1x16xf32>
    %569 = vector.shape_cast %568 : vector<1x1x16xf32> to vector<1x16xf32>
    %c1_338 = arith.constant 1 : index
    %c0_339 = arith.constant 0 : index
    %c0_340 = arith.constant 0 : index
    %570 = vector.load %arg40[%c1_338, %c0_339, %c0_340] : memref<3x1x16xf32, #tpu.memory_space<vmem>>, vector<1x1x16xf32>
    %571 = vector.shape_cast %570 : vector<1x1x16xf32> to vector<1x16xf32>
    %c1_341 = arith.constant 1 : index
    %c0_342 = arith.constant 0 : index
    %c0_343 = arith.constant 0 : index
    %572 = vector.load %arg41[%c1_341, %c0_342, %c0_343] : memref<3x16x16xf32, #tpu.memory_space<vmem>>, vector<1x16x16xf32>
    %573 = vector.shape_cast %572 : vector<1x16x16xf32> to vector<16x16xf32>
    %c1_344 = arith.constant 1 : index
    %c0_345 = arith.constant 0 : index
    %c0_346 = arith.constant 0 : index
    %574 = vector.load %arg42[%c1_344, %c0_345, %c0_346] : memref<3x1x16xf32, #tpu.memory_space<vmem>>, vector<1x1x16xf32>
    %575 = vector.shape_cast %574 : vector<1x1x16xf32> to vector<1x16xf32>
    %c1_347 = arith.constant 1 : index
    %c0_348 = arith.constant 0 : index
    %c0_349 = arith.constant 0 : index
    %576 = vector.load %arg43[%c1_347, %c0_348, %c0_349] : memref<3x1x16xf32, #tpu.memory_space<vmem>>, vector<1x1x16xf32>
    %577 = vector.shape_cast %576 : vector<1x1x16xf32> to vector<1x16xf32>
    %c1_350 = arith.constant 1 : index
    %c0_351 = arith.constant 0 : index
    %c0_352 = arith.constant 0 : index
    %578 = vector.load %arg44[%c1_350, %c0_351, %c0_352] : memref<3x16x16xf32, #tpu.memory_space<vmem>>, vector<1x16x16xf32>
    %579 = vector.shape_cast %578 : vector<1x16x16xf32> to vector<16x16xf32>
    %c1_353 = arith.constant 1 : index
    %c0_354 = arith.constant 0 : index
    %c0_355 = arith.constant 0 : index
    %580 = vector.load %arg45[%c1_353, %c0_354, %c0_355] : memref<3x1x32xf32, #tpu.memory_space<vmem>>, vector<1x1x32xf32>
    %581 = vector.shape_cast %580 : vector<1x1x32xf32> to vector<1x32xf32>
    %c1_356 = arith.constant 1 : index
    %c0_357 = arith.constant 0 : index
    %c0_358 = arith.constant 0 : index
    %582 = vector.load %arg46[%c1_356, %c0_357, %c0_358] : memref<3x1x32xf32, #tpu.memory_space<vmem>>, vector<1x1x32xf32>
    %583 = vector.shape_cast %582 : vector<1x1x32xf32> to vector<1x32xf32>
    %c1_359 = arith.constant 1 : index
    %c0_360 = arith.constant 0 : index
    %c0_361 = arith.constant 0 : index
    %584 = vector.load %arg47[%c1_359, %c0_360, %c0_361] : memref<3x6x32xf32, #tpu.memory_space<vmem>>, vector<1x6x32xf32>
    %585 = vector.shape_cast %584 : vector<1x6x32xf32> to vector<6x32xf32>
    %c1_362 = arith.constant 1 : index
    %c0_363 = arith.constant 0 : index
    %c0_364 = arith.constant 0 : index
    %586 = vector.load %arg48[%c1_362, %c0_363, %c0_364] : memref<3x1x16xf32, #tpu.memory_space<vmem>>, vector<1x1x16xf32>
    %587 = vector.shape_cast %586 : vector<1x1x16xf32> to vector<1x16xf32>
    %c1_365 = arith.constant 1 : index
    %c0_366 = arith.constant 0 : index
    %c0_367 = arith.constant 0 : index
    %588 = vector.load %arg49[%c1_365, %c0_366, %c0_367] : memref<3x1x16xf32, #tpu.memory_space<vmem>>, vector<1x1x16xf32>
    %589 = vector.shape_cast %588 : vector<1x1x16xf32> to vector<1x16xf32>
    %c1_368 = arith.constant 1 : index
    %c0_369 = arith.constant 0 : index
    %c0_370 = arith.constant 0 : index
    %590 = vector.load %arg50[%c1_368, %c0_369, %c0_370] : memref<3x2x16xf32, #tpu.memory_space<vmem>>, vector<1x2x16xf32>
    %591 = vector.shape_cast %590 : vector<1x2x16xf32> to vector<2x16xf32>
    %c1_371 = arith.constant 1 : index
    %c0_372 = arith.constant 0 : index
    %c0_373 = arith.constant 0 : index
    %592 = vector.load %arg51[%c1_371, %c0_372, %c0_373] : memref<3x1x64xf32, #tpu.memory_space<vmem>>, vector<1x1x64xf32>
    %593 = vector.shape_cast %592 : vector<1x1x64xf32> to vector<1x64xf32>
    %c1_374 = arith.constant 1 : index
    %c0_375 = arith.constant 0 : index
    %c0_376 = arith.constant 0 : index
    %594 = vector.load %arg52[%c1_374, %c0_375, %c0_376] : memref<3x1x64xf32, #tpu.memory_space<vmem>>, vector<1x1x64xf32>
    %595 = vector.shape_cast %594 : vector<1x1x64xf32> to vector<1x64xf32>
    %c1_377 = arith.constant 1 : index
    %c0_378 = arith.constant 0 : index
    %c0_379 = arith.constant 0 : index
    %596 = vector.load %arg53[%c1_377, %c0_378, %c0_379] : memref<3x32x64xf32, #tpu.memory_space<vmem>>, vector<1x32x64xf32>
    %597 = vector.shape_cast %596 : vector<1x32x64xf32> to vector<32x64xf32>
    %c1_380 = arith.constant 1 : index
    %c0_381 = arith.constant 0 : index
    %c0_382 = arith.constant 0 : index
    %598 = vector.load %arg54[%c1_380, %c0_381, %c0_382] : memref<3x1x32xf32, #tpu.memory_space<vmem>>, vector<1x1x32xf32>
    %599 = vector.shape_cast %598 : vector<1x1x32xf32> to vector<1x32xf32>
    %c1_383 = arith.constant 1 : index
    %c0_384 = arith.constant 0 : index
    %c0_385 = arith.constant 0 : index
    %600 = vector.load %arg55[%c1_383, %c0_384, %c0_385] : memref<3x1x32xf32, #tpu.memory_space<vmem>>, vector<1x1x32xf32>
    %601 = vector.shape_cast %600 : vector<1x1x32xf32> to vector<1x32xf32>
    %c1_386 = arith.constant 1 : index
    %c0_387 = arith.constant 0 : index
    %c0_388 = arith.constant 0 : index
    %602 = vector.load %arg56[%c1_386, %c0_387, %c0_388] : memref<3x64x32xf32, #tpu.memory_space<vmem>>, vector<1x64x32xf32>
    %603 = vector.shape_cast %602 : vector<1x64x32xf32> to vector<64x32xf32>
    %c1_389 = arith.constant 1 : index
    %c0_390 = arith.constant 0 : index
    %c0_391 = arith.constant 0 : index
    %604 = vector.load %arg57[%c1_389, %c0_390, %c0_391] : memref<3x1x16xf32, #tpu.memory_space<vmem>>, vector<1x1x16xf32>
    %605 = vector.shape_cast %604 : vector<1x1x16xf32> to vector<1x16xf32>
    %c1_392 = arith.constant 1 : index
    %c0_393 = arith.constant 0 : index
    %c0_394 = arith.constant 0 : index
    %606 = vector.load %arg58[%c1_392, %c0_393, %c0_394] : memref<3x1x16xf32, #tpu.memory_space<vmem>>, vector<1x1x16xf32>
    %607 = vector.shape_cast %606 : vector<1x1x16xf32> to vector<1x16xf32>
    %c1_395 = arith.constant 1 : index
    %c0_396 = arith.constant 0 : index
    %c0_397 = arith.constant 0 : index
    %608 = vector.load %arg59[%c1_395, %c0_396, %c0_397] : memref<3x32x16xf32, #tpu.memory_space<vmem>>, vector<1x32x16xf32>
    %609 = vector.shape_cast %608 : vector<1x32x16xf32> to vector<32x16xf32>
    %cst_398 = arith.constant dense<0.000000e+00> : vector<8x64xf32>
    %610 = tpu.matmul %0, %597, %cst_398 {dimension_numbers = #tpu.dot_dimension_numbers<[1], [0], [0], [1], [0, 0, 1, 1], [], []>} : vector<8x32xf32>, vector<32x64xf32>, vector<8x64xf32> -> vector<8x64xf32>
    %cst_399 = arith.constant dense<0.000000e+00> : vector<8xf32>
    %611 = vector.multi_reduction <add>, %610, %cst_399 [1] : vector<8x64xf32> to vector<8xf32>
    %612 = vector.shape_cast %611 : vector<8xf32> to vector<8x1xf32>
    %613 = arith.mulf %610, %610 : vector<8x64xf32>
    %cst_400 = arith.constant dense<0.000000e+00> : vector<8xf32>
    %614 = vector.multi_reduction <add>, %613, %cst_400 [1] : vector<8x64xf32> to vector<8xf32>
    %615 = vector.shape_cast %614 : vector<8xf32> to vector<8x1xf32>
    %cst_401 = arith.constant 1.562500e-02 : f32
    %616 = vector.broadcast %cst_401 : f32 to vector<8x1xf32>
    %617 = arith.mulf %612, %616 : vector<8x1xf32>
    %cst_402 = arith.constant 1.562500e-02 : f32
    %618 = vector.broadcast %cst_402 : f32 to vector<8x1xf32>
    %619 = arith.mulf %615, %618 : vector<8x1xf32>
    %620 = arith.mulf %617, %617 : vector<8x1xf32>
    %621 = arith.subf %619, %620 : vector<8x1xf32>
    %cst_403 = arith.constant 0.000000e+00 : f32
    %622 = vector.broadcast %cst_403 : f32 to vector<8x1xf32>
    %623 = arith.maximumf %621, %622 : vector<8x1xf32>
    %624 = vector.broadcast %617 : vector<8x1xf32> to vector<8x64xf32>
    %625 = arith.subf %610, %624 : vector<8x64xf32>
    %cst_404 = arith.constant 9.99999974E-6 : f32
    %626 = vector.broadcast %cst_404 : f32 to vector<8x1xf32>
    %627 = arith.addf %623, %626 : vector<8x1xf32>
    %628 = math.rsqrt %627 : vector<8x1xf32>
    %629 = vector.broadcast %628 : vector<8x1xf32> to vector<8x64xf32>
    %630 = arith.mulf %625, %629 : vector<8x64xf32>
    %631 = vector.broadcast %595 : vector<1x64xf32> to vector<8x64xf32>
    %632 = arith.mulf %630, %631 : vector<8x64xf32>
    %633 = vector.broadcast %593 : vector<1x64xf32> to vector<8x64xf32>
    %634 = arith.addf %632, %633 : vector<8x64xf32>
    %cst_405 = arith.constant 0.000000e+00 : f32
    %635 = vector.broadcast %cst_405 : f32 to vector<8x64xf32>
    %636 = arith.maximumf %634, %635 : vector<8x64xf32>
    %cst_406 = arith.constant dense<0.000000e+00> : vector<8x32xf32>
    %637 = tpu.matmul %636, %603, %cst_406 {dimension_numbers = #tpu.dot_dimension_numbers<[1], [0], [0], [1], [0, 0, 1, 1], [], []>} : vector<8x64xf32>, vector<64x32xf32>, vector<8x32xf32> -> vector<8x32xf32>
    %cst_407 = arith.constant dense<0.000000e+00> : vector<8xf32>
    %638 = vector.multi_reduction <add>, %637, %cst_407 [1] : vector<8x32xf32> to vector<8xf32>
    %639 = vector.shape_cast %638 : vector<8xf32> to vector<8x1xf32>
    %640 = arith.mulf %637, %637 : vector<8x32xf32>
    %cst_408 = arith.constant dense<0.000000e+00> : vector<8xf32>
    %641 = vector.multi_reduction <add>, %640, %cst_408 [1] : vector<8x32xf32> to vector<8xf32>
    %642 = vector.shape_cast %641 : vector<8xf32> to vector<8x1xf32>
    %cst_409 = arith.constant 3.125000e-02 : f32
    %643 = vector.broadcast %cst_409 : f32 to vector<8x1xf32>
    %644 = arith.mulf %639, %643 : vector<8x1xf32>
    %cst_410 = arith.constant 3.125000e-02 : f32
    %645 = vector.broadcast %cst_410 : f32 to vector<8x1xf32>
    %646 = arith.mulf %642, %645 : vector<8x1xf32>
    %647 = arith.mulf %644, %644 : vector<8x1xf32>
    %648 = arith.subf %646, %647 : vector<8x1xf32>
    %cst_411 = arith.constant 0.000000e+00 : f32
    %649 = vector.broadcast %cst_411 : f32 to vector<8x1xf32>
    %650 = arith.maximumf %648, %649 : vector<8x1xf32>
    %651 = vector.broadcast %644 : vector<8x1xf32> to vector<8x32xf32>
    %652 = arith.subf %637, %651 : vector<8x32xf32>
    %cst_412 = arith.constant 9.99999974E-6 : f32
    %653 = vector.broadcast %cst_412 : f32 to vector<8x1xf32>
    %654 = arith.addf %650, %653 : vector<8x1xf32>
    %655 = math.rsqrt %654 : vector<8x1xf32>
    %656 = vector.broadcast %655 : vector<8x1xf32> to vector<8x32xf32>
    %657 = arith.mulf %652, %656 : vector<8x32xf32>
    %658 = vector.broadcast %601 : vector<1x32xf32> to vector<8x32xf32>
    %659 = arith.mulf %657, %658 : vector<8x32xf32>
    %660 = vector.broadcast %599 : vector<1x32xf32> to vector<8x32xf32>
    %661 = arith.addf %659, %660 : vector<8x32xf32>
    %cst_413 = arith.constant 0.000000e+00 : f32
    %662 = vector.broadcast %cst_413 : f32 to vector<8x32xf32>
    %663 = arith.maximumf %661, %662 : vector<8x32xf32>
    %cst_414 = arith.constant dense<0.000000e+00> : vector<8x16xf32>
    %664 = tpu.matmul %663, %609, %cst_414 {dimension_numbers = #tpu.dot_dimension_numbers<[1], [0], [0], [1], [0, 0, 1, 1], [], []>} : vector<8x32xf32>, vector<32x16xf32>, vector<8x16xf32> -> vector<8x16xf32>
    %cst_415 = arith.constant dense<0.000000e+00> : vector<8xf32>
    %665 = vector.multi_reduction <add>, %664, %cst_415 [1] : vector<8x16xf32> to vector<8xf32>
    %666 = vector.shape_cast %665 : vector<8xf32> to vector<8x1xf32>
    %667 = arith.mulf %664, %664 : vector<8x16xf32>
    %cst_416 = arith.constant dense<0.000000e+00> : vector<8xf32>
    %668 = vector.multi_reduction <add>, %667, %cst_416 [1] : vector<8x16xf32> to vector<8xf32>
    %669 = vector.shape_cast %668 : vector<8xf32> to vector<8x1xf32>
    %cst_417 = arith.constant 6.250000e-02 : f32
    %670 = vector.broadcast %cst_417 : f32 to vector<8x1xf32>
    %671 = arith.mulf %666, %670 : vector<8x1xf32>
    %cst_418 = arith.constant 6.250000e-02 : f32
    %672 = vector.broadcast %cst_418 : f32 to vector<8x1xf32>
    %673 = arith.mulf %669, %672 : vector<8x1xf32>
    %674 = arith.mulf %671, %671 : vector<8x1xf32>
    %675 = arith.subf %673, %674 : vector<8x1xf32>
    %cst_419 = arith.constant 0.000000e+00 : f32
    %676 = vector.broadcast %cst_419 : f32 to vector<8x1xf32>
    %677 = arith.maximumf %675, %676 : vector<8x1xf32>
    %678 = vector.broadcast %671 : vector<8x1xf32> to vector<8x16xf32>
    %679 = arith.subf %664, %678 : vector<8x16xf32>
    %cst_420 = arith.constant 9.99999974E-6 : f32
    %680 = vector.broadcast %cst_420 : f32 to vector<8x1xf32>
    %681 = arith.addf %677, %680 : vector<8x1xf32>
    %682 = math.rsqrt %681 : vector<8x1xf32>
    %683 = vector.broadcast %682 : vector<8x1xf32> to vector<8x16xf32>
    %684 = arith.mulf %679, %683 : vector<8x16xf32>
    %685 = vector.broadcast %607 : vector<1x16xf32> to vector<8x16xf32>
    %686 = arith.mulf %684, %685 : vector<8x16xf32>
    %687 = vector.broadcast %605 : vector<1x16xf32> to vector<8x16xf32>
    %688 = arith.addf %686, %687 : vector<8x16xf32>
    %cst_421 = arith.constant 0.000000e+00 : f32
    %689 = vector.broadcast %cst_421 : f32 to vector<8x16xf32>
    %690 = arith.maximumf %688, %689 : vector<8x16xf32>
    %cst_422 = arith.constant dense<0.000000e+00> : vector<8x16xf32>
    %691 = tpu.matmul %690, %573, %cst_422 {dimension_numbers = #tpu.dot_dimension_numbers<[1], [0], [0], [1], [0, 0, 1, 1], [], []>} : vector<8x16xf32>, vector<16x16xf32>, vector<8x16xf32> -> vector<8x16xf32>
    %cst_423 = arith.constant dense<0.000000e+00> : vector<8xf32>
    %692 = vector.multi_reduction <add>, %691, %cst_423 [1] : vector<8x16xf32> to vector<8xf32>
    %693 = vector.shape_cast %692 : vector<8xf32> to vector<8x1xf32>
    %694 = arith.mulf %691, %691 : vector<8x16xf32>
    %cst_424 = arith.constant dense<0.000000e+00> : vector<8xf32>
    %695 = vector.multi_reduction <add>, %694, %cst_424 [1] : vector<8x16xf32> to vector<8xf32>
    %696 = vector.shape_cast %695 : vector<8xf32> to vector<8x1xf32>
    %cst_425 = arith.constant 6.250000e-02 : f32
    %697 = vector.broadcast %cst_425 : f32 to vector<8x1xf32>
    %698 = arith.mulf %693, %697 : vector<8x1xf32>
    %cst_426 = arith.constant 6.250000e-02 : f32
    %699 = vector.broadcast %cst_426 : f32 to vector<8x1xf32>
    %700 = arith.mulf %696, %699 : vector<8x1xf32>
    %701 = arith.mulf %698, %698 : vector<8x1xf32>
    %702 = arith.subf %700, %701 : vector<8x1xf32>
    %cst_427 = arith.constant 0.000000e+00 : f32
    %703 = vector.broadcast %cst_427 : f32 to vector<8x1xf32>
    %704 = arith.maximumf %702, %703 : vector<8x1xf32>
    %705 = vector.broadcast %698 : vector<8x1xf32> to vector<8x16xf32>
    %706 = arith.subf %691, %705 : vector<8x16xf32>
    %cst_428 = arith.constant 9.99999974E-6 : f32
    %707 = vector.broadcast %cst_428 : f32 to vector<8x1xf32>
    %708 = arith.addf %704, %707 : vector<8x1xf32>
    %709 = math.rsqrt %708 : vector<8x1xf32>
    %710 = vector.broadcast %709 : vector<8x1xf32> to vector<8x16xf32>
    %711 = arith.mulf %706, %710 : vector<8x16xf32>
    %712 = vector.broadcast %571 : vector<1x16xf32> to vector<8x16xf32>
    %713 = arith.mulf %711, %712 : vector<8x16xf32>
    %714 = vector.broadcast %569 : vector<1x16xf32> to vector<8x16xf32>
    %715 = arith.addf %713, %714 : vector<8x16xf32>
    %cst_429 = arith.constant 0.000000e+00 : f32
    %716 = vector.broadcast %cst_429 : f32 to vector<8x16xf32>
    %717 = arith.maximumf %715, %716 : vector<8x16xf32>
    %cst_430 = arith.constant dense<0.000000e+00> : vector<8x16xf32>
    %718 = tpu.matmul %717, %579, %cst_430 {dimension_numbers = #tpu.dot_dimension_numbers<[1], [0], [0], [1], [0, 0, 1, 1], [], []>} : vector<8x16xf32>, vector<16x16xf32>, vector<8x16xf32> -> vector<8x16xf32>
    %cst_431 = arith.constant dense<0.000000e+00> : vector<8xf32>
    %719 = vector.multi_reduction <add>, %718, %cst_431 [1] : vector<8x16xf32> to vector<8xf32>
    %720 = vector.shape_cast %719 : vector<8xf32> to vector<8x1xf32>
    %721 = arith.mulf %718, %718 : vector<8x16xf32>
    %cst_432 = arith.constant dense<0.000000e+00> : vector<8xf32>
    %722 = vector.multi_reduction <add>, %721, %cst_432 [1] : vector<8x16xf32> to vector<8xf32>
    %723 = vector.shape_cast %722 : vector<8xf32> to vector<8x1xf32>
    %cst_433 = arith.constant 6.250000e-02 : f32
    %724 = vector.broadcast %cst_433 : f32 to vector<8x1xf32>
    %725 = arith.mulf %720, %724 : vector<8x1xf32>
    %cst_434 = arith.constant 6.250000e-02 : f32
    %726 = vector.broadcast %cst_434 : f32 to vector<8x1xf32>
    %727 = arith.mulf %723, %726 : vector<8x1xf32>
    %728 = arith.mulf %725, %725 : vector<8x1xf32>
    %729 = arith.subf %727, %728 : vector<8x1xf32>
    %cst_435 = arith.constant 0.000000e+00 : f32
    %730 = vector.broadcast %cst_435 : f32 to vector<8x1xf32>
    %731 = arith.maximumf %729, %730 : vector<8x1xf32>
    %732 = vector.broadcast %725 : vector<8x1xf32> to vector<8x16xf32>
    %733 = arith.subf %718, %732 : vector<8x16xf32>
    %cst_436 = arith.constant 9.99999974E-6 : f32
    %734 = vector.broadcast %cst_436 : f32 to vector<8x1xf32>
    %735 = arith.addf %731, %734 : vector<8x1xf32>
    %736 = math.rsqrt %735 : vector<8x1xf32>
    %737 = vector.broadcast %736 : vector<8x1xf32> to vector<8x16xf32>
    %738 = arith.mulf %733, %737 : vector<8x16xf32>
    %739 = vector.broadcast %577 : vector<1x16xf32> to vector<8x16xf32>
    %740 = arith.mulf %738, %739 : vector<8x16xf32>
    %741 = vector.broadcast %575 : vector<1x16xf32> to vector<8x16xf32>
    %742 = arith.addf %740, %741 : vector<8x16xf32>
    %743 = arith.addf %742, %690 : vector<8x16xf32>
    %cst_437 = arith.constant 0.000000e+00 : f32
    %744 = vector.broadcast %cst_437 : f32 to vector<8x16xf32>
    %745 = arith.maximumf %743, %744 : vector<8x16xf32>
    %cst_438 = arith.constant dense<0.000000e+00> : vector<8x2xf32>
    %746 = tpu.matmul %745, %567, %cst_438 {dimension_numbers = #tpu.dot_dimension_numbers<[1], [0], [0], [1], [0, 0, 1, 1], [], []>} : vector<8x16xf32>, vector<16x2xf32>, vector<8x2xf32> -> vector<8x2xf32>
    %747 = vector.broadcast %565 : vector<1x2xf32> to vector<8x2xf32>
    %748 = arith.addf %746, %747 : vector<8x2xf32>
    %cst_439 = arith.constant dense<0.000000e+00> : vector<8x16xf32>
    %749 = tpu.matmul %748, %591, %cst_439 {dimension_numbers = #tpu.dot_dimension_numbers<[1], [0], [0], [1], [0, 0, 1, 1], [], []>} : vector<8x2xf32>, vector<2x16xf32>, vector<8x16xf32> -> vector<8x16xf32>
    %cst_440 = arith.constant dense<0.000000e+00> : vector<8xf32>
    %750 = vector.multi_reduction <add>, %749, %cst_440 [1] : vector<8x16xf32> to vector<8xf32>
    %751 = vector.shape_cast %750 : vector<8xf32> to vector<8x1xf32>
    %752 = arith.mulf %749, %749 : vector<8x16xf32>
    %cst_441 = arith.constant dense<0.000000e+00> : vector<8xf32>
    %753 = vector.multi_reduction <add>, %752, %cst_441 [1] : vector<8x16xf32> to vector<8xf32>
    %754 = vector.shape_cast %753 : vector<8xf32> to vector<8x1xf32>
    %cst_442 = arith.constant 6.250000e-02 : f32
    %755 = vector.broadcast %cst_442 : f32 to vector<8x1xf32>
    %756 = arith.mulf %751, %755 : vector<8x1xf32>
    %cst_443 = arith.constant 6.250000e-02 : f32
    %757 = vector.broadcast %cst_443 : f32 to vector<8x1xf32>
    %758 = arith.mulf %754, %757 : vector<8x1xf32>
    %759 = arith.mulf %756, %756 : vector<8x1xf32>
    %760 = arith.subf %758, %759 : vector<8x1xf32>
    %cst_444 = arith.constant 0.000000e+00 : f32
    %761 = vector.broadcast %cst_444 : f32 to vector<8x1xf32>
    %762 = arith.maximumf %760, %761 : vector<8x1xf32>
    %763 = vector.broadcast %756 : vector<8x1xf32> to vector<8x16xf32>
    %764 = arith.subf %749, %763 : vector<8x16xf32>
    %cst_445 = arith.constant 9.99999974E-6 : f32
    %765 = vector.broadcast %cst_445 : f32 to vector<8x1xf32>
    %766 = arith.addf %762, %765 : vector<8x1xf32>
    %767 = math.rsqrt %766 : vector<8x1xf32>
    %768 = vector.broadcast %767 : vector<8x1xf32> to vector<8x16xf32>
    %769 = arith.mulf %764, %768 : vector<8x16xf32>
    %770 = vector.broadcast %589 : vector<1x16xf32> to vector<8x16xf32>
    %771 = arith.mulf %769, %770 : vector<8x16xf32>
    %772 = vector.broadcast %587 : vector<1x16xf32> to vector<8x16xf32>
    %773 = arith.addf %771, %772 : vector<8x16xf32>
    %cst_446 = arith.constant 0.000000e+00 : f32
    %774 = vector.broadcast %cst_446 : f32 to vector<8x16xf32>
    %775 = arith.maximumf %773, %774 : vector<8x16xf32>
    %776 = tpu.concatenate %663, %775 in 1 : vector<8x32xf32>, vector<8x16xf32> -> vector<8x48xf32>
    %cst_447 = arith.constant dense<0.000000e+00> : vector<8x48xf32>
    %777 = tpu.matmul %776, %557, %cst_447 {dimension_numbers = #tpu.dot_dimension_numbers<[1], [0], [0], [1], [0, 0, 1, 1], [], []>} : vector<8x48xf32>, vector<48x48xf32>, vector<8x48xf32> -> vector<8x48xf32>
    %cst_448 = arith.constant dense<0.000000e+00> : vector<8xf32>
    %778 = vector.multi_reduction <add>, %777, %cst_448 [1] : vector<8x48xf32> to vector<8xf32>
    %779 = vector.shape_cast %778 : vector<8xf32> to vector<8x1xf32>
    %780 = arith.mulf %777, %777 : vector<8x48xf32>
    %cst_449 = arith.constant dense<0.000000e+00> : vector<8xf32>
    %781 = vector.multi_reduction <add>, %780, %cst_449 [1] : vector<8x48xf32> to vector<8xf32>
    %782 = vector.shape_cast %781 : vector<8xf32> to vector<8x1xf32>
    %cst_450 = arith.constant 0.020833334 : f32
    %783 = vector.broadcast %cst_450 : f32 to vector<8x1xf32>
    %784 = arith.mulf %779, %783 : vector<8x1xf32>
    %cst_451 = arith.constant 0.020833334 : f32
    %785 = vector.broadcast %cst_451 : f32 to vector<8x1xf32>
    %786 = arith.mulf %782, %785 : vector<8x1xf32>
    %787 = arith.mulf %784, %784 : vector<8x1xf32>
    %788 = arith.subf %786, %787 : vector<8x1xf32>
    %cst_452 = arith.constant 0.000000e+00 : f32
    %789 = vector.broadcast %cst_452 : f32 to vector<8x1xf32>
    %790 = arith.maximumf %788, %789 : vector<8x1xf32>
    %791 = vector.broadcast %784 : vector<8x1xf32> to vector<8x48xf32>
    %792 = arith.subf %777, %791 : vector<8x48xf32>
    %cst_453 = arith.constant 9.99999974E-6 : f32
    %793 = vector.broadcast %cst_453 : f32 to vector<8x1xf32>
    %794 = arith.addf %790, %793 : vector<8x1xf32>
    %795 = math.rsqrt %794 : vector<8x1xf32>
    %796 = vector.broadcast %795 : vector<8x1xf32> to vector<8x48xf32>
    %797 = arith.mulf %792, %796 : vector<8x48xf32>
    %798 = vector.broadcast %555 : vector<1x48xf32> to vector<8x48xf32>
    %799 = arith.mulf %797, %798 : vector<8x48xf32>
    %800 = vector.broadcast %553 : vector<1x48xf32> to vector<8x48xf32>
    %801 = arith.addf %799, %800 : vector<8x48xf32>
    %cst_454 = arith.constant 0.000000e+00 : f32
    %802 = vector.broadcast %cst_454 : f32 to vector<8x48xf32>
    %803 = arith.maximumf %801, %802 : vector<8x48xf32>
    %cst_455 = arith.constant dense<0.000000e+00> : vector<8x48xf32>
    %804 = tpu.matmul %803, %563, %cst_455 {dimension_numbers = #tpu.dot_dimension_numbers<[1], [0], [0], [1], [0, 0, 1, 1], [], []>} : vector<8x48xf32>, vector<48x48xf32>, vector<8x48xf32> -> vector<8x48xf32>
    %cst_456 = arith.constant dense<0.000000e+00> : vector<8xf32>
    %805 = vector.multi_reduction <add>, %804, %cst_456 [1] : vector<8x48xf32> to vector<8xf32>
    %806 = vector.shape_cast %805 : vector<8xf32> to vector<8x1xf32>
    %807 = arith.mulf %804, %804 : vector<8x48xf32>
    %cst_457 = arith.constant dense<0.000000e+00> : vector<8xf32>
    %808 = vector.multi_reduction <add>, %807, %cst_457 [1] : vector<8x48xf32> to vector<8xf32>
    %809 = vector.shape_cast %808 : vector<8xf32> to vector<8x1xf32>
    %cst_458 = arith.constant 0.020833334 : f32
    %810 = vector.broadcast %cst_458 : f32 to vector<8x1xf32>
    %811 = arith.mulf %806, %810 : vector<8x1xf32>
    %cst_459 = arith.constant 0.020833334 : f32
    %812 = vector.broadcast %cst_459 : f32 to vector<8x1xf32>
    %813 = arith.mulf %809, %812 : vector<8x1xf32>
    %814 = arith.mulf %811, %811 : vector<8x1xf32>
    %815 = arith.subf %813, %814 : vector<8x1xf32>
    %cst_460 = arith.constant 0.000000e+00 : f32
    %816 = vector.broadcast %cst_460 : f32 to vector<8x1xf32>
    %817 = arith.maximumf %815, %816 : vector<8x1xf32>
    %818 = vector.broadcast %811 : vector<8x1xf32> to vector<8x48xf32>
    %819 = arith.subf %804, %818 : vector<8x48xf32>
    %cst_461 = arith.constant 9.99999974E-6 : f32
    %820 = vector.broadcast %cst_461 : f32 to vector<8x1xf32>
    %821 = arith.addf %817, %820 : vector<8x1xf32>
    %822 = math.rsqrt %821 : vector<8x1xf32>
    %823 = vector.broadcast %822 : vector<8x1xf32> to vector<8x48xf32>
    %824 = arith.mulf %819, %823 : vector<8x48xf32>
    %825 = vector.broadcast %561 : vector<1x48xf32> to vector<8x48xf32>
    %826 = arith.mulf %824, %825 : vector<8x48xf32>
    %827 = vector.broadcast %559 : vector<1x48xf32> to vector<8x48xf32>
    %828 = arith.addf %826, %827 : vector<8x48xf32>
    %829 = arith.addf %828, %776 : vector<8x48xf32>
    %cst_462 = arith.constant 0.000000e+00 : f32
    %830 = vector.broadcast %cst_462 : f32 to vector<8x48xf32>
    %831 = arith.maximumf %829, %830 : vector<8x48xf32>
    %cst_463 = arith.constant dense<0.000000e+00> : vector<8x6xf32>
    %832 = tpu.matmul %831, %551, %cst_463 {dimension_numbers = #tpu.dot_dimension_numbers<[1], [0], [0], [1], [0, 0, 1, 1], [], []>} : vector<8x48xf32>, vector<48x6xf32>, vector<8x6xf32> -> vector<8x6xf32>
    %833 = vector.broadcast %549 : vector<1x6xf32> to vector<8x6xf32>
    %834 = arith.addf %832, %833 : vector<8x6xf32>
    %cst_464 = arith.constant dense<0.000000e+00> : vector<8x32xf32>
    %835 = tpu.matmul %834, %585, %cst_464 {dimension_numbers = #tpu.dot_dimension_numbers<[1], [0], [0], [1], [0, 0, 1, 1], [], []>} : vector<8x6xf32>, vector<6x32xf32>, vector<8x32xf32> -> vector<8x32xf32>
    %cst_465 = arith.constant dense<0.000000e+00> : vector<8xf32>
    %836 = vector.multi_reduction <add>, %835, %cst_465 [1] : vector<8x32xf32> to vector<8xf32>
    %837 = vector.shape_cast %836 : vector<8xf32> to vector<8x1xf32>
    %838 = arith.mulf %835, %835 : vector<8x32xf32>
    %cst_466 = arith.constant dense<0.000000e+00> : vector<8xf32>
    %839 = vector.multi_reduction <add>, %838, %cst_466 [1] : vector<8x32xf32> to vector<8xf32>
    %840 = vector.shape_cast %839 : vector<8xf32> to vector<8x1xf32>
    %cst_467 = arith.constant 3.125000e-02 : f32
    %841 = vector.broadcast %cst_467 : f32 to vector<8x1xf32>
    %842 = arith.mulf %837, %841 : vector<8x1xf32>
    %cst_468 = arith.constant 3.125000e-02 : f32
    %843 = vector.broadcast %cst_468 : f32 to vector<8x1xf32>
    %844 = arith.mulf %840, %843 : vector<8x1xf32>
    %845 = arith.mulf %842, %842 : vector<8x1xf32>
    %846 = arith.subf %844, %845 : vector<8x1xf32>
    %cst_469 = arith.constant 0.000000e+00 : f32
    %847 = vector.broadcast %cst_469 : f32 to vector<8x1xf32>
    %848 = arith.maximumf %846, %847 : vector<8x1xf32>
    %849 = vector.broadcast %842 : vector<8x1xf32> to vector<8x32xf32>
    %850 = arith.subf %835, %849 : vector<8x32xf32>
    %cst_470 = arith.constant 9.99999974E-6 : f32
    %851 = vector.broadcast %cst_470 : f32 to vector<8x1xf32>
    %852 = arith.addf %848, %851 : vector<8x1xf32>
    %853 = math.rsqrt %852 : vector<8x1xf32>
    %854 = vector.broadcast %853 : vector<8x1xf32> to vector<8x32xf32>
    %855 = arith.mulf %850, %854 : vector<8x32xf32>
    %856 = vector.broadcast %583 : vector<1x32xf32> to vector<8x32xf32>
    %857 = arith.mulf %855, %856 : vector<8x32xf32>
    %858 = vector.broadcast %581 : vector<1x32xf32> to vector<8x32xf32>
    %859 = arith.addf %857, %858 : vector<8x32xf32>
    %cst_471 = arith.constant 0.000000e+00 : f32
    %860 = vector.broadcast %cst_471 : f32 to vector<8x32xf32>
    %861 = arith.maximumf %859, %860 : vector<8x32xf32>
    %862 = tpu.concatenate %636, %861 in 1 : vector<8x64xf32>, vector<8x32xf32> -> vector<8x96xf32>
    %cst_472 = arith.constant dense<0.000000e+00> : vector<8x96xf32>
    %863 = tpu.matmul %862, %541, %cst_472 {dimension_numbers = #tpu.dot_dimension_numbers<[1], [0], [0], [1], [0, 0, 1, 1], [], []>} : vector<8x96xf32>, vector<96x96xf32>, vector<8x96xf32> -> vector<8x96xf32>
    %cst_473 = arith.constant dense<0.000000e+00> : vector<8xf32>
    %864 = vector.multi_reduction <add>, %863, %cst_473 [1] : vector<8x96xf32> to vector<8xf32>
    %865 = vector.shape_cast %864 : vector<8xf32> to vector<8x1xf32>
    %866 = arith.mulf %863, %863 : vector<8x96xf32>
    %cst_474 = arith.constant dense<0.000000e+00> : vector<8xf32>
    %867 = vector.multi_reduction <add>, %866, %cst_474 [1] : vector<8x96xf32> to vector<8xf32>
    %868 = vector.shape_cast %867 : vector<8xf32> to vector<8x1xf32>
    %cst_475 = arith.constant 0.010416667 : f32
    %869 = vector.broadcast %cst_475 : f32 to vector<8x1xf32>
    %870 = arith.mulf %865, %869 : vector<8x1xf32>
    %cst_476 = arith.constant 0.010416667 : f32
    %871 = vector.broadcast %cst_476 : f32 to vector<8x1xf32>
    %872 = arith.mulf %868, %871 : vector<8x1xf32>
    %873 = arith.mulf %870, %870 : vector<8x1xf32>
    %874 = arith.subf %872, %873 : vector<8x1xf32>
    %cst_477 = arith.constant 0.000000e+00 : f32
    %875 = vector.broadcast %cst_477 : f32 to vector<8x1xf32>
    %876 = arith.maximumf %874, %875 : vector<8x1xf32>
    %877 = vector.broadcast %870 : vector<8x1xf32> to vector<8x96xf32>
    %878 = arith.subf %863, %877 : vector<8x96xf32>
    %cst_478 = arith.constant 9.99999974E-6 : f32
    %879 = vector.broadcast %cst_478 : f32 to vector<8x1xf32>
    %880 = arith.addf %876, %879 : vector<8x1xf32>
    %881 = math.rsqrt %880 : vector<8x1xf32>
    %882 = vector.broadcast %881 : vector<8x1xf32> to vector<8x96xf32>
    %883 = arith.mulf %878, %882 : vector<8x96xf32>
    %884 = vector.broadcast %539 : vector<1x96xf32> to vector<8x96xf32>
    %885 = arith.mulf %883, %884 : vector<8x96xf32>
    %886 = vector.broadcast %537 : vector<1x96xf32> to vector<8x96xf32>
    %887 = arith.addf %885, %886 : vector<8x96xf32>
    %cst_479 = arith.constant 0.000000e+00 : f32
    %888 = vector.broadcast %cst_479 : f32 to vector<8x96xf32>
    %889 = arith.maximumf %887, %888 : vector<8x96xf32>
    %cst_480 = arith.constant dense<0.000000e+00> : vector<8x96xf32>
    %890 = tpu.matmul %889, %547, %cst_480 {dimension_numbers = #tpu.dot_dimension_numbers<[1], [0], [0], [1], [0, 0, 1, 1], [], []>} : vector<8x96xf32>, vector<96x96xf32>, vector<8x96xf32> -> vector<8x96xf32>
    %cst_481 = arith.constant dense<0.000000e+00> : vector<8xf32>
    %891 = vector.multi_reduction <add>, %890, %cst_481 [1] : vector<8x96xf32> to vector<8xf32>
    %892 = vector.shape_cast %891 : vector<8xf32> to vector<8x1xf32>
    %893 = arith.mulf %890, %890 : vector<8x96xf32>
    %cst_482 = arith.constant dense<0.000000e+00> : vector<8xf32>
    %894 = vector.multi_reduction <add>, %893, %cst_482 [1] : vector<8x96xf32> to vector<8xf32>
    %895 = vector.shape_cast %894 : vector<8xf32> to vector<8x1xf32>
    %cst_483 = arith.constant 0.010416667 : f32
    %896 = vector.broadcast %cst_483 : f32 to vector<8x1xf32>
    %897 = arith.mulf %892, %896 : vector<8x1xf32>
    %cst_484 = arith.constant 0.010416667 : f32
    %898 = vector.broadcast %cst_484 : f32 to vector<8x1xf32>
    %899 = arith.mulf %895, %898 : vector<8x1xf32>
    %900 = arith.mulf %897, %897 : vector<8x1xf32>
    %901 = arith.subf %899, %900 : vector<8x1xf32>
    %cst_485 = arith.constant 0.000000e+00 : f32
    %902 = vector.broadcast %cst_485 : f32 to vector<8x1xf32>
    %903 = arith.maximumf %901, %902 : vector<8x1xf32>
    %904 = vector.broadcast %897 : vector<8x1xf32> to vector<8x96xf32>
    %905 = arith.subf %890, %904 : vector<8x96xf32>
    %cst_486 = arith.constant 9.99999974E-6 : f32
    %906 = vector.broadcast %cst_486 : f32 to vector<8x1xf32>
    %907 = arith.addf %903, %906 : vector<8x1xf32>
    %908 = math.rsqrt %907 : vector<8x1xf32>
    %909 = vector.broadcast %908 : vector<8x1xf32> to vector<8x96xf32>
    %910 = arith.mulf %905, %909 : vector<8x96xf32>
    %911 = vector.broadcast %545 : vector<1x96xf32> to vector<8x96xf32>
    %912 = arith.mulf %910, %911 : vector<8x96xf32>
    %913 = vector.broadcast %543 : vector<1x96xf32> to vector<8x96xf32>
    %914 = arith.addf %912, %913 : vector<8x96xf32>
    %915 = arith.addf %914, %862 : vector<8x96xf32>
    %cst_487 = arith.constant 0.000000e+00 : f32
    %916 = vector.broadcast %cst_487 : f32 to vector<8x96xf32>
    %917 = arith.maximumf %915, %916 : vector<8x96xf32>
    %cst_488 = arith.constant dense<0.000000e+00> : vector<8x60xf32>
    %918 = tpu.matmul %917, %535, %cst_488 {dimension_numbers = #tpu.dot_dimension_numbers<[1], [0], [0], [1], [0, 0, 1, 1], [], []>} : vector<8x96xf32>, vector<96x60xf32>, vector<8x60xf32> -> vector<8x60xf32>
    %919 = vector.broadcast %533 : vector<1x60xf32> to vector<8x60xf32>
    %920 = arith.addf %918, %919 : vector<8x60xf32>
    %921 = tpu.concatenate %748, %834 in 1 : vector<8x2xf32>, vector<8x6xf32> -> vector<8x8xf32>
    %922 = vector.extract_strided_slice %920 {offsets = [0, 58], sizes = [8, 2], strides = [1, 1]} : vector<8x60xf32> to vector<8x2xf32>
    %923 = arith.addf %922, %1 : vector<8x2xf32>
    %924 = arith.subf %2, %923 : vector<8x2xf32>
    %cst_489 = arith.constant dense<0.000000e+00> : vector<8x32xf32>
    %925 = tpu.matmul %924, %8, %cst_489 {dimension_numbers = #tpu.dot_dimension_numbers<[1], [0], [0], [1], [0, 0, 1, 1], [], []>} : vector<8x2xf32>, vector<2x32xf32>, vector<8x32xf32> -> vector<8x32xf32>
    %926 = vector.broadcast %7 : vector<1x32xf32> to vector<8x32xf32>
    %927 = arith.addf %925, %926 : vector<8x32xf32>
    %cst_490 = arith.constant 0.000000e+00 : f32
    %928 = vector.broadcast %cst_490 : f32 to vector<8x32xf32>
    %929 = arith.maximumf %927, %928 : vector<8x32xf32>
    %cst_491 = arith.constant dense<0.000000e+00> : vector<8x32xf32>
    %930 = tpu.matmul %929, %11, %cst_491 {dimension_numbers = #tpu.dot_dimension_numbers<[1], [0], [0], [1], [0, 0, 1, 1], [], []>} : vector<8x32xf32>, vector<32x32xf32>, vector<8x32xf32> -> vector<8x32xf32>
    %cst_492 = arith.constant dense<0.000000e+00> : vector<8xf32>
    %931 = vector.multi_reduction <add>, %930, %cst_492 [1] : vector<8x32xf32> to vector<8xf32>
    %932 = vector.shape_cast %931 : vector<8xf32> to vector<8x1xf32>
    %933 = arith.mulf %930, %930 : vector<8x32xf32>
    %cst_493 = arith.constant dense<0.000000e+00> : vector<8xf32>
    %934 = vector.multi_reduction <add>, %933, %cst_493 [1] : vector<8x32xf32> to vector<8xf32>
    %935 = vector.shape_cast %934 : vector<8xf32> to vector<8x1xf32>
    %cst_494 = arith.constant 3.125000e-02 : f32
    %936 = vector.broadcast %cst_494 : f32 to vector<8x1xf32>
    %937 = arith.mulf %932, %936 : vector<8x1xf32>
    %cst_495 = arith.constant 3.125000e-02 : f32
    %938 = vector.broadcast %cst_495 : f32 to vector<8x1xf32>
    %939 = arith.mulf %935, %938 : vector<8x1xf32>
    %940 = arith.mulf %937, %937 : vector<8x1xf32>
    %941 = arith.subf %939, %940 : vector<8x1xf32>
    %cst_496 = arith.constant 0.000000e+00 : f32
    %942 = vector.broadcast %cst_496 : f32 to vector<8x1xf32>
    %943 = arith.maximumf %941, %942 : vector<8x1xf32>
    %944 = vector.broadcast %937 : vector<8x1xf32> to vector<8x32xf32>
    %945 = arith.subf %930, %944 : vector<8x32xf32>
    %cst_497 = arith.constant 9.99999974E-6 : f32
    %946 = vector.broadcast %cst_497 : f32 to vector<8x1xf32>
    %947 = arith.addf %943, %946 : vector<8x1xf32>
    %948 = math.rsqrt %947 : vector<8x1xf32>
    %949 = vector.broadcast %948 : vector<8x1xf32> to vector<8x32xf32>
    %950 = arith.mulf %945, %949 : vector<8x32xf32>
    %951 = vector.broadcast %10 : vector<1x32xf32> to vector<8x32xf32>
    %952 = arith.mulf %950, %951 : vector<8x32xf32>
    %953 = vector.broadcast %9 : vector<1x32xf32> to vector<8x32xf32>
    %954 = arith.addf %952, %953 : vector<8x32xf32>
    %cst_498 = arith.constant 0.000000e+00 : f32
    %955 = vector.broadcast %cst_498 : f32 to vector<8x32xf32>
    %956 = arith.maximumf %954, %955 : vector<8x32xf32>
    %cst_499 = arith.constant dense<0.000000e+00> : vector<8x32xf32>
    %957 = tpu.matmul %956, %6, %cst_499 {dimension_numbers = #tpu.dot_dimension_numbers<[1], [0], [0], [1], [0, 0, 1, 1], [], []>} : vector<8x32xf32>, vector<32x32xf32>, vector<8x32xf32> -> vector<8x32xf32>
    %cst_500 = arith.constant dense<0.000000e+00> : vector<8x32xf32>
    %958 = tpu.matmul %0, %5, %cst_500 {dimension_numbers = #tpu.dot_dimension_numbers<[1], [0], [0], [1], [0, 0, 1, 1], [], []>} : vector<8x32xf32>, vector<32x32xf32>, vector<8x32xf32> -> vector<8x32xf32>
    %959 = arith.addf %957, %958 : vector<8x32xf32>
    %cst_501 = arith.constant dense<0.000000e+00> : vector<8xf32>
    %960 = vector.multi_reduction <add>, %959, %cst_501 [1] : vector<8x32xf32> to vector<8xf32>
    %961 = vector.shape_cast %960 : vector<8xf32> to vector<8x1xf32>
    %962 = arith.mulf %959, %959 : vector<8x32xf32>
    %cst_502 = arith.constant dense<0.000000e+00> : vector<8xf32>
    %963 = vector.multi_reduction <add>, %962, %cst_502 [1] : vector<8x32xf32> to vector<8xf32>
    %964 = vector.shape_cast %963 : vector<8xf32> to vector<8x1xf32>
    %cst_503 = arith.constant 3.125000e-02 : f32
    %965 = vector.broadcast %cst_503 : f32 to vector<8x1xf32>
    %966 = arith.mulf %961, %965 : vector<8x1xf32>
    %cst_504 = arith.constant 3.125000e-02 : f32
    %967 = vector.broadcast %cst_504 : f32 to vector<8x1xf32>
    %968 = arith.mulf %964, %967 : vector<8x1xf32>
    %969 = arith.mulf %966, %966 : vector<8x1xf32>
    %970 = arith.subf %968, %969 : vector<8x1xf32>
    %cst_505 = arith.constant 0.000000e+00 : f32
    %971 = vector.broadcast %cst_505 : f32 to vector<8x1xf32>
    %972 = arith.maximumf %970, %971 : vector<8x1xf32>
    %973 = vector.broadcast %966 : vector<8x1xf32> to vector<8x32xf32>
    %974 = arith.subf %959, %973 : vector<8x32xf32>
    %cst_506 = arith.constant 9.99999974E-6 : f32
    %975 = vector.broadcast %cst_506 : f32 to vector<8x1xf32>
    %976 = arith.addf %972, %975 : vector<8x1xf32>
    %977 = math.rsqrt %976 : vector<8x1xf32>
    %978 = vector.broadcast %977 : vector<8x1xf32> to vector<8x32xf32>
    %979 = arith.mulf %974, %978 : vector<8x32xf32>
    %980 = vector.broadcast %4 : vector<1x32xf32> to vector<8x32xf32>
    %981 = arith.mulf %979, %980 : vector<8x32xf32>
    %982 = vector.broadcast %3 : vector<1x32xf32> to vector<8x32xf32>
    %983 = arith.addf %981, %982 : vector<8x32xf32>
    %cst_507 = arith.constant 0.000000e+00 : f32
    %984 = vector.broadcast %cst_507 : f32 to vector<8x32xf32>
    %985 = arith.maximumf %983, %984 : vector<8x32xf32>
    %cst_508 = arith.constant dense<0.000000e+00> : vector<8x32xf32>
    %986 = tpu.matmul %985, %16, %cst_508 {dimension_numbers = #tpu.dot_dimension_numbers<[1], [0], [0], [1], [0, 0, 1, 1], [], []>} : vector<8x32xf32>, vector<32x32xf32>, vector<8x32xf32> -> vector<8x32xf32>
    %cst_509 = arith.constant dense<0.000000e+00> : vector<8xf32>
    %987 = vector.multi_reduction <add>, %986, %cst_509 [1] : vector<8x32xf32> to vector<8xf32>
    %988 = vector.shape_cast %987 : vector<8xf32> to vector<8x1xf32>
    %989 = arith.mulf %986, %986 : vector<8x32xf32>
    %cst_510 = arith.constant dense<0.000000e+00> : vector<8xf32>
    %990 = vector.multi_reduction <add>, %989, %cst_510 [1] : vector<8x32xf32> to vector<8xf32>
    %991 = vector.shape_cast %990 : vector<8xf32> to vector<8x1xf32>
    %cst_511 = arith.constant 3.125000e-02 : f32
    %992 = vector.broadcast %cst_511 : f32 to vector<8x1xf32>
    %993 = arith.mulf %988, %992 : vector<8x1xf32>
    %cst_512 = arith.constant 3.125000e-02 : f32
    %994 = vector.broadcast %cst_512 : f32 to vector<8x1xf32>
    %995 = arith.mulf %991, %994 : vector<8x1xf32>
    %996 = arith.mulf %993, %993 : vector<8x1xf32>
    %997 = arith.subf %995, %996 : vector<8x1xf32>
    %cst_513 = arith.constant 0.000000e+00 : f32
    %998 = vector.broadcast %cst_513 : f32 to vector<8x1xf32>
    %999 = arith.maximumf %997, %998 : vector<8x1xf32>
    %1000 = vector.broadcast %993 : vector<8x1xf32> to vector<8x32xf32>
    %1001 = arith.subf %986, %1000 : vector<8x32xf32>
    %cst_514 = arith.constant 9.99999974E-6 : f32
    %1002 = vector.broadcast %cst_514 : f32 to vector<8x1xf32>
    %1003 = arith.addf %999, %1002 : vector<8x1xf32>
    %1004 = math.rsqrt %1003 : vector<8x1xf32>
    %1005 = vector.broadcast %1004 : vector<8x1xf32> to vector<8x32xf32>
    %1006 = arith.mulf %1001, %1005 : vector<8x32xf32>
    %1007 = vector.broadcast %15 : vector<1x32xf32> to vector<8x32xf32>
    %1008 = arith.mulf %1006, %1007 : vector<8x32xf32>
    %1009 = vector.broadcast %14 : vector<1x32xf32> to vector<8x32xf32>
    %1010 = arith.addf %1008, %1009 : vector<8x32xf32>
    %cst_515 = arith.constant 0.000000e+00 : f32
    %1011 = vector.broadcast %cst_515 : f32 to vector<8x32xf32>
    %1012 = arith.maximumf %1010, %1011 : vector<8x32xf32>
    %cst_516 = arith.constant dense<0.000000e+00> : vector<8x32xf32>
    %1013 = tpu.matmul %1012, %19, %cst_516 {dimension_numbers = #tpu.dot_dimension_numbers<[1], [0], [0], [1], [0, 0, 1, 1], [], []>} : vector<8x32xf32>, vector<32x32xf32>, vector<8x32xf32> -> vector<8x32xf32>
    %cst_517 = arith.constant dense<0.000000e+00> : vector<8xf32>
    %1014 = vector.multi_reduction <add>, %1013, %cst_517 [1] : vector<8x32xf32> to vector<8xf32>
    %1015 = vector.shape_cast %1014 : vector<8xf32> to vector<8x1xf32>
    %1016 = arith.mulf %1013, %1013 : vector<8x32xf32>
    %cst_518 = arith.constant dense<0.000000e+00> : vector<8xf32>
    %1017 = vector.multi_reduction <add>, %1016, %cst_518 [1] : vector<8x32xf32> to vector<8xf32>
    %1018 = vector.shape_cast %1017 : vector<8xf32> to vector<8x1xf32>
    %cst_519 = arith.constant 3.125000e-02 : f32
    %1019 = vector.broadcast %cst_519 : f32 to vector<8x1xf32>
    %1020 = arith.mulf %1015, %1019 : vector<8x1xf32>
    %cst_520 = arith.constant 3.125000e-02 : f32
    %1021 = vector.broadcast %cst_520 : f32 to vector<8x1xf32>
    %1022 = arith.mulf %1018, %1021 : vector<8x1xf32>
    %1023 = arith.mulf %1020, %1020 : vector<8x1xf32>
    %1024 = arith.subf %1022, %1023 : vector<8x1xf32>
    %cst_521 = arith.constant 0.000000e+00 : f32
    %1025 = vector.broadcast %cst_521 : f32 to vector<8x1xf32>
    %1026 = arith.maximumf %1024, %1025 : vector<8x1xf32>
    %1027 = vector.broadcast %1020 : vector<8x1xf32> to vector<8x32xf32>
    %1028 = arith.subf %1013, %1027 : vector<8x32xf32>
    %cst_522 = arith.constant 9.99999974E-6 : f32
    %1029 = vector.broadcast %cst_522 : f32 to vector<8x1xf32>
    %1030 = arith.addf %1026, %1029 : vector<8x1xf32>
    %1031 = math.rsqrt %1030 : vector<8x1xf32>
    %1032 = vector.broadcast %1031 : vector<8x1xf32> to vector<8x32xf32>
    %1033 = arith.mulf %1028, %1032 : vector<8x32xf32>
    %1034 = vector.broadcast %18 : vector<1x32xf32> to vector<8x32xf32>
    %1035 = arith.mulf %1033, %1034 : vector<8x32xf32>
    %1036 = vector.broadcast %17 : vector<1x32xf32> to vector<8x32xf32>
    %1037 = arith.addf %1035, %1036 : vector<8x32xf32>
    %1038 = arith.addf %1037, %985 : vector<8x32xf32>
    %cst_523 = arith.constant 0.000000e+00 : f32
    %1039 = vector.broadcast %cst_523 : f32 to vector<8x32xf32>
    %1040 = arith.maximumf %1038, %1039 : vector<8x32xf32>
    %cst_524 = arith.constant dense<0.000000e+00> : vector<8x1xf32>
    %1041 = tpu.matmul %1040, %13, %cst_524 {dimension_numbers = #tpu.dot_dimension_numbers<[1], [0], [0], [1], [0, 0, 1, 1], [], []>} : vector<8x32xf32>, vector<32x1xf32>, vector<8x1xf32> -> vector<8x1xf32>
    %1042 = vector.broadcast %12 : vector<1x1xf32> to vector<8x1xf32>
    %1043 = arith.addf %1041, %1042 : vector<8x1xf32>
    %c2 = arith.constant 2 : index
    %c0_525 = arith.constant 0 : index
    %c0_526 = arith.constant 0 : index
    %1044 = vector.load %arg21[%c2, %c0_525, %c0_526] : memref<3x1x60xf32, #tpu.memory_space<vmem>>, vector<1x1x60xf32>
    %1045 = vector.shape_cast %1044 : vector<1x1x60xf32> to vector<1x60xf32>
    %c2_527 = arith.constant 2 : index
    %c0_528 = arith.constant 0 : index
    %c0_529 = arith.constant 0 : index
    %1046 = vector.load %arg22[%c2_527, %c0_528, %c0_529] : memref<3x96x60xf32, #tpu.memory_space<vmem>>, vector<1x96x60xf32>
    %1047 = vector.shape_cast %1046 : vector<1x96x60xf32> to vector<96x60xf32>
    %c2_530 = arith.constant 2 : index
    %c0_531 = arith.constant 0 : index
    %c0_532 = arith.constant 0 : index
    %1048 = vector.load %arg23[%c2_530, %c0_531, %c0_532] : memref<3x1x96xf32, #tpu.memory_space<vmem>>, vector<1x1x96xf32>
    %1049 = vector.shape_cast %1048 : vector<1x1x96xf32> to vector<1x96xf32>
    %c2_533 = arith.constant 2 : index
    %c0_534 = arith.constant 0 : index
    %c0_535 = arith.constant 0 : index
    %1050 = vector.load %arg24[%c2_533, %c0_534, %c0_535] : memref<3x1x96xf32, #tpu.memory_space<vmem>>, vector<1x1x96xf32>
    %1051 = vector.shape_cast %1050 : vector<1x1x96xf32> to vector<1x96xf32>
    %c2_536 = arith.constant 2 : index
    %c0_537 = arith.constant 0 : index
    %c0_538 = arith.constant 0 : index
    %1052 = vector.load %arg25[%c2_536, %c0_537, %c0_538] : memref<3x96x96xf32, #tpu.memory_space<vmem>>, vector<1x96x96xf32>
    %1053 = vector.shape_cast %1052 : vector<1x96x96xf32> to vector<96x96xf32>
    %c2_539 = arith.constant 2 : index
    %c0_540 = arith.constant 0 : index
    %c0_541 = arith.constant 0 : index
    %1054 = vector.load %arg26[%c2_539, %c0_540, %c0_541] : memref<3x1x96xf32, #tpu.memory_space<vmem>>, vector<1x1x96xf32>
    %1055 = vector.shape_cast %1054 : vector<1x1x96xf32> to vector<1x96xf32>
    %c2_542 = arith.constant 2 : index
    %c0_543 = arith.constant 0 : index
    %c0_544 = arith.constant 0 : index
    %1056 = vector.load %arg27[%c2_542, %c0_543, %c0_544] : memref<3x1x96xf32, #tpu.memory_space<vmem>>, vector<1x1x96xf32>
    %1057 = vector.shape_cast %1056 : vector<1x1x96xf32> to vector<1x96xf32>
    %c2_545 = arith.constant 2 : index
    %c0_546 = arith.constant 0 : index
    %c0_547 = arith.constant 0 : index
    %1058 = vector.load %arg28[%c2_545, %c0_546, %c0_547] : memref<3x96x96xf32, #tpu.memory_space<vmem>>, vector<1x96x96xf32>
    %1059 = vector.shape_cast %1058 : vector<1x96x96xf32> to vector<96x96xf32>
    %c2_548 = arith.constant 2 : index
    %c0_549 = arith.constant 0 : index
    %c0_550 = arith.constant 0 : index
    %1060 = vector.load %arg29[%c2_548, %c0_549, %c0_550] : memref<3x1x6xf32, #tpu.memory_space<vmem>>, vector<1x1x6xf32>
    %1061 = vector.shape_cast %1060 : vector<1x1x6xf32> to vector<1x6xf32>
    %c2_551 = arith.constant 2 : index
    %c0_552 = arith.constant 0 : index
    %c0_553 = arith.constant 0 : index
    %1062 = vector.load %arg30[%c2_551, %c0_552, %c0_553] : memref<3x48x6xf32, #tpu.memory_space<vmem>>, vector<1x48x6xf32>
    %1063 = vector.shape_cast %1062 : vector<1x48x6xf32> to vector<48x6xf32>
    %c2_554 = arith.constant 2 : index
    %c0_555 = arith.constant 0 : index
    %c0_556 = arith.constant 0 : index
    %1064 = vector.load %arg31[%c2_554, %c0_555, %c0_556] : memref<3x1x48xf32, #tpu.memory_space<vmem>>, vector<1x1x48xf32>
    %1065 = vector.shape_cast %1064 : vector<1x1x48xf32> to vector<1x48xf32>
    %c2_557 = arith.constant 2 : index
    %c0_558 = arith.constant 0 : index
    %c0_559 = arith.constant 0 : index
    %1066 = vector.load %arg32[%c2_557, %c0_558, %c0_559] : memref<3x1x48xf32, #tpu.memory_space<vmem>>, vector<1x1x48xf32>
    %1067 = vector.shape_cast %1066 : vector<1x1x48xf32> to vector<1x48xf32>
    %c2_560 = arith.constant 2 : index
    %c0_561 = arith.constant 0 : index
    %c0_562 = arith.constant 0 : index
    %1068 = vector.load %arg33[%c2_560, %c0_561, %c0_562] : memref<3x48x48xf32, #tpu.memory_space<vmem>>, vector<1x48x48xf32>
    %1069 = vector.shape_cast %1068 : vector<1x48x48xf32> to vector<48x48xf32>
    %c2_563 = arith.constant 2 : index
    %c0_564 = arith.constant 0 : index
    %c0_565 = arith.constant 0 : index
    %1070 = vector.load %arg34[%c2_563, %c0_564, %c0_565] : memref<3x1x48xf32, #tpu.memory_space<vmem>>, vector<1x1x48xf32>
    %1071 = vector.shape_cast %1070 : vector<1x1x48xf32> to vector<1x48xf32>
    %c2_566 = arith.constant 2 : index
    %c0_567 = arith.constant 0 : index
    %c0_568 = arith.constant 0 : index
    %1072 = vector.load %arg35[%c2_566, %c0_567, %c0_568] : memref<3x1x48xf32, #tpu.memory_space<vmem>>, vector<1x1x48xf32>
    %1073 = vector.shape_cast %1072 : vector<1x1x48xf32> to vector<1x48xf32>
    %c2_569 = arith.constant 2 : index
    %c0_570 = arith.constant 0 : index
    %c0_571 = arith.constant 0 : index
    %1074 = vector.load %arg36[%c2_569, %c0_570, %c0_571] : memref<3x48x48xf32, #tpu.memory_space<vmem>>, vector<1x48x48xf32>
    %1075 = vector.shape_cast %1074 : vector<1x48x48xf32> to vector<48x48xf32>
    %c2_572 = arith.constant 2 : index
    %c0_573 = arith.constant 0 : index
    %c0_574 = arith.constant 0 : index
    %1076 = vector.load %arg37[%c2_572, %c0_573, %c0_574] : memref<3x1x2xf32, #tpu.memory_space<vmem>>, vector<1x1x2xf32>
    %1077 = vector.shape_cast %1076 : vector<1x1x2xf32> to vector<1x2xf32>
    %c2_575 = arith.constant 2 : index
    %c0_576 = arith.constant 0 : index
    %c0_577 = arith.constant 0 : index
    %1078 = vector.load %arg38[%c2_575, %c0_576, %c0_577] : memref<3x16x2xf32, #tpu.memory_space<vmem>>, vector<1x16x2xf32>
    %1079 = vector.shape_cast %1078 : vector<1x16x2xf32> to vector<16x2xf32>
    %c2_578 = arith.constant 2 : index
    %c0_579 = arith.constant 0 : index
    %c0_580 = arith.constant 0 : index
    %1080 = vector.load %arg39[%c2_578, %c0_579, %c0_580] : memref<3x1x16xf32, #tpu.memory_space<vmem>>, vector<1x1x16xf32>
    %1081 = vector.shape_cast %1080 : vector<1x1x16xf32> to vector<1x16xf32>
    %c2_581 = arith.constant 2 : index
    %c0_582 = arith.constant 0 : index
    %c0_583 = arith.constant 0 : index
    %1082 = vector.load %arg40[%c2_581, %c0_582, %c0_583] : memref<3x1x16xf32, #tpu.memory_space<vmem>>, vector<1x1x16xf32>
    %1083 = vector.shape_cast %1082 : vector<1x1x16xf32> to vector<1x16xf32>
    %c2_584 = arith.constant 2 : index
    %c0_585 = arith.constant 0 : index
    %c0_586 = arith.constant 0 : index
    %1084 = vector.load %arg41[%c2_584, %c0_585, %c0_586] : memref<3x16x16xf32, #tpu.memory_space<vmem>>, vector<1x16x16xf32>
    %1085 = vector.shape_cast %1084 : vector<1x16x16xf32> to vector<16x16xf32>
    %c2_587 = arith.constant 2 : index
    %c0_588 = arith.constant 0 : index
    %c0_589 = arith.constant 0 : index
    %1086 = vector.load %arg42[%c2_587, %c0_588, %c0_589] : memref<3x1x16xf32, #tpu.memory_space<vmem>>, vector<1x1x16xf32>
    %1087 = vector.shape_cast %1086 : vector<1x1x16xf32> to vector<1x16xf32>
    %c2_590 = arith.constant 2 : index
    %c0_591 = arith.constant 0 : index
    %c0_592 = arith.constant 0 : index
    %1088 = vector.load %arg43[%c2_590, %c0_591, %c0_592] : memref<3x1x16xf32, #tpu.memory_space<vmem>>, vector<1x1x16xf32>
    %1089 = vector.shape_cast %1088 : vector<1x1x16xf32> to vector<1x16xf32>
    %c2_593 = arith.constant 2 : index
    %c0_594 = arith.constant 0 : index
    %c0_595 = arith.constant 0 : index
    %1090 = vector.load %arg44[%c2_593, %c0_594, %c0_595] : memref<3x16x16xf32, #tpu.memory_space<vmem>>, vector<1x16x16xf32>
    %1091 = vector.shape_cast %1090 : vector<1x16x16xf32> to vector<16x16xf32>
    %c2_596 = arith.constant 2 : index
    %c0_597 = arith.constant 0 : index
    %c0_598 = arith.constant 0 : index
    %1092 = vector.load %arg45[%c2_596, %c0_597, %c0_598] : memref<3x1x32xf32, #tpu.memory_space<vmem>>, vector<1x1x32xf32>
    %1093 = vector.shape_cast %1092 : vector<1x1x32xf32> to vector<1x32xf32>
    %c2_599 = arith.constant 2 : index
    %c0_600 = arith.constant 0 : index
    %c0_601 = arith.constant 0 : index
    %1094 = vector.load %arg46[%c2_599, %c0_600, %c0_601] : memref<3x1x32xf32, #tpu.memory_space<vmem>>, vector<1x1x32xf32>
    %1095 = vector.shape_cast %1094 : vector<1x1x32xf32> to vector<1x32xf32>
    %c2_602 = arith.constant 2 : index
    %c0_603 = arith.constant 0 : index
    %c0_604 = arith.constant 0 : index
    %1096 = vector.load %arg47[%c2_602, %c0_603, %c0_604] : memref<3x6x32xf32, #tpu.memory_space<vmem>>, vector<1x6x32xf32>
    %1097 = vector.shape_cast %1096 : vector<1x6x32xf32> to vector<6x32xf32>
    %c2_605 = arith.constant 2 : index
    %c0_606 = arith.constant 0 : index
    %c0_607 = arith.constant 0 : index
    %1098 = vector.load %arg48[%c2_605, %c0_606, %c0_607] : memref<3x1x16xf32, #tpu.memory_space<vmem>>, vector<1x1x16xf32>
    %1099 = vector.shape_cast %1098 : vector<1x1x16xf32> to vector<1x16xf32>
    %c2_608 = arith.constant 2 : index
    %c0_609 = arith.constant 0 : index
    %c0_610 = arith.constant 0 : index
    %1100 = vector.load %arg49[%c2_608, %c0_609, %c0_610] : memref<3x1x16xf32, #tpu.memory_space<vmem>>, vector<1x1x16xf32>
    %1101 = vector.shape_cast %1100 : vector<1x1x16xf32> to vector<1x16xf32>
    %c2_611 = arith.constant 2 : index
    %c0_612 = arith.constant 0 : index
    %c0_613 = arith.constant 0 : index
    %1102 = vector.load %arg50[%c2_611, %c0_612, %c0_613] : memref<3x2x16xf32, #tpu.memory_space<vmem>>, vector<1x2x16xf32>
    %1103 = vector.shape_cast %1102 : vector<1x2x16xf32> to vector<2x16xf32>
    %c2_614 = arith.constant 2 : index
    %c0_615 = arith.constant 0 : index
    %c0_616 = arith.constant 0 : index
    %1104 = vector.load %arg51[%c2_614, %c0_615, %c0_616] : memref<3x1x64xf32, #tpu.memory_space<vmem>>, vector<1x1x64xf32>
    %1105 = vector.shape_cast %1104 : vector<1x1x64xf32> to vector<1x64xf32>
    %c2_617 = arith.constant 2 : index
    %c0_618 = arith.constant 0 : index
    %c0_619 = arith.constant 0 : index
    %1106 = vector.load %arg52[%c2_617, %c0_618, %c0_619] : memref<3x1x64xf32, #tpu.memory_space<vmem>>, vector<1x1x64xf32>
    %1107 = vector.shape_cast %1106 : vector<1x1x64xf32> to vector<1x64xf32>
    %c2_620 = arith.constant 2 : index
    %c0_621 = arith.constant 0 : index
    %c0_622 = arith.constant 0 : index
    %1108 = vector.load %arg53[%c2_620, %c0_621, %c0_622] : memref<3x32x64xf32, #tpu.memory_space<vmem>>, vector<1x32x64xf32>
    %1109 = vector.shape_cast %1108 : vector<1x32x64xf32> to vector<32x64xf32>
    %c2_623 = arith.constant 2 : index
    %c0_624 = arith.constant 0 : index
    %c0_625 = arith.constant 0 : index
    %1110 = vector.load %arg54[%c2_623, %c0_624, %c0_625] : memref<3x1x32xf32, #tpu.memory_space<vmem>>, vector<1x1x32xf32>
    %1111 = vector.shape_cast %1110 : vector<1x1x32xf32> to vector<1x32xf32>
    %c2_626 = arith.constant 2 : index
    %c0_627 = arith.constant 0 : index
    %c0_628 = arith.constant 0 : index
    %1112 = vector.load %arg55[%c2_626, %c0_627, %c0_628] : memref<3x1x32xf32, #tpu.memory_space<vmem>>, vector<1x1x32xf32>
    %1113 = vector.shape_cast %1112 : vector<1x1x32xf32> to vector<1x32xf32>
    %c2_629 = arith.constant 2 : index
    %c0_630 = arith.constant 0 : index
    %c0_631 = arith.constant 0 : index
    %1114 = vector.load %arg56[%c2_629, %c0_630, %c0_631] : memref<3x64x32xf32, #tpu.memory_space<vmem>>, vector<1x64x32xf32>
    %1115 = vector.shape_cast %1114 : vector<1x64x32xf32> to vector<64x32xf32>
    %c2_632 = arith.constant 2 : index
    %c0_633 = arith.constant 0 : index
    %c0_634 = arith.constant 0 : index
    %1116 = vector.load %arg57[%c2_632, %c0_633, %c0_634] : memref<3x1x16xf32, #tpu.memory_space<vmem>>, vector<1x1x16xf32>
    %1117 = vector.shape_cast %1116 : vector<1x1x16xf32> to vector<1x16xf32>
    %c2_635 = arith.constant 2 : index
    %c0_636 = arith.constant 0 : index
    %c0_637 = arith.constant 0 : index
    %1118 = vector.load %arg58[%c2_635, %c0_636, %c0_637] : memref<3x1x16xf32, #tpu.memory_space<vmem>>, vector<1x1x16xf32>
    %1119 = vector.shape_cast %1118 : vector<1x1x16xf32> to vector<1x16xf32>
    %c2_638 = arith.constant 2 : index
    %c0_639 = arith.constant 0 : index
    %c0_640 = arith.constant 0 : index
    %1120 = vector.load %arg59[%c2_638, %c0_639, %c0_640] : memref<3x32x16xf32, #tpu.memory_space<vmem>>, vector<1x32x16xf32>
    %1121 = vector.shape_cast %1120 : vector<1x32x16xf32> to vector<32x16xf32>
    %cst_641 = arith.constant dense<0.000000e+00> : vector<8x64xf32>
    %1122 = tpu.matmul %0, %1109, %cst_641 {dimension_numbers = #tpu.dot_dimension_numbers<[1], [0], [0], [1], [0, 0, 1, 1], [], []>} : vector<8x32xf32>, vector<32x64xf32>, vector<8x64xf32> -> vector<8x64xf32>
    %cst_642 = arith.constant dense<0.000000e+00> : vector<8xf32>
    %1123 = vector.multi_reduction <add>, %1122, %cst_642 [1] : vector<8x64xf32> to vector<8xf32>
    %1124 = vector.shape_cast %1123 : vector<8xf32> to vector<8x1xf32>
    %1125 = arith.mulf %1122, %1122 : vector<8x64xf32>
    %cst_643 = arith.constant dense<0.000000e+00> : vector<8xf32>
    %1126 = vector.multi_reduction <add>, %1125, %cst_643 [1] : vector<8x64xf32> to vector<8xf32>
    %1127 = vector.shape_cast %1126 : vector<8xf32> to vector<8x1xf32>
    %cst_644 = arith.constant 1.562500e-02 : f32
    %1128 = vector.broadcast %cst_644 : f32 to vector<8x1xf32>
    %1129 = arith.mulf %1124, %1128 : vector<8x1xf32>
    %cst_645 = arith.constant 1.562500e-02 : f32
    %1130 = vector.broadcast %cst_645 : f32 to vector<8x1xf32>
    %1131 = arith.mulf %1127, %1130 : vector<8x1xf32>
    %1132 = arith.mulf %1129, %1129 : vector<8x1xf32>
    %1133 = arith.subf %1131, %1132 : vector<8x1xf32>
    %cst_646 = arith.constant 0.000000e+00 : f32
    %1134 = vector.broadcast %cst_646 : f32 to vector<8x1xf32>
    %1135 = arith.maximumf %1133, %1134 : vector<8x1xf32>
    %1136 = vector.broadcast %1129 : vector<8x1xf32> to vector<8x64xf32>
    %1137 = arith.subf %1122, %1136 : vector<8x64xf32>
    %cst_647 = arith.constant 9.99999974E-6 : f32
    %1138 = vector.broadcast %cst_647 : f32 to vector<8x1xf32>
    %1139 = arith.addf %1135, %1138 : vector<8x1xf32>
    %1140 = math.rsqrt %1139 : vector<8x1xf32>
    %1141 = vector.broadcast %1140 : vector<8x1xf32> to vector<8x64xf32>
    %1142 = arith.mulf %1137, %1141 : vector<8x64xf32>
    %1143 = vector.broadcast %1107 : vector<1x64xf32> to vector<8x64xf32>
    %1144 = arith.mulf %1142, %1143 : vector<8x64xf32>
    %1145 = vector.broadcast %1105 : vector<1x64xf32> to vector<8x64xf32>
    %1146 = arith.addf %1144, %1145 : vector<8x64xf32>
    %cst_648 = arith.constant 0.000000e+00 : f32
    %1147 = vector.broadcast %cst_648 : f32 to vector<8x64xf32>
    %1148 = arith.maximumf %1146, %1147 : vector<8x64xf32>
    %cst_649 = arith.constant dense<0.000000e+00> : vector<8x32xf32>
    %1149 = tpu.matmul %1148, %1115, %cst_649 {dimension_numbers = #tpu.dot_dimension_numbers<[1], [0], [0], [1], [0, 0, 1, 1], [], []>} : vector<8x64xf32>, vector<64x32xf32>, vector<8x32xf32> -> vector<8x32xf32>
    %cst_650 = arith.constant dense<0.000000e+00> : vector<8xf32>
    %1150 = vector.multi_reduction <add>, %1149, %cst_650 [1] : vector<8x32xf32> to vector<8xf32>
    %1151 = vector.shape_cast %1150 : vector<8xf32> to vector<8x1xf32>
    %1152 = arith.mulf %1149, %1149 : vector<8x32xf32>
    %cst_651 = arith.constant dense<0.000000e+00> : vector<8xf32>
    %1153 = vector.multi_reduction <add>, %1152, %cst_651 [1] : vector<8x32xf32> to vector<8xf32>
    %1154 = vector.shape_cast %1153 : vector<8xf32> to vector<8x1xf32>
    %cst_652 = arith.constant 3.125000e-02 : f32
    %1155 = vector.broadcast %cst_652 : f32 to vector<8x1xf32>
    %1156 = arith.mulf %1151, %1155 : vector<8x1xf32>
    %cst_653 = arith.constant 3.125000e-02 : f32
    %1157 = vector.broadcast %cst_653 : f32 to vector<8x1xf32>
    %1158 = arith.mulf %1154, %1157 : vector<8x1xf32>
    %1159 = arith.mulf %1156, %1156 : vector<8x1xf32>
    %1160 = arith.subf %1158, %1159 : vector<8x1xf32>
    %cst_654 = arith.constant 0.000000e+00 : f32
    %1161 = vector.broadcast %cst_654 : f32 to vector<8x1xf32>
    %1162 = arith.maximumf %1160, %1161 : vector<8x1xf32>
    %1163 = vector.broadcast %1156 : vector<8x1xf32> to vector<8x32xf32>
    %1164 = arith.subf %1149, %1163 : vector<8x32xf32>
    %cst_655 = arith.constant 9.99999974E-6 : f32
    %1165 = vector.broadcast %cst_655 : f32 to vector<8x1xf32>
    %1166 = arith.addf %1162, %1165 : vector<8x1xf32>
    %1167 = math.rsqrt %1166 : vector<8x1xf32>
    %1168 = vector.broadcast %1167 : vector<8x1xf32> to vector<8x32xf32>
    %1169 = arith.mulf %1164, %1168 : vector<8x32xf32>
    %1170 = vector.broadcast %1113 : vector<1x32xf32> to vector<8x32xf32>
    %1171 = arith.mulf %1169, %1170 : vector<8x32xf32>
    %1172 = vector.broadcast %1111 : vector<1x32xf32> to vector<8x32xf32>
    %1173 = arith.addf %1171, %1172 : vector<8x32xf32>
    %cst_656 = arith.constant 0.000000e+00 : f32
    %1174 = vector.broadcast %cst_656 : f32 to vector<8x32xf32>
    %1175 = arith.maximumf %1173, %1174 : vector<8x32xf32>
    %cst_657 = arith.constant dense<0.000000e+00> : vector<8x16xf32>
    %1176 = tpu.matmul %1175, %1121, %cst_657 {dimension_numbers = #tpu.dot_dimension_numbers<[1], [0], [0], [1], [0, 0, 1, 1], [], []>} : vector<8x32xf32>, vector<32x16xf32>, vector<8x16xf32> -> vector<8x16xf32>
    %cst_658 = arith.constant dense<0.000000e+00> : vector<8xf32>
    %1177 = vector.multi_reduction <add>, %1176, %cst_658 [1] : vector<8x16xf32> to vector<8xf32>
    %1178 = vector.shape_cast %1177 : vector<8xf32> to vector<8x1xf32>
    %1179 = arith.mulf %1176, %1176 : vector<8x16xf32>
    %cst_659 = arith.constant dense<0.000000e+00> : vector<8xf32>
    %1180 = vector.multi_reduction <add>, %1179, %cst_659 [1] : vector<8x16xf32> to vector<8xf32>
    %1181 = vector.shape_cast %1180 : vector<8xf32> to vector<8x1xf32>
    %cst_660 = arith.constant 6.250000e-02 : f32
    %1182 = vector.broadcast %cst_660 : f32 to vector<8x1xf32>
    %1183 = arith.mulf %1178, %1182 : vector<8x1xf32>
    %cst_661 = arith.constant 6.250000e-02 : f32
    %1184 = vector.broadcast %cst_661 : f32 to vector<8x1xf32>
    %1185 = arith.mulf %1181, %1184 : vector<8x1xf32>
    %1186 = arith.mulf %1183, %1183 : vector<8x1xf32>
    %1187 = arith.subf %1185, %1186 : vector<8x1xf32>
    %cst_662 = arith.constant 0.000000e+00 : f32
    %1188 = vector.broadcast %cst_662 : f32 to vector<8x1xf32>
    %1189 = arith.maximumf %1187, %1188 : vector<8x1xf32>
    %1190 = vector.broadcast %1183 : vector<8x1xf32> to vector<8x16xf32>
    %1191 = arith.subf %1176, %1190 : vector<8x16xf32>
    %cst_663 = arith.constant 9.99999974E-6 : f32
    %1192 = vector.broadcast %cst_663 : f32 to vector<8x1xf32>
    %1193 = arith.addf %1189, %1192 : vector<8x1xf32>
    %1194 = math.rsqrt %1193 : vector<8x1xf32>
    %1195 = vector.broadcast %1194 : vector<8x1xf32> to vector<8x16xf32>
    %1196 = arith.mulf %1191, %1195 : vector<8x16xf32>
    %1197 = vector.broadcast %1119 : vector<1x16xf32> to vector<8x16xf32>
    %1198 = arith.mulf %1196, %1197 : vector<8x16xf32>
    %1199 = vector.broadcast %1117 : vector<1x16xf32> to vector<8x16xf32>
    %1200 = arith.addf %1198, %1199 : vector<8x16xf32>
    %cst_664 = arith.constant 0.000000e+00 : f32
    %1201 = vector.broadcast %cst_664 : f32 to vector<8x16xf32>
    %1202 = arith.maximumf %1200, %1201 : vector<8x16xf32>
    %cst_665 = arith.constant dense<0.000000e+00> : vector<8x16xf32>
    %1203 = tpu.matmul %1202, %1085, %cst_665 {dimension_numbers = #tpu.dot_dimension_numbers<[1], [0], [0], [1], [0, 0, 1, 1], [], []>} : vector<8x16xf32>, vector<16x16xf32>, vector<8x16xf32> -> vector<8x16xf32>
    %cst_666 = arith.constant dense<0.000000e+00> : vector<8xf32>
    %1204 = vector.multi_reduction <add>, %1203, %cst_666 [1] : vector<8x16xf32> to vector<8xf32>
    %1205 = vector.shape_cast %1204 : vector<8xf32> to vector<8x1xf32>
    %1206 = arith.mulf %1203, %1203 : vector<8x16xf32>
    %cst_667 = arith.constant dense<0.000000e+00> : vector<8xf32>
    %1207 = vector.multi_reduction <add>, %1206, %cst_667 [1] : vector<8x16xf32> to vector<8xf32>
    %1208 = vector.shape_cast %1207 : vector<8xf32> to vector<8x1xf32>
    %cst_668 = arith.constant 6.250000e-02 : f32
    %1209 = vector.broadcast %cst_668 : f32 to vector<8x1xf32>
    %1210 = arith.mulf %1205, %1209 : vector<8x1xf32>
    %cst_669 = arith.constant 6.250000e-02 : f32
    %1211 = vector.broadcast %cst_669 : f32 to vector<8x1xf32>
    %1212 = arith.mulf %1208, %1211 : vector<8x1xf32>
    %1213 = arith.mulf %1210, %1210 : vector<8x1xf32>
    %1214 = arith.subf %1212, %1213 : vector<8x1xf32>
    %cst_670 = arith.constant 0.000000e+00 : f32
    %1215 = vector.broadcast %cst_670 : f32 to vector<8x1xf32>
    %1216 = arith.maximumf %1214, %1215 : vector<8x1xf32>
    %1217 = vector.broadcast %1210 : vector<8x1xf32> to vector<8x16xf32>
    %1218 = arith.subf %1203, %1217 : vector<8x16xf32>
    %cst_671 = arith.constant 9.99999974E-6 : f32
    %1219 = vector.broadcast %cst_671 : f32 to vector<8x1xf32>
    %1220 = arith.addf %1216, %1219 : vector<8x1xf32>
    %1221 = math.rsqrt %1220 : vector<8x1xf32>
    %1222 = vector.broadcast %1221 : vector<8x1xf32> to vector<8x16xf32>
    %1223 = arith.mulf %1218, %1222 : vector<8x16xf32>
    %1224 = vector.broadcast %1083 : vector<1x16xf32> to vector<8x16xf32>
    %1225 = arith.mulf %1223, %1224 : vector<8x16xf32>
    %1226 = vector.broadcast %1081 : vector<1x16xf32> to vector<8x16xf32>
    %1227 = arith.addf %1225, %1226 : vector<8x16xf32>
    %cst_672 = arith.constant 0.000000e+00 : f32
    %1228 = vector.broadcast %cst_672 : f32 to vector<8x16xf32>
    %1229 = arith.maximumf %1227, %1228 : vector<8x16xf32>
    %cst_673 = arith.constant dense<0.000000e+00> : vector<8x16xf32>
    %1230 = tpu.matmul %1229, %1091, %cst_673 {dimension_numbers = #tpu.dot_dimension_numbers<[1], [0], [0], [1], [0, 0, 1, 1], [], []>} : vector<8x16xf32>, vector<16x16xf32>, vector<8x16xf32> -> vector<8x16xf32>
    %cst_674 = arith.constant dense<0.000000e+00> : vector<8xf32>
    %1231 = vector.multi_reduction <add>, %1230, %cst_674 [1] : vector<8x16xf32> to vector<8xf32>
    %1232 = vector.shape_cast %1231 : vector<8xf32> to vector<8x1xf32>
    %1233 = arith.mulf %1230, %1230 : vector<8x16xf32>
    %cst_675 = arith.constant dense<0.000000e+00> : vector<8xf32>
    %1234 = vector.multi_reduction <add>, %1233, %cst_675 [1] : vector<8x16xf32> to vector<8xf32>
    %1235 = vector.shape_cast %1234 : vector<8xf32> to vector<8x1xf32>
    %cst_676 = arith.constant 6.250000e-02 : f32
    %1236 = vector.broadcast %cst_676 : f32 to vector<8x1xf32>
    %1237 = arith.mulf %1232, %1236 : vector<8x1xf32>
    %cst_677 = arith.constant 6.250000e-02 : f32
    %1238 = vector.broadcast %cst_677 : f32 to vector<8x1xf32>
    %1239 = arith.mulf %1235, %1238 : vector<8x1xf32>
    %1240 = arith.mulf %1237, %1237 : vector<8x1xf32>
    %1241 = arith.subf %1239, %1240 : vector<8x1xf32>
    %cst_678 = arith.constant 0.000000e+00 : f32
    %1242 = vector.broadcast %cst_678 : f32 to vector<8x1xf32>
    %1243 = arith.maximumf %1241, %1242 : vector<8x1xf32>
    %1244 = vector.broadcast %1237 : vector<8x1xf32> to vector<8x16xf32>
    %1245 = arith.subf %1230, %1244 : vector<8x16xf32>
    %cst_679 = arith.constant 9.99999974E-6 : f32
    %1246 = vector.broadcast %cst_679 : f32 to vector<8x1xf32>
    %1247 = arith.addf %1243, %1246 : vector<8x1xf32>
    %1248 = math.rsqrt %1247 : vector<8x1xf32>
    %1249 = vector.broadcast %1248 : vector<8x1xf32> to vector<8x16xf32>
    %1250 = arith.mulf %1245, %1249 : vector<8x16xf32>
    %1251 = vector.broadcast %1089 : vector<1x16xf32> to vector<8x16xf32>
    %1252 = arith.mulf %1250, %1251 : vector<8x16xf32>
    %1253 = vector.broadcast %1087 : vector<1x16xf32> to vector<8x16xf32>
    %1254 = arith.addf %1252, %1253 : vector<8x16xf32>
    %1255 = arith.addf %1254, %1202 : vector<8x16xf32>
    %cst_680 = arith.constant 0.000000e+00 : f32
    %1256 = vector.broadcast %cst_680 : f32 to vector<8x16xf32>
    %1257 = arith.maximumf %1255, %1256 : vector<8x16xf32>
    %cst_681 = arith.constant dense<0.000000e+00> : vector<8x2xf32>
    %1258 = tpu.matmul %1257, %1079, %cst_681 {dimension_numbers = #tpu.dot_dimension_numbers<[1], [0], [0], [1], [0, 0, 1, 1], [], []>} : vector<8x16xf32>, vector<16x2xf32>, vector<8x2xf32> -> vector<8x2xf32>
    %1259 = vector.broadcast %1077 : vector<1x2xf32> to vector<8x2xf32>
    %1260 = arith.addf %1258, %1259 : vector<8x2xf32>
    %cst_682 = arith.constant dense<0.000000e+00> : vector<8x16xf32>
    %1261 = tpu.matmul %1260, %1103, %cst_682 {dimension_numbers = #tpu.dot_dimension_numbers<[1], [0], [0], [1], [0, 0, 1, 1], [], []>} : vector<8x2xf32>, vector<2x16xf32>, vector<8x16xf32> -> vector<8x16xf32>
    %cst_683 = arith.constant dense<0.000000e+00> : vector<8xf32>
    %1262 = vector.multi_reduction <add>, %1261, %cst_683 [1] : vector<8x16xf32> to vector<8xf32>
    %1263 = vector.shape_cast %1262 : vector<8xf32> to vector<8x1xf32>
    %1264 = arith.mulf %1261, %1261 : vector<8x16xf32>
    %cst_684 = arith.constant dense<0.000000e+00> : vector<8xf32>
    %1265 = vector.multi_reduction <add>, %1264, %cst_684 [1] : vector<8x16xf32> to vector<8xf32>
    %1266 = vector.shape_cast %1265 : vector<8xf32> to vector<8x1xf32>
    %cst_685 = arith.constant 6.250000e-02 : f32
    %1267 = vector.broadcast %cst_685 : f32 to vector<8x1xf32>
    %1268 = arith.mulf %1263, %1267 : vector<8x1xf32>
    %cst_686 = arith.constant 6.250000e-02 : f32
    %1269 = vector.broadcast %cst_686 : f32 to vector<8x1xf32>
    %1270 = arith.mulf %1266, %1269 : vector<8x1xf32>
    %1271 = arith.mulf %1268, %1268 : vector<8x1xf32>
    %1272 = arith.subf %1270, %1271 : vector<8x1xf32>
    %cst_687 = arith.constant 0.000000e+00 : f32
    %1273 = vector.broadcast %cst_687 : f32 to vector<8x1xf32>
    %1274 = arith.maximumf %1272, %1273 : vector<8x1xf32>
    %1275 = vector.broadcast %1268 : vector<8x1xf32> to vector<8x16xf32>
    %1276 = arith.subf %1261, %1275 : vector<8x16xf32>
    %cst_688 = arith.constant 9.99999974E-6 : f32
    %1277 = vector.broadcast %cst_688 : f32 to vector<8x1xf32>
    %1278 = arith.addf %1274, %1277 : vector<8x1xf32>
    %1279 = math.rsqrt %1278 : vector<8x1xf32>
    %1280 = vector.broadcast %1279 : vector<8x1xf32> to vector<8x16xf32>
    %1281 = arith.mulf %1276, %1280 : vector<8x16xf32>
    %1282 = vector.broadcast %1101 : vector<1x16xf32> to vector<8x16xf32>
    %1283 = arith.mulf %1281, %1282 : vector<8x16xf32>
    %1284 = vector.broadcast %1099 : vector<1x16xf32> to vector<8x16xf32>
    %1285 = arith.addf %1283, %1284 : vector<8x16xf32>
    %cst_689 = arith.constant 0.000000e+00 : f32
    %1286 = vector.broadcast %cst_689 : f32 to vector<8x16xf32>
    %1287 = arith.maximumf %1285, %1286 : vector<8x16xf32>
    %1288 = tpu.concatenate %1175, %1287 in 1 : vector<8x32xf32>, vector<8x16xf32> -> vector<8x48xf32>
    %cst_690 = arith.constant dense<0.000000e+00> : vector<8x48xf32>
    %1289 = tpu.matmul %1288, %1069, %cst_690 {dimension_numbers = #tpu.dot_dimension_numbers<[1], [0], [0], [1], [0, 0, 1, 1], [], []>} : vector<8x48xf32>, vector<48x48xf32>, vector<8x48xf32> -> vector<8x48xf32>
    %cst_691 = arith.constant dense<0.000000e+00> : vector<8xf32>
    %1290 = vector.multi_reduction <add>, %1289, %cst_691 [1] : vector<8x48xf32> to vector<8xf32>
    %1291 = vector.shape_cast %1290 : vector<8xf32> to vector<8x1xf32>
    %1292 = arith.mulf %1289, %1289 : vector<8x48xf32>
    %cst_692 = arith.constant dense<0.000000e+00> : vector<8xf32>
    %1293 = vector.multi_reduction <add>, %1292, %cst_692 [1] : vector<8x48xf32> to vector<8xf32>
    %1294 = vector.shape_cast %1293 : vector<8xf32> to vector<8x1xf32>
    %cst_693 = arith.constant 0.020833334 : f32
    %1295 = vector.broadcast %cst_693 : f32 to vector<8x1xf32>
    %1296 = arith.mulf %1291, %1295 : vector<8x1xf32>
    %cst_694 = arith.constant 0.020833334 : f32
    %1297 = vector.broadcast %cst_694 : f32 to vector<8x1xf32>
    %1298 = arith.mulf %1294, %1297 : vector<8x1xf32>
    %1299 = arith.mulf %1296, %1296 : vector<8x1xf32>
    %1300 = arith.subf %1298, %1299 : vector<8x1xf32>
    %cst_695 = arith.constant 0.000000e+00 : f32
    %1301 = vector.broadcast %cst_695 : f32 to vector<8x1xf32>
    %1302 = arith.maximumf %1300, %1301 : vector<8x1xf32>
    %1303 = vector.broadcast %1296 : vector<8x1xf32> to vector<8x48xf32>
    %1304 = arith.subf %1289, %1303 : vector<8x48xf32>
    %cst_696 = arith.constant 9.99999974E-6 : f32
    %1305 = vector.broadcast %cst_696 : f32 to vector<8x1xf32>
    %1306 = arith.addf %1302, %1305 : vector<8x1xf32>
    %1307 = math.rsqrt %1306 : vector<8x1xf32>
    %1308 = vector.broadcast %1307 : vector<8x1xf32> to vector<8x48xf32>
    %1309 = arith.mulf %1304, %1308 : vector<8x48xf32>
    %1310 = vector.broadcast %1067 : vector<1x48xf32> to vector<8x48xf32>
    %1311 = arith.mulf %1309, %1310 : vector<8x48xf32>
    %1312 = vector.broadcast %1065 : vector<1x48xf32> to vector<8x48xf32>
    %1313 = arith.addf %1311, %1312 : vector<8x48xf32>
    %cst_697 = arith.constant 0.000000e+00 : f32
    %1314 = vector.broadcast %cst_697 : f32 to vector<8x48xf32>
    %1315 = arith.maximumf %1313, %1314 : vector<8x48xf32>
    %cst_698 = arith.constant dense<0.000000e+00> : vector<8x48xf32>
    %1316 = tpu.matmul %1315, %1075, %cst_698 {dimension_numbers = #tpu.dot_dimension_numbers<[1], [0], [0], [1], [0, 0, 1, 1], [], []>} : vector<8x48xf32>, vector<48x48xf32>, vector<8x48xf32> -> vector<8x48xf32>
    %cst_699 = arith.constant dense<0.000000e+00> : vector<8xf32>
    %1317 = vector.multi_reduction <add>, %1316, %cst_699 [1] : vector<8x48xf32> to vector<8xf32>
    %1318 = vector.shape_cast %1317 : vector<8xf32> to vector<8x1xf32>
    %1319 = arith.mulf %1316, %1316 : vector<8x48xf32>
    %cst_700 = arith.constant dense<0.000000e+00> : vector<8xf32>
    %1320 = vector.multi_reduction <add>, %1319, %cst_700 [1] : vector<8x48xf32> to vector<8xf32>
    %1321 = vector.shape_cast %1320 : vector<8xf32> to vector<8x1xf32>
    %cst_701 = arith.constant 0.020833334 : f32
    %1322 = vector.broadcast %cst_701 : f32 to vector<8x1xf32>
    %1323 = arith.mulf %1318, %1322 : vector<8x1xf32>
    %cst_702 = arith.constant 0.020833334 : f32
    %1324 = vector.broadcast %cst_702 : f32 to vector<8x1xf32>
    %1325 = arith.mulf %1321, %1324 : vector<8x1xf32>
    %1326 = arith.mulf %1323, %1323 : vector<8x1xf32>
    %1327 = arith.subf %1325, %1326 : vector<8x1xf32>
    %cst_703 = arith.constant 0.000000e+00 : f32
    %1328 = vector.broadcast %cst_703 : f32 to vector<8x1xf32>
    %1329 = arith.maximumf %1327, %1328 : vector<8x1xf32>
    %1330 = vector.broadcast %1323 : vector<8x1xf32> to vector<8x48xf32>
    %1331 = arith.subf %1316, %1330 : vector<8x48xf32>
    %cst_704 = arith.constant 9.99999974E-6 : f32
    %1332 = vector.broadcast %cst_704 : f32 to vector<8x1xf32>
    %1333 = arith.addf %1329, %1332 : vector<8x1xf32>
    %1334 = math.rsqrt %1333 : vector<8x1xf32>
    %1335 = vector.broadcast %1334 : vector<8x1xf32> to vector<8x48xf32>
    %1336 = arith.mulf %1331, %1335 : vector<8x48xf32>
    %1337 = vector.broadcast %1073 : vector<1x48xf32> to vector<8x48xf32>
    %1338 = arith.mulf %1336, %1337 : vector<8x48xf32>
    %1339 = vector.broadcast %1071 : vector<1x48xf32> to vector<8x48xf32>
    %1340 = arith.addf %1338, %1339 : vector<8x48xf32>
    %1341 = arith.addf %1340, %1288 : vector<8x48xf32>
    %cst_705 = arith.constant 0.000000e+00 : f32
    %1342 = vector.broadcast %cst_705 : f32 to vector<8x48xf32>
    %1343 = arith.maximumf %1341, %1342 : vector<8x48xf32>
    %cst_706 = arith.constant dense<0.000000e+00> : vector<8x6xf32>
    %1344 = tpu.matmul %1343, %1063, %cst_706 {dimension_numbers = #tpu.dot_dimension_numbers<[1], [0], [0], [1], [0, 0, 1, 1], [], []>} : vector<8x48xf32>, vector<48x6xf32>, vector<8x6xf32> -> vector<8x6xf32>
    %1345 = vector.broadcast %1061 : vector<1x6xf32> to vector<8x6xf32>
    %1346 = arith.addf %1344, %1345 : vector<8x6xf32>
    %cst_707 = arith.constant dense<0.000000e+00> : vector<8x32xf32>
    %1347 = tpu.matmul %1346, %1097, %cst_707 {dimension_numbers = #tpu.dot_dimension_numbers<[1], [0], [0], [1], [0, 0, 1, 1], [], []>} : vector<8x6xf32>, vector<6x32xf32>, vector<8x32xf32> -> vector<8x32xf32>
    %cst_708 = arith.constant dense<0.000000e+00> : vector<8xf32>
    %1348 = vector.multi_reduction <add>, %1347, %cst_708 [1] : vector<8x32xf32> to vector<8xf32>
    %1349 = vector.shape_cast %1348 : vector<8xf32> to vector<8x1xf32>
    %1350 = arith.mulf %1347, %1347 : vector<8x32xf32>
    %cst_709 = arith.constant dense<0.000000e+00> : vector<8xf32>
    %1351 = vector.multi_reduction <add>, %1350, %cst_709 [1] : vector<8x32xf32> to vector<8xf32>
    %1352 = vector.shape_cast %1351 : vector<8xf32> to vector<8x1xf32>
    %cst_710 = arith.constant 3.125000e-02 : f32
    %1353 = vector.broadcast %cst_710 : f32 to vector<8x1xf32>
    %1354 = arith.mulf %1349, %1353 : vector<8x1xf32>
    %cst_711 = arith.constant 3.125000e-02 : f32
    %1355 = vector.broadcast %cst_711 : f32 to vector<8x1xf32>
    %1356 = arith.mulf %1352, %1355 : vector<8x1xf32>
    %1357 = arith.mulf %1354, %1354 : vector<8x1xf32>
    %1358 = arith.subf %1356, %1357 : vector<8x1xf32>
    %cst_712 = arith.constant 0.000000e+00 : f32
    %1359 = vector.broadcast %cst_712 : f32 to vector<8x1xf32>
    %1360 = arith.maximumf %1358, %1359 : vector<8x1xf32>
    %1361 = vector.broadcast %1354 : vector<8x1xf32> to vector<8x32xf32>
    %1362 = arith.subf %1347, %1361 : vector<8x32xf32>
    %cst_713 = arith.constant 9.99999974E-6 : f32
    %1363 = vector.broadcast %cst_713 : f32 to vector<8x1xf32>
    %1364 = arith.addf %1360, %1363 : vector<8x1xf32>
    %1365 = math.rsqrt %1364 : vector<8x1xf32>
    %1366 = vector.broadcast %1365 : vector<8x1xf32> to vector<8x32xf32>
    %1367 = arith.mulf %1362, %1366 : vector<8x32xf32>
    %1368 = vector.broadcast %1095 : vector<1x32xf32> to vector<8x32xf32>
    %1369 = arith.mulf %1367, %1368 : vector<8x32xf32>
    %1370 = vector.broadcast %1093 : vector<1x32xf32> to vector<8x32xf32>
    %1371 = arith.addf %1369, %1370 : vector<8x32xf32>
    %cst_714 = arith.constant 0.000000e+00 : f32
    %1372 = vector.broadcast %cst_714 : f32 to vector<8x32xf32>
    %1373 = arith.maximumf %1371, %1372 : vector<8x32xf32>
    %1374 = tpu.concatenate %1148, %1373 in 1 : vector<8x64xf32>, vector<8x32xf32> -> vector<8x96xf32>
    %cst_715 = arith.constant dense<0.000000e+00> : vector<8x96xf32>
    %1375 = tpu.matmul %1374, %1053, %cst_715 {dimension_numbers = #tpu.dot_dimension_numbers<[1], [0], [0], [1], [0, 0, 1, 1], [], []>} : vector<8x96xf32>, vector<96x96xf32>, vector<8x96xf32> -> vector<8x96xf32>
    %cst_716 = arith.constant dense<0.000000e+00> : vector<8xf32>
    %1376 = vector.multi_reduction <add>, %1375, %cst_716 [1] : vector<8x96xf32> to vector<8xf32>
    %1377 = vector.shape_cast %1376 : vector<8xf32> to vector<8x1xf32>
    %1378 = arith.mulf %1375, %1375 : vector<8x96xf32>
    %cst_717 = arith.constant dense<0.000000e+00> : vector<8xf32>
    %1379 = vector.multi_reduction <add>, %1378, %cst_717 [1] : vector<8x96xf32> to vector<8xf32>
    %1380 = vector.shape_cast %1379 : vector<8xf32> to vector<8x1xf32>
    %cst_718 = arith.constant 0.010416667 : f32
    %1381 = vector.broadcast %cst_718 : f32 to vector<8x1xf32>
    %1382 = arith.mulf %1377, %1381 : vector<8x1xf32>
    %cst_719 = arith.constant 0.010416667 : f32
    %1383 = vector.broadcast %cst_719 : f32 to vector<8x1xf32>
    %1384 = arith.mulf %1380, %1383 : vector<8x1xf32>
    %1385 = arith.mulf %1382, %1382 : vector<8x1xf32>
    %1386 = arith.subf %1384, %1385 : vector<8x1xf32>
    %cst_720 = arith.constant 0.000000e+00 : f32
    %1387 = vector.broadcast %cst_720 : f32 to vector<8x1xf32>
    %1388 = arith.maximumf %1386, %1387 : vector<8x1xf32>
    %1389 = vector.broadcast %1382 : vector<8x1xf32> to vector<8x96xf32>
    %1390 = arith.subf %1375, %1389 : vector<8x96xf32>
    %cst_721 = arith.constant 9.99999974E-6 : f32
    %1391 = vector.broadcast %cst_721 : f32 to vector<8x1xf32>
    %1392 = arith.addf %1388, %1391 : vector<8x1xf32>
    %1393 = math.rsqrt %1392 : vector<8x1xf32>
    %1394 = vector.broadcast %1393 : vector<8x1xf32> to vector<8x96xf32>
    %1395 = arith.mulf %1390, %1394 : vector<8x96xf32>
    %1396 = vector.broadcast %1051 : vector<1x96xf32> to vector<8x96xf32>
    %1397 = arith.mulf %1395, %1396 : vector<8x96xf32>
    %1398 = vector.broadcast %1049 : vector<1x96xf32> to vector<8x96xf32>
    %1399 = arith.addf %1397, %1398 : vector<8x96xf32>
    %cst_722 = arith.constant 0.000000e+00 : f32
    %1400 = vector.broadcast %cst_722 : f32 to vector<8x96xf32>
    %1401 = arith.maximumf %1399, %1400 : vector<8x96xf32>
    %cst_723 = arith.constant dense<0.000000e+00> : vector<8x96xf32>
    %1402 = tpu.matmul %1401, %1059, %cst_723 {dimension_numbers = #tpu.dot_dimension_numbers<[1], [0], [0], [1], [0, 0, 1, 1], [], []>} : vector<8x96xf32>, vector<96x96xf32>, vector<8x96xf32> -> vector<8x96xf32>
    %cst_724 = arith.constant dense<0.000000e+00> : vector<8xf32>
    %1403 = vector.multi_reduction <add>, %1402, %cst_724 [1] : vector<8x96xf32> to vector<8xf32>
    %1404 = vector.shape_cast %1403 : vector<8xf32> to vector<8x1xf32>
    %1405 = arith.mulf %1402, %1402 : vector<8x96xf32>
    %cst_725 = arith.constant dense<0.000000e+00> : vector<8xf32>
    %1406 = vector.multi_reduction <add>, %1405, %cst_725 [1] : vector<8x96xf32> to vector<8xf32>
    %1407 = vector.shape_cast %1406 : vector<8xf32> to vector<8x1xf32>
    %cst_726 = arith.constant 0.010416667 : f32
    %1408 = vector.broadcast %cst_726 : f32 to vector<8x1xf32>
    %1409 = arith.mulf %1404, %1408 : vector<8x1xf32>
    %cst_727 = arith.constant 0.010416667 : f32
    %1410 = vector.broadcast %cst_727 : f32 to vector<8x1xf32>
    %1411 = arith.mulf %1407, %1410 : vector<8x1xf32>
    %1412 = arith.mulf %1409, %1409 : vector<8x1xf32>
    %1413 = arith.subf %1411, %1412 : vector<8x1xf32>
    %cst_728 = arith.constant 0.000000e+00 : f32
    %1414 = vector.broadcast %cst_728 : f32 to vector<8x1xf32>
    %1415 = arith.maximumf %1413, %1414 : vector<8x1xf32>
    %1416 = vector.broadcast %1409 : vector<8x1xf32> to vector<8x96xf32>
    %1417 = arith.subf %1402, %1416 : vector<8x96xf32>
    %cst_729 = arith.constant 9.99999974E-6 : f32
    %1418 = vector.broadcast %cst_729 : f32 to vector<8x1xf32>
    %1419 = arith.addf %1415, %1418 : vector<8x1xf32>
    %1420 = math.rsqrt %1419 : vector<8x1xf32>
    %1421 = vector.broadcast %1420 : vector<8x1xf32> to vector<8x96xf32>
    %1422 = arith.mulf %1417, %1421 : vector<8x96xf32>
    %1423 = vector.broadcast %1057 : vector<1x96xf32> to vector<8x96xf32>
    %1424 = arith.mulf %1422, %1423 : vector<8x96xf32>
    %1425 = vector.broadcast %1055 : vector<1x96xf32> to vector<8x96xf32>
    %1426 = arith.addf %1424, %1425 : vector<8x96xf32>
    %1427 = arith.addf %1426, %1374 : vector<8x96xf32>
    %cst_730 = arith.constant 0.000000e+00 : f32
    %1428 = vector.broadcast %cst_730 : f32 to vector<8x96xf32>
    %1429 = arith.maximumf %1427, %1428 : vector<8x96xf32>
    %cst_731 = arith.constant dense<0.000000e+00> : vector<8x60xf32>
    %1430 = tpu.matmul %1429, %1047, %cst_731 {dimension_numbers = #tpu.dot_dimension_numbers<[1], [0], [0], [1], [0, 0, 1, 1], [], []>} : vector<8x96xf32>, vector<96x60xf32>, vector<8x60xf32> -> vector<8x60xf32>
    %1431 = vector.broadcast %1045 : vector<1x60xf32> to vector<8x60xf32>
    %1432 = arith.addf %1430, %1431 : vector<8x60xf32>
    %1433 = tpu.concatenate %1260, %1346 in 1 : vector<8x2xf32>, vector<8x6xf32> -> vector<8x8xf32>
    %1434 = vector.extract_strided_slice %1432 {offsets = [0, 58], sizes = [8, 2], strides = [1, 1]} : vector<8x60xf32> to vector<8x2xf32>
    %1435 = arith.addf %1434, %1 : vector<8x2xf32>
    %1436 = arith.subf %2, %1435 : vector<8x2xf32>
    %cst_732 = arith.constant dense<0.000000e+00> : vector<8x32xf32>
    %1437 = tpu.matmul %1436, %8, %cst_732 {dimension_numbers = #tpu.dot_dimension_numbers<[1], [0], [0], [1], [0, 0, 1, 1], [], []>} : vector<8x2xf32>, vector<2x32xf32>, vector<8x32xf32> -> vector<8x32xf32>
    %1438 = vector.broadcast %7 : vector<1x32xf32> to vector<8x32xf32>
    %1439 = arith.addf %1437, %1438 : vector<8x32xf32>
    %cst_733 = arith.constant 0.000000e+00 : f32
    %1440 = vector.broadcast %cst_733 : f32 to vector<8x32xf32>
    %1441 = arith.maximumf %1439, %1440 : vector<8x32xf32>
    %cst_734 = arith.constant dense<0.000000e+00> : vector<8x32xf32>
    %1442 = tpu.matmul %1441, %11, %cst_734 {dimension_numbers = #tpu.dot_dimension_numbers<[1], [0], [0], [1], [0, 0, 1, 1], [], []>} : vector<8x32xf32>, vector<32x32xf32>, vector<8x32xf32> -> vector<8x32xf32>
    %cst_735 = arith.constant dense<0.000000e+00> : vector<8xf32>
    %1443 = vector.multi_reduction <add>, %1442, %cst_735 [1] : vector<8x32xf32> to vector<8xf32>
    %1444 = vector.shape_cast %1443 : vector<8xf32> to vector<8x1xf32>
    %1445 = arith.mulf %1442, %1442 : vector<8x32xf32>
    %cst_736 = arith.constant dense<0.000000e+00> : vector<8xf32>
    %1446 = vector.multi_reduction <add>, %1445, %cst_736 [1] : vector<8x32xf32> to vector<8xf32>
    %1447 = vector.shape_cast %1446 : vector<8xf32> to vector<8x1xf32>
    %cst_737 = arith.constant 3.125000e-02 : f32
    %1448 = vector.broadcast %cst_737 : f32 to vector<8x1xf32>
    %1449 = arith.mulf %1444, %1448 : vector<8x1xf32>
    %cst_738 = arith.constant 3.125000e-02 : f32
    %1450 = vector.broadcast %cst_738 : f32 to vector<8x1xf32>
    %1451 = arith.mulf %1447, %1450 : vector<8x1xf32>
    %1452 = arith.mulf %1449, %1449 : vector<8x1xf32>
    %1453 = arith.subf %1451, %1452 : vector<8x1xf32>
    %cst_739 = arith.constant 0.000000e+00 : f32
    %1454 = vector.broadcast %cst_739 : f32 to vector<8x1xf32>
    %1455 = arith.maximumf %1453, %1454 : vector<8x1xf32>
    %1456 = vector.broadcast %1449 : vector<8x1xf32> to vector<8x32xf32>
    %1457 = arith.subf %1442, %1456 : vector<8x32xf32>
    %cst_740 = arith.constant 9.99999974E-6 : f32
    %1458 = vector.broadcast %cst_740 : f32 to vector<8x1xf32>
    %1459 = arith.addf %1455, %1458 : vector<8x1xf32>
    %1460 = math.rsqrt %1459 : vector<8x1xf32>
    %1461 = vector.broadcast %1460 : vector<8x1xf32> to vector<8x32xf32>
    %1462 = arith.mulf %1457, %1461 : vector<8x32xf32>
    %1463 = vector.broadcast %10 : vector<1x32xf32> to vector<8x32xf32>
    %1464 = arith.mulf %1462, %1463 : vector<8x32xf32>
    %1465 = vector.broadcast %9 : vector<1x32xf32> to vector<8x32xf32>
    %1466 = arith.addf %1464, %1465 : vector<8x32xf32>
    %cst_741 = arith.constant 0.000000e+00 : f32
    %1467 = vector.broadcast %cst_741 : f32 to vector<8x32xf32>
    %1468 = arith.maximumf %1466, %1467 : vector<8x32xf32>
    %cst_742 = arith.constant dense<0.000000e+00> : vector<8x32xf32>
    %1469 = tpu.matmul %1468, %6, %cst_742 {dimension_numbers = #tpu.dot_dimension_numbers<[1], [0], [0], [1], [0, 0, 1, 1], [], []>} : vector<8x32xf32>, vector<32x32xf32>, vector<8x32xf32> -> vector<8x32xf32>
    %cst_743 = arith.constant dense<0.000000e+00> : vector<8x32xf32>
    %1470 = tpu.matmul %0, %5, %cst_743 {dimension_numbers = #tpu.dot_dimension_numbers<[1], [0], [0], [1], [0, 0, 1, 1], [], []>} : vector<8x32xf32>, vector<32x32xf32>, vector<8x32xf32> -> vector<8x32xf32>
    %1471 = arith.addf %1469, %1470 : vector<8x32xf32>
    %cst_744 = arith.constant dense<0.000000e+00> : vector<8xf32>
    %1472 = vector.multi_reduction <add>, %1471, %cst_744 [1] : vector<8x32xf32> to vector<8xf32>
    %1473 = vector.shape_cast %1472 : vector<8xf32> to vector<8x1xf32>
    %1474 = arith.mulf %1471, %1471 : vector<8x32xf32>
    %cst_745 = arith.constant dense<0.000000e+00> : vector<8xf32>
    %1475 = vector.multi_reduction <add>, %1474, %cst_745 [1] : vector<8x32xf32> to vector<8xf32>
    %1476 = vector.shape_cast %1475 : vector<8xf32> to vector<8x1xf32>
    %cst_746 = arith.constant 3.125000e-02 : f32
    %1477 = vector.broadcast %cst_746 : f32 to vector<8x1xf32>
    %1478 = arith.mulf %1473, %1477 : vector<8x1xf32>
    %cst_747 = arith.constant 3.125000e-02 : f32
    %1479 = vector.broadcast %cst_747 : f32 to vector<8x1xf32>
    %1480 = arith.mulf %1476, %1479 : vector<8x1xf32>
    %1481 = arith.mulf %1478, %1478 : vector<8x1xf32>
    %1482 = arith.subf %1480, %1481 : vector<8x1xf32>
    %cst_748 = arith.constant 0.000000e+00 : f32
    %1483 = vector.broadcast %cst_748 : f32 to vector<8x1xf32>
    %1484 = arith.maximumf %1482, %1483 : vector<8x1xf32>
    %1485 = vector.broadcast %1478 : vector<8x1xf32> to vector<8x32xf32>
    %1486 = arith.subf %1471, %1485 : vector<8x32xf32>
    %cst_749 = arith.constant 9.99999974E-6 : f32
    %1487 = vector.broadcast %cst_749 : f32 to vector<8x1xf32>
    %1488 = arith.addf %1484, %1487 : vector<8x1xf32>
    %1489 = math.rsqrt %1488 : vector<8x1xf32>
    %1490 = vector.broadcast %1489 : vector<8x1xf32> to vector<8x32xf32>
    %1491 = arith.mulf %1486, %1490 : vector<8x32xf32>
    %1492 = vector.broadcast %4 : vector<1x32xf32> to vector<8x32xf32>
    %1493 = arith.mulf %1491, %1492 : vector<8x32xf32>
    %1494 = vector.broadcast %3 : vector<1x32xf32> to vector<8x32xf32>
    %1495 = arith.addf %1493, %1494 : vector<8x32xf32>
    %cst_750 = arith.constant 0.000000e+00 : f32
    %1496 = vector.broadcast %cst_750 : f32 to vector<8x32xf32>
    %1497 = arith.maximumf %1495, %1496 : vector<8x32xf32>
    %cst_751 = arith.constant dense<0.000000e+00> : vector<8x32xf32>
    %1498 = tpu.matmul %1497, %16, %cst_751 {dimension_numbers = #tpu.dot_dimension_numbers<[1], [0], [0], [1], [0, 0, 1, 1], [], []>} : vector<8x32xf32>, vector<32x32xf32>, vector<8x32xf32> -> vector<8x32xf32>
    %cst_752 = arith.constant dense<0.000000e+00> : vector<8xf32>
    %1499 = vector.multi_reduction <add>, %1498, %cst_752 [1] : vector<8x32xf32> to vector<8xf32>
    %1500 = vector.shape_cast %1499 : vector<8xf32> to vector<8x1xf32>
    %1501 = arith.mulf %1498, %1498 : vector<8x32xf32>
    %cst_753 = arith.constant dense<0.000000e+00> : vector<8xf32>
    %1502 = vector.multi_reduction <add>, %1501, %cst_753 [1] : vector<8x32xf32> to vector<8xf32>
    %1503 = vector.shape_cast %1502 : vector<8xf32> to vector<8x1xf32>
    %cst_754 = arith.constant 3.125000e-02 : f32
    %1504 = vector.broadcast %cst_754 : f32 to vector<8x1xf32>
    %1505 = arith.mulf %1500, %1504 : vector<8x1xf32>
    %cst_755 = arith.constant 3.125000e-02 : f32
    %1506 = vector.broadcast %cst_755 : f32 to vector<8x1xf32>
    %1507 = arith.mulf %1503, %1506 : vector<8x1xf32>
    %1508 = arith.mulf %1505, %1505 : vector<8x1xf32>
    %1509 = arith.subf %1507, %1508 : vector<8x1xf32>
    %cst_756 = arith.constant 0.000000e+00 : f32
    %1510 = vector.broadcast %cst_756 : f32 to vector<8x1xf32>
    %1511 = arith.maximumf %1509, %1510 : vector<8x1xf32>
    %1512 = vector.broadcast %1505 : vector<8x1xf32> to vector<8x32xf32>
    %1513 = arith.subf %1498, %1512 : vector<8x32xf32>
    %cst_757 = arith.constant 9.99999974E-6 : f32
    %1514 = vector.broadcast %cst_757 : f32 to vector<8x1xf32>
    %1515 = arith.addf %1511, %1514 : vector<8x1xf32>
    %1516 = math.rsqrt %1515 : vector<8x1xf32>
    %1517 = vector.broadcast %1516 : vector<8x1xf32> to vector<8x32xf32>
    %1518 = arith.mulf %1513, %1517 : vector<8x32xf32>
    %1519 = vector.broadcast %15 : vector<1x32xf32> to vector<8x32xf32>
    %1520 = arith.mulf %1518, %1519 : vector<8x32xf32>
    %1521 = vector.broadcast %14 : vector<1x32xf32> to vector<8x32xf32>
    %1522 = arith.addf %1520, %1521 : vector<8x32xf32>
    %cst_758 = arith.constant 0.000000e+00 : f32
    %1523 = vector.broadcast %cst_758 : f32 to vector<8x32xf32>
    %1524 = arith.maximumf %1522, %1523 : vector<8x32xf32>
    %cst_759 = arith.constant dense<0.000000e+00> : vector<8x32xf32>
    %1525 = tpu.matmul %1524, %19, %cst_759 {dimension_numbers = #tpu.dot_dimension_numbers<[1], [0], [0], [1], [0, 0, 1, 1], [], []>} : vector<8x32xf32>, vector<32x32xf32>, vector<8x32xf32> -> vector<8x32xf32>
    %cst_760 = arith.constant dense<0.000000e+00> : vector<8xf32>
    %1526 = vector.multi_reduction <add>, %1525, %cst_760 [1] : vector<8x32xf32> to vector<8xf32>
    %1527 = vector.shape_cast %1526 : vector<8xf32> to vector<8x1xf32>
    %1528 = arith.mulf %1525, %1525 : vector<8x32xf32>
    %cst_761 = arith.constant dense<0.000000e+00> : vector<8xf32>
    %1529 = vector.multi_reduction <add>, %1528, %cst_761 [1] : vector<8x32xf32> to vector<8xf32>
    %1530 = vector.shape_cast %1529 : vector<8xf32> to vector<8x1xf32>
    %cst_762 = arith.constant 3.125000e-02 : f32
    %1531 = vector.broadcast %cst_762 : f32 to vector<8x1xf32>
    %1532 = arith.mulf %1527, %1531 : vector<8x1xf32>
    %cst_763 = arith.constant 3.125000e-02 : f32
    %1533 = vector.broadcast %cst_763 : f32 to vector<8x1xf32>
    %1534 = arith.mulf %1530, %1533 : vector<8x1xf32>
    %1535 = arith.mulf %1532, %1532 : vector<8x1xf32>
    %1536 = arith.subf %1534, %1535 : vector<8x1xf32>
    %cst_764 = arith.constant 0.000000e+00 : f32
    %1537 = vector.broadcast %cst_764 : f32 to vector<8x1xf32>
    %1538 = arith.maximumf %1536, %1537 : vector<8x1xf32>
    %1539 = vector.broadcast %1532 : vector<8x1xf32> to vector<8x32xf32>
    %1540 = arith.subf %1525, %1539 : vector<8x32xf32>
    %cst_765 = arith.constant 9.99999974E-6 : f32
    %1541 = vector.broadcast %cst_765 : f32 to vector<8x1xf32>
    %1542 = arith.addf %1538, %1541 : vector<8x1xf32>
    %1543 = math.rsqrt %1542 : vector<8x1xf32>
    %1544 = vector.broadcast %1543 : vector<8x1xf32> to vector<8x32xf32>
    %1545 = arith.mulf %1540, %1544 : vector<8x32xf32>
    %1546 = vector.broadcast %18 : vector<1x32xf32> to vector<8x32xf32>
    %1547 = arith.mulf %1545, %1546 : vector<8x32xf32>
    %1548 = vector.broadcast %17 : vector<1x32xf32> to vector<8x32xf32>
    %1549 = arith.addf %1547, %1548 : vector<8x32xf32>
    %1550 = arith.addf %1549, %1497 : vector<8x32xf32>
    %cst_766 = arith.constant 0.000000e+00 : f32
    %1551 = vector.broadcast %cst_766 : f32 to vector<8x32xf32>
    %1552 = arith.maximumf %1550, %1551 : vector<8x32xf32>
    %cst_767 = arith.constant dense<0.000000e+00> : vector<8x1xf32>
    %1553 = tpu.matmul %1552, %13, %cst_767 {dimension_numbers = #tpu.dot_dimension_numbers<[1], [0], [0], [1], [0, 0, 1, 1], [], []>} : vector<8x32xf32>, vector<32x1xf32>, vector<8x1xf32> -> vector<8x1xf32>
    %1554 = vector.broadcast %12 : vector<1x1xf32> to vector<8x1xf32>
    %1555 = arith.addf %1553, %1554 : vector<8x1xf32>
    %1556 = tpu.concatenate %531, %1043, %1555 in 1 : vector<8x1xf32>, vector<8x1xf32>, vector<8x1xf32> -> vector<8x3xf32>
    %cst_768 = arith.constant dense<0xFF800000> : vector<8xf32>
    %1557 = vector.multi_reduction <maximumf>, %1556, %cst_768 [1] : vector<8x3xf32> to vector<8xf32>
    %1558 = vector.shape_cast %1557 : vector<8xf32> to vector<8x1xf32>
    %1559 = vector.broadcast %1558 : vector<8x1xf32> to vector<8x3xf32>
    %1560 = arith.subf %1556, %1559 : vector<8x3xf32>
    %1561 = math.exp %1560 : vector<8x3xf32>
    %cst_769 = arith.constant dense<0.000000e+00> : vector<8xf32>
    %1562 = vector.multi_reduction <add>, %1561, %cst_769 [1] : vector<8x3xf32> to vector<8xf32>
    %1563 = vector.shape_cast %1562 : vector<8xf32> to vector<8x1xf32>
    %1564 = tpu.reciprocal %1563 {approx = true} : vector<8x1xf32> -> vector<8x1xf32>
    %1565 = vector.broadcast %1564 : vector<8x1xf32> to vector<8x3xf32>
    %1566 = arith.mulf %1561, %1565 : vector<8x3xf32>
    %cst_770 = arith.constant 0.000000e+00 : f32
    %1567 = vector.broadcast %cst_770 : f32 to vector<8x49xf32>
    %1568 = tpu.concatenate %408, %920, %1432, %409, %921, %1433, %1566, %1567 in 1 : vector<8x60xf32>, vector<8x60xf32>, vector<8x60xf32>, vector<8x8xf32>, vector<8x8xf32>, vector<8x8xf32>, vector<8x3xf32>, vector<8x49xf32> -> vector<8x256xf32>
    %c0_771 = arith.constant 0 : index
    %c0_772 = arith.constant 0 : index
    %1569 = vector.load %arg60[%c0_771, %c0_772] : memref<8x256xf32, #tpu.memory_space<vmem>>, vector<8x256xf32>
    tpu.vector_store %arg60[%c0_771, %c0_772], %1568 {strides = array<i32>} : memref<8x256xf32, #tpu.memory_space<vmem>>, vector<8x256xf32>,
    return
  }
  func.func @transform_0(%arg0: i32) -> (i32, i32) {
    %c0_i32 = arith.constant 0 : i32
    %c0_i32_0 = arith.constant 0 : i32
    return %arg0, %c0_i32 : i32, i32
  }
  func.func @transform_1(%arg0: i32) -> (i32, i32) {
    %c0_i32 = arith.constant 0 : i32
    %c0_i32_0 = arith.constant 0 : i32
    return %arg0, %c0_i32 : i32, i32
  }
  func.func @transform_2(%arg0: i32) -> (i32, i32) {
    %c0_i32 = arith.constant 0 : i32
    %c0_i32_0 = arith.constant 0 : i32
    return %arg0, %c0_i32 : i32, i32
  }
  func.func @transform_3(%arg0: i32) -> (i32, i32) {
    %c0_i32 = arith.constant 0 : i32
    %c0_i32_0 = arith.constant 0 : i32
    %c0_i32_1 = arith.constant 0 : i32
    return %c0_i32, %c0_i32_0 : i32, i32
  }
  func.func @transform_4(%arg0: i32) -> (i32, i32) {
    %c0_i32 = arith.constant 0 : i32
    %c0_i32_0 = arith.constant 0 : i32
    %c0_i32_1 = arith.constant 0 : i32
    return %c0_i32, %c0_i32_0 : i32, i32
  }
  func.func @transform_5(%arg0: i32) -> (i32, i32) {
    %c0_i32 = arith.constant 0 : i32
    %c0_i32_0 = arith.constant 0 : i32
    %c0_i32_1 = arith.constant 0 : i32
    return %c0_i32, %c0_i32_0 : i32, i32
  }
  func.func @transform_6(%arg0: i32) -> (i32, i32) {
    %c0_i32 = arith.constant 0 : i32
    %c0_i32_0 = arith.constant 0 : i32
    %c0_i32_1 = arith.constant 0 : i32
    return %c0_i32, %c0_i32_0 : i32, i32
  }
  func.func @transform_7(%arg0: i32) -> (i32, i32) {
    %c0_i32 = arith.constant 0 : i32
    %c0_i32_0 = arith.constant 0 : i32
    %c0_i32_1 = arith.constant 0 : i32
    return %c0_i32, %c0_i32_0 : i32, i32
  }
  func.func @transform_8(%arg0: i32) -> (i32, i32) {
    %c0_i32 = arith.constant 0 : i32
    %c0_i32_0 = arith.constant 0 : i32
    %c0_i32_1 = arith.constant 0 : i32
    return %c0_i32, %c0_i32_0 : i32, i32
  }
  func.func @transform_9(%arg0: i32) -> (i32, i32) {
    %c0_i32 = arith.constant 0 : i32
    %c0_i32_0 = arith.constant 0 : i32
    %c0_i32_1 = arith.constant 0 : i32
    return %c0_i32, %c0_i32_0 : i32, i32
  }
  func.func @transform_10(%arg0: i32) -> (i32, i32) {
    %c0_i32 = arith.constant 0 : i32
    %c0_i32_0 = arith.constant 0 : i32
    %c0_i32_1 = arith.constant 0 : i32
    return %c0_i32, %c0_i32_0 : i32, i32
  }
  func.func @transform_11(%arg0: i32) -> (i32, i32) {
    %c0_i32 = arith.constant 0 : i32
    %c0_i32_0 = arith.constant 0 : i32
    %c0_i32_1 = arith.constant 0 : i32
    return %c0_i32, %c0_i32_0 : i32, i32
  }
  func.func @transform_12(%arg0: i32) -> (i32, i32) {
    %c0_i32 = arith.constant 0 : i32
    %c0_i32_0 = arith.constant 0 : i32
    %c0_i32_1 = arith.constant 0 : i32
    return %c0_i32, %c0_i32_0 : i32, i32
  }
  func.func @transform_13(%arg0: i32) -> (i32, i32) {
    %c0_i32 = arith.constant 0 : i32
    %c0_i32_0 = arith.constant 0 : i32
    %c0_i32_1 = arith.constant 0 : i32
    return %c0_i32, %c0_i32_0 : i32, i32
  }
  func.func @transform_14(%arg0: i32) -> (i32, i32) {
    %c0_i32 = arith.constant 0 : i32
    %c0_i32_0 = arith.constant 0 : i32
    %c0_i32_1 = arith.constant 0 : i32
    return %c0_i32, %c0_i32_0 : i32, i32
  }
  func.func @transform_15(%arg0: i32) -> (i32, i32) {
    %c0_i32 = arith.constant 0 : i32
    %c0_i32_0 = arith.constant 0 : i32
    %c0_i32_1 = arith.constant 0 : i32
    return %c0_i32, %c0_i32_0 : i32, i32
  }
  func.func @transform_16(%arg0: i32) -> (i32, i32) {
    %c0_i32 = arith.constant 0 : i32
    %c0_i32_0 = arith.constant 0 : i32
    %c0_i32_1 = arith.constant 0 : i32
    return %c0_i32, %c0_i32_0 : i32, i32
  }
  func.func @transform_17(%arg0: i32) -> (i32, i32) {
    %c0_i32 = arith.constant 0 : i32
    %c0_i32_0 = arith.constant 0 : i32
    %c0_i32_1 = arith.constant 0 : i32
    return %c0_i32, %c0_i32_0 : i32, i32
  }
  func.func @transform_18(%arg0: i32) -> (i32, i32) {
    %c0_i32 = arith.constant 0 : i32
    %c0_i32_0 = arith.constant 0 : i32
    %c0_i32_1 = arith.constant 0 : i32
    return %c0_i32, %c0_i32_0 : i32, i32
  }
  func.func @transform_19(%arg0: i32) -> (i32, i32) {
    %c0_i32 = arith.constant 0 : i32
    %c0_i32_0 = arith.constant 0 : i32
    %c0_i32_1 = arith.constant 0 : i32
    return %c0_i32, %c0_i32_0 : i32, i32
  }
  func.func @transform_20(%arg0: i32) -> (i32, i32, i32) {
    %c0_i32 = arith.constant 0 : i32
    %c0_i32_0 = arith.constant 0 : i32
    %c0_i32_1 = arith.constant 0 : i32
    %c0_i32_2 = arith.constant 0 : i32
    return %c0_i32, %c0_i32_0, %c0_i32_1 : i32, i32, i32
  }
  func.func @transform_21(%arg0: i32) -> (i32, i32, i32) {
    %c0_i32 = arith.constant 0 : i32
    %c0_i32_0 = arith.constant 0 : i32
    %c0_i32_1 = arith.constant 0 : i32
    %c0_i32_2 = arith.constant 0 : i32
    return %c0_i32, %c0_i32_0, %c0_i32_1 : i32, i32, i32
  }
  func.func @transform_22(%arg0: i32) -> (i32, i32, i32) {
    %c0_i32 = arith.constant 0 : i32
    %c0_i32_0 = arith.constant 0 : i32
    %c0_i32_1 = arith.constant 0 : i32
    %c0_i32_2 = arith.constant 0 : i32
    return %c0_i32, %c0_i32_0, %c0_i32_1 : i32, i32, i32
  }
  func.func @transform_23(%arg0: i32) -> (i32, i32, i32) {
    %c0_i32 = arith.constant 0 : i32
    %c0_i32_0 = arith.constant 0 : i32
    %c0_i32_1 = arith.constant 0 : i32
    %c0_i32_2 = arith.constant 0 : i32
    return %c0_i32, %c0_i32_0, %c0_i32_1 : i32, i32, i32
  }
  func.func @transform_24(%arg0: i32) -> (i32, i32, i32) {
    %c0_i32 = arith.constant 0 : i32
    %c0_i32_0 = arith.constant 0 : i32
    %c0_i32_1 = arith.constant 0 : i32
    %c0_i32_2 = arith.constant 0 : i32
    return %c0_i32, %c0_i32_0, %c0_i32_1 : i32, i32, i32
  }
  func.func @transform_25(%arg0: i32) -> (i32, i32, i32) {
    %c0_i32 = arith.constant 0 : i32
    %c0_i32_0 = arith.constant 0 : i32
    %c0_i32_1 = arith.constant 0 : i32
    %c0_i32_2 = arith.constant 0 : i32
    return %c0_i32, %c0_i32_0, %c0_i32_1 : i32, i32, i32
  }
  func.func @transform_26(%arg0: i32) -> (i32, i32, i32) {
    %c0_i32 = arith.constant 0 : i32
    %c0_i32_0 = arith.constant 0 : i32
    %c0_i32_1 = arith.constant 0 : i32
    %c0_i32_2 = arith.constant 0 : i32
    return %c0_i32, %c0_i32_0, %c0_i32_1 : i32, i32, i32
  }
  func.func @transform_27(%arg0: i32) -> (i32, i32, i32) {
    %c0_i32 = arith.constant 0 : i32
    %c0_i32_0 = arith.constant 0 : i32
    %c0_i32_1 = arith.constant 0 : i32
    %c0_i32_2 = arith.constant 0 : i32
    return %c0_i32, %c0_i32_0, %c0_i32_1 : i32, i32, i32
  }
  func.func @transform_28(%arg0: i32) -> (i32, i32, i32) {
    %c0_i32 = arith.constant 0 : i32
    %c0_i32_0 = arith.constant 0 : i32
    %c0_i32_1 = arith.constant 0 : i32
    %c0_i32_2 = arith.constant 0 : i32
    return %c0_i32, %c0_i32_0, %c0_i32_1 : i32, i32, i32
  }
  func.func @transform_29(%arg0: i32) -> (i32, i32, i32) {
    %c0_i32 = arith.constant 0 : i32
    %c0_i32_0 = arith.constant 0 : i32
    %c0_i32_1 = arith.constant 0 : i32
    %c0_i32_2 = arith.constant 0 : i32
    return %c0_i32, %c0_i32_0, %c0_i32_1 : i32, i32, i32
  }
  func.func @transform_30(%arg0: i32) -> (i32, i32, i32) {
    %c0_i32 = arith.constant 0 : i32
    %c0_i32_0 = arith.constant 0 : i32
    %c0_i32_1 = arith.constant 0 : i32
    %c0_i32_2 = arith.constant 0 : i32
    return %c0_i32, %c0_i32_0, %c0_i32_1 : i32, i32, i32
  }
  func.func @transform_31(%arg0: i32) -> (i32, i32, i32) {
    %c0_i32 = arith.constant 0 : i32
    %c0_i32_0 = arith.constant 0 : i32
    %c0_i32_1 = arith.constant 0 : i32
    %c0_i32_2 = arith.constant 0 : i32
    return %c0_i32, %c0_i32_0, %c0_i32_1 : i32, i32, i32
  }
  func.func @transform_32(%arg0: i32) -> (i32, i32, i32) {
    %c0_i32 = arith.constant 0 : i32
    %c0_i32_0 = arith.constant 0 : i32
    %c0_i32_1 = arith.constant 0 : i32
    %c0_i32_2 = arith.constant 0 : i32
    return %c0_i32, %c0_i32_0, %c0_i32_1 : i32, i32, i32
  }
  func.func @transform_33(%arg0: i32) -> (i32, i32, i32) {
    %c0_i32 = arith.constant 0 : i32
    %c0_i32_0 = arith.constant 0 : i32
    %c0_i32_1 = arith.constant 0 : i32
    %c0_i32_2 = arith.constant 0 : i32
    return %c0_i32, %c0_i32_0, %c0_i32_1 : i32, i32, i32
  }
  func.func @transform_34(%arg0: i32) -> (i32, i32, i32) {
    %c0_i32 = arith.constant 0 : i32
    %c0_i32_0 = arith.constant 0 : i32
    %c0_i32_1 = arith.constant 0 : i32
    %c0_i32_2 = arith.constant 0 : i32
    return %c0_i32, %c0_i32_0, %c0_i32_1 : i32, i32, i32
  }
  func.func @transform_35(%arg0: i32) -> (i32, i32, i32) {
    %c0_i32 = arith.constant 0 : i32
    %c0_i32_0 = arith.constant 0 : i32
    %c0_i32_1 = arith.constant 0 : i32
    %c0_i32_2 = arith.constant 0 : i32
    return %c0_i32, %c0_i32_0, %c0_i32_1 : i32, i32, i32
  }
  func.func @transform_36(%arg0: i32) -> (i32, i32, i32) {
    %c0_i32 = arith.constant 0 : i32
    %c0_i32_0 = arith.constant 0 : i32
    %c0_i32_1 = arith.constant 0 : i32
    %c0_i32_2 = arith.constant 0 : i32
    return %c0_i32, %c0_i32_0, %c0_i32_1 : i32, i32, i32
  }
  func.func @transform_37(%arg0: i32) -> (i32, i32, i32) {
    %c0_i32 = arith.constant 0 : i32
    %c0_i32_0 = arith.constant 0 : i32
    %c0_i32_1 = arith.constant 0 : i32
    %c0_i32_2 = arith.constant 0 : i32
    return %c0_i32, %c0_i32_0, %c0_i32_1 : i32, i32, i32
  }
  func.func @transform_38(%arg0: i32) -> (i32, i32, i32) {
    %c0_i32 = arith.constant 0 : i32
    %c0_i32_0 = arith.constant 0 : i32
    %c0_i32_1 = arith.constant 0 : i32
    %c0_i32_2 = arith.constant 0 : i32
    return %c0_i32, %c0_i32_0, %c0_i32_1 : i32, i32, i32
  }
  func.func @transform_39(%arg0: i32) -> (i32, i32, i32) {
    %c0_i32 = arith.constant 0 : i32
    %c0_i32_0 = arith.constant 0 : i32
    %c0_i32_1 = arith.constant 0 : i32
    %c0_i32_2 = arith.constant 0 : i32
    return %c0_i32, %c0_i32_0, %c0_i32_1 : i32, i32, i32
  }
  func.func @transform_40(%arg0: i32) -> (i32, i32, i32) {
    %c0_i32 = arith.constant 0 : i32
    %c0_i32_0 = arith.constant 0 : i32
    %c0_i32_1 = arith.constant 0 : i32
    %c0_i32_2 = arith.constant 0 : i32
    return %c0_i32, %c0_i32_0, %c0_i32_1 : i32, i32, i32
  }
  func.func @transform_41(%arg0: i32) -> (i32, i32, i32) {
    %c0_i32 = arith.constant 0 : i32
    %c0_i32_0 = arith.constant 0 : i32
    %c0_i32_1 = arith.constant 0 : i32
    %c0_i32_2 = arith.constant 0 : i32
    return %c0_i32, %c0_i32_0, %c0_i32_1 : i32, i32, i32
  }
  func.func @transform_42(%arg0: i32) -> (i32, i32, i32) {
    %c0_i32 = arith.constant 0 : i32
    %c0_i32_0 = arith.constant 0 : i32
    %c0_i32_1 = arith.constant 0 : i32
    %c0_i32_2 = arith.constant 0 : i32
    return %c0_i32, %c0_i32_0, %c0_i32_1 : i32, i32, i32
  }
  func.func @transform_43(%arg0: i32) -> (i32, i32, i32) {
    %c0_i32 = arith.constant 0 : i32
    %c0_i32_0 = arith.constant 0 : i32
    %c0_i32_1 = arith.constant 0 : i32
    %c0_i32_2 = arith.constant 0 : i32
    return %c0_i32, %c0_i32_0, %c0_i32_1 : i32, i32, i32
  }
  func.func @transform_44(%arg0: i32) -> (i32, i32, i32) {
    %c0_i32 = arith.constant 0 : i32
    %c0_i32_0 = arith.constant 0 : i32
    %c0_i32_1 = arith.constant 0 : i32
    %c0_i32_2 = arith.constant 0 : i32
    return %c0_i32, %c0_i32_0, %c0_i32_1 : i32, i32, i32
  }
  func.func @transform_45(%arg0: i32) -> (i32, i32, i32) {
    %c0_i32 = arith.constant 0 : i32
    %c0_i32_0 = arith.constant 0 : i32
    %c0_i32_1 = arith.constant 0 : i32
    %c0_i32_2 = arith.constant 0 : i32
    return %c0_i32, %c0_i32_0, %c0_i32_1 : i32, i32, i32
  }
  func.func @transform_46(%arg0: i32) -> (i32, i32, i32) {
    %c0_i32 = arith.constant 0 : i32
    %c0_i32_0 = arith.constant 0 : i32
    %c0_i32_1 = arith.constant 0 : i32
    %c0_i32_2 = arith.constant 0 : i32
    return %c0_i32, %c0_i32_0, %c0_i32_1 : i32, i32, i32
  }
  func.func @transform_47(%arg0: i32) -> (i32, i32, i32) {
    %c0_i32 = arith.constant 0 : i32
    %c0_i32_0 = arith.constant 0 : i32
    %c0_i32_1 = arith.constant 0 : i32
    %c0_i32_2 = arith.constant 0 : i32
    return %c0_i32, %c0_i32_0, %c0_i32_1 : i32, i32, i32
  }
  func.func @transform_48(%arg0: i32) -> (i32, i32, i32) {
    %c0_i32 = arith.constant 0 : i32
    %c0_i32_0 = arith.constant 0 : i32
    %c0_i32_1 = arith.constant 0 : i32
    %c0_i32_2 = arith.constant 0 : i32
    return %c0_i32, %c0_i32_0, %c0_i32_1 : i32, i32, i32
  }
  func.func @transform_49(%arg0: i32) -> (i32, i32, i32) {
    %c0_i32 = arith.constant 0 : i32
    %c0_i32_0 = arith.constant 0 : i32
    %c0_i32_1 = arith.constant 0 : i32
    %c0_i32_2 = arith.constant 0 : i32
    return %c0_i32, %c0_i32_0, %c0_i32_1 : i32, i32, i32
  }
  func.func @transform_50(%arg0: i32) -> (i32, i32, i32) {
    %c0_i32 = arith.constant 0 : i32
    %c0_i32_0 = arith.constant 0 : i32
    %c0_i32_1 = arith.constant 0 : i32
    %c0_i32_2 = arith.constant 0 : i32
    return %c0_i32, %c0_i32_0, %c0_i32_1 : i32, i32, i32
  }
  func.func @transform_51(%arg0: i32) -> (i32, i32, i32) {
    %c0_i32 = arith.constant 0 : i32
    %c0_i32_0 = arith.constant 0 : i32
    %c0_i32_1 = arith.constant 0 : i32
    %c0_i32_2 = arith.constant 0 : i32
    return %c0_i32, %c0_i32_0, %c0_i32_1 : i32, i32, i32
  }
  func.func @transform_52(%arg0: i32) -> (i32, i32, i32) {
    %c0_i32 = arith.constant 0 : i32
    %c0_i32_0 = arith.constant 0 : i32
    %c0_i32_1 = arith.constant 0 : i32
    %c0_i32_2 = arith.constant 0 : i32
    return %c0_i32, %c0_i32_0, %c0_i32_1 : i32, i32, i32
  }
  func.func @transform_53(%arg0: i32) -> (i32, i32, i32) {
    %c0_i32 = arith.constant 0 : i32
    %c0_i32_0 = arith.constant 0 : i32
    %c0_i32_1 = arith.constant 0 : i32
    %c0_i32_2 = arith.constant 0 : i32
    return %c0_i32, %c0_i32_0, %c0_i32_1 : i32, i32, i32
  }
  func.func @transform_54(%arg0: i32) -> (i32, i32, i32) {
    %c0_i32 = arith.constant 0 : i32
    %c0_i32_0 = arith.constant 0 : i32
    %c0_i32_1 = arith.constant 0 : i32
    %c0_i32_2 = arith.constant 0 : i32
    return %c0_i32, %c0_i32_0, %c0_i32_1 : i32, i32, i32
  }
  func.func @transform_55(%arg0: i32) -> (i32, i32, i32) {
    %c0_i32 = arith.constant 0 : i32
    %c0_i32_0 = arith.constant 0 : i32
    %c0_i32_1 = arith.constant 0 : i32
    %c0_i32_2 = arith.constant 0 : i32
    return %c0_i32, %c0_i32_0, %c0_i32_1 : i32, i32, i32
  }
  func.func @transform_56(%arg0: i32) -> (i32, i32, i32) {
    %c0_i32 = arith.constant 0 : i32
    %c0_i32_0 = arith.constant 0 : i32
    %c0_i32_1 = arith.constant 0 : i32
    %c0_i32_2 = arith.constant 0 : i32
    return %c0_i32, %c0_i32_0, %c0_i32_1 : i32, i32, i32
  }
  func.func @transform_57(%arg0: i32) -> (i32, i32, i32) {
    %c0_i32 = arith.constant 0 : i32
    %c0_i32_0 = arith.constant 0 : i32
    %c0_i32_1 = arith.constant 0 : i32
    %c0_i32_2 = arith.constant 0 : i32
    return %c0_i32, %c0_i32_0, %c0_i32_1 : i32, i32, i32
  }
  func.func @transform_58(%arg0: i32) -> (i32, i32, i32) {
    %c0_i32 = arith.constant 0 : i32
    %c0_i32_0 = arith.constant 0 : i32
    %c0_i32_1 = arith.constant 0 : i32
    %c0_i32_2 = arith.constant 0 : i32
    return %c0_i32, %c0_i32_0, %c0_i32_1 : i32, i32, i32
  }
  func.func @transform_59(%arg0: i32) -> (i32, i32) {
    %c0_i32 = arith.constant 0 : i32
    %c0_i32_0 = arith.constant 0 : i32
    return %arg0, %c0_i32 : i32, i32
  }
}

</mosaic_0001>

<llo_original>
// kernel: tpu_custom_call.1
$region0: #{tpu_custom_call.1}
  #allocation0 [shape = 'u32[]', space=smem, size = 0x4, offset = 0x4, fixed_abs, tag = 'smem constant byte address 0x4 - core index']
  #allocation1 [shape = 'u32[144,128]{1,0:T(1,128)}', space=vmem, size = 0x12000, scoped, tag = 'internal scratch']
  #allocation2 [shape = 'f32[1,1]{1,0:T(1,128)S(1)}', space=vmem, size = 0x200, scoped, tag = 'scoped memory for tpu_custom_call.1']
  %s0 = inlined_call_operand.smem [shape: u32[60], index: -1, kind: input, shape index: {}]
  %s1 = sld [smem:[%s0]]
  %s2 = scalar_lea.smem %s0, 1
  %s3 = sld [smem:[%s2]]
  %s4 = scalar_lea.smem %s0, 2
  %s5 = sld [smem:[%s4]]
  %s6 = scalar_lea.smem %s0, 3
  %s7 = sld [smem:[%s6]]
  %s8 = scalar_lea.smem %s0, 4
  %s9 = sld [smem:[%s8]]
  %s10 = scalar_lea.smem %s0, 5
  %s11 = sld [smem:[%s10]]
  %s12 = scalar_lea.smem %s0, 6
  %s13 = sld [smem:[%s12]]
  %s14 = scalar_lea.smem %s0, 7
  %s15 = sld [smem:[%s14]]
  %s16 = scalar_lea.smem %s0, 8
  %s17 = sld [smem:[%s16]]
  %s18 = scalar_lea.smem %s0, 9
  %s19 = sld [smem:[%s18]]
  %s20 = scalar_lea.smem %s0, 10
  %s21 = sld [smem:[%s20]]
  %s22 = scalar_lea.smem %s0, 11
  %s23 = sld [smem:[%s22]]
  %s24 = scalar_lea.smem %s0, 12
  %s25 = sld [smem:[%s24]]
  %s26 = scalar_lea.smem %s0, 13
  %s27 = sld [smem:[%s26]]
  %s28 = scalar_lea.smem %s0, 14
  %s29 = sld [smem:[%s28]]
  %s30 = scalar_lea.smem %s0, 15
  %s31 = sld [smem:[%s30]]
  %s32 = scalar_lea.smem %s0, 16
  %s33 = sld [smem:[%s32]]
  %s34 = scalar_lea.smem %s0, 17
  %s35 = sld [smem:[%s34]]
  %s36 = scalar_lea.smem %s0, 18
  %s37 = sld [smem:[%s36]]
  %s38 = scalar_lea.smem %s0, 19
  %s39 = sld [smem:[%s38]]
  %s40 = scalar_lea.smem %s0, 20
  %s41 = sld [smem:[%s40]]
  %s42 = scalar_lea.smem %s0, 21
  %s43 = sld [smem:[%s42]]
  %s44 = scalar_lea.smem %s0, 22
  %s45 = sld [smem:[%s44]]
  %s46 = scalar_lea.smem %s0, 23
  %s47 = sld [smem:[%s46]]
  %s48 = scalar_lea.smem %s0, 24
  %s49 = sld [smem:[%s48]]
  %s50 = scalar_lea.smem %s0, 25
  %s51 = sld [smem:[%s50]]
  %s52 = scalar_lea.smem %s0, 26
  %s53 = sld [smem:[%s52]]
  %s54 = scalar_lea.smem %s0, 27
  %s55 = sld [smem:[%s54]]
  %s56 = scalar_lea.smem %s0, 28
  %s57 = sld [smem:[%s56]]
  %s58 = scalar_lea.smem %s0, 29
  %s59 = sld [smem:[%s58]]
  %s60 = scalar_lea.smem %s0, 30
  %s61 = sld [smem:[%s60]]
  %s62 = scalar_lea.smem %s0, 31
  %s63 = sld [smem:[%s62]]
  %s64 = scalar_lea.smem %s0, 32
  %s65 = sld [smem:[%s64]]
  %s66 = scalar_lea.smem %s0, 33
  %s67 = sld [smem:[%s66]]
  %s68 = scalar_lea.smem %s0, 34
  %s69 = sld [smem:[%s68]]
  %s70 = scalar_lea.smem %s0, 35
  %s71 = sld [smem:[%s70]]
  %s72 = scalar_lea.smem %s0, 36
  %s73 = sld [smem:[%s72]]
  %s74 = scalar_lea.smem %s0, 37
  %s75 = sld [smem:[%s74]]
  %s76 = scalar_lea.smem %s0, 38
  %s77 = sld [smem:[%s76]]
  %s78 = scalar_lea.smem %s0, 39
  %s79 = sld [smem:[%s78]]
  %s80 = scalar_lea.smem %s0, 40
  %s81 = sld [smem:[%s80]]
  %s82 = scalar_lea.smem %s0, 41
  %s83 = sld [smem:[%s82]]
  %s84 = scalar_lea.smem %s0, 42
  %s85 = sld [smem:[%s84]]
  %s86 = scalar_lea.smem %s0, 43
  %s87 = sld [smem:[%s86]]
  %s88 = scalar_lea.smem %s0, 44
  %s89 = sld [smem:[%s88]]
  %s90 = scalar_lea.smem %s0, 45
  %s91 = sld [smem:[%s90]]
  %s92 = scalar_lea.smem %s0, 46
  %s93 = sld [smem:[%s92]]
  %s94 = scalar_lea.smem %s0, 47
  %s95 = sld [smem:[%s94]]
  %s96 = scalar_lea.smem %s0, 48
  %s97 = sld [smem:[%s96]]
  %s98 = scalar_lea.smem %s0, 49
  %s99 = sld [smem:[%s98]]
  %s100 = scalar_lea.smem %s0, 50
  %s101 = sld [smem:[%s100]]
  %s102 = scalar_lea.smem %s0, 51
  %s103 = sld [smem:[%s102]]
  %s104 = scalar_lea.smem %s0, 52
  %s105 = sld [smem:[%s104]]
  %s106 = scalar_lea.smem %s0, 53
  %s107 = sld [smem:[%s106]]
  %s108 = scalar_lea.smem %s0, 54
  %s109 = sld [smem:[%s108]]
  %s110 = scalar_lea.smem %s0, 55
  %s111 = sld [smem:[%s110]]
  %s112 = scalar_lea.smem %s0, 56
  %s113 = sld [smem:[%s112]]
  %s114 = scalar_lea.smem %s0, 57
  %s115 = sld [smem:[%s114]]
  %s116 = scalar_lea.smem %s0, 58
  %s117 = sld [smem:[%s116]]
  %s118 = scalar_lea.smem %s0, 59
  %s119 = sld [smem:[%s118]]
  %s120 = sld [smem:[#allocation0]]
  $region418: #{tpu_custom_call.1} parent=0
    _
  %s122 = ssub.s32 1, %s120
  %s123 = scalar_select 0, %s122, %s120
  %v124 = vstv %s25
  %125 = vst [vmem:[#allocation2] sm:$0x1] %v124
  $region1: #{tpu_custom_call.1} parent=0
    #allocation3 [shape = 'u8[4096]{0}', space=vmem, size = 0x1000, scoped, tag = 'input window, operand 0, single buffered']
    #allocation4 [shape = 's32[1]{0}', space=sflag, size = 0x4, scoped, tag = 'scoped memory for tpu_custom_call.1']
    #allocation5 [shape = 's32[1]{0}', space=sflag, size = 0x4, scoped, tag = 'scoped memory for tpu_custom_call.1']
    #allocation6 [shape = 'u8[512]{0}', space=vmem, size = 0x400, scoped, tag = 'input window, operand 3, single buffered']
    #allocation7 [shape = 's32[1]{0}', space=sflag, size = 0x4, scoped, tag = 'scoped memory for tpu_custom_call.1']
    #allocation8 [shape = 'u8[512]{0}', space=vmem, size = 0x400, scoped, tag = 'input window, operand 4, single buffered']
    #allocation9 [shape = 'u8[16384]{0}', space=vmem, size = 0x4000, scoped, tag = 'input window, operand 5, single buffered']
    #allocation10 [shape = 's32[1]{0}', space=sflag, size = 0x4, scoped, tag = 'scoped memory for tpu_custom_call.1']
    #allocation11 [shape = 'u8[16384]{0}', space=vmem, size = 0x4000, scoped, tag = 'input window, operand 6, single buffered']
    #allocation12 [shape = 'u8[512]{0}', space=vmem, size = 0x400, scoped, tag = 'input window, operand 7, single buffered']
    #allocation13 [shape = 's32[1]{0}', space=sflag, size = 0x4, scoped, tag = 'scoped memory for tpu_custom_call.1']
    #allocation14 [shape = 'u8[512]{0}', space=vmem, size = 0x400, scoped, tag = 'input window, operand 9, single buffered']
    #allocation15 [shape = 'u8[512]{0}', space=vmem, size = 0x400, scoped, tag = 'input window, operand 10, single buffered']
    #allocation16 [shape = 's32[1]{0}', space=sflag, size = 0x4, scoped, tag = 'scoped memory for tpu_custom_call.1']
    #allocation17 [shape = 'u8[16384]{0}', space=vmem, size = 0x4000, scoped, tag = 'input window, operand 11, single buffered']
    #allocation18 [shape = 'u8[512]{0}', space=vmem, size = 0x400, scoped, tag = 'input window, operand 14, single buffered']
    #allocation19 [shape = 's32[1]{0}', space=sflag, size = 0x4, scoped, tag = 'scoped memory for tpu_custom_call.1']
    #allocation20 [shape = 'u8[512]{0}', space=vmem, size = 0x400, scoped, tag = 'input window, operand 15, single buffered']
    #allocation21 [shape = 'u8[16384]{0}', space=vmem, size = 0x4000, scoped, tag = 'input window, operand 16, single buffered']
    #allocation22 [shape = 's32[1]{0}', space=sflag, size = 0x4, scoped, tag = 'scoped memory for tpu_custom_call.1']
    #allocation23 [shape = 'u8[512]{0}', space=vmem, size = 0x400, scoped, tag = 'input window, operand 17, single buffered']
    #allocation24 [shape = 'u8[512]{0}', space=vmem, size = 0x400, scoped, tag = 'input window, operand 18, single buffered']
    #allocation25 [shape = 's32[1]{0}', space=sflag, size = 0x4, scoped, tag = 'scoped memory for tpu_custom_call.1']
    #allocation26 [shape = 'u8[16384]{0}', space=vmem, size = 0x4000, scoped, tag = 'input window, operand 19, single buffered']
    #allocation27 [shape = 'u8[1536]{0}', space=vmem, size = 0x800, scoped, tag = 'input window, operand 20, single buffered']
    #allocation28 [shape = 's32[1]{0}', space=sflag, size = 0x4, scoped, tag = 'scoped memory for tpu_custom_call.1']
    #allocation29 [shape = 'u8[1536]{0}', space=vmem, size = 0x800, scoped, tag = 'input window, operand 22, single buffered']
    #allocation30 [shape = 'u8[1536]{0}', space=vmem, size = 0x800, scoped, tag = 'input window, operand 23, single buffered']
    #allocation31 [shape = 's32[1]{0}', space=sflag, size = 0x4, scoped, tag = 'scoped memory for tpu_custom_call.1']
    #allocation32 [shape = 'u8[1536]{0}', space=vmem, size = 0x800, scoped, tag = 'input window, operand 25, single buffered']
    #allocation33 [shape = 'u8[1536]{0}', space=vmem, size = 0x800, scoped, tag = 'input window, operand 26, single buffered']
    #allocation34 [shape = 's32[1]{0}', space=sflag, size = 0x4, scoped, tag = 'scoped memory for tpu_custom_call.1']
    #allocation35 [shape = 'u8[1536]{0}', space=vmem, size = 0x800, scoped, tag = 'input window, operand 28, single buffered']
    #allocation36 [shape = 'u8[1536]{0}', space=vmem, size = 0x800, scoped, tag = 'input window, operand 30, single buffered']
    #allocation37 [shape = 's32[1]{0}', space=sflag, size = 0x4, scoped, tag = 'scoped memory for tpu_custom_call.1']
    #allocation38 [shape = 'u8[1536]{0}', space=vmem, size = 0x800, scoped, tag = 'input window, operand 31, single buffered']
    #allocation39 [shape = 'u8[1536]{0}', space=vmem, size = 0x800, scoped, tag = 'input window, operand 33, single buffered']
    #allocation40 [shape = 's32[1]{0}', space=sflag, size = 0x4, scoped, tag = 'scoped memory for tpu_custom_call.1']
    #allocation41 [shape = 'u8[1536]{0}', space=vmem, size = 0x800, scoped, tag = 'input window, operand 34, single buffered']
    #allocation42 [shape = 'u8[1536]{0}', space=vmem, size = 0x800, scoped, tag = 'input window, operand 38, single buffered']
    #allocation43 [shape = 's32[1]{0}', space=sflag, size = 0x4, scoped, tag = 'scoped memory for tpu_custom_call.1']
    #allocation44 [shape = 'u8[1536]{0}', space=vmem, size = 0x800, scoped, tag = 'input window, operand 39, single buffered']
    #allocation45 [shape = 'u8[24576]{0}', space=vmem, size = 0x6000, scoped, tag = 'input window, operand 40, single buffered']
    #allocation46 [shape = 's32[1]{0}', space=sflag, size = 0x4, scoped, tag = 'scoped memory for tpu_custom_call.1']
    #allocation47 [shape = 'u8[1536]{0}', space=vmem, size = 0x800, scoped, tag = 'input window, operand 41, single buffered']
    #allocation48 [shape = 'u8[1536]{0}', space=vmem, size = 0x800, scoped, tag = 'input window, operand 42, single buffered']
    #allocation49 [shape = 's32[1]{0}', space=sflag, size = 0x4, scoped, tag = 'scoped memory for tpu_custom_call.1']
    #allocation50 [shape = 'u8[24576]{0}', space=vmem, size = 0x6000, scoped, tag = 'input window, operand 43, single buffered']
    #allocation51 [shape = 'u8[1536]{0}', space=vmem, size = 0x800, scoped, tag = 'input window, operand 44, single buffered']
    #allocation52 [shape = 's32[1]{0}', space=sflag, size = 0x4, scoped, tag = 'scoped memory for tpu_custom_call.1']
    #allocation53 [shape = 'u8[1536]{0}', space=vmem, size = 0x800, scoped, tag = 'input window, operand 45, single buffered']
    #allocation54 [shape = 'u8[12288]{0}', space=vmem, size = 0x3000, scoped, tag = 'input window, operand 46, single buffered']
    #allocation55 [shape = 's32[1]{0}', space=sflag, size = 0x4, scoped, tag = 'scoped memory for tpu_custom_call.1']
    #allocation56 [shape = 'u8[1536]{0}', space=vmem, size = 0x800, scoped, tag = 'input window, operand 47, single buffered']
    #allocation57 [shape = 'u8[1536]{0}', space=vmem, size = 0x800, scoped, tag = 'input window, operand 48, single buffered']
    #allocation58 [shape = 's32[1]{0}', space=sflag, size = 0x4, scoped, tag = 'scoped memory for tpu_custom_call.1']
    #allocation59 [shape = 'u8[3072]{0}', space=vmem, size = 0xc00, scoped, tag = 'input window, operand 49, single buffered']
    #allocation60 [shape = 'u8[1536]{0}', space=vmem, size = 0x800, scoped, tag = 'input window, operand 50, single buffered']
    #allocation61 [shape = 's32[1]{0}', space=sflag, size = 0x4, scoped, tag = 'scoped memory for tpu_custom_call.1']
    #allocation62 [shape = 'u8[1536]{0}', space=vmem, size = 0x800, scoped, tag = 'input window, operand 51, single buffered']
    #allocation63 [shape = 'u8[1536]{0}', space=vmem, size = 0x800, scoped, tag = 'input window, operand 53, single buffered']
    #allocation64 [shape = 's32[1]{0}', space=sflag, size = 0x4, scoped, tag = 'scoped memory for tpu_custom_call.1']
    #allocation65 [shape = 'u8[1536]{0}', space=vmem, size = 0x800, scoped, tag = 'input window, operand 54, single buffered']
    #allocation66 [shape = 'u8[1536]{0}', space=vmem, size = 0x800, scoped, tag = 'input window, operand 56, single buffered']
    #allocation67 [shape = 's32[1]{0}', space=sflag, size = 0x4, scoped, tag = 'scoped memory for tpu_custom_call.1']
    #allocation68 [shape = 'u8[1536]{0}', space=vmem, size = 0x800, scoped, tag = 'input window, operand 57, single buffered']
    #allocation69 [shape = 'u8[8192]{0}', space=vmem, size = 0x2000, scoped, tag = 'output window, operand 0, single buffered']
    %126 = vsyncpa [#allocation4], 0
    %127 = vsyncpa [#allocation7], 0
    %128 = vsyncpa [#allocation10], 0
    %129 = vsyncpa [#allocation13], 0
    %130 = vsyncpa [#allocation16], 0
    %131 = vsyncpa [#allocation19], 0
    %132 = vsyncpa [#allocation22], 0
    %133 = vsyncpa [#allocation25], 0
    %134 = vsyncpa [#allocation28], 0
    %135 = vsyncpa [#allocation31], 0
    %136 = vsyncpa [#allocation34], 0
    %137 = vsyncpa [#allocation37], 0
    %138 = vsyncpa [#allocation40], 0
    %139 = vsyncpa [#allocation43], 0
    %140 = vsyncpa [#allocation46], 0
    %141 = vsyncpa [#allocation49], 0
    %142 = vsyncpa [#allocation52], 0
    %143 = vsyncpa [#allocation55], 0
    %144 = vsyncpa [#allocation58], 0
    %145 = vsyncpa [#allocation61], 0
    %146 = vsyncpa [#allocation64], 0
    %147 = vsyncpa [#allocation67], 0
    %148 = vsyncpa [#allocation5], 0
    // Predicated region
    $region2: #{tpu_custom_call.1} parent=1 // pred_check
      _
    $region3: #{tpu_custom_call.1} parent=1 // pred_check_branch
      %150 = sbr.rel (0) target = $region5
    $region4: #{tpu_custom_call.1} parent=1 // pred_region
      %s152 = ssub.s32 128, 128
      %153 = vsyncadd [#allocation4], %s152
      %s155 = sshll.u32 [#allocation3], 4
      %s156 = int_to_ptr.vmem [resolvable:$true] %s155
      %158 = dma.hbm_to_vmem [thread:$0]  %s1, 128, %s156, [#allocation4]
    $region5: #{tpu_custom_call.1} parent=1 // pred_fallthru
      _
    // Predicated region
    $region6: #{tpu_custom_call.1} parent=1 // pred_check
      _
    $region7: #{tpu_custom_call.1} parent=1 // pred_check_branch
      %160 = sbr.rel (0) target = $region9
    $region8: #{tpu_custom_call.1} parent=1 // pred_region
      _
    $region9: #{tpu_custom_call.1} parent=1 // pred_fallthru
      _
    // Predicated region
    $region10: #{tpu_custom_call.1} parent=1 // pred_check
      _
    $region11: #{tpu_custom_call.1} parent=1 // pred_check_branch
      %162 = sbr.rel (0) target = $region13
    $region12: #{tpu_custom_call.1} parent=1 // pred_region
      _
    $region13: #{tpu_custom_call.1} parent=1 // pred_fallthru
      _
    // Predicated region
    $region14: #{tpu_custom_call.1} parent=1 // pred_check
      _
    $region15: #{tpu_custom_call.1} parent=1 // pred_check_branch
      %164 = sbr.rel (0) target = $region17
    $region16: #{tpu_custom_call.1} parent=1 // pred_region
      %s166 = ssub.s32 16, 16
      %167 = vsyncadd [#allocation7], %s166
      %s169 = sshll.u32 [#allocation6], 4
      %s170 = int_to_ptr.vmem [resolvable:$true] %s169
      %172 = dma.hbm_to_vmem [thread:$0]  %s7, 16, %s170, [#allocation7]
    $region17: #{tpu_custom_call.1} parent=1 // pred_fallthru
      _
    // Predicated region
    $region18: #{tpu_custom_call.1} parent=1 // pred_check
      _
    $region19: #{tpu_custom_call.1} parent=1 // pred_check_branch
      %174 = sbr.rel (0) target = $region21
    $region20: #{tpu_custom_call.1} parent=1 // pred_region
      %s176 = ssub.s32 16, 16
      %177 = vsyncadd [#allocation7], %s176
      %s179 = sshll.u32 [#allocation8], 4
      %s180 = int_to_ptr.vmem [resolvable:$true] %s179
      %182 = dma.hbm_to_vmem [thread:$0]  %s9, 16, %s180, [#allocation7]
    $region21: #{tpu_custom_call.1} parent=1 // pred_fallthru
      _
    // Predicated region
    $region22: #{tpu_custom_call.1} parent=1 // pred_check
      _
    $region23: #{tpu_custom_call.1} parent=1 // pred_check_branch
      %184 = sbr.rel (0) target = $region25
    $region24: #{tpu_custom_call.1} parent=1 // pred_region
      %s186 = ssub.s32 512, 512
      %187 = vsyncadd [#allocation10], %s186
      %s188 = sshll.u32 [#allocation9], 4
      %s189 = int_to_ptr.vmem [resolvable:$true] %s188
      %194 = dma.hbm_to_vmem [thread:$0]  %s11, 512, %s189, [#allocation10], 128, 128, 8
    $region25: #{tpu_custom_call.1} parent=1 // pred_fallthru
      _
    // Predicated region
    $region26: #{tpu_custom_call.1} parent=1 // pred_check
      _
    $region27: #{tpu_custom_call.1} parent=1 // pred_check_branch
      %196 = sbr.rel (0) target = $region29
    $region28: #{tpu_custom_call.1} parent=1 // pred_region
      %s198 = ssub.s32 512, 512
      %199 = vsyncadd [#allocation10], %s198
      %s200 = sshll.u32 [#allocation11], 4
      %s201 = int_to_ptr.vmem [resolvable:$true] %s200
      %206 = dma.hbm_to_vmem [thread:$0]  %s13, 512, %s201, [#allocation10], 128, 128, 8
    $region29: #{tpu_custom_call.1} parent=1 // pred_fallthru
      _
    // Predicated region
    $region30: #{tpu_custom_call.1} parent=1 // pred_check
      _
    $region31: #{tpu_custom_call.1} parent=1 // pred_check_branch
      %208 = sbr.rel (0) target = $region33
    $region32: #{tpu_custom_call.1} parent=1 // pred_region
      %s210 = ssub.s32 16, 16
      %211 = vsyncadd [#allocation13], %s210
      %s213 = sshll.u32 [#allocation12], 4
      %s214 = int_to_ptr.vmem [resolvable:$true] %s213
      %216 = dma.hbm_to_vmem [thread:$0]  %s15, 16, %s214, [#allocation13]
    $region33: #{tpu_custom_call.1} parent=1 // pred_fallthru
      _
    // Predicated region
    $region34: #{tpu_custom_call.1} parent=1 // pred_check
      _
    $region35: #{tpu_custom_call.1} parent=1 // pred_check_branch
      %218 = sbr.rel (0) target = $region37
    $region36: #{tpu_custom_call.1} parent=1 // pred_region
      _
    $region37: #{tpu_custom_call.1} parent=1 // pred_fallthru
      _
    // Predicated region
    $region38: #{tpu_custom_call.1} parent=1 // pred_check
      _
    $region39: #{tpu_custom_call.1} parent=1 // pred_check_branch
      %220 = sbr.rel (0) target = $region41
    $region40: #{tpu_custom_call.1} parent=1 // pred_region
      %s222 = ssub.s32 16, 16
      %223 = vsyncadd [#allocation13], %s222
      %s225 = sshll.u32 [#allocation14], 4
      %s226 = int_to_ptr.vmem [resolvable:$true] %s225
      %228 = dma.hbm_to_vmem [thread:$0]  %s19, 16, %s226, [#allocation13]
    $region41: #{tpu_custom_call.1} parent=1 // pred_fallthru
      _
    // Predicated region
    $region42: #{tpu_custom_call.1} parent=1 // pred_check
      _
    $region43: #{tpu_custom_call.1} parent=1 // pred_check_branch
      %230 = sbr.rel (0) target = $region45
    $region44: #{tpu_custom_call.1} parent=1 // pred_region
      %s232 = ssub.s32 16, 16
      %233 = vsyncadd [#allocation16], %s232
      %s235 = sshll.u32 [#allocation15], 4
      %s236 = int_to_ptr.vmem [resolvable:$true] %s235
      %238 = dma.hbm_to_vmem [thread:$0]  %s21, 16, %s236, [#allocation16]
    $region45: #{tpu_custom_call.1} parent=1 // pred_fallthru
      _
    // Predicated region
    $region46: #{tpu_custom_call.1} parent=1 // pred_check
      _
    $region47: #{tpu_custom_call.1} parent=1 // pred_check_branch
      %240 = sbr.rel (0) target = $region49
    $region48: #{tpu_custom_call.1} parent=1 // pred_region
      %s242 = ssub.s32 512, 512
      %243 = vsyncadd [#allocation16], %s242
      %s244 = sshll.u32 [#allocation17], 4
      %s245 = int_to_ptr.vmem [resolvable:$true] %s244
      %250 = dma.hbm_to_vmem [thread:$0]  %s23, 512, %s245, [#allocation16], 128, 128, 8
    $region49: #{tpu_custom_call.1} parent=1 // pred_fallthru
      _
    // Predicated region
    $region50: #{tpu_custom_call.1} parent=1 // pred_check
      _
    $region51: #{tpu_custom_call.1} parent=1 // pred_check_branch
      %252 = sbr.rel (0) target = $region53
    $region52: #{tpu_custom_call.1} parent=1 // pred_region
      _
    $region53: #{tpu_custom_call.1} parent=1 // pred_fallthru
      _
    // Predicated region
    $region54: #{tpu_custom_call.1} parent=1 // pred_check
      _
    $region55: #{tpu_custom_call.1} parent=1 // pred_check_branch
      %254 = sbr.rel (0) target = $region57
    $region56: #{tpu_custom_call.1} parent=1 // pred_region
      _
    $region57: #{tpu_custom_call.1} parent=1 // pred_fallthru
      _
    // Predicated region
    $region58: #{tpu_custom_call.1} parent=1 // pred_check
      _
    $region59: #{tpu_custom_call.1} parent=1 // pred_check_branch
      %256 = sbr.rel (0) target = $region61
    $region60: #{tpu_custom_call.1} parent=1 // pred_region
      %s258 = ssub.s32 16, 16
      %259 = vsyncadd [#allocation19], %s258
      %s261 = sshll.u32 [#allocation18], 4
      %s262 = int_to_ptr.vmem [resolvable:$true] %s261
      %264 = dma.hbm_to_vmem [thread:$0]  %s29, 16, %s262, [#allocation19]
    $region61: #{tpu_custom_call.1} parent=1 // pred_fallthru
      _
    // Predicated region
    $region62: #{tpu_custom_call.1} parent=1 // pred_check
      _
    $region63: #{tpu_custom_call.1} parent=1 // pred_check_branch
      %266 = sbr.rel (0) target = $region65
    $region64: #{tpu_custom_call.1} parent=1 // pred_region
      %s268 = ssub.s32 16, 16
      %269 = vsyncadd [#allocation19], %s268
      %s271 = sshll.u32 [#allocation20], 4
      %s272 = int_to_ptr.vmem [resolvable:$true] %s271
      %274 = dma.hbm_to_vmem [thread:$0]  %s31, 16, %s272, [#allocation19]
    $region65: #{tpu_custom_call.1} parent=1 // pred_fallthru
      _
    // Predicated region
    $region66: #{tpu_custom_call.1} parent=1 // pred_check
      _
    $region67: #{tpu_custom_call.1} parent=1 // pred_check_branch
      %276 = sbr.rel (0) target = $region69
    $region68: #{tpu_custom_call.1} parent=1 // pred_region
      %s278 = ssub.s32 512, 512
      %279 = vsyncadd [#allocation22], %s278
      %s280 = sshll.u32 [#allocation21], 4
      %s281 = int_to_ptr.vmem [resolvable:$true] %s280
      %286 = dma.hbm_to_vmem [thread:$0]  %s33, 512, %s281, [#allocation22], 128, 128, 8
    $region69: #{tpu_custom_call.1} parent=1 // pred_fallthru
      _
    // Predicated region
    $region70: #{tpu_custom_call.1} parent=1 // pred_check
      _
    $region71: #{tpu_custom_call.1} parent=1 // pred_check_branch
      %288 = sbr.rel (0) target = $region73
    $region72: #{tpu_custom_call.1} parent=1 // pred_region
      %s290 = ssub.s32 16, 16
      %291 = vsyncadd [#allocation22], %s290
      %s293 = sshll.u32 [#allocation23], 4
      %s294 = int_to_ptr.vmem [resolvable:$true] %s293
      %296 = dma.hbm_to_vmem [thread:$0]  %s35, 16, %s294, [#allocation22]
    $region73: #{tpu_custom_call.1} parent=1 // pred_fallthru
      _
    // Predicated region
    $region74: #{tpu_custom_call.1} parent=1 // pred_check
      _
    $region75: #{tpu_custom_call.1} parent=1 // pred_check_branch
      %298 = sbr.rel (0) target = $region77
    $region76: #{tpu_custom_call.1} parent=1 // pred_region
      %s300 = ssub.s32 16, 16
      %301 = vsyncadd [#allocation25], %s300
      %s303 = sshll.u32 [#allocation24], 4
      %s304 = int_to_ptr.vmem [resolvable:$true] %s303
      %306 = dma.hbm_to_vmem [thread:$0]  %s37, 16, %s304, [#allocation25]
    $region77: #{tpu_custom_call.1} parent=1 // pred_fallthru
      _
    // Predicated region
    $region78: #{tpu_custom_call.1} parent=1 // pred_check
      _
    $region79: #{tpu_custom_call.1} parent=1 // pred_check_branch
      %308 = sbr.rel (0) target = $region81
    $region80: #{tpu_custom_call.1} parent=1 // pred_region
      %s310 = ssub.s32 512, 512
      %311 = vsyncadd [#allocation25], %s310
      %s312 = sshll.u32 [#allocation26], 4
      %s313 = int_to_ptr.vmem [resolvable:$true] %s312
      %318 = dma.hbm_to_vmem [thread:$0]  %s39, 512, %s313, [#allocation25], 128, 128, 8
    $region81: #{tpu_custom_call.1} parent=1 // pred_fallthru
      _
    // Predicated region
    $region82: #{tpu_custom_call.1} parent=1 // pred_check
      _
    $region83: #{tpu_custom_call.1} parent=1 // pred_check_branch
      %320 = sbr.rel (0) target = $region85
    $region84: #{tpu_custom_call.1} parent=1 // pred_region
      %s322 = ssub.s32 48, 48
      %323 = vsyncadd [#allocation28], %s322
      %s324 = sshll.u32 [#allocation27], 4
      %s325 = int_to_ptr.vmem [resolvable:$true] %s324
      %330 = dma.hbm_to_vmem [thread:$0]  %s41, 48, %s325, [#allocation28], 16, 16, 1
    $region85: #{tpu_custom_call.1} parent=1 // pred_fallthru
      _
    // Predicated region
    $region86: #{tpu_custom_call.1} parent=1 // pred_check
      _
    $region87: #{tpu_custom_call.1} parent=1 // pred_check_branch
      %332 = sbr.rel (0) target = $region89
    $region88: #{tpu_custom_call.1} parent=1 // pred_region
      _
    $region89: #{tpu_custom_call.1} parent=1 // pred_fallthru
      _
    // Predicated region
    $region90: #{tpu_custom_call.1} parent=1 // pred_check
      _
    $region91: #{tpu_custom_call.1} parent=1 // pred_check_branch
      %334 = sbr.rel (0) target = $region93
    $region92: #{tpu_custom_call.1} parent=1 // pred_region
      %s336 = ssub.s32 48, 48
      %337 = vsyncadd [#allocation28], %s336
      %s338 = sshll.u32 [#allocation29], 4
      %s339 = int_to_ptr.vmem [resolvable:$true] %s338
      %344 = dma.hbm_to_vmem [thread:$0]  %s45, 48, %s339, [#allocation28], 16, 16, 1
    $region93: #{tpu_custom_call.1} parent=1 // pred_fallthru
      _
    // Predicated region
    $region94: #{tpu_custom_call.1} parent=1 // pred_check
      _
    $region95: #{tpu_custom_call.1} parent=1 // pred_check_branch
      %346 = sbr.rel (0) target = $region97
    $region96: #{tpu_custom_call.1} parent=1 // pred_region
      %s348 = ssub.s32 48, 48
      %349 = vsyncadd [#allocation31], %s348
      %s350 = sshll.u32 [#allocation30], 4
      %s351 = int_to_ptr.vmem [resolvable:$true] %s350
      %356 = dma.hbm_to_vmem [thread:$0]  %s47, 48, %s351, [#allocation31], 16, 16, 1
    $region97: #{tpu_custom_call.1} parent=1 // pred_fallthru
      _
    // Predicated region
    $region98: #{tpu_custom_call.1} parent=1 // pred_check
      _
    $region99: #{tpu_custom_call.1} parent=1 // pred_check_branch
      %358 = sbr.rel (0) target = $region101
    $region100: #{tpu_custom_call.1} parent=1 // pred_region
      _
    $region101: #{tpu_custom_call.1} parent=1 // pred_fallthru
      _
    // Predicated region
    $region102: #{tpu_custom_call.1} parent=1 // pred_check
      _
    $region103: #{tpu_custom_call.1} parent=1 // pred_check_branch
      %360 = sbr.rel (0) target = $region105
    $region104: #{tpu_custom_call.1} parent=1 // pred_region
      %s362 = ssub.s32 48, 48
      %363 = vsyncadd [#allocation31], %s362
      %s364 = sshll.u32 [#allocation32], 4
      %s365 = int_to_ptr.vmem [resolvable:$true] %s364
      %370 = dma.hbm_to_vmem [thread:$0]  %s51, 48, %s365, [#allocation31], 16, 16, 1
    $region105: #{tpu_custom_call.1} parent=1 // pred_fallthru
      _
    // Predicated region
    $region106: #{tpu_custom_call.1} parent=1 // pred_check
      _
    $region107: #{tpu_custom_call.1} parent=1 // pred_check_branch
      %372 = sbr.rel (0) target = $region109
    $region108: #{tpu_custom_call.1} parent=1 // pred_region
      %s374 = ssub.s32 48, 48
      %375 = vsyncadd [#allocation34], %s374
      %s376 = sshll.u32 [#allocation33], 4
      %s377 = int_to_ptr.vmem [resolvable:$true] %s376
      %382 = dma.hbm_to_vmem [thread:$0]  %s53, 48, %s377, [#allocation34], 16, 16, 1
    $region109: #{tpu_custom_call.1} parent=1 // pred_fallthru
      _
    // Predicated region
    $region110: #{tpu_custom_call.1} parent=1 // pred_check
      _
    $region111: #{tpu_custom_call.1} parent=1 // pred_check_branch
      %384 = sbr.rel (0) target = $region113
    $region112: #{tpu_custom_call.1} parent=1 // pred_region
      _
    $region113: #{tpu_custom_call.1} parent=1 // pred_fallthru
      _
    // Predicated region
    $region114: #{tpu_custom_call.1} parent=1 // pred_check
      _
    $region115: #{tpu_custom_call.1} parent=1 // pred_check_branch
      %386 = sbr.rel (0) target = $region117
    $region116: #{tpu_custom_call.1} parent=1 // pred_region
      %s388 = ssub.s32 48, 48
      %389 = vsyncadd [#allocation34], %s388
      %s390 = sshll.u32 [#allocation35], 4
      %s391 = int_to_ptr.vmem [resolvable:$true] %s390
      %396 = dma.hbm_to_vmem [thread:$0]  %s57, 48, %s391, [#allocation34], 16, 16, 1
    $region117: #{tpu_custom_call.1} parent=1 // pred_fallthru
      _
    // Predicated region
    $region118: #{tpu_custom_call.1} parent=1 // pred_check
      _
    $region119: #{tpu_custom_call.1} parent=1 // pred_check_branch
      %398 = sbr.rel (0) target = $region121
    $region120: #{tpu_custom_call.1} parent=1 // pred_region
      _
    $region121: #{tpu_custom_call.1} parent=1 // pred_fallthru
      _
    // Predicated region
    $region122: #{tpu_custom_call.1} parent=1 // pred_check
      _
    $region123: #{tpu_custom_call.1} parent=1 // pred_check_branch
      %400 = sbr.rel (0) target = $region125
    $region124: #{tpu_custom_call.1} parent=1 // pred_region
      %s402 = ssub.s32 48, 48
      %403 = vsyncadd [#allocation37], %s402
      %s404 = sshll.u32 [#allocation36], 4
      %s405 = int_to_ptr.vmem [resolvable:$true] %s404
      %410 = dma.hbm_to_vmem [thread:$0]  %s61, 48, %s405, [#allocation37], 16, 16, 1
    $region125: #{tpu_custom_call.1} parent=1 // pred_fallthru
      _
    // Predicated region
    $region126: #{tpu_custom_call.1} parent=1 // pred_check
      _
    $region127: #{tpu_custom_call.1} parent=1 // pred_check_branch
      %412 = sbr.rel (0) target = $region129
    $region128: #{tpu_custom_call.1} parent=1 // pred_region
      %s414 = ssub.s32 48, 48
      %415 = vsyncadd [#allocation37], %s414
      %s416 = sshll.u32 [#allocation38], 4
      %s417 = int_to_ptr.vmem [resolvable:$true] %s416
      %422 = dma.hbm_to_vmem [thread:$0]  %s63, 48, %s417, [#allocation37], 16, 16, 1
    $region129: #{tpu_custom_call.1} parent=1 // pred_fallthru
      _
    // Predicated region
    $region130: #{tpu_custom_call.1} parent=1 // pred_check
      _
    $region131: #{tpu_custom_call.1} parent=1 // pred_check_branch
      %424 = sbr.rel (0) target = $region133
    $region132: #{tpu_custom_call.1} parent=1 // pred_region
      _
    $region133: #{tpu_custom_call.1} parent=1 // pred_fallthru
      _
    // Predicated region
    $region134: #{tpu_custom_call.1} parent=1 // pred_check
      _
    $region135: #{tpu_custom_call.1} parent=1 // pred_check_branch
      %426 = sbr.rel (0) target = $region137
    $region136: #{tpu_custom_call.1} parent=1 // pred_region
      %s428 = ssub.s32 48, 48
      %429 = vsyncadd [#allocation40], %s428
      %s430 = sshll.u32 [#allocation39], 4
      %s431 = int_to_ptr.vmem [resolvable:$true] %s430
      %436 = dma.hbm_to_vmem [thread:$0]  %s67, 48, %s431, [#allocation40], 16, 16, 1
    $region137: #{tpu_custom_call.1} parent=1 // pred_fallthru
      _
    // Predicated region
    $region138: #{tpu_custom_call.1} parent=1 // pred_check
      _
    $region139: #{tpu_custom_call.1} parent=1 // pred_check_branch
      %438 = sbr.rel (0) target = $region141
    $region140: #{tpu_custom_call.1} parent=1 // pred_region
      %s440 = ssub.s32 48, 48
      %441 = vsyncadd [#allocation40], %s440
      %s442 = sshll.u32 [#allocation41], 4
      %s443 = int_to_ptr.vmem [resolvable:$true] %s442
      %448 = dma.hbm_to_vmem [thread:$0]  %s69, 48, %s443, [#allocation40], 16, 16, 1
    $region141: #{tpu_custom_call.1} parent=1 // pred_fallthru
      _
    // Predicated region
    $region142: #{tpu_custom_call.1} parent=1 // pred_check
      _
    $region143: #{tpu_custom_call.1} parent=1 // pred_check_branch
      %450 = sbr.rel (0) target = $region145
    $region144: #{tpu_custom_call.1} parent=1 // pred_region
      _
    $region145: #{tpu_custom_call.1} parent=1 // pred_fallthru
      _
    // Predicated region
    $region146: #{tpu_custom_call.1} parent=1 // pred_check
      _
    $region147: #{tpu_custom_call.1} parent=1 // pred_check_branch
      %452 = sbr.rel (0) target = $region149
    $region148: #{tpu_custom_call.1} parent=1 // pred_region
      _
    $region149: #{tpu_custom_call.1} parent=1 // pred_fallthru
      _
    // Predicated region
    $region150: #{tpu_custom_call.1} parent=1 // pred_check
      _
    $region151: #{tpu_custom_call.1} parent=1 // pred_check_branch
      %454 = sbr.rel (0) target = $region153
    $region152: #{tpu_custom_call.1} parent=1 // pred_region
      _
    $region153: #{tpu_custom_call.1} parent=1 // pred_fallthru
      _
    // Predicated region
    $region154: #{tpu_custom_call.1} parent=1 // pred_check
      _
    $region155: #{tpu_custom_call.1} parent=1 // pred_check_branch
      %456 = sbr.rel (0) target = $region157
    $region156: #{tpu_custom_call.1} parent=1 // pred_region
      %s458 = ssub.s32 48, 48
      %459 = vsyncadd [#allocation43], %s458
      %s460 = sshll.u32 [#allocation42], 4
      %s461 = int_to_ptr.vmem [resolvable:$true] %s460
      %466 = dma.hbm_to_vmem [thread:$0]  %s77, 48, %s461, [#allocation43], 16, 16, 1
    $region157: #{tpu_custom_call.1} parent=1 // pred_fallthru
      _
    // Predicated region
    $region158: #{tpu_custom_call.1} parent=1 // pred_check
      _
    $region159: #{tpu_custom_call.1} parent=1 // pred_check_branch
      %468 = sbr.rel (0) target = $region161
    $region160: #{tpu_custom_call.1} parent=1 // pred_region
      %s470 = ssub.s32 48, 48
      %471 = vsyncadd [#allocation43], %s470
      %s472 = sshll.u32 [#allocation44], 4
      %s473 = int_to_ptr.vmem [resolvable:$true] %s472
      %478 = dma.hbm_to_vmem [thread:$0]  %s79, 48, %s473, [#allocation43], 16, 16, 1
    $region161: #{tpu_custom_call.1} parent=1 // pred_fallthru
      _
    // Predicated region
    $region162: #{tpu_custom_call.1} parent=1 // pred_check
      _
    $region163: #{tpu_custom_call.1} parent=1 // pred_check_branch
      %480 = sbr.rel (0) target = $region165
    $region164: #{tpu_custom_call.1} parent=1 // pred_region
      %s482 = ssub.s32 768, 768
      %483 = vsyncadd [#allocation46], %s482
      %s484 = sshll.u32 [#allocation45], 4
      %s485 = int_to_ptr.vmem [resolvable:$true] %s484
      %490 = dma.hbm_to_vmem [thread:$0]  %s81, 768, %s485, [#allocation46], 128, 128, 8
    $region165: #{tpu_custom_call.1} parent=1 // pred_fallthru
      _
    // Predicated region
    $region166: #{tpu_custom_call.1} parent=1 // pred_check
      _
    $region167: #{tpu_custom_call.1} parent=1 // pred_check_branch
      %492 = sbr.rel (0) target = $region169
    $region168: #{tpu_custom_call.1} parent=1 // pred_region
      %s494 = ssub.s32 48, 48
      %495 = vsyncadd [#allocation46], %s494
      %s496 = sshll.u32 [#allocation47], 4
      %s497 = int_to_ptr.vmem [resolvable:$true] %s496
      %502 = dma.hbm_to_vmem [thread:$0]  %s83, 48, %s497, [#allocation46], 16, 16, 1
    $region169: #{tpu_custom_call.1} parent=1 // pred_fallthru
      _
    // Predicated region
    $region170: #{tpu_custom_call.1} parent=1 // pred_check
      _
    $region171: #{tpu_custom_call.1} parent=1 // pred_check_branch
      %504 = sbr.rel (0) target = $region173
    $region172: #{tpu_custom_call.1} parent=1 // pred_region
      %s506 = ssub.s32 48, 48
      %507 = vsyncadd [#allocation49], %s506
      %s508 = sshll.u32 [#allocation48], 4
      %s509 = int_to_ptr.vmem [resolvable:$true] %s508
      %514 = dma.hbm_to_vmem [thread:$0]  %s85, 48, %s509, [#allocation49], 16, 16, 1
    $region173: #{tpu_custom_call.1} parent=1 // pred_fallthru
      _
    // Predicated region
    $region174: #{tpu_custom_call.1} parent=1 // pred_check
      _
    $region175: #{tpu_custom_call.1} parent=1 // pred_check_branch
      %516 = sbr.rel (0) target = $region177
    $region176: #{tpu_custom_call.1} parent=1 // pred_region
      %s518 = ssub.s32 768, 768
      %519 = vsyncadd [#allocation49], %s518
      %s520 = sshll.u32 [#allocation50], 4
      %s521 = int_to_ptr.vmem [resolvable:$true] %s520
      %526 = dma.hbm_to_vmem [thread:$0]  %s87, 768, %s521, [#allocation49], 128, 128, 8
    $region177: #{tpu_custom_call.1} parent=1 // pred_fallthru
      _
    // Predicated region
    $region178: #{tpu_custom_call.1} parent=1 // pred_check
      _
    $region179: #{tpu_custom_call.1} parent=1 // pred_check_branch
      %528 = sbr.rel (0) target = $region181
    $region180: #{tpu_custom_call.1} parent=1 // pred_region
      %s530 = ssub.s32 48, 48
      %531 = vsyncadd [#allocation52], %s530
      %s532 = sshll.u32 [#allocation51], 4
      %s533 = int_to_ptr.vmem [resolvable:$true] %s532
      %538 = dma.hbm_to_vmem [thread:$0]  %s89, 48, %s533, [#allocation52], 16, 16, 1
    $region181: #{tpu_custom_call.1} parent=1 // pred_fallthru
      _
    // Predicated region
    $region182: #{tpu_custom_call.1} parent=1 // pred_check
      _
    $region183: #{tpu_custom_call.1} parent=1 // pred_check_branch
      %540 = sbr.rel (0) target = $region185
    $region184: #{tpu_custom_call.1} parent=1 // pred_region
      %s542 = ssub.s32 48, 48
      %543 = vsyncadd [#allocation52], %s542
      %s544 = sshll.u32 [#allocation53], 4
      %s545 = int_to_ptr.vmem [resolvable:$true] %s544
      %550 = dma.hbm_to_vmem [thread:$0]  %s91, 48, %s545, [#allocation52], 16, 16, 1
    $region185: #{tpu_custom_call.1} parent=1 // pred_fallthru
      _
    // Predicated region
    $region186: #{tpu_custom_call.1} parent=1 // pred_check
      _
    $region187: #{tpu_custom_call.1} parent=1 // pred_check_branch
      %552 = sbr.rel (0) target = $region189
    $region188: #{tpu_custom_call.1} parent=1 // pred_region
      %s554 = ssub.s32 384, 384
      %555 = vsyncadd [#allocation55], %s554
      %s556 = sshll.u32 [#allocation54], 4
      %s557 = int_to_ptr.vmem [resolvable:$true] %s556
      %562 = dma.hbm_to_vmem [thread:$0]  %s93, 384, %s557, [#allocation55], 128, 128, 8
    $region189: #{tpu_custom_call.1} parent=1 // pred_fallthru
      _
    // Predicated region
    $region190: #{tpu_custom_call.1} parent=1 // pred_check
      _
    $region191: #{tpu_custom_call.1} parent=1 // pred_check_branch
      %564 = sbr.rel (0) target = $region193
    $region192: #{tpu_custom_call.1} parent=1 // pred_region
      %s566 = ssub.s32 48, 48
      %567 = vsyncadd [#allocation55], %s566
      %s568 = sshll.u32 [#allocation56], 4
      %s569 = int_to_ptr.vmem [resolvable:$true] %s568
      %574 = dma.hbm_to_vmem [thread:$0]  %s95, 48, %s569, [#allocation55], 16, 16, 1
    $region193: #{tpu_custom_call.1} parent=1 // pred_fallthru
      _
    // Predicated region
    $region194: #{tpu_custom_call.1} parent=1 // pred_check
      _
    $region195: #{tpu_custom_call.1} parent=1 // pred_check_branch
      %576 = sbr.rel (0) target = $region197
    $region196: #{tpu_custom_call.1} parent=1 // pred_region
      %s578 = ssub.s32 48, 48
      %579 = vsyncadd [#allocation58], %s578
      %s580 = sshll.u32 [#allocation57], 4
      %s581 = int_to_ptr.vmem [resolvable:$true] %s580
      %586 = dma.hbm_to_vmem [thread:$0]  %s97, 48, %s581, [#allocation58], 16, 16, 1
    $region197: #{tpu_custom_call.1} parent=1 // pred_fallthru
      _
    // Predicated region
    $region198: #{tpu_custom_call.1} parent=1 // pred_check
      _
    $region199: #{tpu_custom_call.1} parent=1 // pred_check_branch
      %588 = sbr.rel (0) target = $region201
    $region200: #{tpu_custom_call.1} parent=1 // pred_region
      %s590 = ssub.s32 96, 96
      %591 = vsyncadd [#allocation58], %s590
      %s592 = sshll.u32 [#allocation59], 4
      %s593 = int_to_ptr.vmem [resolvable:$true] %s592
      %598 = dma.hbm_to_vmem [thread:$0]  %s99, 96, %s593, [#allocation58], 32, 32, 2
    $region201: #{tpu_custom_call.1} parent=1 // pred_fallthru
      _
    // Predicated region
    $region202: #{tpu_custom_call.1} parent=1 // pred_check
      _
    $region203: #{tpu_custom_call.1} parent=1 // pred_check_branch
      %600 = sbr.rel (0) target = $region205
    $region204: #{tpu_custom_call.1} parent=1 // pred_region
      %s602 = ssub.s32 48, 48
      %603 = vsyncadd [#allocation61], %s602
      %s604 = sshll.u32 [#allocation60], 4
      %s605 = int_to_ptr.vmem [resolvable:$true] %s604
      %610 = dma.hbm_to_vmem [thread:$0]  %s101, 48, %s605, [#allocation61], 16, 16, 1
    $region205: #{tpu_custom_call.1} parent=1 // pred_fallthru
      _
    // Predicated region
    $region206: #{tpu_custom_call.1} parent=1 // pred_check
      _
    $region207: #{tpu_custom_call.1} parent=1 // pred_check_branch
      %612 = sbr.rel (0) target = $region209
    $region208: #{tpu_custom_call.1} parent=1 // pred_region
      %s614 = ssub.s32 48, 48
      %615 = vsyncadd [#allocation61], %s614
      %s616 = sshll.u32 [#allocation62], 4
      %s617 = int_to_ptr.vmem [resolvable:$true] %s616
      %622 = dma.hbm_to_vmem [thread:$0]  %s103, 48, %s617, [#allocation61], 16, 16, 1
    $region209: #{tpu_custom_call.1} parent=1 // pred_fallthru
      _
    // Predicated region
    $region210: #{tpu_custom_call.1} parent=1 // pred_check
      _
    $region211: #{tpu_custom_call.1} parent=1 // pred_check_branch
      %624 = sbr.rel (0) target = $region213
    $region212: #{tpu_custom_call.1} parent=1 // pred_region
      _
    $region213: #{tpu_custom_call.1} parent=1 // pred_fallthru
      _
    // Predicated region
    $region214: #{tpu_custom_call.1} parent=1 // pred_check
      _
    $region215: #{tpu_custom_call.1} parent=1 // pred_check_branch
      %626 = sbr.rel (0) target = $region217
    $region216: #{tpu_custom_call.1} parent=1 // pred_region
      %s628 = ssub.s32 48, 48
      %629 = vsyncadd [#allocation64], %s628
      %s630 = sshll.u32 [#allocation63], 4
      %s631 = int_to_ptr.vmem [resolvable:$true] %s630
      %636 = dma.hbm_to_vmem [thread:$0]  %s107, 48, %s631, [#allocation64], 16, 16, 1
    $region217: #{tpu_custom_call.1} parent=1 // pred_fallthru
      _
    // Predicated region
    $region218: #{tpu_custom_call.1} parent=1 // pred_check
      _
    $region219: #{tpu_custom_call.1} parent=1 // pred_check_branch
      %638 = sbr.rel (0) target = $region221
    $region220: #{tpu_custom_call.1} parent=1 // pred_region
      %s640 = ssub.s32 48, 48
      %641 = vsyncadd [#allocation64], %s640
      %s642 = sshll.u32 [#allocation65], 4
      %s643 = int_to_ptr.vmem [resolvable:$true] %s642
      %648 = dma.hbm_to_vmem [thread:$0]  %s109, 48, %s643, [#allocation64], 16, 16, 1
    $region221: #{tpu_custom_call.1} parent=1 // pred_fallthru
      _
    // Predicated region
    $region222: #{tpu_custom_call.1} parent=1 // pred_check
      _
    $region223: #{tpu_custom_call.1} parent=1 // pred_check_branch
      %650 = sbr.rel (0) target = $region225
    $region224: #{tpu_custom_call.1} parent=1 // pred_region
      _
    $region225: #{tpu_custom_call.1} parent=1 // pred_fallthru
      _
    // Predicated region
    $region226: #{tpu_custom_call.1} parent=1 // pred_check
      _
    $region227: #{tpu_custom_call.1} parent=1 // pred_check_branch
      %652 = sbr.rel (0) target = $region229
    $region228: #{tpu_custom_call.1} parent=1 // pred_region
      %s654 = ssub.s32 48, 48
      %655 = vsyncadd [#allocation67], %s654
      %s656 = sshll.u32 [#allocation66], 4
      %s657 = int_to_ptr.vmem [resolvable:$true] %s656
      %662 = dma.hbm_to_vmem [thread:$0]  %s113, 48, %s657, [#allocation67], 16, 16, 1
    $region229: #{tpu_custom_call.1} parent=1 // pred_fallthru
      _
    // Predicated region
    $region230: #{tpu_custom_call.1} parent=1 // pred_check
      _
    $region231: #{tpu_custom_call.1} parent=1 // pred_check_branch
      %664 = sbr.rel (0) target = $region233
    $region232: #{tpu_custom_call.1} parent=1 // pred_region
      %s666 = ssub.s32 48, 48
      %667 = vsyncadd [#allocation67], %s666
      %s668 = sshll.u32 [#allocation68], 4
      %s669 = int_to_ptr.vmem [resolvable:$true] %s668
      %674 = dma.hbm_to_vmem [thread:$0]  %s115, 48, %s669, [#allocation67], 16, 16, 1
    $region233: #{tpu_custom_call.1} parent=1 // pred_fallthru
      _
    // Predicated region
    $region234: #{tpu_custom_call.1} parent=1 // pred_check
      _
    $region235: #{tpu_custom_call.1} parent=1 // pred_check_branch
      %676 = sbr.rel (0) target = $region237
    $region236: #{tpu_custom_call.1} parent=1 // pred_region
      _
    $region237: #{tpu_custom_call.1} parent=1 // pred_fallthru
      _
    // Predicated region
    $region238: #{tpu_custom_call.1} parent=1 // pred_check
      _
    $region239: #{tpu_custom_call.1} parent=1 // pred_check_branch
      %678 = sbr.rel (0) target = $region241
    $region240: #{tpu_custom_call.1} parent=1 // pred_region
      %679 = dma.done [#allocation4], 128
    $region241: #{tpu_custom_call.1} parent=1 // pred_fallthru
      _
    // Predicated region
    $region242: #{tpu_custom_call.1} parent=1 // pred_check
      _
    $region243: #{tpu_custom_call.1} parent=1 // pred_check_branch
      %681 = sbr.rel (0) target = $region245
    $region244: #{tpu_custom_call.1} parent=1 // pred_region
      %682 = dma.done [#allocation7], 16
    $region245: #{tpu_custom_call.1} parent=1 // pred_fallthru
      _
    // Predicated region
    $region246: #{tpu_custom_call.1} parent=1 // pred_check
      _
    $region247: #{tpu_custom_call.1} parent=1 // pred_check_branch
      %684 = sbr.rel (0) target = $region249
    $region248: #{tpu_custom_call.1} parent=1 // pred_region
      %685 = dma.done [#allocation7], 16
    $region249: #{tpu_custom_call.1} parent=1 // pred_fallthru
      _
    // Predicated region
    $region250: #{tpu_custom_call.1} parent=1 // pred_check
      _
    $region251: #{tpu_custom_call.1} parent=1 // pred_check_branch
      %687 = sbr.rel (0) target = $region253
    $region252: #{tpu_custom_call.1} parent=1 // pred_region
      %688 = dma.done [#allocation10], 512
    $region253: #{tpu_custom_call.1} parent=1 // pred_fallthru
      _
    // Predicated region
    $region254: #{tpu_custom_call.1} parent=1 // pred_check
      _
    $region255: #{tpu_custom_call.1} parent=1 // pred_check_branch
      %690 = sbr.rel (0) target = $region257
    $region256: #{tpu_custom_call.1} parent=1 // pred_region
      %691 = dma.done [#allocation10], 512
    $region257: #{tpu_custom_call.1} parent=1 // pred_fallthru
      _
    // Predicated region
    $region258: #{tpu_custom_call.1} parent=1 // pred_check
      _
    $region259: #{tpu_custom_call.1} parent=1 // pred_check_branch
      %693 = sbr.rel (0) target = $region261
    $region260: #{tpu_custom_call.1} parent=1 // pred_region
      %694 = dma.done [#allocation13], 16
    $region261: #{tpu_custom_call.1} parent=1 // pred_fallthru
      _
    // Predicated region
    $region262: #{tpu_custom_call.1} parent=1 // pred_check
      _
    $region263: #{tpu_custom_call.1} parent=1 // pred_check_branch
      %696 = sbr.rel (0) target = $region265
    $region264: #{tpu_custom_call.1} parent=1 // pred_region
      %697 = dma.done [#allocation13], 16
    $region265: #{tpu_custom_call.1} parent=1 // pred_fallthru
      _
    // Predicated region
    $region266: #{tpu_custom_call.1} parent=1 // pred_check
      _
    $region267: #{tpu_custom_call.1} parent=1 // pred_check_branch
      %699 = sbr.rel (0) target = $region269
    $region268: #{tpu_custom_call.1} parent=1 // pred_region
      %700 = dma.done [#allocation16], 16
    $region269: #{tpu_custom_call.1} parent=1 // pred_fallthru
      _
    // Predicated region
    $region270: #{tpu_custom_call.1} parent=1 // pred_check
      _
    $region271: #{tpu_custom_call.1} parent=1 // pred_check_branch
      %702 = sbr.rel (0) target = $region273
    $region272: #{tpu_custom_call.1} parent=1 // pred_region
      %703 = dma.done [#allocation16], 512
    $region273: #{tpu_custom_call.1} parent=1 // pred_fallthru
      _
    // Predicated region
    $region274: #{tpu_custom_call.1} parent=1 // pred_check
      _
    $region275: #{tpu_custom_call.1} parent=1 // pred_check_branch
      %705 = sbr.rel (0) target = $region277
    $region276: #{tpu_custom_call.1} parent=1 // pred_region
      %706 = dma.done [#allocation19], 16
    $region277: #{tpu_custom_call.1} parent=1 // pred_fallthru
      _
    // Predicated region
    $region278: #{tpu_custom_call.1} parent=1 // pred_check
      _
    $region279: #{tpu_custom_call.1} parent=1 // pred_check_branch
      %708 = sbr.rel (0) target = $region281
    $region280: #{tpu_custom_call.1} parent=1 // pred_region
      %709 = dma.done [#allocation19], 16
    $region281: #{tpu_custom_call.1} parent=1 // pred_fallthru
      _
    // Predicated region
    $region282: #{tpu_custom_call.1} parent=1 // pred_check
      _
    $region283: #{tpu_custom_call.1} parent=1 // pred_check_branch
      %711 = sbr.rel (0) target = $region285
    $region284: #{tpu_custom_call.1} parent=1 // pred_region
      %712 = dma.done [#allocation22], 512
    $region285: #{tpu_custom_call.1} parent=1 // pred_fallthru
      _
    // Predicated region
    $region286: #{tpu_custom_call.1} parent=1 // pred_check
      _
    $region287: #{tpu_custom_call.1} parent=1 // pred_check_branch
      %714 = sbr.rel (0) target = $region289
    $region288: #{tpu_custom_call.1} parent=1 // pred_region
      %715 = dma.done [#allocation22], 16
    $region289: #{tpu_custom_call.1} parent=1 // pred_fallthru
      _
    // Predicated region
    $region290: #{tpu_custom_call.1} parent=1 // pred_check
      _
    $region291: #{tpu_custom_call.1} parent=1 // pred_check_branch
      %717 = sbr.rel (0) target = $region293
    $region292: #{tpu_custom_call.1} parent=1 // pred_region
      %718 = dma.done [#allocation25], 16
    $region293: #{tpu_custom_call.1} parent=1 // pred_fallthru
      _
    // Predicated region
    $region294: #{tpu_custom_call.1} parent=1 // pred_check
      _
    $region295: #{tpu_custom_call.1} parent=1 // pred_check_branch
      %720 = sbr.rel (0) target = $region297
    $region296: #{tpu_custom_call.1} parent=1 // pred_region
      %721 = dma.done [#allocation25], 512
    $region297: #{tpu_custom_call.1} parent=1 // pred_fallthru
      _
    // Predicated region
    $region298: #{tpu_custom_call.1} parent=1 // pred_check
      _
    $region299: #{tpu_custom_call.1} parent=1 // pred_check_branch
      %723 = sbr.rel (0) target = $region301
    $region300: #{tpu_custom_call.1} parent=1 // pred_region
      %724 = dma.done [#allocation28], 48
    $region301: #{tpu_custom_call.1} parent=1 // pred_fallthru
      _
    // Predicated region
    $region302: #{tpu_custom_call.1} parent=1 // pred_check
      _
    $region303: #{tpu_custom_call.1} parent=1 // pred_check_branch
      %726 = sbr.rel (0) target = $region305
    $region304: #{tpu_custom_call.1} parent=1 // pred_region
      %727 = dma.done [#allocation28], 48
    $region305: #{tpu_custom_call.1} parent=1 // pred_fallthru
      _
    // Predicated region
    $region306: #{tpu_custom_call.1} parent=1 // pred_check
      _
    $region307: #{tpu_custom_call.1} parent=1 // pred_check_branch
      %729 = sbr.rel (0) target = $region309
    $region308: #{tpu_custom_call.1} parent=1 // pred_region
      %730 = dma.done [#allocation31], 48
    $region309: #{tpu_custom_call.1} parent=1 // pred_fallthru
      _
    // Predicated region
    $region310: #{tpu_custom_call.1} parent=1 // pred_check
      _
    $region311: #{tpu_custom_call.1} parent=1 // pred_check_branch
      %732 = sbr.rel (0) target = $region313
    $region312: #{tpu_custom_call.1} parent=1 // pred_region
      %733 = dma.done [#allocation31], 48
    $region313: #{tpu_custom_call.1} parent=1 // pred_fallthru
      _
    // Predicated region
    $region314: #{tpu_custom_call.1} parent=1 // pred_check
      _
    $region315: #{tpu_custom_call.1} parent=1 // pred_check_branch
      %735 = sbr.rel (0) target = $region317
    $region316: #{tpu_custom_call.1} parent=1 // pred_region
      %736 = dma.done [#allocation34], 48
    $region317: #{tpu_custom_call.1} parent=1 // pred_fallthru
      _
    // Predicated region
    $region318: #{tpu_custom_call.1} parent=1 // pred_check
      _
    $region319: #{tpu_custom_call.1} parent=1 // pred_check_branch
      %738 = sbr.rel (0) target = $region321
    $region320: #{tpu_custom_call.1} parent=1 // pred_region
      %739 = dma.done [#allocation34], 48
    $region321: #{tpu_custom_call.1} parent=1 // pred_fallthru
      _
    // Predicated region
    $region322: #{tpu_custom_call.1} parent=1 // pred_check
      _
    $region323: #{tpu_custom_call.1} parent=1 // pred_check_branch
      %741 = sbr.rel (0) target = $region325
    $region324: #{tpu_custom_call.1} parent=1 // pred_region
      %742 = dma.done [#allocation37], 48
    $region325: #{tpu_custom_call.1} parent=1 // pred_fallthru
      _
    // Predicated region
    $region326: #{tpu_custom_call.1} parent=1 // pred_check
      _
    $region327: #{tpu_custom_call.1} parent=1 // pred_check_branch
      %744 = sbr.rel (0) target = $region329
    $region328: #{tpu_custom_call.1} parent=1 // pred_region
      %745 = dma.done [#allocation37], 48
    $region329: #{tpu_custom_call.1} parent=1 // pred_fallthru
      _
    // Predicated region
    $region330: #{tpu_custom_call.1} parent=1 // pred_check
      _
    $region331: #{tpu_custom_call.1} parent=1 // pred_check_branch
      %747 = sbr.rel (0) target = $region333
    $region332: #{tpu_custom_call.1} parent=1 // pred_region
      %748 = dma.done [#allocation40], 48
    $region333: #{tpu_custom_call.1} parent=1 // pred_fallthru
      _
    // Predicated region
    $region334: #{tpu_custom_call.1} parent=1 // pred_check
      _
    $region335: #{tpu_custom_call.1} parent=1 // pred_check_branch
      %750 = sbr.rel (0) target = $region337
    $region336: #{tpu_custom_call.1} parent=1 // pred_region
      %751 = dma.done [#allocation40], 48
    $region337: #{tpu_custom_call.1} parent=1 // pred_fallthru
      _
    // Predicated region
    $region338: #{tpu_custom_call.1} parent=1 // pred_check
      _
    $region339: #{tpu_custom_call.1} parent=1 // pred_check_branch
      %753 = sbr.rel (0) target = $region341
    $region340: #{tpu_custom_call.1} parent=1 // pred_region
      %754 = dma.done [#allocation43], 48
    $region341: #{tpu_custom_call.1} parent=1 // pred_fallthru
      _
    // Predicated region
    $region342: #{tpu_custom_call.1} parent=1 // pred_check
      _
    $region343: #{tpu_custom_call.1} parent=1 // pred_check_branch
      %756 = sbr.rel (0) target = $region345
    $region344: #{tpu_custom_call.1} parent=1 // pred_region
      %757 = dma.done [#allocation43], 48
    $region345: #{tpu_custom_call.1} parent=1 // pred_fallthru
      _
    // Predicated region
    $region346: #{tpu_custom_call.1} parent=1 // pred_check
      _
    $region347: #{tpu_custom_call.1} parent=1 // pred_check_branch
      %759 = sbr.rel (0) target = $region349
    $region348: #{tpu_custom_call.1} parent=1 // pred_region
      %760 = dma.done [#allocation46], 768
    $region349: #{tpu_custom_call.1} parent=1 // pred_fallthru
      _
    // Predicated region
    $region350: #{tpu_custom_call.1} parent=1 // pred_check
      _
    $region351: #{tpu_custom_call.1} parent=1 // pred_check_branch
      %762 = sbr.rel (0) target = $region353
    $region352: #{tpu_custom_call.1} parent=1 // pred_region
      %763 = dma.done [#allocation46], 48
    $region353: #{tpu_custom_call.1} parent=1 // pred_fallthru
      _
    // Predicated region
    $region354: #{tpu_custom_call.1} parent=1 // pred_check
      _
    $region355: #{tpu_custom_call.1} parent=1 // pred_check_branch
      %765 = sbr.rel (0) target = $region357
    $region356: #{tpu_custom_call.1} parent=1 // pred_region
      %766 = dma.done [#allocation49], 48
    $region357: #{tpu_custom_call.1} parent=1 // pred_fallthru
      _
    // Predicated region
    $region358: #{tpu_custom_call.1} parent=1 // pred_check
      _
    $region359: #{tpu_custom_call.1} parent=1 // pred_check_branch
      %768 = sbr.rel (0) target = $region361
    $region360: #{tpu_custom_call.1} parent=1 // pred_region
      %769 = dma.done [#allocation49], 768
    $region361: #{tpu_custom_call.1} parent=1 // pred_fallthru
      _
    // Predicated region
    $region362: #{tpu_custom_call.1} parent=1 // pred_check
      _
    $region363: #{tpu_custom_call.1} parent=1 // pred_check_branch
      %771 = sbr.rel (0) target = $region365
    $region364: #{tpu_custom_call.1} parent=1 // pred_region
      %772 = dma.done [#allocation52], 48
    $region365: #{tpu_custom_call.1} parent=1 // pred_fallthru
      _
    // Predicated region
    $region366: #{tpu_custom_call.1} parent=1 // pred_check
      _
    $region367: #{tpu_custom_call.1} parent=1 // pred_check_branch
      %774 = sbr.rel (0) target = $region369
    $region368: #{tpu_custom_call.1} parent=1 // pred_region
      %775 = dma.done [#allocation52], 48
    $region369: #{tpu_custom_call.1} parent=1 // pred_fallthru
      _
    // Predicated region
    $region370: #{tpu_custom_call.1} parent=1 // pred_check
      _
    $region371: #{tpu_custom_call.1} parent=1 // pred_check_branch
      %777 = sbr.rel (0) target = $region373
    $region372: #{tpu_custom_call.1} parent=1 // pred_region
      %778 = dma.done [#allocation55], 384
    $region373: #{tpu_custom_call.1} parent=1 // pred_fallthru
      _
    // Predicated region
    $region374: #{tpu_custom_call.1} parent=1 // pred_check
      _
    $region375: #{tpu_custom_call.1} parent=1 // pred_check_branch
      %780 = sbr.rel (0) target = $region377
    $region376: #{tpu_custom_call.1} parent=1 // pred_region
      %781 = dma.done [#allocation55], 48
    $region377: #{tpu_custom_call.1} parent=1 // pred_fallthru
      _
    // Predicated region
    $region378: #{tpu_custom_call.1} parent=1 // pred_check
      _
    $region379: #{tpu_custom_call.1} parent=1 // pred_check_branch
      %783 = sbr.rel (0) target = $region381
    $region380: #{tpu_custom_call.1} parent=1 // pred_region
      %784 = dma.done [#allocation58], 48
    $region381: #{tpu_custom_call.1} parent=1 // pred_fallthru
      _
    // Predicated region
    $region382: #{tpu_custom_call.1} parent=1 // pred_check
      _
    $region383: #{tpu_custom_call.1} parent=1 // pred_check_branch
      %786 = sbr.rel (0) target = $region385
    $region384: #{tpu_custom_call.1} parent=1 // pred_region
      %787 = dma.done [#allocation58], 96
    $region385: #{tpu_custom_call.1} parent=1 // pred_fallthru
      _
    // Predicated region
    $region386: #{tpu_custom_call.1} parent=1 // pred_check
      _
    $region387: #{tpu_custom_call.1} parent=1 // pred_check_branch
      %789 = sbr.rel (0) target = $region389
    $region388: #{tpu_custom_call.1} parent=1 // pred_region
      %790 = dma.done [#allocation61], 48
    $region389: #{tpu_custom_call.1} parent=1 // pred_fallthru
      _
    // Predicated region
    $region390: #{tpu_custom_call.1} parent=1 // pred_check
      _
    $region391: #{tpu_custom_call.1} parent=1 // pred_check_branch
      %792 = sbr.rel (0) target = $region393
    $region392: #{tpu_custom_call.1} parent=1 // pred_region
      %793 = dma.done [#allocation61], 48
    $region393: #{tpu_custom_call.1} parent=1 // pred_fallthru
      _
    // Predicated region
    $region394: #{tpu_custom_call.1} parent=1 // pred_check
      _
    $region395: #{tpu_custom_call.1} parent=1 // pred_check_branch
      %795 = sbr.rel (0) target = $region397
    $region396: #{tpu_custom_call.1} parent=1 // pred_region
      %796 = dma.done [#allocation64], 48
    $region397: #{tpu_custom_call.1} parent=1 // pred_fallthru
      _
    // Predicated region
    $region398: #{tpu_custom_call.1} parent=1 // pred_check
      _
    $region399: #{tpu_custom_call.1} parent=1 // pred_check_branch
      %798 = sbr.rel (0) target = $region401
    $region400: #{tpu_custom_call.1} parent=1 // pred_region
      %799 = dma.done [#allocation64], 48
    $region401: #{tpu_custom_call.1} parent=1 // pred_fallthru
      _
    // Predicated region
    $region402: #{tpu_custom_call.1} parent=1 // pred_check
      _
    $region403: #{tpu_custom_call.1} parent=1 // pred_check_branch
      %801 = sbr.rel (0) target = $region405
    $region404: #{tpu_custom_call.1} parent=1 // pred_region
      %802 = dma.done [#allocation67], 48
    $region405: #{tpu_custom_call.1} parent=1 // pred_fallthru
      _
    // Predicated region
    $region406: #{tpu_custom_call.1} parent=1 // pred_check
      _
    $region407: #{tpu_custom_call.1} parent=1 // pred_check_branch
      %804 = sbr.rel (0) target = $region409
    $region408: #{tpu_custom_call.1} parent=1 // pred_region
      %805 = dma.done [#allocation67], 48
    $region409: #{tpu_custom_call.1} parent=1 // pred_fallthru
      _
    %v806 = vld [vmem:[#allocation3] sm:$0xff]
    %v807 = vld [vmem:[%s3] sm:$0xff]
    %v808 = vld [vmem:[%s5] sm:$0xff]
    %v809 = vld [vmem:[#allocation6] sm:$0x1]
    %v810 = vld [vmem:[#allocation8] sm:$0x1]
    %v811 = vld [vmem:[#allocation9] sm:$0xff]
    %v812 = vld [vmem:[#allocation9 + $0x8] sm:$0xff]
    %v813 = vld [vmem:[#allocation9 + $0x10] sm:$0xff]
    %v814 = vld [vmem:[#allocation9 + $0x18] sm:$0xff]
    %v815 = vld [vmem:[#allocation11] sm:$0xff]
    %v816 = vld [vmem:[#allocation11 + $0x8] sm:$0xff]
    %v817 = vld [vmem:[#allocation11 + $0x10] sm:$0xff]
    %v818 = vld [vmem:[#allocation11 + $0x18] sm:$0xff]
    %v819 = vld [vmem:[#allocation12] sm:$0x1]
    %v820 = vld [vmem:[%s17] sm:$0x3]
    %v821 = vld [vmem:[#allocation14] sm:$0x1]
    %v822 = vld [vmem:[#allocation15] sm:$0x1]
    %v823 = vld [vmem:[#allocation17] sm:$0xff]
    %v824 = vld [vmem:[#allocation17 + $0x8] sm:$0xff]
    %v825 = vld [vmem:[#allocation17 + $0x10] sm:$0xff]
    %v826 = vld [vmem:[#allocation17 + $0x18] sm:$0xff]
    %v827 = vld [vmem:[#allocation2] sm:$0x1]
    %v828 = vld [vmem:[%s27] sm:$0xff]
    %v829 = vld [vmem:[%s27 + $0x8] sm:$0xff]
    %v830 = vld [vmem:[%s27 + $0x10] sm:$0xff]
    %v831 = vld [vmem:[%s27 + $0x18] sm:$0xff]
    %v832 = vld [vmem:[#allocation18] sm:$0x1]
    %v833 = vld [vmem:[#allocation20] sm:$0x1]
    %v834 = vld [vmem:[#allocation21] sm:$0xff]
    %v835 = vld [vmem:[#allocation21 + $0x8] sm:$0xff]
    %v836 = vld [vmem:[#allocation21 + $0x10] sm:$0xff]
    %v837 = vld [vmem:[#allocation21 + $0x18] sm:$0xff]
    %v838 = vld [vmem:[#allocation23] sm:$0x1]
    %v839 = vld [vmem:[#allocation24] sm:$0x1]
    %v840 = vld [vmem:[#allocation26] sm:$0xff]
    %v841 = vld [vmem:[#allocation26 + $0x8] sm:$0xff]
    %v842 = vld [vmem:[#allocation26 + $0x10] sm:$0xff]
    %v843 = vld [vmem:[#allocation26 + $0x18] sm:$0xff]
    %v844 = vld [vmem:[#allocation27] sm:$0x1]
    %v845 = vld [vmem:[%s43] sm:$0xff]
    %v846 = vld [vmem:[%s43 + $0x8] sm:$0xff]
    %v847 = vld [vmem:[%s43 + $0x10] sm:$0xff]
    %v848 = vld [vmem:[%s43 + $0x18] sm:$0xff]
    %v849 = vld [vmem:[%s43 + $0x20] sm:$0xff]
    %v850 = vld [vmem:[%s43 + $0x28] sm:$0xff]
    %v851 = vld [vmem:[%s43 + $0x30] sm:$0xff]
    %v852 = vld [vmem:[%s43 + $0x38] sm:$0xff]
    %v853 = vld [vmem:[%s43 + $0x40] sm:$0xff]
    %v854 = vld [vmem:[%s43 + $0x48] sm:$0xff]
    %v855 = vld [vmem:[%s43 + $0x50] sm:$0xff]
    %v856 = vld [vmem:[%s43 + $0x58] sm:$0xff]
    %v857 = vld [vmem:[#allocation29] sm:$0x1]
    %v858 = vld [vmem:[#allocation30] sm:$0x1]
    %v859 = vld [vmem:[%s49] sm:$0xff]
    %v860 = vld [vmem:[%s49 + $0x8] sm:$0xff]
    %v861 = vld [vmem:[%s49 + $0x10] sm:$0xff]
    %v862 = vld [vmem:[%s49 + $0x18] sm:$0xff]
    %v863 = vld [vmem:[%s49 + $0x20] sm:$0xff]
    %v864 = vld [vmem:[%s49 + $0x28] sm:$0xff]
    %v865 = vld [vmem:[%s49 + $0x30] sm:$0xff]
    %v866 = vld [vmem:[%s49 + $0x38] sm:$0xff]
    %v867 = vld [vmem:[%s49 + $0x40] sm:$0xff]
    %v868 = vld [vmem:[%s49 + $0x48] sm:$0xff]
    %v869 = vld [vmem:[%s49 + $0x50] sm:$0xff]
    %v870 = vld [vmem:[%s49 + $0x58] sm:$0xff]
    %v871 = vld [vmem:[#allocation32] sm:$0x1]
    %v872 = vld [vmem:[#allocation33] sm:$0x1]
    %v873 = vld [vmem:[%s55] sm:$0xff]
    %v874 = vld [vmem:[%s55 + $0x8] sm:$0xff]
    %v875 = vld [vmem:[%s55 + $0x10] sm:$0xff]
    %v876 = vld [vmem:[%s55 + $0x18] sm:$0xff]
    %v877 = vld [vmem:[%s55 + $0x20] sm:$0xff]
    %v878 = vld [vmem:[%s55 + $0x28] sm:$0xff]
    %v879 = vld [vmem:[%s55 + $0x30] sm:$0xff]
    %v880 = vld [vmem:[%s55 + $0x38] sm:$0xff]
    %v881 = vld [vmem:[%s55 + $0x40] sm:$0xff]
    %v882 = vld [vmem:[%s55 + $0x48] sm:$0xff]
    %v883 = vld [vmem:[%s55 + $0x50] sm:$0xff]
    %v884 = vld [vmem:[%s55 + $0x58] sm:$0xff]
    %v885 = vld [vmem:[#allocation35] sm:$0x1]
    %v886 = vld [vmem:[%s59] sm:$0xff]
    %v887 = vld [vmem:[%s59 + $0x8] sm:$0xff]
    %v888 = vld [vmem:[%s59 + $0x10] sm:$0xff]
    %v889 = vld [vmem:[%s59 + $0x18] sm:$0xff]
    %v890 = vld [vmem:[%s59 + $0x20] sm:$0xff]
    %v891 = vld [vmem:[%s59 + $0x28] sm:$0xff]
    %v892 = vld [vmem:[#allocation36] sm:$0x1]
    %v893 = vld [vmem:[#allocation38] sm:$0x1]
    %v894 = vld [vmem:[%s65] sm:$0xff]
    %v895 = vld [vmem:[%s65 + $0x8] sm:$0xff]
    %v896 = vld [vmem:[%s65 + $0x10] sm:$0xff]
    %v897 = vld [vmem:[%s65 + $0x18] sm:$0xff]
    %v898 = vld [vmem:[%s65 + $0x20] sm:$0xff]
    %v899 = vld [vmem:[%s65 + $0x28] sm:$0xff]
    %v900 = vld [vmem:[#allocation39] sm:$0x1]
    %v901 = vld [vmem:[#allocation41] sm:$0x1]
    %v902 = vld [vmem:[%s71] sm:$0xff]
    %v903 = vld [vmem:[%s71 + $0x8] sm:$0xff]
    %v904 = vld [vmem:[%s71 + $0x10] sm:$0xff]
    %v905 = vld [vmem:[%s71 + $0x18] sm:$0xff]
    %v906 = vld [vmem:[%s71 + $0x20] sm:$0xff]
    %v907 = vld [vmem:[%s71 + $0x28] sm:$0xff]
    %v908 = vld [vmem:[%s73] sm:$0x1]
    %v909 = vld [vmem:[%s75] sm:$0xff]
    %v910 = vld [vmem:[%s75 + $0x8] sm:$0xff]
    %v911 = vld [vmem:[#allocation42] sm:$0x1]
    %v912 = vld [vmem:[#allocation44] sm:$0x1]
    %v913 = vld [vmem:[#allocation45] sm:$0xff]
    %v914 = vld [vmem:[#allocation45 + $0x8] sm:$0xff]
    %v915 = vld [vmem:[#allocation47] sm:$0x1]
    %v916 = vld [vmem:[#allocation48] sm:$0x1]
    %v917 = vld [vmem:[#allocation50] sm:$0xff]
    %v918 = vld [vmem:[#allocation50 + $0x8] sm:$0xff]
    %v919 = vld [vmem:[#allocation51] sm:$0x1]
    %v920 = vld [vmem:[#allocation53] sm:$0x1]
    %v921 = vld [vmem:[#allocation54] sm:$0x3f]
    %v922 = vld [vmem:[#allocation56] sm:$0x1]
    %v923 = vld [vmem:[#allocation57] sm:$0x1]
    %v924 = vld [vmem:[#allocation59] sm:$0x3]
    %v925 = vld [vmem:[#allocation60] sm:$0x1]
    %v926 = vld [vmem:[#allocation62] sm:$0x1]
    %v927 = vld [vmem:[%s105] sm:$0xff]
    %v928 = vld [vmem:[%s105 + $0x8] sm:$0xff]
    %v929 = vld [vmem:[%s105 + $0x10] sm:$0xff]
    %v930 = vld [vmem:[%s105 + $0x18] sm:$0xff]
    %v931 = vld [vmem:[#allocation63] sm:$0x1]
    %v932 = vld [vmem:[#allocation65] sm:$0x1]
    %v933 = vld [vmem:[%s111] sm:$0xff]
    %v934 = vld [vmem:[%s111 + $0x8] sm:$0xff]
    %v935 = vld [vmem:[%s111 + $0x10] sm:$0xff]
    %v936 = vld [vmem:[%s111 + $0x18] sm:$0xff]
    %v937 = vld [vmem:[%s111 + $0x20] sm:$0xff]
    %v938 = vld [vmem:[%s111 + $0x28] sm:$0xff]
    %v939 = vld [vmem:[%s111 + $0x30] sm:$0xff]
    %v940 = vld [vmem:[%s111 + $0x38] sm:$0xff]
    %v941 = vld [vmem:[#allocation66] sm:$0x1]
    %v942 = vld [vmem:[#allocation68] sm:$0x1]
    %v943 = vld [vmem:[%s117] sm:$0xff]
    %v944 = vld [vmem:[%s117 + $0x8] sm:$0xff]
    %v945 = vld [vmem:[%s117 + $0x10] sm:$0xff]
    %v946 = vld [vmem:[%s117 + $0x18] sm:$0xff]
    %vm947 = vcmask 261120
    %v949 = vsel %vm947, %v806, 0
    %951 = vmatprep.subr.mxu0 0.0
    %952 = vmatpush1.msra.mxu0 0.0
    %953 = vmatprep.subr.mxu0 0.0
    %954 = vmatpush1.msra.mxu0 0.0
    %955 = vmatprep.subr.mxu0 0.0
    %956 = vmatpush1.msra.mxu0 0.0
    %957 = vmatprep.subr.mxu0 0.0
    %958 = vmatpush1.msra.mxu0 0.0
    %959 = vmatprep.subr.mxu0 0.0
    %960 = vmatpush1.msra.mxu0 0.0
    %961 = vmatprep.subr.mxu0 0.0
    %962 = vmatpush1.msra.mxu0 0.0
    %963 = vmatprep.subr.mxu0 0.0
    %964 = vmatpush1.msra.mxu0 0.0
    %965 = vmatprep.subr.mxu0 0.0
    %966 = vmatpush1.msra.mxu0 0.0
    %967 = vmatprep.subr.mxu0 0.0
    %968 = vmatpush1.msra.mxu0 0.0
    %969 = vmatprep.subr.mxu0 0.0
    %970 = vmatpush1.msra.mxu0 0.0
    %971 = vmatprep.subr.mxu0 0.0
    %972 = vmatpush1.msra.mxu0 0.0
    %973 = vmatprep.subr.mxu0 0.0
    %974 = vmatpush1.msra.mxu0 0.0
    %975 = vmatprep.subr.mxu0 0.0
    %976 = vmatpush1.msra.mxu0 %v930
    %977 = vmatprep.subr.mxu0 0.0
    %978 = vmatpush1.msra.mxu0 %v929
    %979 = vmatprep.subr.mxu0 0.0
    %980 = vmatpush1.msra.mxu0 %v928
    %981 = vmatprep.subr.mxu0 0.0
    %982 = vmatpush1.msra.mxu0 %v927
    %983 = vmatprep.subr.mxu0 0.0
    %984 = vmatpush2.msra.mxu0 0.0
    %985 = vmatprep.subr.mxu0 0.0
    %986 = vmatpush2.msra.mxu0 0.0
    %987 = vmatprep.subr.mxu0 0.0
    %988 = vmatpush2.msra.mxu0 0.0
    %989 = vmatprep.subr.mxu0 0.0
    %990 = vmatpush2.msra.mxu0 0.0
    %991 = vmatprep.subr.mxu0 0.0
    %992 = vmatpush2.msra.mxu0 0.0
    %993 = vmatprep.subr.mxu0 0.0
    %994 = vmatpush2.msra.mxu0 0.0
    %995 = vmatprep.subr.mxu0 0.0
    %996 = vmatpush2.msra.mxu0 0.0
    %997 = vmatprep.subr.mxu0 0.0
    %998 = vmatpush2.msra.mxu0 0.0
    %999 = vmatprep.subr.mxu0 0.0
    %1000 = vmatpush2.msra.mxu0 0.0
    %1001 = vmatprep.subr.mxu0 0.0
    %1002 = vmatpush2.msra.mxu0 0.0
    %1003 = vmatprep.subr.mxu0 0.0
    %1004 = vmatpush2.msra.mxu0 0.0
    %1005 = vmatprep.subr.mxu0 0.0
    %1006 = vmatpush2.msra.mxu0 0.0
    %1007 = vmatprep.subr.mxu0 0.0
    %1008 = vmatpush2.msra.mxu0 0.0
    %1009 = vmatprep.subr.mxu0 0.0
    %1010 = vmatpush2.msra.mxu0 0.0
    %1011 = vmatprep.subr.mxu0 0.0
    %1012 = vmatpush2.msra.mxu0 0.0
    %1013 = vmatprep.subr.mxu0 0.0
    %1014 = vmatpush2.msra.mxu0 0.0
    %1015 = vmatprep.mubr.f32.mxu0 0.0
    %1016 = vmatmul.mubr.f32.gmra.mxu0 %v949
    %v1017 = vpop.f32.mrf.mxu0
    %v1018 = vadd.f32 0.0, %v1017
    %v1019 = vpop.f32.mrf.mxu0
    %1020 = vdwg.mxu0
    %vm1021 = vcmask 523264
    %v1022 = vsel %vm1021, %v1018, 0.0
    %1023 = vadd.xlane.f32.xlu0 %v1022
    %v1024 = vpop.xlane.xlu0 %1023
    %v1025 = vmul.f32 %v1018, %v1018
    %v1026 = vsel %vm1021, %v1025, 0.0
    %1027 = vadd.xlane.f32.xlu0 %v1026
    %v1028 = vpop.xlane.xlu0 %1027
    %v1029 = vmul.f32 %v1024, 0.015625
    %v1030 = vmul.f32 %v1028, 0.015625
    %v1031 = vmul.f32 %v1029, %v1029
    %v1032 = vsub.f32 %v1030, %v1031
    %v1033 = vmax.f32 %v1032, 0.0
    %v1034 = vsub.f32 %v1018, %v1029
    %v1035 = vadd.f32 %v1033, 1e-05
    %v1036 = vrsqrt.pop %v1035
    %v1037 = vmul.f32 %v1034, %v1036
    %v1039 = vlaneseq
    %v1040 = vshrl.u32 %v1039, 7
    %v1041 = vsub.s32 0, %v1040
    %v1042 = vrot.slane %v926, %v1041
    %v1044 = vmul.f32 %v1037, %v1042
    %v1046 = vlaneseq
    %v1047 = vshrl.u32 %v1046, 7
    %v1048 = vsub.s32 0, %v1047
    %v1049 = vrot.slane %v925, %v1048
    %v1051 = vadd.f32 %v1044, %v1049
    %v1052 = vmax.f32 %v1051, 0.0
    %v1054 = vsel %vm1021, %v1052, 0
    %1056 = vmatprep.subr.mxu0 0.0
    %1057 = vmatpush1.msra.mxu0 0.0
    %1058 = vmatprep.subr.mxu0 0.0
    %1059 = vmatpush1.msra.mxu0 0.0
    %1060 = vmatprep.subr.mxu0 0.0
    %1061 = vmatpush1.msra.mxu0 0.0
    %1062 = vmatprep.subr.mxu0 0.0
    %1063 = vmatpush1.msra.mxu0 0.0
    %1064 = vmatprep.subr.mxu0 0.0
    %1065 = vmatpush1.msra.mxu0 0.0
    %1066 = vmatprep.subr.mxu0 0.0
    %1067 = vmatpush1.msra.mxu0 0.0
    %1068 = vmatprep.subr.mxu0 0.0
    %1069 = vmatpush1.msra.mxu0 0.0
    %1070 = vmatprep.subr.mxu0 0.0
    %1071 = vmatpush1.msra.mxu0 0.0
    %1072 = vmatprep.subr.mxu0 0.0
    %1073 = vmatpush1.msra.mxu0 %v940
    %1074 = vmatprep.subr.mxu0 0.0
    %1075 = vmatpush1.msra.mxu0 %v939
    %1076 = vmatprep.subr.mxu0 0.0
    %1077 = vmatpush1.msra.mxu0 %v938
    %1078 = vmatprep.subr.mxu0 0.0
    %1079 = vmatpush1.msra.mxu0 %v937
    %1080 = vmatprep.subr.mxu0 0.0
    %1081 = vmatpush1.msra.mxu0 %v936
    %1082 = vmatprep.subr.mxu0 0.0
    %1083 = vmatpush1.msra.mxu0 %v935
    %1084 = vmatprep.subr.mxu0 0.0
    %1085 = vmatpush1.msra.mxu0 %v934
    %1086 = vmatprep.subr.mxu0 0.0
    %1087 = vmatpush1.msra.mxu0 %v933
    %1088 = vmatprep.subr.mxu0 0.0
    %1089 = vmatpush2.msra.mxu0 0.0
    %1090 = vmatprep.subr.mxu0 0.0
    %1091 = vmatpush2.msra.mxu0 0.0
    %1092 = vmatprep.subr.mxu0 0.0
    %1093 = vmatpush2.msra.mxu0 0.0
    %1094 = vmatprep.subr.mxu0 0.0
    %1095 = vmatpush2.msra.mxu0 0.0
    %1096 = vmatprep.subr.mxu0 0.0
    %1097 = vmatpush2.msra.mxu0 0.0
    %1098 = vmatprep.subr.mxu0 0.0
    %1099 = vmatpush2.msra.mxu0 0.0
    %1100 = vmatprep.subr.mxu0 0.0
    %1101 = vmatpush2.msra.mxu0 0.0
    %1102 = vmatprep.subr.mxu0 0.0
    %1103 = vmatpush2.msra.mxu0 0.0
    %1104 = vmatprep.subr.mxu0 0.0
    %1105 = vmatpush2.msra.mxu0 0.0
    %1106 = vmatprep.subr.mxu0 0.0
    %1107 = vmatpush2.msra.mxu0 0.0
    %1108 = vmatprep.subr.mxu0 0.0
    %1109 = vmatpush2.msra.mxu0 0.0
    %1110 = vmatprep.subr.mxu0 0.0
    %1111 = vmatpush2.msra.mxu0 0.0
    %1112 = vmatprep.subr.mxu0 0.0
    %1113 = vmatpush2.msra.mxu0 0.0
    %1114 = vmatprep.subr.mxu0 0.0
    %1115 = vmatpush2.msra.mxu0 0.0
    %1116 = vmatprep.subr.mxu0 0.0
    %1117 = vmatpush2.msra.mxu0 0.0
    %1118 = vmatprep.subr.mxu0 0.0
    %1119 = vmatpush2.msra.mxu0 0.0
    %1120 = vmatprep.mubr.f32.mxu0 0.0
    %1121 = vmatmul.mubr.f32.gmra.mxu0 %v1054
    %v1122 = vpop.f32.mrf.mxu0
    %v1123 = vadd.f32 0.0, %v1122
    %v1124 = vpop.f32.mrf.mxu0
    %1125 = vdwg.mxu0
    %v1126 = vsel %vm947, %v1123, 0.0
    %1127 = vadd.xlane.f32.xlu0 %v1126
    %v1128 = vpop.xlane.xlu0 %1127
    %v1129 = vmul.f32 %v1123, %v1123
    %v1130 = vsel %vm947, %v1129, 0.0
    %1131 = vadd.xlane.f32.xlu0 %v1130
    %v1132 = vpop.xlane.xlu0 %1131
    %v1133 = vmul.f32 %v1128, 0.03125
    %v1134 = vmul.f32 %v1132, 0.03125
    %v1135 = vmul.f32 %v1133, %v1133
    %v1136 = vsub.f32 %v1134, %v1135
    %v1137 = vmax.f32 %v1136, 0.0
    %v1138 = vsub.f32 %v1123, %v1133
    %v1139 = vadd.f32 %v1137, 1e-05
    %v1140 = vrsqrt.pop %v1139
    %v1141 = vmul.f32 %v1138, %v1140
    %v1143 = vlaneseq
    %v1144 = vshrl.u32 %v1143, 7
    %v1145 = vsub.s32 0, %v1144
    %v1146 = vrot.slane %v932, %v1145
    %v1148 = vmul.f32 %v1141, %v1146
    %v1150 = vlaneseq
    %v1151 = vshrl.u32 %v1150, 7
    %v1152 = vsub.s32 0, %v1151
    %v1153 = vrot.slane %v931, %v1152
    %v1155 = vadd.f32 %v1148, %v1153
    %v1156 = vmax.f32 %v1155, 0.0
    %v1158 = vsel %vm947, %v1156, 0
    %1160 = vmatprep.subr.mxu0 0.0
    %1161 = vmatpush1.msra.mxu0 0.0
    %1162 = vmatprep.subr.mxu0 0.0
    %1163 = vmatpush1.msra.mxu0 0.0
    %1164 = vmatprep.subr.mxu0 0.0
    %1165 = vmatpush1.msra.mxu0 0.0
    %1166 = vmatprep.subr.mxu0 0.0
    %1167 = vmatpush1.msra.mxu0 0.0
    %1168 = vmatprep.subr.mxu0 0.0
    %1169 = vmatpush1.msra.mxu0 0.0
    %1170 = vmatprep.subr.mxu0 0.0
    %1171 = vmatpush1.msra.mxu0 0.0
    %1172 = vmatprep.subr.mxu0 0.0
    %1173 = vmatpush1.msra.mxu0 0.0
    %1174 = vmatprep.subr.mxu0 0.0
    %1175 = vmatpush1.msra.mxu0 0.0
    %1176 = vmatprep.subr.mxu0 0.0
    %1177 = vmatpush1.msra.mxu0 0.0
    %1178 = vmatprep.subr.mxu0 0.0
    %1179 = vmatpush1.msra.mxu0 0.0
    %1180 = vmatprep.subr.mxu0 0.0
    %1181 = vmatpush1.msra.mxu0 0.0
    %1182 = vmatprep.subr.mxu0 0.0
    %1183 = vmatpush1.msra.mxu0 0.0
    %1184 = vmatprep.subr.mxu0 0.0
    %1185 = vmatpush1.msra.mxu0 %v946
    %1186 = vmatprep.subr.mxu0 0.0
    %1187 = vmatpush1.msra.mxu0 %v945
    %1188 = vmatprep.subr.mxu0 0.0
    %1189 = vmatpush1.msra.mxu0 %v944
    %1190 = vmatprep.subr.mxu0 0.0
    %1191 = vmatpush1.msra.mxu0 %v943
    %1192 = vmatprep.subr.mxu0 0.0
    %1193 = vmatpush2.msra.mxu0 0.0
    %1194 = vmatprep.subr.mxu0 0.0
    %1195 = vmatpush2.msra.mxu0 0.0
    %1196 = vmatprep.subr.mxu0 0.0
    %1197 = vmatpush2.msra.mxu0 0.0
    %1198 = vmatprep.subr.mxu0 0.0
    %1199 = vmatpush2.msra.mxu0 0.0
    %1200 = vmatprep.subr.mxu0 0.0
    %1201 = vmatpush2.msra.mxu0 0.0
    %1202 = vmatprep.subr.mxu0 0.0
    %1203 = vmatpush2.msra.mxu0 0.0
    %1204 = vmatprep.subr.mxu0 0.0
    %1205 = vmatpush2.msra.mxu0 0.0
    %1206 = vmatprep.subr.mxu0 0.0
    %1207 = vmatpush2.msra.mxu0 0.0
    %1208 = vmatprep.subr.mxu0 0.0
    %1209 = vmatpush2.msra.mxu0 0.0
    %1210 = vmatprep.subr.mxu0 0.0
    %1211 = vmatpush2.msra.mxu0 0.0
    %1212 = vmatprep.subr.mxu0 0.0
    %1213 = vmatpush2.msra.mxu0 0.0
    %1214 = vmatprep.subr.mxu0 0.0
    %1215 = vmatpush2.msra.mxu0 0.0
    %1216 = vmatprep.subr.mxu0 0.0
    %1217 = vmatpush2.msra.mxu0 0.0
    %1218 = vmatprep.subr.mxu0 0.0
    %1219 = vmatpush2.msra.mxu0 0.0
    %1220 = vmatprep.subr.mxu0 0.0
    %1221 = vmatpush2.msra.mxu0 0.0
    %1222 = vmatprep.subr.mxu0 0.0
    %1223 = vmatpush2.msra.mxu0 0.0
    %1224 = vmatprep.mubr.f32.mxu0 0.0
    %1225 = vmatmul.mubr.f32.gmra.mxu0 %v1158
    %v1226 = vpop.f32.mrf.mxu0
    %v1227 = vadd.f32 0.0, %v1226
    %v1228 = vpop.f32.mrf.mxu0
    %1229 = vdwg.mxu0
    %vm1230 = vcmask 130048
    %v1231 = vsel %vm1230, %v1227, 0.0
    %1232 = vadd.xlane.f32.xlu0 %v1231
    %v1233 = vpop.xlane.xlu0 %1232
    %v1234 = vmul.f32 %v1227, %v1227
    %v1235 = vsel %vm1230, %v1234, 0.0
    %1236 = vadd.xlane.f32.xlu0 %v1235
    %v1237 = vpop.xlane.xlu0 %1236
    %v1238 = vmul.f32 %v1233, 0.0625
    %v1239 = vmul.f32 %v1237, 0.0625
    %v1240 = vmul.f32 %v1238, %v1238
    %v1241 = vsub.f32 %v1239, %v1240
    %v1242 = vmax.f32 %v1241, 0.0
    %v1243 = vsub.f32 %v1227, %v1238
    %v1244 = vadd.f32 %v1242, 1e-05
    %v1245 = vrsqrt.pop %v1244
    %v1246 = vmul.f32 %v1243, %v1245
    %v1248 = vlaneseq
    %v1249 = vshrl.u32 %v1248, 7
    %v1250 = vsub.s32 0, %v1249
    %v1251 = vrot.slane %v942, %v1250
    %v1253 = vmul.f32 %v1246, %v1251
    %v1255 = vlaneseq
    %v1256 = vshrl.u32 %v1255, 7
    %v1257 = vsub.s32 0, %v1256
    %v1258 = vrot.slane %v941, %v1257
    %v1260 = vadd.f32 %v1253, %v1258
    %v1261 = vmax.f32 %v1260, 0.0
    %v1263 = vsel %vm1230, %v1261, 0
    %1265 = vmatprep.subr.mxu0 0.0
    %1266 = vmatpush1.msra.mxu0 0.0
    %1267 = vmatprep.subr.mxu0 0.0
    %1268 = vmatpush1.msra.mxu0 0.0
    %1269 = vmatprep.subr.mxu0 0.0
    %1270 = vmatpush1.msra.mxu0 0.0
    %1271 = vmatprep.subr.mxu0 0.0
    %1272 = vmatpush1.msra.mxu0 0.0
    %1273 = vmatprep.subr.mxu0 0.0
    %1274 = vmatpush1.msra.mxu0 0.0
    %1275 = vmatprep.subr.mxu0 0.0
    %1276 = vmatpush1.msra.mxu0 0.0
    %1277 = vmatprep.subr.mxu0 0.0
    %1278 = vmatpush1.msra.mxu0 0.0
    %1279 = vmatprep.subr.mxu0 0.0
    %1280 = vmatpush1.msra.mxu0 0.0
    %1281 = vmatprep.subr.mxu0 0.0
    %1282 = vmatpush1.msra.mxu0 0.0
    %1283 = vmatprep.subr.mxu0 0.0
    %1284 = vmatpush1.msra.mxu0 0.0
    %1285 = vmatprep.subr.mxu0 0.0
    %1286 = vmatpush1.msra.mxu0 0.0
    %1287 = vmatprep.subr.mxu0 0.0
    %1288 = vmatpush1.msra.mxu0 0.0
    %1289 = vmatprep.subr.mxu0 0.0
    %1290 = vmatpush1.msra.mxu0 0.0
    %1291 = vmatprep.subr.mxu0 0.0
    %1292 = vmatpush1.msra.mxu0 0.0
    %1293 = vmatprep.subr.mxu0 0.0
    %1294 = vmatpush1.msra.mxu0 %v914
    %1295 = vmatprep.subr.mxu0 0.0
    %1296 = vmatpush1.msra.mxu0 %v913
    %1297 = vmatprep.subr.mxu0 0.0
    %1298 = vmatpush2.msra.mxu0 0.0
    %1299 = vmatprep.subr.mxu0 0.0
    %1300 = vmatpush2.msra.mxu0 0.0
    %1301 = vmatprep.subr.mxu0 0.0
    %1302 = vmatpush2.msra.mxu0 0.0
    %1303 = vmatprep.subr.mxu0 0.0
    %1304 = vmatpush2.msra.mxu0 0.0
    %1305 = vmatprep.subr.mxu0 0.0
    %1306 = vmatpush2.msra.mxu0 0.0
    %1307 = vmatprep.subr.mxu0 0.0
    %1308 = vmatpush2.msra.mxu0 0.0
    %1309 = vmatprep.subr.mxu0 0.0
    %1310 = vmatpush2.msra.mxu0 0.0
    %1311 = vmatprep.subr.mxu0 0.0
    %1312 = vmatpush2.msra.mxu0 0.0
    %1313 = vmatprep.subr.mxu0 0.0
    %1314 = vmatpush2.msra.mxu0 0.0
    %1315 = vmatprep.subr.mxu0 0.0
    %1316 = vmatpush2.msra.mxu0 0.0
    %1317 = vmatprep.subr.mxu0 0.0
    %1318 = vmatpush2.msra.mxu0 0.0
    %1319 = vmatprep.subr.mxu0 0.0
    %1320 = vmatpush2.msra.mxu0 0.0
    %1321 = vmatprep.subr.mxu0 0.0
    %1322 = vmatpush2.msra.mxu0 0.0
    %1323 = vmatprep.subr.mxu0 0.0
    %1324 = vmatpush2.msra.mxu0 0.0
    %1325 = vmatprep.subr.mxu0 0.0
    %1326 = vmatpush2.msra.mxu0 0.0
    %1327 = vmatprep.subr.mxu0 0.0
    %1328 = vmatpush2.msra.mxu0 0.0
    %1329 = vmatprep.mubr.f32.mxu0 0.0
    %1330 = vmatmul.mubr.f32.gmra.mxu0 %v1263
    %v1331 = vpop.f32.mrf.mxu0
    %v1332 = vadd.f32 0.0, %v1331
    %v1333 = vpop.f32.mrf.mxu0
    %1334 = vdwg.mxu0
    %v1335 = vsel %vm1230, %v1332, 0.0
    %1336 = vadd.xlane.f32.xlu0 %v1335
    %v1337 = vpop.xlane.xlu0 %1336
    %v1338 = vmul.f32 %v1332, %v1332
    %v1339 = vsel %vm1230, %v1338, 0.0
    %1340 = vadd.xlane.f32.xlu0 %v1339
    %v1341 = vpop.xlane.xlu0 %1340
    %v1342 = vmul.f32 %v1337, 0.0625
    %v1343 = vmul.f32 %v1341, 0.0625
    %v1344 = vmul.f32 %v1342, %v1342
    %v1345 = vsub.f32 %v1343, %v1344
    %v1346 = vmax.f32 %v1345, 0.0
    %v1347 = vsub.f32 %v1332, %v1342
    %v1348 = vadd.f32 %v1346, 1e-05
    %v1349 = vrsqrt.pop %v1348
    %v1350 = vmul.f32 %v1347, %v1349
    %v1352 = vlaneseq
    %v1353 = vshrl.u32 %v1352, 7
    %v1354 = vsub.s32 0, %v1353
    %v1355 = vrot.slane %v912, %v1354
    %v1357 = vmul.f32 %v1350, %v1355
    %v1359 = vlaneseq
    %v1360 = vshrl.u32 %v1359, 7
    %v1361 = vsub.s32 0, %v1360
    %v1362 = vrot.slane %v911, %v1361
    %v1364 = vadd.f32 %v1357, %v1362
    %v1365 = vmax.f32 %v1364, 0.0
    %v1367 = vsel %vm1230, %v1365, 0
    %1369 = vmatprep.subr.mxu0 0.0
    %1370 = vmatpush1.msra.mxu0 0.0
    %1371 = vmatprep.subr.mxu0 0.0
    %1372 = vmatpush1.msra.mxu0 0.0
    %1373 = vmatprep.subr.mxu0 0.0
    %1374 = vmatpush1.msra.mxu0 0.0
    %1375 = vmatprep.subr.mxu0 0.0
    %1376 = vmatpush1.msra.mxu0 0.0
    %1377 = vmatprep.subr.mxu0 0.0
    %1378 = vmatpush1.msra.mxu0 0.0
    %1379 = vmatprep.subr.mxu0 0.0
    %1380 = vmatpush1.msra.mxu0 0.0
    %1381 = vmatprep.subr.mxu0 0.0
    %1382 = vmatpush1.msra.mxu0 0.0
    %1383 = vmatprep.subr.mxu0 0.0
    %1384 = vmatpush1.msra.mxu0 0.0
    %1385 = vmatprep.subr.mxu0 0.0
    %1386 = vmatpush1.msra.mxu0 0.0
    %1387 = vmatprep.subr.mxu0 0.0
    %1388 = vmatpush1.msra.mxu0 0.0
    %1389 = vmatprep.subr.mxu0 0.0
    %1390 = vmatpush1.msra.mxu0 0.0
    %1391 = vmatprep.subr.mxu0 0.0
    %1392 = vmatpush1.msra.mxu0 0.0
    %1393 = vmatprep.subr.mxu0 0.0
    %1394 = vmatpush1.msra.mxu0 0.0
    %1395 = vmatprep.subr.mxu0 0.0
    %1396 = vmatpush1.msra.mxu0 0.0
    %1397 = vmatprep.subr.mxu0 0.0
    %1398 = vmatpush1.msra.mxu0 %v918
    %1399 = vmatprep.subr.mxu0 0.0
    %1400 = vmatpush1.msra.mxu0 %v917
    %1401 = vmatprep.subr.mxu0 0.0
    %1402 = vmatpush2.msra.mxu0 0.0
    %1403 = vmatprep.subr.mxu0 0.0
    %1404 = vmatpush2.msra.mxu0 0.0
    %1405 = vmatprep.subr.mxu0 0.0
    %1406 = vmatpush2.msra.mxu0 0.0
    %1407 = vmatprep.subr.mxu0 0.0
    %1408 = vmatpush2.msra.mxu0 0.0
    %1409 = vmatprep.subr.mxu0 0.0
    %1410 = vmatpush2.msra.mxu0 0.0
    %1411 = vmatprep.subr.mxu0 0.0
    %1412 = vmatpush2.msra.mxu0 0.0
    %1413 = vmatprep.subr.mxu0 0.0
    %1414 = vmatpush2.msra.mxu0 0.0
    %1415 = vmatprep.subr.mxu0 0.0
    %1416 = vmatpush2.msra.mxu0 0.0
    %1417 = vmatprep.subr.mxu0 0.0
    %1418 = vmatpush2.msra.mxu0 0.0
    %1419 = vmatprep.subr.mxu0 0.0
    %1420 = vmatpush2.msra.mxu0 0.0
    %1421 = vmatprep.subr.mxu0 0.0
    %1422 = vmatpush2.msra.mxu0 0.0
    %1423 = vmatprep.subr.mxu0 0.0
    %1424 = vmatpush2.msra.mxu0 0.0
    %1425 = vmatprep.subr.mxu0 0.0
    %1426 = vmatpush2.msra.mxu0 0.0
    %1427 = vmatprep.subr.mxu0 0.0
    %1428 = vmatpush2.msra.mxu0 0.0
    %1429 = vmatprep.subr.mxu0 0.0
    %1430 = vmatpush2.msra.mxu0 0.0
    %1431 = vmatprep.subr.mxu0 0.0
    %1432 = vmatpush2.msra.mxu0 0.0
    %1433 = vmatprep.mubr.f32.mxu0 0.0
    %1434 = vmatmul.mubr.f32.gmra.mxu0 %v1367
    %v1435 = vpop.f32.mrf.mxu0
    %v1436 = vadd.f32 0.0, %v1435
    %v1437 = vpop.f32.mrf.mxu0
    %1438 = vdwg.mxu0
    %v1439 = vsel %vm1230, %v1436, 0.0
    %1440 = vadd.xlane.f32.xlu0 %v1439
    %v1441 = vpop.xlane.xlu0 %1440
    %v1442 = vmul.f32 %v1436, %v1436
    %v1443 = vsel %vm1230, %v1442, 0.0
    %1444 = vadd.xlane.f32.xlu0 %v1443
    %v1445 = vpop.xlane.xlu0 %1444
    %v1446 = vmul.f32 %v1441, 0.0625
    %v1447 = vmul.f32 %v1445, 0.0625
    %v1448 = vmul.f32 %v1446, %v1446
    %v1449 = vsub.f32 %v1447, %v1448
    %v1450 = vmax.f32 %v1449, 0.0
    %v1451 = vsub.f32 %v1436, %v1446
    %v1452 = vadd.f32 %v1450, 1e-05
    %v1453 = vrsqrt.pop %v1452
    %v1454 = vmul.f32 %v1451, %v1453
    %v1456 = vlaneseq
    %v1457 = vshrl.u32 %v1456, 7
    %v1458 = vsub.s32 0, %v1457
    %v1459 = vrot.slane %v916, %v1458
    %v1461 = vmul.f32 %v1454, %v1459
    %v1463 = vlaneseq
    %v1464 = vshrl.u32 %v1463, 7
    %v1465 = vsub.s32 0, %v1464
    %v1466 = vrot.slane %v915, %v1465
    %v1468 = vadd.f32 %v1461, %v1466
    %v1469 = vadd.f32 %v1468, %v1261
    %v1470 = vmax.f32 %v1469, 0.0
    %v1472 = vlaneseq
    %v1473 = vshrl.u32 %v1472, 7
    %v1474 = vsub.s32 0, %v1473
    %v1475 = vrot.slane %v908, %v1474
    %v1478 = vsel %vm1230, %v1470, 0
    %1480 = vmatprep.subr.mxu0 0.0
    %1481 = vmatpush1.msra.mxu0 0.0
    %1482 = vmatprep.subr.mxu0 0.0
    %1483 = vmatpush1.msra.mxu0 0.0
    %1484 = vmatprep.subr.mxu0 0.0
    %1485 = vmatpush1.msra.mxu0 0.0
    %1486 = vmatprep.subr.mxu0 0.0
    %1487 = vmatpush1.msra.mxu0 0.0
    %1488 = vmatprep.subr.mxu0 0.0
    %1489 = vmatpush1.msra.mxu0 0.0
    %1490 = vmatprep.subr.mxu0 0.0
    %1491 = vmatpush1.msra.mxu0 0.0
    %1492 = vmatprep.subr.mxu0 0.0
    %1493 = vmatpush1.msra.mxu0 0.0
    %1494 = vmatprep.subr.mxu0 0.0
    %1495 = vmatpush1.msra.mxu0 0.0
    %1496 = vmatprep.subr.mxu0 0.0
    %1497 = vmatpush1.msra.mxu0 0.0
    %1498 = vmatprep.subr.mxu0 0.0
    %1499 = vmatpush1.msra.mxu0 0.0
    %1500 = vmatprep.subr.mxu0 0.0
    %1501 = vmatpush1.msra.mxu0 0.0
    %1502 = vmatprep.subr.mxu0 0.0
    %1503 = vmatpush1.msra.mxu0 0.0
    %1504 = vmatprep.subr.mxu0 0.0
    %1505 = vmatpush1.msra.mxu0 0.0
    %1506 = vmatprep.subr.mxu0 0.0
    %1507 = vmatpush1.msra.mxu0 0.0
    %1508 = vmatprep.subr.mxu0 0.0
    %1509 = vmatpush1.msra.mxu0 %v910
    %1510 = vmatprep.subr.mxu0 0.0
    %1511 = vmatpush1.msra.mxu0 %v909
    %1512 = vmatprep.subr.mxu0 0.0
    %1513 = vmatpush2.msra.mxu0 0.0
    %1514 = vmatprep.subr.mxu0 0.0
    %1515 = vmatpush2.msra.mxu0 0.0
    %1516 = vmatprep.subr.mxu0 0.0
    %1517 = vmatpush2.msra.mxu0 0.0
    %1518 = vmatprep.subr.mxu0 0.0
    %1519 = vmatpush2.msra.mxu0 0.0
    %1520 = vmatprep.subr.mxu0 0.0
    %1521 = vmatpush2.msra.mxu0 0.0
    %1522 = vmatprep.subr.mxu0 0.0
    %1523 = vmatpush2.msra.mxu0 0.0
    %1524 = vmatprep.subr.mxu0 0.0
    %1525 = vmatpush2.msra.mxu0 0.0
    %1526 = vmatprep.subr.mxu0 0.0
    %1527 = vmatpush2.msra.mxu0 0.0
    %1528 = vmatprep.subr.mxu0 0.0
    %1529 = vmatpush2.msra.mxu0 0.0
    %1530 = vmatprep.subr.mxu0 0.0
    %1531 = vmatpush2.msra.mxu0 0.0
    %1532 = vmatprep.subr.mxu0 0.0
    %1533 = vmatpush2.msra.mxu0 0.0
    %1534 = vmatprep.subr.mxu0 0.0
    %1535 = vmatpush2.msra.mxu0 0.0
    %1536 = vmatprep.subr.mxu0 0.0
    %1537 = vmatpush2.msra.mxu0 0.0
    %1538 = vmatprep.subr.mxu0 0.0
    %1539 = vmatpush2.msra.mxu0 0.0
    %1540 = vmatprep.subr.mxu0 0.0
    %1541 = vmatpush2.msra.mxu0 0.0
    %1542 = vmatprep.subr.mxu0 0.0
    %1543 = vmatpush2.msra.mxu0 0.0
    %1544 = vmatprep.mubr.f32.mxu0 0.0
    %1545 = vmatmul.mubr.f32.gmra.mxu0 %v1478
    %v1546 = vpop.f32.mrf.mxu0
    %v1547 = vadd.f32 %v1475, %v1546
    %v1548 = vpop.f32.mrf.mxu0
    %1549 = vdwg.mxu0
    %vm1550 = vcmask 15360
    %v1552 = vsel %vm1550, %v1547, 0
    %vm1554 = vcmask 1041408
    %v1556 = vsel %vm1554, %v924, 0
    %1558 = vmatprep.subr.mxu0 0.0
    %1559 = vmatpush1.msra.mxu0 0.0
    %1560 = vmatprep.subr.mxu0 0.0
    %1561 = vmatpush1.msra.mxu0 0.0
    %1562 = vmatprep.subr.mxu0 0.0
    %1563 = vmatpush1.msra.mxu0 0.0
    %1564 = vmatprep.subr.mxu0 0.0
    %1565 = vmatpush1.msra.mxu0 0.0
    %1566 = vmatprep.subr.mxu0 0.0
    %1567 = vmatpush1.msra.mxu0 0.0
    %1568 = vmatprep.subr.mxu0 0.0
    %1569 = vmatpush1.msra.mxu0 0.0
    %1570 = vmatprep.subr.mxu0 0.0
    %1571 = vmatpush1.msra.mxu0 0.0
    %1572 = vmatprep.subr.mxu0 0.0
    %1573 = vmatpush1.msra.mxu0 0.0
    %1574 = vmatprep.subr.mxu0 0.0
    %1575 = vmatpush1.msra.mxu0 0.0
    %1576 = vmatprep.subr.mxu0 0.0
    %1577 = vmatpush1.msra.mxu0 0.0
    %1578 = vmatprep.subr.mxu0 0.0
    %1579 = vmatpush1.msra.mxu0 0.0
    %1580 = vmatprep.subr.mxu0 0.0
    %1581 = vmatpush1.msra.mxu0 0.0
    %1582 = vmatprep.subr.mxu0 0.0
    %1583 = vmatpush1.msra.mxu0 0.0
    %1584 = vmatprep.subr.mxu0 0.0
    %1585 = vmatpush1.msra.mxu0 0.0
    %1586 = vmatprep.subr.mxu0 0.0
    %1587 = vmatpush1.msra.mxu0 0.0
    %1588 = vmatprep.subr.mxu0 0.0
    %1589 = vmatpush1.msra.mxu0 %v1556
    %1590 = vmatprep.subr.mxu0 0.0
    %1591 = vmatpush2.msra.mxu0 0.0
    %1592 = vmatprep.subr.mxu0 0.0
    %1593 = vmatpush2.msra.mxu0 0.0
    %1594 = vmatprep.subr.mxu0 0.0
    %1595 = vmatpush2.msra.mxu0 0.0
    %1596 = vmatprep.subr.mxu0 0.0
    %1597 = vmatpush2.msra.mxu0 0.0
    %1598 = vmatprep.subr.mxu0 0.0
    %1599 = vmatpush2.msra.mxu0 0.0
    %1600 = vmatprep.subr.mxu0 0.0
    %1601 = vmatpush2.msra.mxu0 0.0
    %1602 = vmatprep.subr.mxu0 0.0
    %1603 = vmatpush2.msra.mxu0 0.0
    %1604 = vmatprep.subr.mxu0 0.0
    %1605 = vmatpush2.msra.mxu0 0.0
    %1606 = vmatprep.subr.mxu0 0.0
    %1607 = vmatpush2.msra.mxu0 0.0
    %1608 = vmatprep.subr.mxu0 0.0
    %1609 = vmatpush2.msra.mxu0 0.0
    %1610 = vmatprep.subr.mxu0 0.0
    %1611 = vmatpush2.msra.mxu0 0.0
    %1612 = vmatprep.subr.mxu0 0.0
    %1613 = vmatpush2.msra.mxu0 0.0
    %1614 = vmatprep.subr.mxu0 0.0
    %1615 = vmatpush2.msra.mxu0 0.0
    %1616 = vmatprep.subr.mxu0 0.0
    %1617 = vmatpush2.msra.mxu0 0.0
    %1618 = vmatprep.subr.mxu0 0.0
    %1619 = vmatpush2.msra.mxu0 0.0
    %1620 = vmatprep.subr.mxu0 0.0
    %1621 = vmatpush2.msra.mxu0 0.0
    %1622 = vmatprep.mubr.f32.mxu0 0.0
    %1623 = vmatmul.mubr.f32.gmra.mxu0 %v1552
    %v1624 = vpop.f32.mrf.mxu0
    %v1625 = vadd.f32 0.0, %v1624
    %v1626 = vpop.f32.mrf.mxu0
    %1627 = vdwg.mxu0
    %v1628 = vsel %vm1230, %v1625, 0.0
    %1629 = vadd.xlane.f32.xlu0 %v1628
    %v1630 = vpop.xlane.xlu0 %1629
    %v1631 = vmul.f32 %v1625, %v1625
    %v1632 = vsel %vm1230, %v1631, 0.0
    %1633 = vadd.xlane.f32.xlu0 %v1632
    %v1634 = vpop.xlane.xlu0 %1633
    %v1635 = vmul.f32 %v1630, 0.0625
    %v1636 = vmul.f32 %v1634, 0.0625
    %v1637 = vmul.f32 %v1635, %v1635
    %v1638 = vsub.f32 %v1636, %v1637
    %v1639 = vmax.f32 %v1638, 0.0
    %v1640 = vsub.f32 %v1625, %v1635
    %v1641 = vadd.f32 %v1639, 1e-05
    %v1642 = vrsqrt.pop %v1641
    %v1643 = vmul.f32 %v1640, %v1642
    %v1645 = vlaneseq
    %v1646 = vshrl.u32 %v1645, 7
    %v1647 = vsub.s32 0, %v1646
    %v1648 = vrot.slane %v923, %v1647
    %v1650 = vmul.f32 %v1643, %v1648
    %v1652 = vlaneseq
    %v1653 = vshrl.u32 %v1652, 7
    %v1654 = vsub.s32 0, %v1653
    %v1655 = vrot.slane %v922, %v1654
    %v1657 = vadd.f32 %v1650, %v1655
    %v1658 = vmax.f32 %v1657, 0.0
    %1660 = vrot.lane.b32.xlu0 %v1658, 32
    %v1661 = vpop.permute.xlu0 %1660
    %v1663 = vsel %vm947, %v1156, %v1661
    %vm1664 = vcmask 392192
    %v1666 = vsel %vm1664, %v1663, 0
    %1668 = vmatprep.subr.mxu0 0.0
    %1669 = vmatpush1.msra.mxu0 0.0
    %1670 = vmatprep.subr.mxu0 0.0
    %1671 = vmatpush1.msra.mxu0 0.0
    %1672 = vmatprep.subr.mxu0 0.0
    %1673 = vmatpush1.msra.mxu0 0.0
    %1674 = vmatprep.subr.mxu0 0.0
    %1675 = vmatpush1.msra.mxu0 0.0
    %1676 = vmatprep.subr.mxu0 0.0
    %1677 = vmatpush1.msra.mxu0 0.0
    %1678 = vmatprep.subr.mxu0 0.0
    %1679 = vmatpush1.msra.mxu0 0.0
    %1680 = vmatprep.subr.mxu0 0.0
    %1681 = vmatpush1.msra.mxu0 0.0
    %1682 = vmatprep.subr.mxu0 0.0
    %1683 = vmatpush1.msra.mxu0 0.0
    %1684 = vmatprep.subr.mxu0 0.0
    %1685 = vmatpush1.msra.mxu0 0.0
    %1686 = vmatprep.subr.mxu0 0.0
    %1687 = vmatpush1.msra.mxu0 0.0
    %1688 = vmatprep.subr.mxu0 0.0
    %1689 = vmatpush1.msra.mxu0 %v899
    %1690 = vmatprep.subr.mxu0 0.0
    %1691 = vmatpush1.msra.mxu0 %v898
    %1692 = vmatprep.subr.mxu0 0.0
    %1693 = vmatpush1.msra.mxu0 %v897
    %1694 = vmatprep.subr.mxu0 0.0
    %1695 = vmatpush1.msra.mxu0 %v896
    %1696 = vmatprep.subr.mxu0 0.0
    %1697 = vmatpush1.msra.mxu0 %v895
    %1698 = vmatprep.subr.mxu0 0.0
    %1699 = vmatpush1.msra.mxu0 %v894
    %1700 = vmatprep.subr.mxu0 0.0
    %1701 = vmatpush2.msra.mxu0 0.0
    %1702 = vmatprep.subr.mxu0 0.0
    %1703 = vmatpush2.msra.mxu0 0.0
    %1704 = vmatprep.subr.mxu0 0.0
    %1705 = vmatpush2.msra.mxu0 0.0
    %1706 = vmatprep.subr.mxu0 0.0
    %1707 = vmatpush2.msra.mxu0 0.0
    %1708 = vmatprep.subr.mxu0 0.0
    %1709 = vmatpush2.msra.mxu0 0.0
    %1710 = vmatprep.subr.mxu0 0.0
    %1711 = vmatpush2.msra.mxu0 0.0
    %1712 = vmatprep.subr.mxu0 0.0
    %1713 = vmatpush2.msra.mxu0 0.0
    %1714 = vmatprep.subr.mxu0 0.0
    %1715 = vmatpush2.msra.mxu0 0.0
    %1716 = vmatprep.subr.mxu0 0.0
    %1717 = vmatpush2.msra.mxu0 0.0
    %1718 = vmatprep.subr.mxu0 0.0
    %1719 = vmatpush2.msra.mxu0 0.0
    %1720 = vmatprep.subr.mxu0 0.0
    %1721 = vmatpush2.msra.mxu0 0.0
    %1722 = vmatprep.subr.mxu0 0.0
    %1723 = vmatpush2.msra.mxu0 0.0
    %1724 = vmatprep.subr.mxu0 0.0
    %1725 = vmatpush2.msra.mxu0 0.0
    %1726 = vmatprep.subr.mxu0 0.0
    %1727 = vmatpush2.msra.mxu0 0.0
    %1728 = vmatprep.subr.mxu0 0.0
    %1729 = vmatpush2.msra.mxu0 0.0
    %1730 = vmatprep.subr.mxu0 0.0
    %1731 = vmatpush2.msra.mxu0 0.0
    %1732 = vmatprep.mubr.f32.mxu0 0.0
    %1733 = vmatmul.mubr.f32.gmra.mxu0 %v1666
    %v1734 = vpop.f32.mrf.mxu0
    %v1735 = vadd.f32 0.0, %v1734
    %v1736 = vpop.f32.mrf.mxu0
    %1737 = vdwg.mxu0
    %v1738 = vsel %vm1664, %v1735, 0.0
    %1739 = vadd.xlane.f32.xlu0 %v1738
    %v1740 = vpop.xlane.xlu0 %1739
    %v1741 = vmul.f32 %v1735, %v1735
    %v1742 = vsel %vm1664, %v1741, 0.0
    %1743 = vadd.xlane.f32.xlu0 %v1742
    %v1744 = vpop.xlane.xlu0 %1743
    %v1745 = vmul.f32 %v1740, 0.020833334
    %v1746 = vmul.f32 %v1744, 0.020833334
    %v1747 = vmul.f32 %v1745, %v1745
    %v1748 = vsub.f32 %v1746, %v1747
    %v1749 = vmax.f32 %v1748, 0.0
    %v1750 = vsub.f32 %v1735, %v1745
    %v1751 = vadd.f32 %v1749, 1e-05
    %v1752 = vrsqrt.pop %v1751
    %v1753 = vmul.f32 %v1750, %v1752
    %v1755 = vlaneseq
    %v1756 = vshrl.u32 %v1755, 7
    %v1757 = vsub.s32 0, %v1756
    %v1758 = vrot.slane %v893, %v1757
    %v1760 = vmul.f32 %v1753, %v1758
    %v1762 = vlaneseq
    %v1763 = vshrl.u32 %v1762, 7
    %v1764 = vsub.s32 0, %v1763
    %v1765 = vrot.slane %v892, %v1764
    %v1767 = vadd.f32 %v1760, %v1765
    %v1768 = vmax.f32 %v1767, 0.0
    %v1770 = vsel %vm1664, %v1768, 0
    %1772 = vmatprep.subr.mxu0 0.0
    %1773 = vmatpush1.msra.mxu0 0.0
    %1774 = vmatprep.subr.mxu0 0.0
    %1775 = vmatpush1.msra.mxu0 0.0
    %1776 = vmatprep.subr.mxu0 0.0
    %1777 = vmatpush1.msra.mxu0 0.0
    %1778 = vmatprep.subr.mxu0 0.0
    %1779 = vmatpush1.msra.mxu0 0.0
    %1780 = vmatprep.subr.mxu0 0.0
    %1781 = vmatpush1.msra.mxu0 0.0
    %1782 = vmatprep.subr.mxu0 0.0
    %1783 = vmatpush1.msra.mxu0 0.0
    %1784 = vmatprep.subr.mxu0 0.0
    %1785 = vmatpush1.msra.mxu0 0.0
    %1786 = vmatprep.subr.mxu0 0.0
    %1787 = vmatpush1.msra.mxu0 0.0
    %1788 = vmatprep.subr.mxu0 0.0
    %1789 = vmatpush1.msra.mxu0 0.0
    %1790 = vmatprep.subr.mxu0 0.0
    %1791 = vmatpush1.msra.mxu0 0.0
    %1792 = vmatprep.subr.mxu0 0.0
    %1793 = vmatpush1.msra.mxu0 %v907
    %1794 = vmatprep.subr.mxu0 0.0
    %1795 = vmatpush1.msra.mxu0 %v906
    %1796 = vmatprep.subr.mxu0 0.0
    %1797 = vmatpush1.msra.mxu0 %v905
    %1798 = vmatprep.subr.mxu0 0.0
    %1799 = vmatpush1.msra.mxu0 %v904
    %1800 = vmatprep.subr.mxu0 0.0
    %1801 = vmatpush1.msra.mxu0 %v903
    %1802 = vmatprep.subr.mxu0 0.0
    %1803 = vmatpush1.msra.mxu0 %v902
    %1804 = vmatprep.subr.mxu0 0.0
    %1805 = vmatpush2.msra.mxu0 0.0
    %1806 = vmatprep.subr.mxu0 0.0
    %1807 = vmatpush2.msra.mxu0 0.0
    %1808 = vmatprep.subr.mxu0 0.0
    %1809 = vmatpush2.msra.mxu0 0.0
    %1810 = vmatprep.subr.mxu0 0.0
    %1811 = vmatpush2.msra.mxu0 0.0
    %1812 = vmatprep.subr.mxu0 0.0
    %1813 = vmatpush2.msra.mxu0 0.0
    %1814 = vmatprep.subr.mxu0 0.0
    %1815 = vmatpush2.msra.mxu0 0.0
    %1816 = vmatprep.subr.mxu0 0.0
    %1817 = vmatpush2.msra.mxu0 0.0
    %1818 = vmatprep.subr.mxu0 0.0
    %1819 = vmatpush2.msra.mxu0 0.0
    %1820 = vmatprep.subr.mxu0 0.0
    %1821 = vmatpush2.msra.mxu0 0.0
    %1822 = vmatprep.subr.mxu0 0.0
    %1823 = vmatpush2.msra.mxu0 0.0
    %1824 = vmatprep.subr.mxu0 0.0
    %1825 = vmatpush2.msra.mxu0 0.0
    %1826 = vmatprep.subr.mxu0 0.0
    %1827 = vmatpush2.msra.mxu0 0.0
    %1828 = vmatprep.subr.mxu0 0.0
    %1829 = vmatpush2.msra.mxu0 0.0
    %1830 = vmatprep.subr.mxu0 0.0
    %1831 = vmatpush2.msra.mxu0 0.0
    %1832 = vmatprep.subr.mxu0 0.0
    %1833 = vmatpush2.msra.mxu0 0.0
    %1834 = vmatprep.subr.mxu0 0.0
    %1835 = vmatpush2.msra.mxu0 0.0
    %1836 = vmatprep.mubr.f32.mxu0 0.0
    %1837 = vmatmul.mubr.f32.gmra.mxu0 %v1770
    %v1838 = vpop.f32.mrf.mxu0
    %v1839 = vadd.f32 0.0, %v1838
    %v1840 = vpop.f32.mrf.mxu0
    %1841 = vdwg.mxu0
    %v1842 = vsel %vm1664, %v1839, 0.0
    %1843 = vadd.xlane.f32.xlu0 %v1842
    %v1844 = vpop.xlane.xlu0 %1843
    %v1845 = vmul.f32 %v1839, %v1839
    %v1846 = vsel %vm1664, %v1845, 0.0
    %1847 = vadd.xlane.f32.xlu0 %v1846
    %v1848 = vpop.xlane.xlu0 %1847
    %v1849 = vmul.f32 %v1844, 0.020833334
    %v1850 = vmul.f32 %v1848, 0.020833334
    %v1851 = vmul.f32 %v1849, %v1849
    %v1852 = vsub.f32 %v1850, %v1851
    %v1853 = vmax.f32 %v1852, 0.0
    %v1854 = vsub.f32 %v1839, %v1849
    %v1855 = vadd.f32 %v1853, 1e-05
    %v1856 = vrsqrt.pop %v1855
    %v1857 = vmul.f32 %v1854, %v1856
    %v1859 = vlaneseq
    %v1860 = vshrl.u32 %v1859, 7
    %v1861 = vsub.s32 0, %v1860
    %v1862 = vrot.slane %v901, %v1861
    %v1864 = vmul.f32 %v1857, %v1862
    %v1866 = vlaneseq
    %v1867 = vshrl.u32 %v1866, 7
    %v1868 = vsub.s32 0, %v1867
    %v1869 = vrot.slane %v900, %v1868
    %v1871 = vadd.f32 %v1864, %v1869
    %v1872 = vadd.f32 %v1871, %v1663
    %v1873 = vmax.f32 %v1872, 0.0
    %v1875 = vlaneseq
    %v1876 = vshrl.u32 %v1875, 7
    %v1877 = vsub.s32 0, %v1876
    %v1878 = vrot.slane %v885, %v1877
    %v1881 = vsel %vm1664, %v1873, 0
    %1883 = vmatprep.subr.mxu0 0.0
    %1884 = vmatpush1.msra.mxu0 0.0
    %1885 = vmatprep.subr.mxu0 0.0
    %1886 = vmatpush1.msra.mxu0 0.0
    %1887 = vmatprep.subr.mxu0 0.0
    %1888 = vmatpush1.msra.mxu0 0.0
    %1889 = vmatprep.subr.mxu0 0.0
    %1890 = vmatpush1.msra.mxu0 0.0
    %1891 = vmatprep.subr.mxu0 0.0
    %1892 = vmatpush1.msra.mxu0 0.0
    %1893 = vmatprep.subr.mxu0 0.0
    %1894 = vmatpush1.msra.mxu0 0.0
    %1895 = vmatprep.subr.mxu0 0.0
    %1896 = vmatpush1.msra.mxu0 0.0
    %1897 = vmatprep.subr.mxu0 0.0
    %1898 = vmatpush1.msra.mxu0 0.0
    %1899 = vmatprep.subr.mxu0 0.0
    %1900 = vmatpush1.msra.mxu0 0.0
    %1901 = vmatprep.subr.mxu0 0.0
    %1902 = vmatpush1.msra.mxu0 0.0
    %1903 = vmatprep.subr.mxu0 0.0
    %1904 = vmatpush1.msra.mxu0 %v891
    %1905 = vmatprep.subr.mxu0 0.0
    %1906 = vmatpush1.msra.mxu0 %v890
    %1907 = vmatprep.subr.mxu0 0.0
    %1908 = vmatpush1.msra.mxu0 %v889
    %1909 = vmatprep.subr.mxu0 0.0
    %1910 = vmatpush1.msra.mxu0 %v888
    %1911 = vmatprep.subr.mxu0 0.0
    %1912 = vmatpush1.msra.mxu0 %v887
    %1913 = vmatprep.subr.mxu0 0.0
    %1914 = vmatpush1.msra.mxu0 %v886
    %1915 = vmatprep.subr.mxu0 0.0
    %1916 = vmatpush2.msra.mxu0 0.0
    %1917 = vmatprep.subr.mxu0 0.0
    %1918 = vmatpush2.msra.mxu0 0.0
    %1919 = vmatprep.subr.mxu0 0.0
    %1920 = vmatpush2.msra.mxu0 0.0
    %1921 = vmatprep.subr.mxu0 0.0
    %1922 = vmatpush2.msra.mxu0 0.0
    %1923 = vmatprep.subr.mxu0 0.0
    %1924 = vmatpush2.msra.mxu0 0.0
    %1925 = vmatprep.subr.mxu0 0.0
    %1926 = vmatpush2.msra.mxu0 0.0
    %1927 = vmatprep.subr.mxu0 0.0
    %1928 = vmatpush2.msra.mxu0 0.0
    %1929 = vmatprep.subr.mxu0 0.0
    %1930 = vmatpush2.msra.mxu0 0.0
    %1931 = vmatprep.subr.mxu0 0.0
    %1932 = vmatpush2.msra.mxu0 0.0
    %1933 = vmatprep.subr.mxu0 0.0
    %1934 = vmatpush2.msra.mxu0 0.0
    %1935 = vmatprep.subr.mxu0 0.0
    %1936 = vmatpush2.msra.mxu0 0.0
    %1937 = vmatprep.subr.mxu0 0.0
    %1938 = vmatpush2.msra.mxu0 0.0
    %1939 = vmatprep.subr.mxu0 0.0
    %1940 = vmatpush2.msra.mxu0 0.0
    %1941 = vmatprep.subr.mxu0 0.0
    %1942 = vmatpush2.msra.mxu0 0.0
    %1943 = vmatprep.subr.mxu0 0.0
    %1944 = vmatpush2.msra.mxu0 0.0
    %1945 = vmatprep.subr.mxu0 0.0
    %1946 = vmatpush2.msra.mxu0 0.0
    %1947 = vmatprep.mubr.f32.mxu0 0.0
    %1948 = vmatmul.mubr.f32.gmra.mxu0 %v1881
    %v1949 = vpop.f32.mrf.mxu0
    %v1950 = vadd.f32 %v1878, %v1949
    %v1951 = vpop.f32.mrf.mxu0
    %1952 = vdwg.mxu0
    %vm1953 = vcmask 48128
    %v1955 = vsel %vm1953, %v1950, 0
    %vm1957 = vcmask 1045504
    %v1959 = vsel %vm1957, %v921, 0
    %1961 = vmatprep.subr.mxu0 0.0
    %1962 = vmatpush1.msra.mxu0 0.0
    %1963 = vmatprep.subr.mxu0 0.0
    %1964 = vmatpush1.msra.mxu0 0.0
    %1965 = vmatprep.subr.mxu0 0.0
    %1966 = vmatpush1.msra.mxu0 0.0
    %1967 = vmatprep.subr.mxu0 0.0
    %1968 = vmatpush1.msra.mxu0 0.0
    %1969 = vmatprep.subr.mxu0 0.0
    %1970 = vmatpush1.msra.mxu0 0.0
    %1971 = vmatprep.subr.mxu0 0.0
    %1972 = vmatpush1.msra.mxu0 0.0
    %1973 = vmatprep.subr.mxu0 0.0
    %1974 = vmatpush1.msra.mxu0 0.0
    %1975 = vmatprep.subr.mxu0 0.0
    %1976 = vmatpush1.msra.mxu0 0.0
    %1977 = vmatprep.subr.mxu0 0.0
    %1978 = vmatpush1.msra.mxu0 0.0
    %1979 = vmatprep.subr.mxu0 0.0
    %1980 = vmatpush1.msra.mxu0 0.0
    %1981 = vmatprep.subr.mxu0 0.0
    %1982 = vmatpush1.msra.mxu0 0.0
    %1983 = vmatprep.subr.mxu0 0.0
    %1984 = vmatpush1.msra.mxu0 0.0
    %1985 = vmatprep.subr.mxu0 0.0
    %1986 = vmatpush1.msra.mxu0 0.0
    %1987 = vmatprep.subr.mxu0 0.0
    %1988 = vmatpush1.msra.mxu0 0.0
    %1989 = vmatprep.subr.mxu0 0.0
    %1990 = vmatpush1.msra.mxu0 0.0
    %1991 = vmatprep.subr.mxu0 0.0
    %1992 = vmatpush1.msra.mxu0 %v1959
    %1993 = vmatprep.subr.mxu0 0.0
    %1994 = vmatpush2.msra.mxu0 0.0
    %1995 = vmatprep.subr.mxu0 0.0
    %1996 = vmatpush2.msra.mxu0 0.0
    %1997 = vmatprep.subr.mxu0 0.0
    %1998 = vmatpush2.msra.mxu0 0.0
    %1999 = vmatprep.subr.mxu0 0.0
    %2000 = vmatpush2.msra.mxu0 0.0
    %2001 = vmatprep.subr.mxu0 0.0
    %2002 = vmatpush2.msra.mxu0 0.0
    %2003 = vmatprep.subr.mxu0 0.0
    %2004 = vmatpush2.msra.mxu0 0.0
    %2005 = vmatprep.subr.mxu0 0.0
    %2006 = vmatpush2.msra.mxu0 0.0
    %2007 = vmatprep.subr.mxu0 0.0
    %2008 = vmatpush2.msra.mxu0 0.0
    %2009 = vmatprep.subr.mxu0 0.0
    %2010 = vmatpush2.msra.mxu0 0.0
    %2011 = vmatprep.subr.mxu0 0.0
    %2012 = vmatpush2.msra.mxu0 0.0
    %2013 = vmatprep.subr.mxu0 0.0
    %2014 = vmatpush2.msra.mxu0 0.0
    %2015 = vmatprep.subr.mxu0 0.0
    %2016 = vmatpush2.msra.mxu0 0.0
    %2017 = vmatprep.subr.mxu0 0.0
    %2018 = vmatpush2.msra.mxu0 0.0
    %2019 = vmatprep.subr.mxu0 0.0
    %2020 = vmatpush2.msra.mxu0 0.0
    %2021 = vmatprep.subr.mxu0 0.0
    %2022 = vmatpush2.msra.mxu0 0.0
    %2023 = vmatprep.subr.mxu0 0.0
    %2024 = vmatpush2.msra.mxu0 0.0
    %2025 = vmatprep.mubr.f32.mxu0 0.0
    %2026 = vmatmul.mubr.f32.gmra.mxu0 %v1955
    %v2027 = vpop.f32.mrf.mxu0
    %v2028 = vadd.f32 0.0, %v2027
    %v2029 = vpop.f32.mrf.mxu0
    %2030 = vdwg.mxu0
    %v2031 = vsel %vm947, %v2028, 0.0
    %2032 = vadd.xlane.f32.xlu0 %v2031
    %v2033 = vpop.xlane.xlu0 %2032
    %v2034 = vmul.f32 %v2028, %v2028
    %v2035 = vsel %vm947, %v2034, 0.0
    %2036 = vadd.xlane.f32.xlu0 %v2035
    %v2037 = vpop.xlane.xlu0 %2036
    %v2038 = vmul.f32 %v2033, 0.03125
    %v2039 = vmul.f32 %v2037, 0.03125
    %v2040 = vmul.f32 %v2038, %v2038
    %v2041 = vsub.f32 %v2039, %v2040
    %v2042 = vmax.f32 %v2041, 0.0
    %v2043 = vsub.f32 %v2028, %v2038
    %v2044 = vadd.f32 %v2042, 1e-05
    %v2045 = vrsqrt.pop %v2044
    %v2046 = vmul.f32 %v2043, %v2045
    %v2048 = vlaneseq
    %v2049 = vshrl.u32 %v2048, 7
    %v2050 = vsub.s32 0, %v2049
    %v2051 = vrot.slane %v920, %v2050
    %v2053 = vmul.f32 %v2046, %v2051
    %v2055 = vlaneseq
    %v2056 = vshrl.u32 %v2055, 7
    %v2057 = vsub.s32 0, %v2056
    %v2058 = vrot.slane %v919, %v2057
    %v2060 = vadd.f32 %v2053, %v2058
    %v2061 = vmax.f32 %v2060, 0.0
    %2063 = vrot.lane.b32.xlu0 %v2061, 64
    %v2064 = vpop.permute.xlu0 %2063
    %v2066 = vsel %vm1021, %v1052, %v2064
    %vm2067 = vcmask 785408
    %v2069 = vsel %vm2067, %v2066, 0
    %2071 = vmatprep.subr.mxu0 0.0
    %2072 = vmatpush1.msra.mxu0 0.0
    %2073 = vmatprep.subr.mxu0 0.0
    %2074 = vmatpush1.msra.mxu0 0.0
    %2075 = vmatprep.subr.mxu0 0.0
    %2076 = vmatpush1.msra.mxu0 0.0
    %2077 = vmatprep.subr.mxu0 0.0
    %2078 = vmatpush1.msra.mxu0 0.0
    %2079 = vmatprep.subr.mxu0 0.0
    %2080 = vmatpush1.msra.mxu0 %v870
    %2081 = vmatprep.subr.mxu0 0.0
    %2082 = vmatpush1.msra.mxu0 %v869
    %2083 = vmatprep.subr.mxu0 0.0
    %2084 = vmatpush1.msra.mxu0 %v868
    %2085 = vmatprep.subr.mxu0 0.0
    %2086 = vmatpush1.msra.mxu0 %v867
    %2087 = vmatprep.subr.mxu0 0.0
    %2088 = vmatpush1.msra.mxu0 %v866
    %2089 = vmatprep.subr.mxu0 0.0
    %2090 = vmatpush1.msra.mxu0 %v865
    %2091 = vmatprep.subr.mxu0 0.0
    %2092 = vmatpush1.msra.mxu0 %v864
    %2093 = vmatprep.subr.mxu0 0.0
    %2094 = vmatpush1.msra.mxu0 %v863
    %2095 = vmatprep.subr.mxu0 0.0
    %2096 = vmatpush1.msra.mxu0 %v862
    %2097 = vmatprep.subr.mxu0 0.0
    %2098 = vmatpush1.msra.mxu0 %v861
    %2099 = vmatprep.subr.mxu0 0.0
    %2100 = vmatpush1.msra.mxu0 %v860
    %2101 = vmatprep.subr.mxu0 0.0
    %2102 = vmatpush1.msra.mxu0 %v859
    %2103 = vmatprep.subr.mxu0 0.0
    %2104 = vmatpush2.msra.mxu0 0.0
    %2105 = vmatprep.subr.mxu0 0.0
    %2106 = vmatpush2.msra.mxu0 0.0
    %2107 = vmatprep.subr.mxu0 0.0
    %2108 = vmatpush2.msra.mxu0 0.0
    %2109 = vmatprep.subr.mxu0 0.0
    %2110 = vmatpush2.msra.mxu0 0.0
    %2111 = vmatprep.subr.mxu0 0.0
    %2112 = vmatpush2.msra.mxu0 0.0
    %2113 = vmatprep.subr.mxu0 0.0
    %2114 = vmatpush2.msra.mxu0 0.0
    %2115 = vmatprep.subr.mxu0 0.0
    %2116 = vmatpush2.msra.mxu0 0.0
    %2117 = vmatprep.subr.mxu0 0.0
    %2118 = vmatpush2.msra.mxu0 0.0
    %2119 = vmatprep.subr.mxu0 0.0
    %2120 = vmatpush2.msra.mxu0 0.0
    %2121 = vmatprep.subr.mxu0 0.0
    %2122 = vmatpush2.msra.mxu0 0.0
    %2123 = vmatprep.subr.mxu0 0.0
    %2124 = vmatpush2.msra.mxu0 0.0
    %2125 = vmatprep.subr.mxu0 0.0
    %2126 = vmatpush2.msra.mxu0 0.0
    %2127 = vmatprep.subr.mxu0 0.0
    %2128 = vmatpush2.msra.mxu0 0.0
    %2129 = vmatprep.subr.mxu0 0.0
    %2130 = vmatpush2.msra.mxu0 0.0
    %2131 = vmatprep.subr.mxu0 0.0
    %2132 = vmatpush2.msra.mxu0 0.0
    %2133 = vmatprep.subr.mxu0 0.0
    %2134 = vmatpush2.msra.mxu0 0.0
    %2135 = vmatprep.mubr.f32.mxu0 0.0
    %2136 = vmatmul.mubr.f32.gmra.mxu0 %v2069
    %v2137 = vpop.f32.mrf.mxu0
    %v2138 = vadd.f32 0.0, %v2137
    %v2139 = vpop.f32.mrf.mxu0
    %2140 = vdwg.mxu0
    %v2141 = vsel %vm2067, %v2138, 0.0
    %2142 = vadd.xlane.f32.xlu0 %v2141
    %v2143 = vpop.xlane.xlu0 %2142
    %v2144 = vmul.f32 %v2138, %v2138
    %v2145 = vsel %vm2067, %v2144, 0.0
    %2146 = vadd.xlane.f32.xlu0 %v2145
    %v2147 = vpop.xlane.xlu0 %2146
    %v2148 = vmul.f32 %v2143, 0.010416667
    %v2149 = vmul.f32 %v2147, 0.010416667
    %v2150 = vmul.f32 %v2148, %v2148
    %v2151 = vsub.f32 %v2149, %v2150
    %v2152 = vmax.f32 %v2151, 0.0
    %v2153 = vsub.f32 %v2138, %v2148
    %v2154 = vadd.f32 %v2152, 1e-05
    %v2155 = vrsqrt.pop %v2154
    %v2156 = vmul.f32 %v2153, %v2155
    %v2158 = vlaneseq
    %v2159 = vshrl.u32 %v2158, 7
    %v2160 = vsub.s32 0, %v2159
    %v2161 = vrot.slane %v858, %v2160
    %v2163 = vmul.f32 %v2156, %v2161
    %v2165 = vlaneseq
    %v2166 = vshrl.u32 %v2165, 7
    %v2167 = vsub.s32 0, %v2166
    %v2168 = vrot.slane %v857, %v2167
    %v2170 = vadd.f32 %v2163, %v2168
    %v2171 = vmax.f32 %v2170, 0.0
    %v2173 = vsel %vm2067, %v2171, 0
    %2175 = vmatprep.subr.mxu0 0.0
    %2176 = vmatpush1.msra.mxu0 0.0
    %2177 = vmatprep.subr.mxu0 0.0
    %2178 = vmatpush1.msra.mxu0 0.0
    %2179 = vmatprep.subr.mxu0 0.0
    %2180 = vmatpush1.msra.mxu0 0.0
    %2181 = vmatprep.subr.mxu0 0.0
    %2182 = vmatpush1.msra.mxu0 0.0
    %2183 = vmatprep.subr.mxu0 0.0
    %2184 = vmatpush1.msra.mxu0 %v884
    %2185 = vmatprep.subr.mxu0 0.0
    %2186 = vmatpush1.msra.mxu0 %v883
    %2187 = vmatprep.subr.mxu0 0.0
    %2188 = vmatpush1.msra.mxu0 %v882
    %2189 = vmatprep.subr.mxu0 0.0
    %2190 = vmatpush1.msra.mxu0 %v881
    %2191 = vmatprep.subr.mxu0 0.0
    %2192 = vmatpush1.msra.mxu0 %v880
    %2193 = vmatprep.subr.mxu0 0.0
    %2194 = vmatpush1.msra.mxu0 %v879
    %2195 = vmatprep.subr.mxu0 0.0
    %2196 = vmatpush1.msra.mxu0 %v878
    %2197 = vmatprep.subr.mxu0 0.0
    %2198 = vmatpush1.msra.mxu0 %v877
    %2199 = vmatprep.subr.mxu0 0.0
    %2200 = vmatpush1.msra.mxu0 %v876
    %2201 = vmatprep.subr.mxu0 0.0
    %2202 = vmatpush1.msra.mxu0 %v875
    %2203 = vmatprep.subr.mxu0 0.0
    %2204 = vmatpush1.msra.mxu0 %v874
    %2205 = vmatprep.subr.mxu0 0.0
    %2206 = vmatpush1.msra.mxu0 %v873
    %2207 = vmatprep.subr.mxu0 0.0
    %2208 = vmatpush2.msra.mxu0 0.0
    %2209 = vmatprep.subr.mxu0 0.0
    %2210 = vmatpush2.msra.mxu0 0.0
    %2211 = vmatprep.subr.mxu0 0.0
    %2212 = vmatpush2.msra.mxu0 0.0
    %2213 = vmatprep.subr.mxu0 0.0
    %2214 = vmatpush2.msra.mxu0 0.0
    %2215 = vmatprep.subr.mxu0 0.0
    %2216 = vmatpush2.msra.mxu0 0.0
    %2217 = vmatprep.subr.mxu0 0.0
    %2218 = vmatpush2.msra.mxu0 0.0
    %2219 = vmatprep.subr.mxu0 0.0
    %2220 = vmatpush2.msra.mxu0 0.0
    %2221 = vmatprep.subr.mxu0 0.0
    %2222 = vmatpush2.msra.mxu0 0.0
    %2223 = vmatprep.subr.mxu0 0.0
    %2224 = vmatpush2.msra.mxu0 0.0
    %2225 = vmatprep.subr.mxu0 0.0
    %2226 = vmatpush2.msra.mxu0 0.0
    %2227 = vmatprep.subr.mxu0 0.0
    %2228 = vmatpush2.msra.mxu0 0.0
    %2229 = vmatprep.subr.mxu0 0.0
    %2230 = vmatpush2.msra.mxu0 0.0
    %2231 = vmatprep.subr.mxu0 0.0
    %2232 = vmatpush2.msra.mxu0 0.0
    %2233 = vmatprep.subr.mxu0 0.0
    %2234 = vmatpush2.msra.mxu0 0.0
    %2235 = vmatprep.subr.mxu0 0.0
    %2236 = vmatpush2.msra.mxu0 0.0
    %2237 = vmatprep.subr.mxu0 0.0
    %2238 = vmatpush2.msra.mxu0 0.0
    %2239 = vmatprep.mubr.f32.mxu0 0.0
    %2240 = vmatmul.mubr.f32.gmra.mxu0 %v2173
    %v2241 = vpop.f32.mrf.mxu0
    %v2242 = vadd.f32 0.0, %v2241
    %v2243 = vpop.f32.mrf.mxu0
    %2244 = vdwg.mxu0
    %v2245 = vsel %vm2067, %v2242, 0.0
    %2246 = vadd.xlane.f32.xlu0 %v2245
    %v2247 = vpop.xlane.xlu0 %2246
    %v2248 = vmul.f32 %v2242, %v2242
    %v2249 = vsel %vm2067, %v2248, 0.0
    %2250 = vadd.xlane.f32.xlu0 %v2249
    %v2251 = vpop.xlane.xlu0 %2250
    %v2252 = vmul.f32 %v2247, 0.010416667
    %v2253 = vmul.f32 %v2251, 0.010416667
    %v2254 = vmul.f32 %v2252, %v2252
    %v2255 = vsub.f32 %v2253, %v2254
    %v2256 = vmax.f32 %v2255, 0.0
    %v2257 = vsub.f32 %v2242, %v2252
    %v2258 = vadd.f32 %v2256, 1e-05
    %v2259 = vrsqrt.pop %v2258
    %v2260 = vmul.f32 %v2257, %v2259
    %v2262 = vlaneseq
    %v2263 = vshrl.u32 %v2262, 7
    %v2264 = vsub.s32 0, %v2263
    %v2265 = vrot.slane %v872, %v2264
    %v2267 = vmul.f32 %v2260, %v2265
    %v2269 = vlaneseq
    %v2270 = vshrl.u32 %v2269, 7
    %v2271 = vsub.s32 0, %v2270
    %v2272 = vrot.slane %v871, %v2271
    %v2274 = vadd.f32 %v2267, %v2272
    %v2275 = vadd.f32 %v2274, %v2066
    %v2276 = vmax.f32 %v2275, 0.0
    %v2278 = vlaneseq
    %v2279 = vshrl.u32 %v2278, 7
    %v2280 = vsub.s32 0, %v2279
    %v2281 = vrot.slane %v844, %v2280
    %v2284 = vsel %vm2067, %v2276, 0
    %2286 = vmatprep.subr.mxu0 0.0
    %2287 = vmatpush1.msra.mxu0 0.0
    %2288 = vmatprep.subr.mxu0 0.0
    %2289 = vmatpush1.msra.mxu0 0.0
    %2290 = vmatprep.subr.mxu0 0.0
    %2291 = vmatpush1.msra.mxu0 0.0
    %2292 = vmatprep.subr.mxu0 0.0
    %2293 = vmatpush1.msra.mxu0 0.0
    %2294 = vmatprep.subr.mxu0 0.0
    %2295 = vmatpush1.msra.mxu0 %v856
    %2296 = vmatprep.subr.mxu0 0.0
    %2297 = vmatpush1.msra.mxu0 %v855
    %2298 = vmatprep.subr.mxu0 0.0
    %2299 = vmatpush1.msra.mxu0 %v854
    %2300 = vmatprep.subr.mxu0 0.0
    %2301 = vmatpush1.msra.mxu0 %v853
    %2302 = vmatprep.subr.mxu0 0.0
    %2303 = vmatpush1.msra.mxu0 %v852
    %2304 = vmatprep.subr.mxu0 0.0
    %2305 = vmatpush1.msra.mxu0 %v851
    %2306 = vmatprep.subr.mxu0 0.0
    %2307 = vmatpush1.msra.mxu0 %v850
    %2308 = vmatprep.subr.mxu0 0.0
    %2309 = vmatpush1.msra.mxu0 %v849
    %2310 = vmatprep.subr.mxu0 0.0
    %2311 = vmatpush1.msra.mxu0 %v848
    %2312 = vmatprep.subr.mxu0 0.0
    %2313 = vmatpush1.msra.mxu0 %v847
    %2314 = vmatprep.subr.mxu0 0.0
    %2315 = vmatpush1.msra.mxu0 %v846
    %2316 = vmatprep.subr.mxu0 0.0
    %2317 = vmatpush1.msra.mxu0 %v845
    %2318 = vmatprep.subr.mxu0 0.0
    %2319 = vmatpush2.msra.mxu0 0.0
    %2320 = vmatprep.subr.mxu0 0.0
    %2321 = vmatpush2.msra.mxu0 0.0
    %2322 = vmatprep.subr.mxu0 0.0
    %2323 = vmatpush2.msra.mxu0 0.0
    %2324 = vmatprep.subr.mxu0 0.0
    %2325 = vmatpush2.msra.mxu0 0.0
    %2326 = vmatprep.subr.mxu0 0.0
    %2327 = vmatpush2.msra.mxu0 0.0
    %2328 = vmatprep.subr.mxu0 0.0
    %2329 = vmatpush2.msra.mxu0 0.0
    %2330 = vmatprep.subr.mxu0 0.0
    %2331 = vmatpush2.msra.mxu0 0.0
    %2332 = vmatprep.subr.mxu0 0.0
    %2333 = vmatpush2.msra.mxu0 0.0
    %2334 = vmatprep.subr.mxu0 0.0
    %2335 = vmatpush2.msra.mxu0 0.0
    %2336 = vmatprep.subr.mxu0 0.0
    %2337 = vmatpush2.msra.mxu0 0.0
    %2338 = vmatprep.subr.mxu0 0.0
    %2339 = vmatpush2.msra.mxu0 0.0
    %2340 = vmatprep.subr.mxu0 0.0
    %2341 = vmatpush2.msra.mxu0 0.0
    %2342 = vmatprep.subr.mxu0 0.0
    %2343 = vmatpush2.msra.mxu0 0.0
    %2344 = vmatprep.subr.mxu0 0.0
    %2345 = vmatpush2.msra.mxu0 0.0
    %2346 = vmatprep.subr.mxu0 0.0
    %2347 = vmatpush2.msra.mxu0 0.0
    %2348 = vmatprep.subr.mxu0 0.0
    %2349 = vmatpush2.msra.mxu0 0.0
    %2350 = vmatprep.mubr.f32.mxu0 0.0
    %2351 = vmatmul.mubr.f32.gmra.mxu0 %v2284
    %v2352 = vpop.f32.mrf.mxu0
    %v2353 = vadd.f32 %v2281, %v2352
    %v2354 = vpop.f32.mrf.mxu0
    %2355 = vdwg.mxu0
    %2356 = vrot.lane.b32.xlu0 %v1950, 2
    %v2357 = vpop.permute.xlu0 %2356
    %v2359 = vsel %vm1550, %v1547, %v2357
    %2361 = vrot.lane.b32.xlu0 %v807, 58
    %v2362 = vpop.permute.xlu0 %2361
    %v2364 = vadd.f32 %v2353, %v2362
    %2366 = vrot.lane.b32.xlu0 %v2364, 70
    %v2367 = vpop.permute.xlu0 %2366
    %v2369 = vsub.f32 %v808, %v2367
    %v2371 = vlaneseq
    %v2372 = vshrl.u32 %v2371, 7
    %v2373 = vsub.s32 0, %v2372
    %v2374 = vrot.slane %v819, %v2373
    %v2377 = vsel %vm1550, %v2369, 0
    %v2380 = vsel %vm1554, %v820, 0
    %2382 = vmatprep.subr.mxu0 0.0
    %2383 = vmatpush1.msra.mxu0 0.0
    %2384 = vmatprep.subr.mxu0 0.0
    %2385 = vmatpush1.msra.mxu0 0.0
    %2386 = vmatprep.subr.mxu0 0.0
    %2387 = vmatpush1.msra.mxu0 0.0
    %2388 = vmatprep.subr.mxu0 0.0
    %2389 = vmatpush1.msra.mxu0 0.0
    %2390 = vmatprep.subr.mxu0 0.0
    %2391 = vmatpush1.msra.mxu0 0.0
    %2392 = vmatprep.subr.mxu0 0.0
    %2393 = vmatpush1.msra.mxu0 0.0
    %2394 = vmatprep.subr.mxu0 0.0
    %2395 = vmatpush1.msra.mxu0 0.0
    %2396 = vmatprep.subr.mxu0 0.0
    %2397 = vmatpush1.msra.mxu0 0.0
    %2398 = vmatprep.subr.mxu0 0.0
    %2399 = vmatpush1.msra.mxu0 0.0
    %2400 = vmatprep.subr.mxu0 0.0
    %2401 = vmatpush1.msra.mxu0 0.0
    %2402 = vmatprep.subr.mxu0 0.0
    %2403 = vmatpush1.msra.mxu0 0.0
    %2404 = vmatprep.subr.mxu0 0.0
    %2405 = vmatpush1.msra.mxu0 0.0
    %2406 = vmatprep.subr.mxu0 0.0
    %2407 = vmatpush1.msra.mxu0 0.0
    %2408 = vmatprep.subr.mxu0 0.0
    %2409 = vmatpush1.msra.mxu0 0.0
    %2410 = vmatprep.subr.mxu0 0.0
    %2411 = vmatpush1.msra.mxu0 0.0
    %2412 = vmatprep.subr.mxu0 0.0
    %2413 = vmatpush1.msra.mxu0 %v2380
    %2414 = vmatprep.subr.mxu0 0.0
    %2415 = vmatpush2.msra.mxu0 0.0
    %2416 = vmatprep.subr.mxu0 0.0
    %2417 = vmatpush2.msra.mxu0 0.0
    %2418 = vmatprep.subr.mxu0 0.0
    %2419 = vmatpush2.msra.mxu0 0.0
    %2420 = vmatprep.subr.mxu0 0.0
    %2421 = vmatpush2.msra.mxu0 0.0
    %2422 = vmatprep.subr.mxu0 0.0
    %2423 = vmatpush2.msra.mxu0 0.0
    %2424 = vmatprep.subr.mxu0 0.0
    %2425 = vmatpush2.msra.mxu0 0.0
    %2426 = vmatprep.subr.mxu0 0.0
    %2427 = vmatpush2.msra.mxu0 0.0
    %2428 = vmatprep.subr.mxu0 0.0
    %2429 = vmatpush2.msra.mxu0 0.0
    %2430 = vmatprep.subr.mxu0 0.0
    %2431 = vmatpush2.msra.mxu0 0.0
    %2432 = vmatprep.subr.mxu0 0.0
    %2433 = vmatpush2.msra.mxu0 0.0
    %2434 = vmatprep.subr.mxu0 0.0
    %2435 = vmatpush2.msra.mxu0 0.0
    %2436 = vmatprep.subr.mxu0 0.0
    %2437 = vmatpush2.msra.mxu0 0.0
    %2438 = vmatprep.subr.mxu0 0.0
    %2439 = vmatpush2.msra.mxu0 0.0
    %2440 = vmatprep.subr.mxu0 0.0
    %2441 = vmatpush2.msra.mxu0 0.0
    %2442 = vmatprep.subr.mxu0 0.0
    %2443 = vmatpush2.msra.mxu0 0.0
    %2444 = vmatprep.subr.mxu0 0.0
    %2445 = vmatpush2.msra.mxu0 0.0
    %2446 = vmatprep.mubr.f32.mxu0 0.0
    %2447 = vmatmul.mubr.f32.gmra.mxu0 %v2377
    %v2448 = vpop.f32.mrf.mxu0
    %v2449 = vadd.f32 %v2374, %v2448
    %v2450 = vpop.f32.mrf.mxu0
    %2451 = vdwg.mxu0
    %v2452 = vmax.f32 %v2449, 0.0
    %v2454 = vsel %vm947, %v2452, 0
    %2456 = vmatprep.subr.mxu0 0.0
    %2457 = vmatpush1.msra.mxu0 0.0
    %2458 = vmatprep.subr.mxu0 0.0
    %2459 = vmatpush1.msra.mxu0 0.0
    %2460 = vmatprep.subr.mxu0 0.0
    %2461 = vmatpush1.msra.mxu0 0.0
    %2462 = vmatprep.subr.mxu0 0.0
    %2463 = vmatpush1.msra.mxu0 0.0
    %2464 = vmatprep.subr.mxu0 0.0
    %2465 = vmatpush1.msra.mxu0 0.0
    %2466 = vmatprep.subr.mxu0 0.0
    %2467 = vmatpush1.msra.mxu0 0.0
    %2468 = vmatprep.subr.mxu0 0.0
    %2469 = vmatpush1.msra.mxu0 0.0
    %2470 = vmatprep.subr.mxu0 0.0
    %2471 = vmatpush1.msra.mxu0 0.0
    %2472 = vmatprep.subr.mxu0 0.0
    %2473 = vmatpush1.msra.mxu0 0.0
    %2474 = vmatprep.subr.mxu0 0.0
    %2475 = vmatpush1.msra.mxu0 0.0
    %2476 = vmatprep.subr.mxu0 0.0
    %2477 = vmatpush1.msra.mxu0 0.0
    %2478 = vmatprep.subr.mxu0 0.0
    %2479 = vmatpush1.msra.mxu0 0.0
    %2480 = vmatprep.subr.mxu0 0.0
    %2481 = vmatpush1.msra.mxu0 %v826
    %2482 = vmatprep.subr.mxu0 0.0
    %2483 = vmatpush1.msra.mxu0 %v825
    %2484 = vmatprep.subr.mxu0 0.0
    %2485 = vmatpush1.msra.mxu0 %v824
    %2486 = vmatprep.subr.mxu0 0.0
    %2487 = vmatpush1.msra.mxu0 %v823
    %2488 = vmatprep.subr.mxu0 0.0
    %2489 = vmatpush2.msra.mxu0 0.0
    %2490 = vmatprep.subr.mxu0 0.0
    %2491 = vmatpush2.msra.mxu0 0.0
    %2492 = vmatprep.subr.mxu0 0.0
    %2493 = vmatpush2.msra.mxu0 0.0
    %2494 = vmatprep.subr.mxu0 0.0
    %2495 = vmatpush2.msra.mxu0 0.0
    %2496 = vmatprep.subr.mxu0 0.0
    %2497 = vmatpush2.msra.mxu0 0.0
    %2498 = vmatprep.subr.mxu0 0.0
    %2499 = vmatpush2.msra.mxu0 0.0
    %2500 = vmatprep.subr.mxu0 0.0
    %2501 = vmatpush2.msra.mxu0 0.0
    %2502 = vmatprep.subr.mxu0 0.0
    %2503 = vmatpush2.msra.mxu0 0.0
    %2504 = vmatprep.subr.mxu0 0.0
    %2505 = vmatpush2.msra.mxu0 0.0
    %2506 = vmatprep.subr.mxu0 0.0
    %2507 = vmatpush2.msra.mxu0 0.0
    %2508 = vmatprep.subr.mxu0 0.0
    %2509 = vmatpush2.msra.mxu0 0.0
    %2510 = vmatprep.subr.mxu0 0.0
    %2511 = vmatpush2.msra.mxu0 0.0
    %2512 = vmatprep.subr.mxu0 0.0
    %2513 = vmatpush2.msra.mxu0 0.0
    %2514 = vmatprep.subr.mxu0 0.0
    %2515 = vmatpush2.msra.mxu0 0.0
    %2516 = vmatprep.subr.mxu0 0.0
    %2517 = vmatpush2.msra.mxu0 0.0
    %2518 = vmatprep.subr.mxu0 0.0
    %2519 = vmatpush2.msra.mxu0 0.0
    %2520 = vmatprep.mubr.f32.mxu0 0.0
    %2521 = vmatmul.mubr.f32.gmra.mxu0 %v2454
    %v2522 = vpop.f32.mrf.mxu0
    %v2523 = vadd.f32 0.0, %v2522
    %v2524 = vpop.f32.mrf.mxu0
    %2525 = vdwg.mxu0
    %v2526 = vsel %vm947, %v2523, 0.0
    %2527 = vadd.xlane.f32.xlu0 %v2526
    %v2528 = vpop.xlane.xlu0 %2527
    %v2529 = vmul.f32 %v2523, %v2523
    %v2530 = vsel %vm947, %v2529, 0.0
    %2531 = vadd.xlane.f32.xlu0 %v2530
    %v2532 = vpop.xlane.xlu0 %2531
    %v2533 = vmul.f32 %v2528, 0.03125
    %v2534 = vmul.f32 %v2532, 0.03125
    %v2535 = vmul.f32 %v2533, %v2533
    %v2536 = vsub.f32 %v2534, %v2535
    %v2537 = vmax.f32 %v2536, 0.0
    %v2538 = vsub.f32 %v2523, %v2533
    %v2539 = vadd.f32 %v2537, 1e-05
    %v2540 = vrsqrt.pop %v2539
    %v2541 = vmul.f32 %v2538, %v2540
    %v2543 = vlaneseq
    %v2544 = vshrl.u32 %v2543, 7
    %v2545 = vsub.s32 0, %v2544
    %v2546 = vrot.slane %v822, %v2545
    %v2548 = vmul.f32 %v2541, %v2546
    %v2550 = vlaneseq
    %v2551 = vshrl.u32 %v2550, 7
    %v2552 = vsub.s32 0, %v2551
    %v2553 = vrot.slane %v821, %v2552
    %v2555 = vadd.f32 %v2548, %v2553
    %v2556 = vmax.f32 %v2555, 0.0
    %2557 = vmatprep.subr.mxu0 0.0
    %2558 = vmatpush1.msra.mxu0 0.0
    %2559 = vmatprep.subr.mxu0 0.0
    %2560 = vmatpush1.msra.mxu0 0.0
    %2561 = vmatprep.subr.mxu0 0.0
    %2562 = vmatpush1.msra.mxu0 0.0
    %2563 = vmatprep.subr.mxu0 0.0
    %2564 = vmatpush1.msra.mxu0 0.0
    %2565 = vmatprep.subr.mxu0 0.0
    %2566 = vmatpush1.msra.mxu0 0.0
    %2567 = vmatprep.subr.mxu0 0.0
    %2568 = vmatpush1.msra.mxu0 0.0
    %2569 = vmatprep.subr.mxu0 0.0
    %2570 = vmatpush1.msra.mxu0 0.0
    %2571 = vmatprep.subr.mxu0 0.0
    %2572 = vmatpush1.msra.mxu0 0.0
    %2573 = vmatprep.subr.mxu0 0.0
    %2574 = vmatpush1.msra.mxu0 0.0
    %2575 = vmatprep.subr.mxu0 0.0
    %2576 = vmatpush1.msra.mxu0 0.0
    %2577 = vmatprep.subr.mxu0 0.0
    %2578 = vmatpush1.msra.mxu0 0.0
    %2579 = vmatprep.subr.mxu0 0.0
    %2580 = vmatpush1.msra.mxu0 0.0
    %2581 = vmatprep.subr.mxu0 0.0
    %2582 = vmatpush1.msra.mxu0 %v814
    %2583 = vmatprep.subr.mxu0 0.0
    %2584 = vmatpush1.msra.mxu0 %v813
    %2585 = vmatprep.subr.mxu0 0.0
    %2586 = vmatpush1.msra.mxu0 %v812
    %2587 = vmatprep.subr.mxu0 0.0
    %2588 = vmatpush1.msra.mxu0 %v811
    %2589 = vmatprep.subr.mxu0 0.0
    %2590 = vmatpush2.msra.mxu0 0.0
    %2591 = vmatprep.subr.mxu0 0.0
    %2592 = vmatpush2.msra.mxu0 0.0
    %2593 = vmatprep.subr.mxu0 0.0
    %2594 = vmatpush2.msra.mxu0 0.0
    %2595 = vmatprep.subr.mxu0 0.0
    %2596 = vmatpush2.msra.mxu0 0.0
    %2597 = vmatprep.subr.mxu0 0.0
    %2598 = vmatpush2.msra.mxu0 0.0
    %2599 = vmatprep.subr.mxu0 0.0
    %2600 = vmatpush2.msra.mxu0 0.0
    %2601 = vmatprep.subr.mxu0 0.0
    %2602 = vmatpush2.msra.mxu0 0.0
    %2603 = vmatprep.subr.mxu0 0.0
    %2604 = vmatpush2.msra.mxu0 0.0
    %2605 = vmatprep.subr.mxu0 0.0
    %2606 = vmatpush2.msra.mxu0 0.0
    %2607 = vmatprep.subr.mxu0 0.0
    %2608 = vmatpush2.msra.mxu0 0.0
    %2609 = vmatprep.subr.mxu0 0.0
    %2610 = vmatpush2.msra.mxu0 0.0
    %2611 = vmatprep.subr.mxu0 0.0
    %2612 = vmatpush2.msra.mxu0 0.0
    %2613 = vmatprep.subr.mxu0 0.0
    %2614 = vmatpush2.msra.mxu0 0.0
    %2615 = vmatprep.subr.mxu0 0.0
    %2616 = vmatpush2.msra.mxu0 0.0
    %2617 = vmatprep.subr.mxu0 0.0
    %2618 = vmatpush2.msra.mxu0 0.0
    %2619 = vmatprep.subr.mxu0 0.0
    %2620 = vmatpush2.msra.mxu0 0.0
    %2621 = vmatprep.mubr.f32.mxu0 0.0
    %2622 = vmatmul.mubr.f32.gmra.mxu0 %v949
    %v2623 = vpop.f32.mrf.mxu0
    %v2624 = vadd.f32 0.0, %v2623
    %v2625 = vpop.f32.mrf.mxu0
    %2626 = vdwg.mxu0
    %v2628 = vsel %vm947, %v2556, 0
    %2630 = vmatprep.subr.mxu0 0.0
    %2631 = vmatpush1.msra.mxu0 0.0
    %2632 = vmatprep.subr.mxu0 0.0
    %2633 = vmatpush1.msra.mxu0 0.0
    %2634 = vmatprep.subr.mxu0 0.0
    %2635 = vmatpush1.msra.mxu0 0.0
    %2636 = vmatprep.subr.mxu0 0.0
    %2637 = vmatpush1.msra.mxu0 0.0
    %2638 = vmatprep.subr.mxu0 0.0
    %2639 = vmatpush1.msra.mxu0 0.0
    %2640 = vmatprep.subr.mxu0 0.0
    %2641 = vmatpush1.msra.mxu0 0.0
    %2642 = vmatprep.subr.mxu0 0.0
    %2643 = vmatpush1.msra.mxu0 0.0
    %2644 = vmatprep.subr.mxu0 0.0
    %2645 = vmatpush1.msra.mxu0 0.0
    %2646 = vmatprep.subr.mxu0 0.0
    %2647 = vmatpush1.msra.mxu0 0.0
    %2648 = vmatprep.subr.mxu0 0.0
    %2649 = vmatpush1.msra.mxu0 0.0
    %2650 = vmatprep.subr.mxu0 0.0
    %2651 = vmatpush1.msra.mxu0 0.0
    %2652 = vmatprep.subr.mxu0 0.0
    %2653 = vmatpush1.msra.mxu0 0.0
    %2654 = vmatprep.subr.mxu0 0.0
    %2655 = vmatpush1.msra.mxu0 %v818
    %2656 = vmatprep.subr.mxu0 0.0
    %2657 = vmatpush1.msra.mxu0 %v817
    %2658 = vmatprep.subr.mxu0 0.0
    %2659 = vmatpush1.msra.mxu0 %v816
    %2660 = vmatprep.subr.mxu0 0.0
    %2661 = vmatpush1.msra.mxu0 %v815
    %2662 = vmatprep.subr.mxu0 0.0
    %2663 = vmatpush2.msra.mxu0 0.0
    %2664 = vmatprep.subr.mxu0 0.0
    %2665 = vmatpush2.msra.mxu0 0.0
    %2666 = vmatprep.subr.mxu0 0.0
    %2667 = vmatpush2.msra.mxu0 0.0
    %2668 = vmatprep.subr.mxu0 0.0
    %2669 = vmatpush2.msra.mxu0 0.0
    %2670 = vmatprep.subr.mxu0 0.0
    %2671 = vmatpush2.msra.mxu0 0.0
    %2672 = vmatprep.subr.mxu0 0.0
    %2673 = vmatpush2.msra.mxu0 0.0
    %2674 = vmatprep.subr.mxu0 0.0
    %2675 = vmatpush2.msra.mxu0 0.0
    %2676 = vmatprep.subr.mxu0 0.0
    %2677 = vmatpush2.msra.mxu0 0.0
    %2678 = vmatprep.subr.mxu0 0.0
    %2679 = vmatpush2.msra.mxu0 0.0
    %2680 = vmatprep.subr.mxu0 0.0
    %2681 = vmatpush2.msra.mxu0 0.0
    %2682 = vmatprep.subr.mxu0 0.0
    %2683 = vmatpush2.msra.mxu0 0.0
    %2684 = vmatprep.subr.mxu0 0.0
    %2685 = vmatpush2.msra.mxu0 0.0
    %2686 = vmatprep.subr.mxu0 0.0
    %2687 = vmatpush2.msra.mxu0 0.0
    %2688 = vmatprep.subr.mxu0 0.0
    %2689 = vmatpush2.msra.mxu0 0.0
    %2690 = vmatprep.subr.mxu0 0.0
    %2691 = vmatpush2.msra.mxu0 0.0
    %2692 = vmatprep.subr.mxu0 0.0
    %2693 = vmatpush2.msra.mxu0 0.0
    %2694 = vmatprep.mubr.f32.mxu0 0.0
    %2695 = vmatmul.mubr.f32.gmra.mxu0 %v2628
    %v2696 = vpop.f32.mrf.mxu0
    %v2697 = vadd.f32 %v2624, %v2696
    %v2698 = vpop.f32.mrf.mxu0
    %2699 = vdwg.mxu0
    %v2700 = vsel %vm947, %v2697, 0.0
    %2701 = vadd.xlane.f32.xlu0 %v2700
    %v2702 = vpop.xlane.xlu0 %2701
    %v2703 = vmul.f32 %v2697, %v2697
    %v2704 = vsel %vm947, %v2703, 0.0
    %2705 = vadd.xlane.f32.xlu0 %v2704
    %v2706 = vpop.xlane.xlu0 %2705
    %v2707 = vmul.f32 %v2702, 0.03125
    %v2708 = vmul.f32 %v2706, 0.03125
    %v2709 = vmul.f32 %v2707, %v2707
    %v2710 = vsub.f32 %v2708, %v2709
    %v2711 = vmax.f32 %v2710, 0.0
    %v2712 = vsub.f32 %v2697, %v2707
    %v2713 = vadd.f32 %v2711, 1e-05
    %v2714 = vrsqrt.pop %v2713
    %v2715 = vmul.f32 %v2712, %v2714
    %v2717 = vlaneseq
    %v2718 = vshrl.u32 %v2717, 7
    %v2719 = vsub.s32 0, %v2718
    %v2720 = vrot.slane %v810, %v2719
    %v2722 = vmul.f32 %v2715, %v2720
    %v2724 = vlaneseq
    %v2725 = vshrl.u32 %v2724, 7
    %v2726 = vsub.s32 0, %v2725
    %v2727 = vrot.slane %v809, %v2726
    %v2729 = vadd.f32 %v2722, %v2727
    %v2730 = vmax.f32 %v2729, 0.0
    %v2732 = vsel %vm947, %v2730, 0
    %2734 = vmatprep.subr.mxu0 0.0
    %2735 = vmatpush1.msra.mxu0 0.0
    %2736 = vmatprep.subr.mxu0 0.0
    %2737 = vmatpush1.msra.mxu0 0.0
    %2738 = vmatprep.subr.mxu0 0.0
    %2739 = vmatpush1.msra.mxu0 0.0
    %2740 = vmatprep.subr.mxu0 0.0
    %2741 = vmatpush1.msra.mxu0 0.0
    %2742 = vmatprep.subr.mxu0 0.0
    %2743 = vmatpush1.msra.mxu0 0.0
    %2744 = vmatprep.subr.mxu0 0.0
    %2745 = vmatpush1.msra.mxu0 0.0
    %2746 = vmatprep.subr.mxu0 0.0
    %2747 = vmatpush1.msra.mxu0 0.0
    %2748 = vmatprep.subr.mxu0 0.0
    %2749 = vmatpush1.msra.mxu0 0.0
    %2750 = vmatprep.subr.mxu0 0.0
    %2751 = vmatpush1.msra.mxu0 0.0
    %2752 = vmatprep.subr.mxu0 0.0
    %2753 = vmatpush1.msra.mxu0 0.0
    %2754 = vmatprep.subr.mxu0 0.0
    %2755 = vmatpush1.msra.mxu0 0.0
    %2756 = vmatprep.subr.mxu0 0.0
    %2757 = vmatpush1.msra.mxu0 0.0
    %2758 = vmatprep.subr.mxu0 0.0
    %2759 = vmatpush1.msra.mxu0 %v837
    %2760 = vmatprep.subr.mxu0 0.0
    %2761 = vmatpush1.msra.mxu0 %v836
    %2762 = vmatprep.subr.mxu0 0.0
    %2763 = vmatpush1.msra.mxu0 %v835
    %2764 = vmatprep.subr.mxu0 0.0
    %2765 = vmatpush1.msra.mxu0 %v834
    %2766 = vmatprep.subr.mxu0 0.0
    %2767 = vmatpush2.msra.mxu0 0.0
    %2768 = vmatprep.subr.mxu0 0.0
    %2769 = vmatpush2.msra.mxu0 0.0
    %2770 = vmatprep.subr.mxu0 0.0
    %2771 = vmatpush2.msra.mxu0 0.0
    %2772 = vmatprep.subr.mxu0 0.0
    %2773 = vmatpush2.msra.mxu0 0.0
    %2774 = vmatprep.subr.mxu0 0.0
    %2775 = vmatpush2.msra.mxu0 0.0
    %2776 = vmatprep.subr.mxu0 0.0
    %2777 = vmatpush2.msra.mxu0 0.0
    %2778 = vmatprep.subr.mxu0 0.0
    %2779 = vmatpush2.msra.mxu0 0.0
    %2780 = vmatprep.subr.mxu0 0.0
    %2781 = vmatpush2.msra.mxu0 0.0
    %2782 = vmatprep.subr.mxu0 0.0
    %2783 = vmatpush2.msra.mxu0 0.0
    %2784 = vmatprep.subr.mxu0 0.0
    %2785 = vmatpush2.msra.mxu0 0.0
    %2786 = vmatprep.subr.mxu0 0.0
    %2787 = vmatpush2.msra.mxu0 0.0
    %2788 = vmatprep.subr.mxu0 0.0
    %2789 = vmatpush2.msra.mxu0 0.0
    %2790 = vmatprep.subr.mxu0 0.0
    %2791 = vmatpush2.msra.mxu0 0.0
    %2792 = vmatprep.subr.mxu0 0.0
    %2793 = vmatpush2.msra.mxu0 0.0
    %2794 = vmatprep.subr.mxu0 0.0
    %2795 = vmatpush2.msra.mxu0 0.0
    %2796 = vmatprep.subr.mxu0 0.0
    %2797 = vmatpush2.msra.mxu0 0.0
    %2798 = vmatprep.mubr.f32.mxu0 0.0
    %2799 = vmatmul.mubr.f32.gmra.mxu0 %v2732
    %v2800 = vpop.f32.mrf.mxu0
    %v2801 = vadd.f32 0.0, %v2800
    %v2802 = vpop.f32.mrf.mxu0
    %2803 = vdwg.mxu0
    %v2804 = vsel %vm947, %v2801, 0.0
    %2805 = vadd.xlane.f32.xlu0 %v2804
    %v2806 = vpop.xlane.xlu0 %2805
    %v2807 = vmul.f32 %v2801, %v2801
    %v2808 = vsel %vm947, %v2807, 0.0
    %2809 = vadd.xlane.f32.xlu0 %v2808
    %v2810 = vpop.xlane.xlu0 %2809
    %v2811 = vmul.f32 %v2806, 0.03125
    %v2812 = vmul.f32 %v2810, 0.03125
    %v2813 = vmul.f32 %v2811, %v2811
    %v2814 = vsub.f32 %v2812, %v2813
    %v2815 = vmax.f32 %v2814, 0.0
    %v2816 = vsub.f32 %v2801, %v2811
    %v2817 = vadd.f32 %v2815, 1e-05
    %v2818 = vrsqrt.pop %v2817
    %v2819 = vmul.f32 %v2816, %v2818
    %v2821 = vlaneseq
    %v2822 = vshrl.u32 %v2821, 7
    %v2823 = vsub.s32 0, %v2822
    %v2824 = vrot.slane %v833, %v2823
    %v2826 = vmul.f32 %v2819, %v2824
    %v2828 = vlaneseq
    %v2829 = vshrl.u32 %v2828, 7
    %v2830 = vsub.s32 0, %v2829
    %v2831 = vrot.slane %v832, %v2830
    %v2833 = vadd.f32 %v2826, %v2831
    %v2834 = vmax.f32 %v2833, 0.0
    %v2836 = vsel %vm947, %v2834, 0
    %2838 = vmatprep.subr.mxu0 0.0
    %2839 = vmatpush1.msra.mxu0 0.0
    %2840 = vmatprep.subr.mxu0 0.0
    %2841 = vmatpush1.msra.mxu0 0.0
    %2842 = vmatprep.subr.mxu0 0.0
    %2843 = vmatpush1.msra.mxu0 0.0
    %2844 = vmatprep.subr.mxu0 0.0
    %2845 = vmatpush1.msra.mxu0 0.0
    %2846 = vmatprep.subr.mxu0 0.0
    %2847 = vmatpush1.msra.mxu0 0.0
    %2848 = vmatprep.subr.mxu0 0.0
    %2849 = vmatpush1.msra.mxu0 0.0
    %2850 = vmatprep.subr.mxu0 0.0
    %2851 = vmatpush1.msra.mxu0 0.0
    %2852 = vmatprep.subr.mxu0 0.0
    %2853 = vmatpush1.msra.mxu0 0.0
    %2854 = vmatprep.subr.mxu0 0.0
    %2855 = vmatpush1.msra.mxu0 0.0
    %2856 = vmatprep.subr.mxu0 0.0
    %2857 = vmatpush1.msra.mxu0 0.0
    %2858 = vmatprep.subr.mxu0 0.0
    %2859 = vmatpush1.msra.mxu0 0.0
    %2860 = vmatprep.subr.mxu0 0.0
    %2861 = vmatpush1.msra.mxu0 0.0
    %2862 = vmatprep.subr.mxu0 0.0
    %2863 = vmatpush1.msra.mxu0 %v843
    %2864 = vmatprep.subr.mxu0 0.0
    %2865 = vmatpush1.msra.mxu0 %v842
    %2866 = vmatprep.subr.mxu0 0.0
    %2867 = vmatpush1.msra.mxu0 %v841
    %2868 = vmatprep.subr.mxu0 0.0
    %2869 = vmatpush1.msra.mxu0 %v840
    %2870 = vmatprep.subr.mxu0 0.0
    %2871 = vmatpush2.msra.mxu0 0.0
    %2872 = vmatprep.subr.mxu0 0.0
    %2873 = vmatpush2.msra.mxu0 0.0
    %2874 = vmatprep.subr.mxu0 0.0
    %2875 = vmatpush2.msra.mxu0 0.0
    %2876 = vmatprep.subr.mxu0 0.0
    %2877 = vmatpush2.msra.mxu0 0.0
    %2878 = vmatprep.subr.mxu0 0.0
    %2879 = vmatpush2.msra.mxu0 0.0
    %2880 = vmatprep.subr.mxu0 0.0
    %2881 = vmatpush2.msra.mxu0 0.0
    %2882 = vmatprep.subr.mxu0 0.0
    %2883 = vmatpush2.msra.mxu0 0.0
    %2884 = vmatprep.subr.mxu0 0.0
    %2885 = vmatpush2.msra.mxu0 0.0
    %2886 = vmatprep.subr.mxu0 0.0
    %2887 = vmatpush2.msra.mxu0 0.0
    %2888 = vmatprep.subr.mxu0 0.0
    %2889 = vmatpush2.msra.mxu0 0.0
    %2890 = vmatprep.subr.mxu0 0.0
    %2891 = vmatpush2.msra.mxu0 0.0
    %2892 = vmatprep.subr.mxu0 0.0
    %2893 = vmatpush2.msra.mxu0 0.0
    %2894 = vmatprep.subr.mxu0 0.0
    %2895 = vmatpush2.msra.mxu0 0.0
    %2896 = vmatprep.subr.mxu0 0.0
    %2897 = vmatpush2.msra.mxu0 0.0
    %2898 = vmatprep.subr.mxu0 0.0
    %2899 = vmatpush2.msra.mxu0 0.0
    %2900 = vmatprep.subr.mxu0 0.0
    %2901 = vmatpush2.msra.mxu0 0.0
    %2902 = vmatprep.mubr.f32.mxu0 0.0
    %2903 = vmatmul.mubr.f32.gmra.mxu0 %v2836
    %v2904 = vpop.f32.mrf.mxu0
    %v2905 = vadd.f32 0.0, %v2904
    %v2906 = vpop.f32.mrf.mxu0
    %2907 = vdwg.mxu0
    %v2908 = vsel %vm947, %v2905, 0.0
    %2909 = vadd.xlane.f32.xlu0 %v2908
    %v2910 = vpop.xlane.xlu0 %2909
    %v2911 = vmul.f32 %v2905, %v2905
    %v2912 = vsel %vm947, %v2911, 0.0
    %2913 = vadd.xlane.f32.xlu0 %v2912
    %v2914 = vpop.xlane.xlu0 %2913
    %v2915 = vmul.f32 %v2910, 0.03125
    %v2916 = vmul.f32 %v2914, 0.03125
    %v2917 = vmul.f32 %v2915, %v2915
    %v2918 = vsub.f32 %v2916, %v2917
    %v2919 = vmax.f32 %v2918, 0.0
    %v2920 = vsub.f32 %v2905, %v2915
    %v2921 = vadd.f32 %v2919, 1e-05
    %v2922 = vrsqrt.pop %v2921
    %v2923 = vmul.f32 %v2920, %v2922
    %v2925 = vlaneseq
    %v2926 = vshrl.u32 %v2925, 7
    %v2927 = vsub.s32 0, %v2926
    %v2928 = vrot.slane %v839, %v2927
    %v2930 = vmul.f32 %v2923, %v2928
    %v2932 = vlaneseq
    %v2933 = vshrl.u32 %v2932, 7
    %v2934 = vsub.s32 0, %v2933
    %v2935 = vrot.slane %v838, %v2934
    %v2937 = vadd.f32 %v2930, %v2935
    %v2938 = vadd.f32 %v2937, %v2730
    %v2939 = vmax.f32 %v2938, 0.0
    %v2941 = vlaneseq
    %v2942 = vshrl.u32 %v2941, 7
    %v2943 = vsub.s32 0, %v2942
    %v2944 = vrot.slane %v827, %v2943
    %v2947 = vsel %vm947, %v2939, 0
    %2949 = vmatprep.subr.mxu0 0.0
    %2950 = vmatpush1.msra.mxu0 0.0
    %2951 = vmatprep.subr.mxu0 0.0
    %2952 = vmatpush1.msra.mxu0 0.0
    %2953 = vmatprep.subr.mxu0 0.0
    %2954 = vmatpush1.msra.mxu0 0.0
    %2955 = vmatprep.subr.mxu0 0.0
    %2956 = vmatpush1.msra.mxu0 0.0
    %2957 = vmatprep.subr.mxu0 0.0
    %2958 = vmatpush1.msra.mxu0 0.0
    %2959 = vmatprep.subr.mxu0 0.0
    %2960 = vmatpush1.msra.mxu0 0.0
    %2961 = vmatprep.subr.mxu0 0.0
    %2962 = vmatpush1.msra.mxu0 0.0
    %2963 = vmatprep.subr.mxu0 0.0
    %2964 = vmatpush1.msra.mxu0 0.0
    %2965 = vmatprep.subr.mxu0 0.0
    %2966 = vmatpush1.msra.mxu0 0.0
    %2967 = vmatprep.subr.mxu0 0.0
    %2968 = vmatpush1.msra.mxu0 0.0
    %2969 = vmatprep.subr.mxu0 0.0
    %2970 = vmatpush1.msra.mxu0 0.0
    %2971 = vmatprep.subr.mxu0 0.0
    %2972 = vmatpush1.msra.mxu0 0.0
    %2973 = vmatprep.subr.mxu0 0.0
    %2974 = vmatpush1.msra.mxu0 %v831
    %2975 = vmatprep.subr.mxu0 0.0
    %2976 = vmatpush1.msra.mxu0 %v830
    %2977 = vmatprep.subr.mxu0 0.0
    %2978 = vmatpush1.msra.mxu0 %v829
    %2979 = vmatprep.subr.mxu0 0.0
    %2980 = vmatpush1.msra.mxu0 %v828
    %2981 = vmatprep.subr.mxu0 0.0
    %2982 = vmatpush2.msra.mxu0 0.0
    %2983 = vmatprep.subr.mxu0 0.0
    %2984 = vmatpush2.msra.mxu0 0.0
    %2985 = vmatprep.subr.mxu0 0.0
    %2986 = vmatpush2.msra.mxu0 0.0
    %2987 = vmatprep.subr.mxu0 0.0
    %2988 = vmatpush2.msra.mxu0 0.0
    %2989 = vmatprep.subr.mxu0 0.0
    %2990 = vmatpush2.msra.mxu0 0.0
    %2991 = vmatprep.subr.mxu0 0.0
    %2992 = vmatpush2.msra.mxu0 0.0
    %2993 = vmatprep.subr.mxu0 0.0
    %2994 = vmatpush2.msra.mxu0 0.0
    %2995 = vmatprep.subr.mxu0 0.0
    %2996 = vmatpush2.msra.mxu0 0.0
    %2997 = vmatprep.subr.mxu0 0.0
    %2998 = vmatpush2.msra.mxu0 0.0
    %2999 = vmatprep.subr.mxu0 0.0
    %3000 = vmatpush2.msra.mxu0 0.0
    %3001 = vmatprep.subr.mxu0 0.0
    %3002 = vmatpush2.msra.mxu0 0.0
    %3003 = vmatprep.subr.mxu0 0.0
    %3004 = vmatpush2.msra.mxu0 0.0
    %3005 = vmatprep.subr.mxu0 0.0
    %3006 = vmatpush2.msra.mxu0 0.0
    %3007 = vmatprep.subr.mxu0 0.0
    %3008 = vmatpush2.msra.mxu0 0.0
    %3009 = vmatprep.subr.mxu0 0.0
    %3010 = vmatpush2.msra.mxu0 0.0
    %3011 = vmatprep.subr.mxu0 0.0
    %3012 = vmatpush2.msra.mxu0 0.0
    %3013 = vmatprep.mubr.f32.mxu0 0.0
    %3014 = vmatmul.mubr.f32.gmra.mxu0 %v2947
    %v3015 = vpop.f32.mrf.mxu0
    %v3016 = vadd.f32 %v2944, %v3015
    %v3017 = vpop.f32.mrf.mxu0
    %3018 = vdwg.mxu0
    %s3019 = scalar_lea.vmem [#allocation27], 1
    %v3020 = vld [vmem:[%s3019] sm:$0x1]
    %s3021 = scalar_lea.vmem %s43, 96
    %v3022 = vld [vmem:[%s3021] sm:$0xff]
    %v3023 = vld [vmem:[%s3021 + $0x8] sm:$0xff]
    %v3024 = vld [vmem:[%s3021 + $0x10] sm:$0xff]
    %v3025 = vld [vmem:[%s3021 + $0x18] sm:$0xff]
    %v3026 = vld [vmem:[%s3021 + $0x20] sm:$0xff]
    %v3027 = vld [vmem:[%s3021 + $0x28] sm:$0xff]
    %v3028 = vld [vmem:[%s3021 + $0x30] sm:$0xff]
    %v3029 = vld [vmem:[%s3021 + $0x38] sm:$0xff]
    %v3030 = vld [vmem:[%s3021 + $0x40] sm:$0xff]
    %v3031 = vld [vmem:[%s3021 + $0x48] sm:$0xff]
    %v3032 = vld [vmem:[%s3021 + $0x50] sm:$0xff]
    %v3033 = vld [vmem:[%s3021 + $0x58] sm:$0xff]
    %s3034 = scalar_lea.vmem [#allocation29], 1
    %v3035 = vld [vmem:[%s3034] sm:$0x1]
    %s3036 = scalar_lea.vmem [#allocation30], 1
    %v3037 = vld [vmem:[%s3036] sm:$0x1]
    %s3038 = scalar_lea.vmem %s49, 96
    %v3039 = vld [vmem:[%s3038] sm:$0xff]
    %v3040 = vld [vmem:[%s3038 + $0x8] sm:$0xff]
    %v3041 = vld [vmem:[%s3038 + $0x10] sm:$0xff]
    %v3042 = vld [vmem:[%s3038 + $0x18] sm:$0xff]
    %v3043 = vld [vmem:[%s3038 + $0x20] sm:$0xff]
    %v3044 = vld [vmem:[%s3038 + $0x28] sm:$0xff]
    %v3045 = vld [vmem:[%s3038 + $0x30] sm:$0xff]
    %v3046 = vld [vmem:[%s3038 + $0x38] sm:$0xff]
    %v3047 = vld [vmem:[%s3038 + $0x40] sm:$0xff]
    %v3048 = vld [vmem:[%s3038 + $0x48] sm:$0xff]
    %v3049 = vld [vmem:[%s3038 + $0x50] sm:$0xff]
    %v3050 = vld [vmem:[%s3038 + $0x58] sm:$0xff]
    %s3051 = scalar_lea.vmem [#allocation32], 1
    %v3052 = vld [vmem:[%s3051] sm:$0x1]
    %s3053 = scalar_lea.vmem [#allocation33], 1
    %v3054 = vld [vmem:[%s3053] sm:$0x1]
    %s3055 = scalar_lea.vmem %s55, 96
    %v3056 = vld [vmem:[%s3055] sm:$0xff]
    %v3057 = vld [vmem:[%s3055 + $0x8] sm:$0xff]
    %v3058 = vld [vmem:[%s3055 + $0x10] sm:$0xff]
    %v3059 = vld [vmem:[%s3055 + $0x18] sm:$0xff]
    %v3060 = vld [vmem:[%s3055 + $0x20] sm:$0xff]
    %v3061 = vld [vmem:[%s3055 + $0x28] sm:$0xff]
    %v3062 = vld [vmem:[%s3055 + $0x30] sm:$0xff]
    %v3063 = vld [vmem:[%s3055 + $0x38] sm:$0xff]
    %v3064 = vld [vmem:[%s3055 + $0x40] sm:$0xff]
    %v3065 = vld [vmem:[%s3055 + $0x48] sm:$0xff]
    %v3066 = vld [vmem:[%s3055 + $0x50] sm:$0xff]
    %v3067 = vld [vmem:[%s3055 + $0x58] sm:$0xff]
    %s3068 = scalar_lea.vmem [#allocation35], 1
    %v3069 = vld [vmem:[%s3068] sm:$0x1]
    %s3070 = scalar_lea.vmem %s59, 48
    %v3071 = vld [vmem:[%s3070] sm:$0xff]
    %v3072 = vld [vmem:[%s3070 + $0x8] sm:$0xff]
    %v3073 = vld [vmem:[%s3070 + $0x10] sm:$0xff]
    %v3074 = vld [vmem:[%s3070 + $0x18] sm:$0xff]
    %v3075 = vld [vmem:[%s3070 + $0x20] sm:$0xff]
    %v3076 = vld [vmem:[%s3070 + $0x28] sm:$0xff]
    %s3077 = scalar_lea.vmem [#allocation36], 1
    %v3078 = vld [vmem:[%s3077] sm:$0x1]
    %s3079 = scalar_lea.vmem [#allocation38], 1
    %v3080 = vld [vmem:[%s3079] sm:$0x1]
    %s3081 = scalar_lea.vmem %s65, 48
    %v3082 = vld [vmem:[%s3081] sm:$0xff]
    %v3083 = vld [vmem:[%s3081 + $0x8] sm:$0xff]
    %v3084 = vld [vmem:[%s3081 + $0x10] sm:$0xff]
    %v3085 = vld [vmem:[%s3081 + $0x18] sm:$0xff]
    %v3086 = vld [vmem:[%s3081 + $0x20] sm:$0xff]
    %v3087 = vld [vmem:[%s3081 + $0x28] sm:$0xff]
    %s3088 = scalar_lea.vmem [#allocation39], 1
    %v3089 = vld [vmem:[%s3088] sm:$0x1]
    %s3090 = scalar_lea.vmem [#allocation41], 1
    %v3091 = vld [vmem:[%s3090] sm:$0x1]
    %s3092 = scalar_lea.vmem %s71, 48
    %v3093 = vld [vmem:[%s3092] sm:$0xff]
    %v3094 = vld [vmem:[%s3092 + $0x8] sm:$0xff]
    %v3095 = vld [vmem:[%s3092 + $0x10] sm:$0xff]
    %v3096 = vld [vmem:[%s3092 + $0x18] sm:$0xff]
    %v3097 = vld [vmem:[%s3092 + $0x20] sm:$0xff]
    %v3098 = vld [vmem:[%s3092 + $0x28] sm:$0xff]
    %s3099 = scalar_lea.vmem %s73, 1
    %v3100 = vld [vmem:[%s3099] sm:$0x1]
    %s3101 = scalar_lea.vmem %s75, 16
    %v3102 = vld [vmem:[%s3101] sm:$0xff]
    %v3103 = vld [vmem:[%s3101 + $0x8] sm:$0xff]
    %s3104 = scalar_lea.vmem [#allocation42], 1
    %v3105 = vld [vmem:[%s3104] sm:$0x1]
    %s3106 = scalar_lea.vmem [#allocation44], 1
    %v3107 = vld [vmem:[%s3106] sm:$0x1]
    %s3108 = scalar_lea.vmem [#allocation45], 16
    %v3109 = vld [vmem:[%s3108] sm:$0xff]
    %v3110 = vld [vmem:[%s3108 + $0x8] sm:$0xff]
    %s3111 = scalar_lea.vmem [#allocation47], 1
    %v3112 = vld [vmem:[%s3111] sm:$0x1]
    %s3113 = scalar_lea.vmem [#allocation48], 1
    %v3114 = vld [vmem:[%s3113] sm:$0x1]
    %s3115 = scalar_lea.vmem [#allocation50], 16
    %v3116 = vld [vmem:[%s3115] sm:$0xff]
    %v3117 = vld [vmem:[%s3115 + $0x8] sm:$0xff]
    %s3118 = scalar_lea.vmem [#allocation51], 1
    %v3119 = vld [vmem:[%s3118] sm:$0x1]
    %s3120 = scalar_lea.vmem [#allocation53], 1
    %v3121 = vld [vmem:[%s3120] sm:$0x1]
    %s3122 = scalar_lea.vmem [#allocation54], 8
    %v3123 = vld [vmem:[%s3122] sm:$0x3f]
    %s3124 = scalar_lea.vmem [#allocation56], 1
    %v3125 = vld [vmem:[%s3124] sm:$0x1]
    %s3126 = scalar_lea.vmem [#allocation57], 1
    %v3127 = vld [vmem:[%s3126] sm:$0x1]
    %s3128 = scalar_lea.vmem [#allocation59], 2
    %v3129 = vld [vmem:[%s3128] sm:$0x3]
    %s3130 = scalar_lea.vmem [#allocation60], 1
    %v3131 = vld [vmem:[%s3130] sm:$0x1]
    %s3132 = scalar_lea.vmem [#allocation62], 1
    %v3133 = vld [vmem:[%s3132] sm:$0x1]
    %s3134 = scalar_lea.vmem %s105, 32
    %v3135 = vld [vmem:[%s3134] sm:$0xff]
    %v3136 = vld [vmem:[%s3134 + $0x8] sm:$0xff]
    %v3137 = vld [vmem:[%s3134 + $0x10] sm:$0xff]
    %v3138 = vld [vmem:[%s3134 + $0x18] sm:$0xff]
    %s3139 = scalar_lea.vmem [#allocation63], 1
    %v3140 = vld [vmem:[%s3139] sm:$0x1]
    %s3141 = scalar_lea.vmem [#allocation65], 1
    %v3142 = vld [vmem:[%s3141] sm:$0x1]
    %s3143 = scalar_lea.vmem %s111, 64
    %v3144 = vld [vmem:[%s3143] sm:$0xff]
    %v3145 = vld [vmem:[%s3143 + $0x8] sm:$0xff]
    %v3146 = vld [vmem:[%s3143 + $0x10] sm:$0xff]
    %v3147 = vld [vmem:[%s3143 + $0x18] sm:$0xff]
    %v3148 = vld [vmem:[%s3143 + $0x20] sm:$0xff]
    %v3149 = vld [vmem:[%s3143 + $0x28] sm:$0xff]
    %v3150 = vld [vmem:[%s3143 + $0x30] sm:$0xff]
    %v3151 = vld [vmem:[%s3143 + $0x38] sm:$0xff]
    %s3152 = scalar_lea.vmem [#allocation66], 1
    %v3153 = vld [vmem:[%s3152] sm:$0x1]
    %s3154 = scalar_lea.vmem [#allocation68], 1
    %v3155 = vld [vmem:[%s3154] sm:$0x1]
    %s3156 = scalar_lea.vmem %s117, 32
    %v3157 = vld [vmem:[%s3156] sm:$0xff]
    %v3158 = vld [vmem:[%s3156 + $0x8] sm:$0xff]
    %v3159 = vld [vmem:[%s3156 + $0x10] sm:$0xff]
    %v3160 = vld [vmem:[%s3156 + $0x18] sm:$0xff]
    %3161 = vmatprep.subr.mxu0 0.0
    %3162 = vmatpush1.msra.mxu0 0.0
    %3163 = vmatprep.subr.mxu0 0.0
    %3164 = vmatpush1.msra.mxu0 0.0
    %3165 = vmatprep.subr.mxu0 0.0
    %3166 = vmatpush1.msra.mxu0 0.0
    %3167 = vmatprep.subr.mxu0 0.0
    %3168 = vmatpush1.msra.mxu0 0.0
    %3169 = vmatprep.subr.mxu0 0.0
    %3170 = vmatpush1.msra.mxu0 0.0
    %3171 = vmatprep.subr.mxu0 0.0
    %3172 = vmatpush1.msra.mxu0 0.0
    %3173 = vmatprep.subr.mxu0 0.0
    %3174 = vmatpush1.msra.mxu0 0.0
    %3175 = vmatprep.subr.mxu0 0.0
    %3176 = vmatpush1.msra.mxu0 0.0
    %3177 = vmatprep.subr.mxu0 0.0
    %3178 = vmatpush1.msra.mxu0 0.0
    %3179 = vmatprep.subr.mxu0 0.0
    %3180 = vmatpush1.msra.mxu0 0.0
    %3181 = vmatprep.subr.mxu0 0.0
    %3182 = vmatpush1.msra.mxu0 0.0
    %3183 = vmatprep.subr.mxu0 0.0
    %3184 = vmatpush1.msra.mxu0 0.0
    %3185 = vmatprep.subr.mxu0 0.0
    %3186 = vmatpush1.msra.mxu0 %v3138
    %3187 = vmatprep.subr.mxu0 0.0
    %3188 = vmatpush1.msra.mxu0 %v3137
    %3189 = vmatprep.subr.mxu0 0.0
    %3190 = vmatpush1.msra.mxu0 %v3136
    %3191 = vmatprep.subr.mxu0 0.0
    %3192 = vmatpush1.msra.mxu0 %v3135
    %3193 = vmatprep.subr.mxu0 0.0
    %3194 = vmatpush2.msra.mxu0 0.0
    %3195 = vmatprep.subr.mxu0 0.0
    %3196 = vmatpush2.msra.mxu0 0.0
    %3197 = vmatprep.subr.mxu0 0.0
    %3198 = vmatpush2.msra.mxu0 0.0
    %3199 = vmatprep.subr.mxu0 0.0
    %3200 = vmatpush2.msra.mxu0 0.0
    %3201 = vmatprep.subr.mxu0 0.0
    %3202 = vmatpush2.msra.mxu0 0.0
    %3203 = vmatprep.subr.mxu0 0.0
    %3204 = vmatpush2.msra.mxu0 0.0
    %3205 = vmatprep.subr.mxu0 0.0
    %3206 = vmatpush2.msra.mxu0 0.0
    %3207 = vmatprep.subr.mxu0 0.0
    %3208 = vmatpush2.msra.mxu0 0.0
    %3209 = vmatprep.subr.mxu0 0.0
    %3210 = vmatpush2.msra.mxu0 0.0
    %3211 = vmatprep.subr.mxu0 0.0
    %3212 = vmatpush2.msra.mxu0 0.0
    %3213 = vmatprep.subr.mxu0 0.0
    %3214 = vmatpush2.msra.mxu0 0.0
    %3215 = vmatprep.subr.mxu0 0.0
    %3216 = vmatpush2.msra.mxu0 0.0
    %3217 = vmatprep.subr.mxu0 0.0
    %3218 = vmatpush2.msra.mxu0 0.0
    %3219 = vmatprep.subr.mxu0 0.0
    %3220 = vmatpush2.msra.mxu0 0.0
    %3221 = vmatprep.subr.mxu0 0.0
    %3222 = vmatpush2.msra.mxu0 0.0
    %3223 = vmatprep.subr.mxu0 0.0
    %3224 = vmatpush2.msra.mxu0 0.0
    %3225 = vmatprep.mubr.f32.mxu0 0.0
    %3226 = vmatmul.mubr.f32.gmra.mxu0 %v949
    %v3227 = vpop.f32.mrf.mxu0
    %v3228 = vadd.f32 0.0, %v3227
    %v3229 = vpop.f32.mrf.mxu0
    %3230 = vdwg.mxu0
    %v3231 = vsel %vm1021, %v3228, 0.0
    %3232 = vadd.xlane.f32.xlu0 %v3231
    %v3233 = vpop.xlane.xlu0 %3232
    %v3234 = vmul.f32 %v3228, %v3228
    %v3235 = vsel %vm1021, %v3234, 0.0
    %3236 = vadd.xlane.f32.xlu0 %v3235
    %v3237 = vpop.xlane.xlu0 %3236
    %v3238 = vmul.f32 %v3233, 0.015625
    %v3239 = vmul.f32 %v3237, 0.015625
    %v3240 = vmul.f32 %v3238, %v3238
    %v3241 = vsub.f32 %v3239, %v3240
    %v3242 = vmax.f32 %v3241, 0.0
    %v3243 = vsub.f32 %v3228, %v3238
    %v3244 = vadd.f32 %v3242, 1e-05
    %v3245 = vrsqrt.pop %v3244
    %v3246 = vmul.f32 %v3243, %v3245
    %v3248 = vlaneseq
    %v3249 = vshrl.u32 %v3248, 7
    %v3250 = vsub.s32 0, %v3249
    %v3251 = vrot.slane %v3133, %v3250
    %v3253 = vmul.f32 %v3246, %v3251
    %v3255 = vlaneseq
    %v3256 = vshrl.u32 %v3255, 7
    %v3257 = vsub.s32 0, %v3256
    %v3258 = vrot.slane %v3131, %v3257
    %v3260 = vadd.f32 %v3253, %v3258
    %v3261 = vmax.f32 %v3260, 0.0
    %v3263 = vsel %vm1021, %v3261, 0
    %3265 = vmatprep.subr.mxu0 0.0
    %3266 = vmatpush1.msra.mxu0 0.0
    %3267 = vmatprep.subr.mxu0 0.0
    %3268 = vmatpush1.msra.mxu0 0.0
    %3269 = vmatprep.subr.mxu0 0.0
    %3270 = vmatpush1.msra.mxu0 0.0
    %3271 = vmatprep.subr.mxu0 0.0
    %3272 = vmatpush1.msra.mxu0 0.0
    %3273 = vmatprep.subr.mxu0 0.0
    %3274 = vmatpush1.msra.mxu0 0.0
    %3275 = vmatprep.subr.mxu0 0.0
    %3276 = vmatpush1.msra.mxu0 0.0
    %3277 = vmatprep.subr.mxu0 0.0
    %3278 = vmatpush1.msra.mxu0 0.0
    %3279 = vmatprep.subr.mxu0 0.0
    %3280 = vmatpush1.msra.mxu0 0.0
    %3281 = vmatprep.subr.mxu0 0.0
    %3282 = vmatpush1.msra.mxu0 %v3151
    %3283 = vmatprep.subr.mxu0 0.0
    %3284 = vmatpush1.msra.mxu0 %v3150
    %3285 = vmatprep.subr.mxu0 0.0
    %3286 = vmatpush1.msra.mxu0 %v3149
    %3287 = vmatprep.subr.mxu0 0.0
    %3288 = vmatpush1.msra.mxu0 %v3148
    %3289 = vmatprep.subr.mxu0 0.0
    %3290 = vmatpush1.msra.mxu0 %v3147
    %3291 = vmatprep.subr.mxu0 0.0
    %3292 = vmatpush1.msra.mxu0 %v3146
    %3293 = vmatprep.subr.mxu0 0.0
    %3294 = vmatpush1.msra.mxu0 %v3145
    %3295 = vmatprep.subr.mxu0 0.0
    %3296 = vmatpush1.msra.mxu0 %v3144
    %3297 = vmatprep.subr.mxu0 0.0
    %3298 = vmatpush2.msra.mxu0 0.0
    %3299 = vmatprep.subr.mxu0 0.0
    %3300 = vmatpush2.msra.mxu0 0.0
    %3301 = vmatprep.subr.mxu0 0.0
    %3302 = vmatpush2.msra.mxu0 0.0
    %3303 = vmatprep.subr.mxu0 0.0
    %3304 = vmatpush2.msra.mxu0 0.0
    %3305 = vmatprep.subr.mxu0 0.0
    %3306 = vmatpush2.msra.mxu0 0.0
    %3307 = vmatprep.subr.mxu0 0.0
    %3308 = vmatpush2.msra.mxu0 0.0
    %3309 = vmatprep.subr.mxu0 0.0
    %3310 = vmatpush2.msra.mxu0 0.0
    %3311 = vmatprep.subr.mxu0 0.0
    %3312 = vmatpush2.msra.mxu0 0.0
    %3313 = vmatprep.subr.mxu0 0.0
    %3314 = vmatpush2.msra.mxu0 0.0
    %3315 = vmatprep.subr.mxu0 0.0
    %3316 = vmatpush2.msra.mxu0 0.0
    %3317 = vmatprep.subr.mxu0 0.0
    %3318 = vmatpush2.msra.mxu0 0.0
    %3319 = vmatprep.subr.mxu0 0.0
    %3320 = vmatpush2.msra.mxu0 0.0
    %3321 = vmatprep.subr.mxu0 0.0
    %3322 = vmatpush2.msra.mxu0 0.0
    %3323 = vmatprep.subr.mxu0 0.0
    %3324 = vmatpush2.msra.mxu0 0.0
    %3325 = vmatprep.subr.mxu0 0.0
    %3326 = vmatpush2.msra.mxu0 0.0
    %3327 = vmatprep.subr.mxu0 0.0
    %3328 = vmatpush2.msra.mxu0 0.0
    %3329 = vmatprep.mubr.f32.mxu0 0.0
    %3330 = vmatmul.mubr.f32.gmra.mxu0 %v3263
    %v3331 = vpop.f32.mrf.mxu0
    %v3332 = vadd.f32 0.0, %v3331
    %v3333 = vpop.f32.mrf.mxu0
    %3334 = vdwg.mxu0
    %v3335 = vsel %vm947, %v3332, 0.0
    %3336 = vadd.xlane.f32.xlu0 %v3335
    %v3337 = vpop.xlane.xlu0 %3336
    %v3338 = vmul.f32 %v3332, %v3332
    %v3339 = vsel %vm947, %v3338, 0.0
    %3340 = vadd.xlane.f32.xlu0 %v3339
    %v3341 = vpop.xlane.xlu0 %3340
    %v3342 = vmul.f32 %v3337, 0.03125
    %v3343 = vmul.f32 %v3341, 0.03125
    %v3344 = vmul.f32 %v3342, %v3342
    %v3345 = vsub.f32 %v3343, %v3344
    %v3346 = vmax.f32 %v3345, 0.0
    %v3347 = vsub.f32 %v3332, %v3342
    %v3348 = vadd.f32 %v3346, 1e-05
    %v3349 = vrsqrt.pop %v3348
    %v3350 = vmul.f32 %v3347, %v3349
    %v3352 = vlaneseq
    %v3353 = vshrl.u32 %v3352, 7
    %v3354 = vsub.s32 0, %v3353
    %v3355 = vrot.slane %v3142, %v3354
    %v3357 = vmul.f32 %v3350, %v3355
    %v3359 = vlaneseq
    %v3360 = vshrl.u32 %v3359, 7
    %v3361 = vsub.s32 0, %v3360
    %v3362 = vrot.slane %v3140, %v3361
    %v3364 = vadd.f32 %v3357, %v3362
    %v3365 = vmax.f32 %v3364, 0.0
    %v3367 = vsel %vm947, %v3365, 0
    %3369 = vmatprep.subr.mxu0 0.0
    %3370 = vmatpush1.msra.mxu0 0.0
    %3371 = vmatprep.subr.mxu0 0.0
    %3372 = vmatpush1.msra.mxu0 0.0
    %3373 = vmatprep.subr.mxu0 0.0
    %3374 = vmatpush1.msra.mxu0 0.0
    %3375 = vmatprep.subr.mxu0 0.0
    %3376 = vmatpush1.msra.mxu0 0.0
    %3377 = vmatprep.subr.mxu0 0.0
    %3378 = vmatpush1.msra.mxu0 0.0
    %3379 = vmatprep.subr.mxu0 0.0
    %3380 = vmatpush1.msra.mxu0 0.0
    %3381 = vmatprep.subr.mxu0 0.0
    %3382 = vmatpush1.msra.mxu0 0.0
    %3383 = vmatprep.subr.mxu0 0.0
    %3384 = vmatpush1.msra.mxu0 0.0
    %3385 = vmatprep.subr.mxu0 0.0
    %3386 = vmatpush1.msra.mxu0 0.0
    %3387 = vmatprep.subr.mxu0 0.0
    %3388 = vmatpush1.msra.mxu0 0.0
    %3389 = vmatprep.subr.mxu0 0.0
    %3390 = vmatpush1.msra.mxu0 0.0
    %3391 = vmatprep.subr.mxu0 0.0
    %3392 = vmatpush1.msra.mxu0 0.0
    %3393 = vmatprep.subr.mxu0 0.0
    %3394 = vmatpush1.msra.mxu0 %v3160
    %3395 = vmatprep.subr.mxu0 0.0
    %3396 = vmatpush1.msra.mxu0 %v3159
    %3397 = vmatprep.subr.mxu0 0.0
    %3398 = vmatpush1.msra.mxu0 %v3158
    %3399 = vmatprep.subr.mxu0 0.0
    %3400 = vmatpush1.msra.mxu0 %v3157
    %3401 = vmatprep.subr.mxu0 0.0
    %3402 = vmatpush2.msra.mxu0 0.0
    %3403 = vmatprep.subr.mxu0 0.0
    %3404 = vmatpush2.msra.mxu0 0.0
    %3405 = vmatprep.subr.mxu0 0.0
    %3406 = vmatpush2.msra.mxu0 0.0
    %3407 = vmatprep.subr.mxu0 0.0
    %3408 = vmatpush2.msra.mxu0 0.0
    %3409 = vmatprep.subr.mxu0 0.0
    %3410 = vmatpush2.msra.mxu0 0.0
    %3411 = vmatprep.subr.mxu0 0.0
    %3412 = vmatpush2.msra.mxu0 0.0
    %3413 = vmatprep.subr.mxu0 0.0
    %3414 = vmatpush2.msra.mxu0 0.0
    %3415 = vmatprep.subr.mxu0 0.0
    %3416 = vmatpush2.msra.mxu0 0.0
    %3417 = vmatprep.subr.mxu0 0.0
    %3418 = vmatpush2.msra.mxu0 0.0
    %3419 = vmatprep.subr.mxu0 0.0
    %3420 = vmatpush2.msra.mxu0 0.0
    %3421 = vmatprep.subr.mxu0 0.0
    %3422 = vmatpush2.msra.mxu0 0.0
    %3423 = vmatprep.subr.mxu0 0.0
    %3424 = vmatpush2.msra.mxu0 0.0
    %3425 = vmatprep.subr.mxu0 0.0
    %3426 = vmatpush2.msra.mxu0 0.0
    %3427 = vmatprep.subr.mxu0 0.0
    %3428 = vmatpush2.msra.mxu0 0.0
    %3429 = vmatprep.subr.mxu0 0.0
    %3430 = vmatpush2.msra.mxu0 0.0
    %3431 = vmatprep.subr.mxu0 0.0
    %3432 = vmatpush2.msra.mxu0 0.0
    %3433 = vmatprep.mubr.f32.mxu0 0.0
    %3434 = vmatmul.mubr.f32.gmra.mxu0 %v3367
    %v3435 = vpop.f32.mrf.mxu0
    %v3436 = vadd.f32 0.0, %v3435
    %v3437 = vpop.f32.mrf.mxu0
    %3438 = vdwg.mxu0
    %v3439 = vsel %vm1230, %v3436, 0.0
    %3440 = vadd.xlane.f32.xlu0 %v3439
    %v3441 = vpop.xlane.xlu0 %3440
    %v3442 = vmul.f32 %v3436, %v3436
    %v3443 = vsel %vm1230, %v3442, 0.0
    %3444 = vadd.xlane.f32.xlu0 %v3443
    %v3445 = vpop.xlane.xlu0 %3444
    %v3446 = vmul.f32 %v3441, 0.0625
    %v3447 = vmul.f32 %v3445, 0.0625
    %v3448 = vmul.f32 %v3446, %v3446
    %v3449 = vsub.f32 %v3447, %v3448
    %v3450 = vmax.f32 %v3449, 0.0
    %v3451 = vsub.f32 %v3436, %v3446
    %v3452 = vadd.f32 %v3450, 1e-05
    %v3453 = vrsqrt.pop %v3452
    %v3454 = vmul.f32 %v3451, %v3453
    %v3456 = vlaneseq
    %v3457 = vshrl.u32 %v3456, 7
    %v3458 = vsub.s32 0, %v3457
    %v3459 = vrot.slane %v3155, %v3458
    %v3461 = vmul.f32 %v3454, %v3459
    %v3463 = vlaneseq
    %v3464 = vshrl.u32 %v3463, 7
    %v3465 = vsub.s32 0, %v3464
    %v3466 = vrot.slane %v3153, %v3465
    %v3468 = vadd.f32 %v3461, %v3466
    %v3469 = vmax.f32 %v3468, 0.0
    %v3471 = vsel %vm1230, %v3469, 0
    %3473 = vmatprep.subr.mxu0 0.0
    %3474 = vmatpush1.msra.mxu0 0.0
    %3475 = vmatprep.subr.mxu0 0.0
    %3476 = vmatpush1.msra.mxu0 0.0
    %3477 = vmatprep.subr.mxu0 0.0
    %3478 = vmatpush1.msra.mxu0 0.0
    %3479 = vmatprep.subr.mxu0 0.0
    %3480 = vmatpush1.msra.mxu0 0.0
    %3481 = vmatprep.subr.mxu0 0.0
    %3482 = vmatpush1.msra.mxu0 0.0
    %3483 = vmatprep.subr.mxu0 0.0
    %3484 = vmatpush1.msra.mxu0 0.0
    %3485 = vmatprep.subr.mxu0 0.0
    %3486 = vmatpush1.msra.mxu0 0.0
    %3487 = vmatprep.subr.mxu0 0.0
    %3488 = vmatpush1.msra.mxu0 0.0
    %3489 = vmatprep.subr.mxu0 0.0
    %3490 = vmatpush1.msra.mxu0 0.0
    %3491 = vmatprep.subr.mxu0 0.0
    %3492 = vmatpush1.msra.mxu0 0.0
    %3493 = vmatprep.subr.mxu0 0.0
    %3494 = vmatpush1.msra.mxu0 0.0
    %3495 = vmatprep.subr.mxu0 0.0
    %3496 = vmatpush1.msra.mxu0 0.0
    %3497 = vmatprep.subr.mxu0 0.0
    %3498 = vmatpush1.msra.mxu0 0.0
    %3499 = vmatprep.subr.mxu0 0.0
    %3500 = vmatpush1.msra.mxu0 0.0
    %3501 = vmatprep.subr.mxu0 0.0
    %3502 = vmatpush1.msra.mxu0 %v3110
    %3503 = vmatprep.subr.mxu0 0.0
    %3504 = vmatpush1.msra.mxu0 %v3109
    %3505 = vmatprep.subr.mxu0 0.0
    %3506 = vmatpush2.msra.mxu0 0.0
    %3507 = vmatprep.subr.mxu0 0.0
    %3508 = vmatpush2.msra.mxu0 0.0
    %3509 = vmatprep.subr.mxu0 0.0
    %3510 = vmatpush2.msra.mxu0 0.0
    %3511 = vmatprep.subr.mxu0 0.0
    %3512 = vmatpush2.msra.mxu0 0.0
    %3513 = vmatprep.subr.mxu0 0.0
    %3514 = vmatpush2.msra.mxu0 0.0
    %3515 = vmatprep.subr.mxu0 0.0
    %3516 = vmatpush2.msra.mxu0 0.0
    %3517 = vmatprep.subr.mxu0 0.0
    %3518 = vmatpush2.msra.mxu0 0.0
    %3519 = vmatprep.subr.mxu0 0.0
    %3520 = vmatpush2.msra.mxu0 0.0
    %3521 = vmatprep.subr.mxu0 0.0
    %3522 = vmatpush2.msra.mxu0 0.0
    %3523 = vmatprep.subr.mxu0 0.0
    %3524 = vmatpush2.msra.mxu0 0.0
    %3525 = vmatprep.subr.mxu0 0.0
    %3526 = vmatpush2.msra.mxu0 0.0
    %3527 = vmatprep.subr.mxu0 0.0
    %3528 = vmatpush2.msra.mxu0 0.0
    %3529 = vmatprep.subr.mxu0 0.0
    %3530 = vmatpush2.msra.mxu0 0.0
    %3531 = vmatprep.subr.mxu0 0.0
    %3532 = vmatpush2.msra.mxu0 0.0
    %3533 = vmatprep.subr.mxu0 0.0
    %3534 = vmatpush2.msra.mxu0 0.0
    %3535 = vmatprep.subr.mxu0 0.0
    %3536 = vmatpush2.msra.mxu0 0.0
    %3537 = vmatprep.mubr.f32.mxu0 0.0
    %3538 = vmatmul.mubr.f32.gmra.mxu0 %v3471
    %v3539 = vpop.f32.mrf.mxu0
    %v3540 = vadd.f32 0.0, %v3539
    %v3541 = vpop.f32.mrf.mxu0
    %3542 = vdwg.mxu0
    %v3543 = vsel %vm1230, %v3540, 0.0
    %3544 = vadd.xlane.f32.xlu0 %v3543
    %v3545 = vpop.xlane.xlu0 %3544
    %v3546 = vmul.f32 %v3540, %v3540
    %v3547 = vsel %vm1230, %v3546, 0.0
    %3548 = vadd.xlane.f32.xlu0 %v3547
    %v3549 = vpop.xlane.xlu0 %3548
    %v3550 = vmul.f32 %v3545, 0.0625
    %v3551 = vmul.f32 %v3549, 0.0625
    %v3552 = vmul.f32 %v3550, %v3550
    %v3553 = vsub.f32 %v3551, %v3552
    %v3554 = vmax.f32 %v3553, 0.0
    %v3555 = vsub.f32 %v3540, %v3550
    %v3556 = vadd.f32 %v3554, 1e-05
    %v3557 = vrsqrt.pop %v3556
    %v3558 = vmul.f32 %v3555, %v3557
    %v3560 = vlaneseq
    %v3561 = vshrl.u32 %v3560, 7
    %v3562 = vsub.s32 0, %v3561
    %v3563 = vrot.slane %v3107, %v3562
    %v3565 = vmul.f32 %v3558, %v3563
    %v3567 = vlaneseq
    %v3568 = vshrl.u32 %v3567, 7
    %v3569 = vsub.s32 0, %v3568
    %v3570 = vrot.slane %v3105, %v3569
    %v3572 = vadd.f32 %v3565, %v3570
    %v3573 = vmax.f32 %v3572, 0.0
    %v3575 = vsel %vm1230, %v3573, 0
    %3577 = vmatprep.subr.mxu0 0.0
    %3578 = vmatpush1.msra.mxu0 0.0
    %3579 = vmatprep.subr.mxu0 0.0
    %3580 = vmatpush1.msra.mxu0 0.0
    %3581 = vmatprep.subr.mxu0 0.0
    %3582 = vmatpush1.msra.mxu0 0.0
    %3583 = vmatprep.subr.mxu0 0.0
    %3584 = vmatpush1.msra.mxu0 0.0
    %3585 = vmatprep.subr.mxu0 0.0
    %3586 = vmatpush1.msra.mxu0 0.0
    %3587 = vmatprep.subr.mxu0 0.0
    %3588 = vmatpush1.msra.mxu0 0.0
    %3589 = vmatprep.subr.mxu0 0.0
    %3590 = vmatpush1.msra.mxu0 0.0
    %3591 = vmatprep.subr.mxu0 0.0
    %3592 = vmatpush1.msra.mxu0 0.0
    %3593 = vmatprep.subr.mxu0 0.0
    %3594 = vmatpush1.msra.mxu0 0.0
    %3595 = vmatprep.subr.mxu0 0.0
    %3596 = vmatpush1.msra.mxu0 0.0
    %3597 = vmatprep.subr.mxu0 0.0
    %3598 = vmatpush1.msra.mxu0 0.0
    %3599 = vmatprep.subr.mxu0 0.0
    %3600 = vmatpush1.msra.mxu0 0.0
    %3601 = vmatprep.subr.mxu0 0.0
    %3602 = vmatpush1.msra.mxu0 0.0
    %3603 = vmatprep.subr.mxu0 0.0
    %3604 = vmatpush1.msra.mxu0 0.0
    %3605 = vmatprep.subr.mxu0 0.0
    %3606 = vmatpush1.msra.mxu0 %v3117
    %3607 = vmatprep.subr.mxu0 0.0
    %3608 = vmatpush1.msra.mxu0 %v3116
    %3609 = vmatprep.subr.mxu0 0.0
    %3610 = vmatpush2.msra.mxu0 0.0
    %3611 = vmatprep.subr.mxu0 0.0
    %3612 = vmatpush2.msra.mxu0 0.0
    %3613 = vmatprep.subr.mxu0 0.0
    %3614 = vmatpush2.msra.mxu0 0.0
    %3615 = vmatprep.subr.mxu0 0.0
    %3616 = vmatpush2.msra.mxu0 0.0
    %3617 = vmatprep.subr.mxu0 0.0
    %3618 = vmatpush2.msra.mxu0 0.0
    %3619 = vmatprep.subr.mxu0 0.0
    %3620 = vmatpush2.msra.mxu0 0.0
    %3621 = vmatprep.subr.mxu0 0.0
    %3622 = vmatpush2.msra.mxu0 0.0
    %3623 = vmatprep.subr.mxu0 0.0
    %3624 = vmatpush2.msra.mxu0 0.0
    %3625 = vmatprep.subr.mxu0 0.0
    %3626 = vmatpush2.msra.mxu0 0.0
    %3627 = vmatprep.subr.mxu0 0.0
    %3628 = vmatpush2.msra.mxu0 0.0
    %3629 = vmatprep.subr.mxu0 0.0
    %3630 = vmatpush2.msra.mxu0 0.0
    %3631 = vmatprep.subr.mxu0 0.0
    %3632 = vmatpush2.msra.mxu0 0.0
    %3633 = vmatprep.subr.mxu0 0.0
    %3634 = vmatpush2.msra.mxu0 0.0
    %3635 = vmatprep.subr.mxu0 0.0
    %3636 = vmatpush2.msra.mxu0 0.0
    %3637 = vmatprep.subr.mxu0 0.0
    %3638 = vmatpush2.msra.mxu0 0.0
    %3639 = vmatprep.subr.mxu0 0.0
    %3640 = vmatpush2.msra.mxu0 0.0
    %3641 = vmatprep.mubr.f32.mxu0 0.0
    %3642 = vmatmul.mubr.f32.gmra.mxu0 %v3575
    %v3643 = vpop.f32.mrf.mxu0
    %v3644 = vadd.f32 0.0, %v3643
    %v3645 = vpop.f32.mrf.mxu0
    %3646 = vdwg.mxu0
    %v3647 = vsel %vm1230, %v3644, 0.0
    %3648 = vadd.xlane.f32.xlu0 %v3647
    %v3649 = vpop.xlane.xlu0 %3648
    %v3650 = vmul.f32 %v3644, %v3644
    %v3651 = vsel %vm1230, %v3650, 0.0
    %3652 = vadd.xlane.f32.xlu0 %v3651
    %v3653 = vpop.xlane.xlu0 %3652
    %v3654 = vmul.f32 %v3649, 0.0625
    %v3655 = vmul.f32 %v3653, 0.0625
    %v3656 = vmul.f32 %v3654, %v3654
    %v3657 = vsub.f32 %v3655, %v3656
    %v3658 = vmax.f32 %v3657, 0.0
    %v3659 = vsub.f32 %v3644, %v3654
    %v3660 = vadd.f32 %v3658, 1e-05
    %v3661 = vrsqrt.pop %v3660
    %v3662 = vmul.f32 %v3659, %v3661
    %v3664 = vlaneseq
    %v3665 = vshrl.u32 %v3664, 7
    %v3666 = vsub.s32 0, %v3665
    %v3667 = vrot.slane %v3114, %v3666
    %v3669 = vmul.f32 %v3662, %v3667
    %v3671 = vlaneseq
    %v3672 = vshrl.u32 %v3671, 7
    %v3673 = vsub.s32 0, %v3672
    %v3674 = vrot.slane %v3112, %v3673
    %v3676 = vadd.f32 %v3669, %v3674
    %v3677 = vadd.f32 %v3676, %v3469
    %v3678 = vmax.f32 %v3677, 0.0
    %v3680 = vlaneseq
    %v3681 = vshrl.u32 %v3680, 7
    %v3682 = vsub.s32 0, %v3681
    %v3683 = vrot.slane %v3100, %v3682
    %v3686 = vsel %vm1230, %v3678, 0
    %3688 = vmatprep.subr.mxu0 0.0
    %3689 = vmatpush1.msra.mxu0 0.0
    %3690 = vmatprep.subr.mxu0 0.0
    %3691 = vmatpush1.msra.mxu0 0.0
    %3692 = vmatprep.subr.mxu0 0.0
    %3693 = vmatpush1.msra.mxu0 0.0
    %3694 = vmatprep.subr.mxu0 0.0
    %3695 = vmatpush1.msra.mxu0 0.0
    %3696 = vmatprep.subr.mxu0 0.0
    %3697 = vmatpush1.msra.mxu0 0.0
    %3698 = vmatprep.subr.mxu0 0.0
    %3699 = vmatpush1.msra.mxu0 0.0
    %3700 = vmatprep.subr.mxu0 0.0
    %3701 = vmatpush1.msra.mxu0 0.0
    %3702 = vmatprep.subr.mxu0 0.0
    %3703 = vmatpush1.msra.mxu0 0.0
    %3704 = vmatprep.subr.mxu0 0.0
    %3705 = vmatpush1.msra.mxu0 0.0
    %3706 = vmatprep.subr.mxu0 0.0
    %3707 = vmatpush1.msra.mxu0 0.0
    %3708 = vmatprep.subr.mxu0 0.0
    %3709 = vmatpush1.msra.mxu0 0.0
    %3710 = vmatprep.subr.mxu0 0.0
    %3711 = vmatpush1.msra.mxu0 0.0
    %3712 = vmatprep.subr.mxu0 0.0
    %3713 = vmatpush1.msra.mxu0 0.0
    %3714 = vmatprep.subr.mxu0 0.0
    %3715 = vmatpush1.msra.mxu0 0.0
    %3716 = vmatprep.subr.mxu0 0.0
    %3717 = vmatpush1.msra.mxu0 %v3103
    %3718 = vmatprep.subr.mxu0 0.0
    %3719 = vmatpush1.msra.mxu0 %v3102
    %3720 = vmatprep.subr.mxu0 0.0
    %3721 = vmatpush2.msra.mxu0 0.0
    %3722 = vmatprep.subr.mxu0 0.0
    %3723 = vmatpush2.msra.mxu0 0.0
    %3724 = vmatprep.subr.mxu0 0.0
    %3725 = vmatpush2.msra.mxu0 0.0
    %3726 = vmatprep.subr.mxu0 0.0
    %3727 = vmatpush2.msra.mxu0 0.0
    %3728 = vmatprep.subr.mxu0 0.0
    %3729 = vmatpush2.msra.mxu0 0.0
    %3730 = vmatprep.subr.mxu0 0.0
    %3731 = vmatpush2.msra.mxu0 0.0
    %3732 = vmatprep.subr.mxu0 0.0
    %3733 = vmatpush2.msra.mxu0 0.0
    %3734 = vmatprep.subr.mxu0 0.0
    %3735 = vmatpush2.msra.mxu0 0.0
    %3736 = vmatprep.subr.mxu0 0.0
    %3737 = vmatpush2.msra.mxu0 0.0
    %3738 = vmatprep.subr.mxu0 0.0
    %3739 = vmatpush2.msra.mxu0 0.0
    %3740 = vmatprep.subr.mxu0 0.0
    %3741 = vmatpush2.msra.mxu0 0.0
    %3742 = vmatprep.subr.mxu0 0.0
    %3743 = vmatpush2.msra.mxu0 0.0
    %3744 = vmatprep.subr.mxu0 0.0
    %3745 = vmatpush2.msra.mxu0 0.0
    %3746 = vmatprep.subr.mxu0 0.0
    %3747 = vmatpush2.msra.mxu0 0.0
    %3748 = vmatprep.subr.mxu0 0.0
    %3749 = vmatpush2.msra.mxu0 0.0
    %3750 = vmatprep.subr.mxu0 0.0
    %3751 = vmatpush2.msra.mxu0 0.0
    %3752 = vmatprep.mubr.f32.mxu0 0.0
    %3753 = vmatmul.mubr.f32.gmra.mxu0 %v3686
    %v3754 = vpop.f32.mrf.mxu0
    %v3755 = vadd.f32 %v3683, %v3754
    %v3756 = vpop.f32.mrf.mxu0
    %3757 = vdwg.mxu0
    %v3759 = vsel %vm1550, %v3755, 0
    %v3762 = vsel %vm1554, %v3129, 0
    %3764 = vmatprep.subr.mxu0 0.0
    %3765 = vmatpush1.msra.mxu0 0.0
    %3766 = vmatprep.subr.mxu0 0.0
    %3767 = vmatpush1.msra.mxu0 0.0
    %3768 = vmatprep.subr.mxu0 0.0
    %3769 = vmatpush1.msra.mxu0 0.0
    %3770 = vmatprep.subr.mxu0 0.0
    %3771 = vmatpush1.msra.mxu0 0.0
    %3772 = vmatprep.subr.mxu0 0.0
    %3773 = vmatpush1.msra.mxu0 0.0
    %3774 = vmatprep.subr.mxu0 0.0
    %3775 = vmatpush1.msra.mxu0 0.0
    %3776 = vmatprep.subr.mxu0 0.0
    %3777 = vmatpush1.msra.mxu0 0.0
    %3778 = vmatprep.subr.mxu0 0.0
    %3779 = vmatpush1.msra.mxu0 0.0
    %3780 = vmatprep.subr.mxu0 0.0
    %3781 = vmatpush1.msra.mxu0 0.0
    %3782 = vmatprep.subr.mxu0 0.0
    %3783 = vmatpush1.msra.mxu0 0.0
    %3784 = vmatprep.subr.mxu0 0.0
    %3785 = vmatpush1.msra.mxu0 0.0
    %3786 = vmatprep.subr.mxu0 0.0
    %3787 = vmatpush1.msra.mxu0 0.0
    %3788 = vmatprep.subr.mxu0 0.0
    %3789 = vmatpush1.msra.mxu0 0.0
    %3790 = vmatprep.subr.mxu0 0.0
    %3791 = vmatpush1.msra.mxu0 0.0
    %3792 = vmatprep.subr.mxu0 0.0
    %3793 = vmatpush1.msra.mxu0 0.0
    %3794 = vmatprep.subr.mxu0 0.0
    %3795 = vmatpush1.msra.mxu0 %v3762
    %3796 = vmatprep.subr.mxu0 0.0
    %3797 = vmatpush2.msra.mxu0 0.0
    %3798 = vmatprep.subr.mxu0 0.0
    %3799 = vmatpush2.msra.mxu0 0.0
    %3800 = vmatprep.subr.mxu0 0.0
    %3801 = vmatpush2.msra.mxu0 0.0
    %3802 = vmatprep.subr.mxu0 0.0
    %3803 = vmatpush2.msra.mxu0 0.0
    %3804 = vmatprep.subr.mxu0 0.0
    %3805 = vmatpush2.msra.mxu0 0.0
    %3806 = vmatprep.subr.mxu0 0.0
    %3807 = vmatpush2.msra.mxu0 0.0
    %3808 = vmatprep.subr.mxu0 0.0
    %3809 = vmatpush2.msra.mxu0 0.0
    %3810 = vmatprep.subr.mxu0 0.0
    %3811 = vmatpush2.msra.mxu0 0.0
    %3812 = vmatprep.subr.mxu0 0.0
    %3813 = vmatpush2.msra.mxu0 0.0
    %3814 = vmatprep.subr.mxu0 0.0
    %3815 = vmatpush2.msra.mxu0 0.0
    %3816 = vmatprep.subr.mxu0 0.0
    %3817 = vmatpush2.msra.mxu0 0.0
    %3818 = vmatprep.subr.mxu0 0.0
    %3819 = vmatpush2.msra.mxu0 0.0
    %3820 = vmatprep.subr.mxu0 0.0
    %3821 = vmatpush2.msra.mxu0 0.0
    %3822 = vmatprep.subr.mxu0 0.0
    %3823 = vmatpush2.msra.mxu0 0.0
    %3824 = vmatprep.subr.mxu0 0.0
    %3825 = vmatpush2.msra.mxu0 0.0
    %3826 = vmatprep.subr.mxu0 0.0
    %3827 = vmatpush2.msra.mxu0 0.0
    %3828 = vmatprep.mubr.f32.mxu0 0.0
    %3829 = vmatmul.mubr.f32.gmra.mxu0 %v3759
    %v3830 = vpop.f32.mrf.mxu0
    %v3831 = vadd.f32 0.0, %v3830
    %v3832 = vpop.f32.mrf.mxu0
    %3833 = vdwg.mxu0
    %v3834 = vsel %vm1230, %v3831, 0.0
    %3835 = vadd.xlane.f32.xlu0 %v3834
    %v3836 = vpop.xlane.xlu0 %3835
    %v3837 = vmul.f32 %v3831, %v3831
    %v3838 = vsel %vm1230, %v3837, 0.0
    %3839 = vadd.xlane.f32.xlu0 %v3838
    %v3840 = vpop.xlane.xlu0 %3839
    %v3841 = vmul.f32 %v3836, 0.0625
    %v3842 = vmul.f32 %v3840, 0.0625
    %v3843 = vmul.f32 %v3841, %v3841
    %v3844 = vsub.f32 %v3842, %v3843
    %v3845 = vmax.f32 %v3844, 0.0
    %v3846 = vsub.f32 %v3831, %v3841
    %v3847 = vadd.f32 %v3845, 1e-05
    %v3848 = vrsqrt.pop %v3847
    %v3849 = vmul.f32 %v3846, %v3848
    %v3851 = vlaneseq
    %v3852 = vshrl.u32 %v3851, 7
    %v3853 = vsub.s32 0, %v3852
    %v3854 = vrot.slane %v3127, %v3853
    %v3856 = vmul.f32 %v3849, %v3854
    %v3858 = vlaneseq
    %v3859 = vshrl.u32 %v3858, 7
    %v3860 = vsub.s32 0, %v3859
    %v3861 = vrot.slane %v3125, %v3860
    %v3863 = vadd.f32 %v3856, %v3861
    %v3864 = vmax.f32 %v3863, 0.0
    %3866 = vrot.lane.b32.xlu0 %v3864, 32
    %v3867 = vpop.permute.xlu0 %3866
    %v3869 = vsel %vm947, %v3365, %v3867
    %v3871 = vsel %vm1664, %v3869, 0
    %3873 = vmatprep.subr.mxu0 0.0
    %3874 = vmatpush1.msra.mxu0 0.0
    %3875 = vmatprep.subr.mxu0 0.0
    %3876 = vmatpush1.msra.mxu0 0.0
    %3877 = vmatprep.subr.mxu0 0.0
    %3878 = vmatpush1.msra.mxu0 0.0
    %3879 = vmatprep.subr.mxu0 0.0
    %3880 = vmatpush1.msra.mxu0 0.0
    %3881 = vmatprep.subr.mxu0 0.0
    %3882 = vmatpush1.msra.mxu0 0.0
    %3883 = vmatprep.subr.mxu0 0.0
    %3884 = vmatpush1.msra.mxu0 0.0
    %3885 = vmatprep.subr.mxu0 0.0
    %3886 = vmatpush1.msra.mxu0 0.0
    %3887 = vmatprep.subr.mxu0 0.0
    %3888 = vmatpush1.msra.mxu0 0.0
    %3889 = vmatprep.subr.mxu0 0.0
    %3890 = vmatpush1.msra.mxu0 0.0
    %3891 = vmatprep.subr.mxu0 0.0
    %3892 = vmatpush1.msra.mxu0 0.0
    %3893 = vmatprep.subr.mxu0 0.0
    %3894 = vmatpush1.msra.mxu0 %v3087
    %3895 = vmatprep.subr.mxu0 0.0
    %3896 = vmatpush1.msra.mxu0 %v3086
    %3897 = vmatprep.subr.mxu0 0.0
    %3898 = vmatpush1.msra.mxu0 %v3085
    %3899 = vmatprep.subr.mxu0 0.0
    %3900 = vmatpush1.msra.mxu0 %v3084
    %3901 = vmatprep.subr.mxu0 0.0
    %3902 = vmatpush1.msra.mxu0 %v3083
    %3903 = vmatprep.subr.mxu0 0.0
    %3904 = vmatpush1.msra.mxu0 %v3082
    %3905 = vmatprep.subr.mxu0 0.0
    %3906 = vmatpush2.msra.mxu0 0.0
    %3907 = vmatprep.subr.mxu0 0.0
    %3908 = vmatpush2.msra.mxu0 0.0
    %3909 = vmatprep.subr.mxu0 0.0
    %3910 = vmatpush2.msra.mxu0 0.0
    %3911 = vmatprep.subr.mxu0 0.0
    %3912 = vmatpush2.msra.mxu0 0.0
    %3913 = vmatprep.subr.mxu0 0.0
    %3914 = vmatpush2.msra.mxu0 0.0
    %3915 = vmatprep.subr.mxu0 0.0
    %3916 = vmatpush2.msra.mxu0 0.0
    %3917 = vmatprep.subr.mxu0 0.0
    %3918 = vmatpush2.msra.mxu0 0.0
    %3919 = vmatprep.subr.mxu0 0.0
    %3920 = vmatpush2.msra.mxu0 0.0
    %3921 = vmatprep.subr.mxu0 0.0
    %3922 = vmatpush2.msra.mxu0 0.0
    %3923 = vmatprep.subr.mxu0 0.0
    %3924 = vmatpush2.msra.mxu0 0.0
    %3925 = vmatprep.subr.mxu0 0.0
    %3926 = vmatpush2.msra.mxu0 0.0
    %3927 = vmatprep.subr.mxu0 0.0
    %3928 = vmatpush2.msra.mxu0 0.0
    %3929 = vmatprep.subr.mxu0 0.0
    %3930 = vmatpush2.msra.mxu0 0.0
    %3931 = vmatprep.subr.mxu0 0.0
    %3932 = vmatpush2.msra.mxu0 0.0
    %3933 = vmatprep.subr.mxu0 0.0
    %3934 = vmatpush2.msra.mxu0 0.0
    %3935 = vmatprep.subr.mxu0 0.0
    %3936 = vmatpush2.msra.mxu0 0.0
    %3937 = vmatprep.mubr.f32.mxu0 0.0
    %3938 = vmatmul.mubr.f32.gmra.mxu0 %v3871
    %v3939 = vpop.f32.mrf.mxu0
    %v3940 = vadd.f32 0.0, %v3939
    %v3941 = vpop.f32.mrf.mxu0
    %3942 = vdwg.mxu0
    %v3943 = vsel %vm1664, %v3940, 0.0
    %3944 = vadd.xlane.f32.xlu0 %v3943
    %v3945 = vpop.xlane.xlu0 %3944
    %v3946 = vmul.f32 %v3940, %v3940
    %v3947 = vsel %vm1664, %v3946, 0.0
    %3948 = vadd.xlane.f32.xlu0 %v3947
    %v3949 = vpop.xlane.xlu0 %3948
    %v3950 = vmul.f32 %v3945, 0.020833334
    %v3951 = vmul.f32 %v3949, 0.020833334
    %v3952 = vmul.f32 %v3950, %v3950
    %v3953 = vsub.f32 %v3951, %v3952
    %v3954 = vmax.f32 %v3953, 0.0
    %v3955 = vsub.f32 %v3940, %v3950
    %v3956 = vadd.f32 %v3954, 1e-05
    %v3957 = vrsqrt.pop %v3956
    %v3958 = vmul.f32 %v3955, %v3957
    %v3960 = vlaneseq
    %v3961 = vshrl.u32 %v3960, 7
    %v3962 = vsub.s32 0, %v3961
    %v3963 = vrot.slane %v3080, %v3962
    %v3965 = vmul.f32 %v3958, %v3963
    %v3967 = vlaneseq
    %v3968 = vshrl.u32 %v3967, 7
    %v3969 = vsub.s32 0, %v3968
    %v3970 = vrot.slane %v3078, %v3969
    %v3972 = vadd.f32 %v3965, %v3970
    %v3973 = vmax.f32 %v3972, 0.0
    %v3975 = vsel %vm1664, %v3973, 0
    %3977 = vmatprep.subr.mxu0 0.0
    %3978 = vmatpush1.msra.mxu0 0.0
    %3979 = vmatprep.subr.mxu0 0.0
    %3980 = vmatpush1.msra.mxu0 0.0
    %3981 = vmatprep.subr.mxu0 0.0
    %3982 = vmatpush1.msra.mxu0 0.0
    %3983 = vmatprep.subr.mxu0 0.0
    %3984 = vmatpush1.msra.mxu0 0.0
    %3985 = vmatprep.subr.mxu0 0.0
    %3986 = vmatpush1.msra.mxu0 0.0
    %3987 = vmatprep.subr.mxu0 0.0
    %3988 = vmatpush1.msra.mxu0 0.0
    %3989 = vmatprep.subr.mxu0 0.0
    %3990 = vmatpush1.msra.mxu0 0.0
    %3991 = vmatprep.subr.mxu0 0.0
    %3992 = vmatpush1.msra.mxu0 0.0
    %3993 = vmatprep.subr.mxu0 0.0
    %3994 = vmatpush1.msra.mxu0 0.0
    %3995 = vmatprep.subr.mxu0 0.0
    %3996 = vmatpush1.msra.mxu0 0.0
    %3997 = vmatprep.subr.mxu0 0.0
    %3998 = vmatpush1.msra.mxu0 %v3098
    %3999 = vmatprep.subr.mxu0 0.0
    %4000 = vmatpush1.msra.mxu0 %v3097
    %4001 = vmatprep.subr.mxu0 0.0
    %4002 = vmatpush1.msra.mxu0 %v3096
    %4003 = vmatprep.subr.mxu0 0.0
    %4004 = vmatpush1.msra.mxu0 %v3095
    %4005 = vmatprep.subr.mxu0 0.0
    %4006 = vmatpush1.msra.mxu0 %v3094
    %4007 = vmatprep.subr.mxu0 0.0
    %4008 = vmatpush1.msra.mxu0 %v3093
    %4009 = vmatprep.subr.mxu0 0.0
    %4010 = vmatpush2.msra.mxu0 0.0
    %4011 = vmatprep.subr.mxu0 0.0
    %4012 = vmatpush2.msra.mxu0 0.0
    %4013 = vmatprep.subr.mxu0 0.0
    %4014 = vmatpush2.msra.mxu0 0.0
    %4015 = vmatprep.subr.mxu0 0.0
    %4016 = vmatpush2.msra.mxu0 0.0
    %4017 = vmatprep.subr.mxu0 0.0
    %4018 = vmatpush2.msra.mxu0 0.0
    %4019 = vmatprep.subr.mxu0 0.0
    %4020 = vmatpush2.msra.mxu0 0.0
    %4021 = vmatprep.subr.mxu0 0.0
    %4022 = vmatpush2.msra.mxu0 0.0
    %4023 = vmatprep.subr.mxu0 0.0
    %4024 = vmatpush2.msra.mxu0 0.0
    %4025 = vmatprep.subr.mxu0 0.0
    %4026 = vmatpush2.msra.mxu0 0.0
    %4027 = vmatprep.subr.mxu0 0.0
    %4028 = vmatpush2.msra.mxu0 0.0
    %4029 = vmatprep.subr.mxu0 0.0
    %4030 = vmatpush2.msra.mxu0 0.0
    %4031 = vmatprep.subr.mxu0 0.0
    %4032 = vmatpush2.msra.mxu0 0.0
    %4033 = vmatprep.subr.mxu0 0.0
    %4034 = vmatpush2.msra.mxu0 0.0
    %4035 = vmatprep.subr.mxu0 0.0
    %4036 = vmatpush2.msra.mxu0 0.0
    %4037 = vmatprep.subr.mxu0 0.0
    %4038 = vmatpush2.msra.mxu0 0.0
    %4039 = vmatprep.subr.mxu0 0.0
    %4040 = vmatpush2.msra.mxu0 0.0
    %4041 = vmatprep.mubr.f32.mxu0 0.0
    %4042 = vmatmul.mubr.f32.gmra.mxu0 %v3975
    %v4043 = vpop.f32.mrf.mxu0
    %v4044 = vadd.f32 0.0, %v4043
    %v4045 = vpop.f32.mrf.mxu0
    %4046 = vdwg.mxu0
    %v4047 = vsel %vm1664, %v4044, 0.0
    %4048 = vadd.xlane.f32.xlu0 %v4047
    %v4049 = vpop.xlane.xlu0 %4048
    %v4050 = vmul.f32 %v4044, %v4044
    %v4051 = vsel %vm1664, %v4050, 0.0
    %4052 = vadd.xlane.f32.xlu0 %v4051
    %v4053 = vpop.xlane.xlu0 %4052
    %v4054 = vmul.f32 %v4049, 0.020833334
    %v4055 = vmul.f32 %v4053, 0.020833334
    %v4056 = vmul.f32 %v4054, %v4054
    %v4057 = vsub.f32 %v4055, %v4056
    %v4058 = vmax.f32 %v4057, 0.0
    %v4059 = vsub.f32 %v4044, %v4054
    %v4060 = vadd.f32 %v4058, 1e-05
    %v4061 = vrsqrt.pop %v4060
    %v4062 = vmul.f32 %v4059, %v4061
    %v4064 = vlaneseq
    %v4065 = vshrl.u32 %v4064, 7
    %v4066 = vsub.s32 0, %v4065
    %v4067 = vrot.slane %v3091, %v4066
    %v4069 = vmul.f32 %v4062, %v4067
    %v4071 = vlaneseq
    %v4072 = vshrl.u32 %v4071, 7
    %v4073 = vsub.s32 0, %v4072
    %v4074 = vrot.slane %v3089, %v4073
    %v4076 = vadd.f32 %v4069, %v4074
    %v4077 = vadd.f32 %v4076, %v3869
    %v4078 = vmax.f32 %v4077, 0.0
    %v4080 = vlaneseq
    %v4081 = vshrl.u32 %v4080, 7
    %v4082 = vsub.s32 0, %v4081
    %v4083 = vrot.slane %v3069, %v4082
    %v4086 = vsel %vm1664, %v4078, 0
    %4088 = vmatprep.subr.mxu0 0.0
    %4089 = vmatpush1.msra.mxu0 0.0
    %4090 = vmatprep.subr.mxu0 0.0
    %4091 = vmatpush1.msra.mxu0 0.0
    %4092 = vmatprep.subr.mxu0 0.0
    %4093 = vmatpush1.msra.mxu0 0.0
    %4094 = vmatprep.subr.mxu0 0.0
    %4095 = vmatpush1.msra.mxu0 0.0
    %4096 = vmatprep.subr.mxu0 0.0
    %4097 = vmatpush1.msra.mxu0 0.0
    %4098 = vmatprep.subr.mxu0 0.0
    %4099 = vmatpush1.msra.mxu0 0.0
    %4100 = vmatprep.subr.mxu0 0.0
    %4101 = vmatpush1.msra.mxu0 0.0
    %4102 = vmatprep.subr.mxu0 0.0
    %4103 = vmatpush1.msra.mxu0 0.0
    %4104 = vmatprep.subr.mxu0 0.0
    %4105 = vmatpush1.msra.mxu0 0.0
    %4106 = vmatprep.subr.mxu0 0.0
    %4107 = vmatpush1.msra.mxu0 0.0
    %4108 = vmatprep.subr.mxu0 0.0
    %4109 = vmatpush1.msra.mxu0 %v3076
    %4110 = vmatprep.subr.mxu0 0.0
    %4111 = vmatpush1.msra.mxu0 %v3075
    %4112 = vmatprep.subr.mxu0 0.0
    %4113 = vmatpush1.msra.mxu0 %v3074
    %4114 = vmatprep.subr.mxu0 0.0
    %4115 = vmatpush1.msra.mxu0 %v3073
    %4116 = vmatprep.subr.mxu0 0.0
    %4117 = vmatpush1.msra.mxu0 %v3072
    %4118 = vmatprep.subr.mxu0 0.0
    %4119 = vmatpush1.msra.mxu0 %v3071
    %4120 = vmatprep.subr.mxu0 0.0
    %4121 = vmatpush2.msra.mxu0 0.0
    %4122 = vmatprep.subr.mxu0 0.0
    %4123 = vmatpush2.msra.mxu0 0.0
    %4124 = vmatprep.subr.mxu0 0.0
    %4125 = vmatpush2.msra.mxu0 0.0
    %4126 = vmatprep.subr.mxu0 0.0
    %4127 = vmatpush2.msra.mxu0 0.0
    %4128 = vmatprep.subr.mxu0 0.0
    %4129 = vmatpush2.msra.mxu0 0.0
    %4130 = vmatprep.subr.mxu0 0.0
    %4131 = vmatpush2.msra.mxu0 0.0
    %4132 = vmatprep.subr.mxu0 0.0
    %4133 = vmatpush2.msra.mxu0 0.0
    %4134 = vmatprep.subr.mxu0 0.0
    %4135 = vmatpush2.msra.mxu0 0.0
    %4136 = vmatprep.subr.mxu0 0.0
    %4137 = vmatpush2.msra.mxu0 0.0
    %4138 = vmatprep.subr.mxu0 0.0
    %4139 = vmatpush2.msra.mxu0 0.0
    %4140 = vmatprep.subr.mxu0 0.0
    %4141 = vmatpush2.msra.mxu0 0.0
    %4142 = vmatprep.subr.mxu0 0.0
    %4143 = vmatpush2.msra.mxu0 0.0
    %4144 = vmatprep.subr.mxu0 0.0
    %4145 = vmatpush2.msra.mxu0 0.0
    %4146 = vmatprep.subr.mxu0 0.0
    %4147 = vmatpush2.msra.mxu0 0.0
    %4148 = vmatprep.subr.mxu0 0.0
    %4149 = vmatpush2.msra.mxu0 0.0
    %4150 = vmatprep.subr.mxu0 0.0
    %4151 = vmatpush2.msra.mxu0 0.0
    %4152 = vmatprep.mubr.f32.mxu0 0.0
    %4153 = vmatmul.mubr.f32.gmra.mxu0 %v4086
    %v4154 = vpop.f32.mrf.mxu0
    %v4155 = vadd.f32 %v4083, %v4154
    %v4156 = vpop.f32.mrf.mxu0
    %4157 = vdwg.mxu0
    %v4159 = vsel %vm1953, %v4155, 0
    %v4162 = vsel %vm1957, %v3123, 0
    %4164 = vmatprep.subr.mxu0 0.0
    %4165 = vmatpush1.msra.mxu0 0.0
    %4166 = vmatprep.subr.mxu0 0.0
    %4167 = vmatpush1.msra.mxu0 0.0
    %4168 = vmatprep.subr.mxu0 0.0
    %4169 = vmatpush1.msra.mxu0 0.0
    %4170 = vmatprep.subr.mxu0 0.0
    %4171 = vmatpush1.msra.mxu0 0.0
    %4172 = vmatprep.subr.mxu0 0.0
    %4173 = vmatpush1.msra.mxu0 0.0
    %4174 = vmatprep.subr.mxu0 0.0
    %4175 = vmatpush1.msra.mxu0 0.0
    %4176 = vmatprep.subr.mxu0 0.0
    %4177 = vmatpush1.msra.mxu0 0.0
    %4178 = vmatprep.subr.mxu0 0.0
    %4179 = vmatpush1.msra.mxu0 0.0
    %4180 = vmatprep.subr.mxu0 0.0
    %4181 = vmatpush1.msra.mxu0 0.0
    %4182 = vmatprep.subr.mxu0 0.0
    %4183 = vmatpush1.msra.mxu0 0.0
    %4184 = vmatprep.subr.mxu0 0.0
    %4185 = vmatpush1.msra.mxu0 0.0
    %4186 = vmatprep.subr.mxu0 0.0
    %4187 = vmatpush1.msra.mxu0 0.0
    %4188 = vmatprep.subr.mxu0 0.0
    %4189 = vmatpush1.msra.mxu0 0.0
    %4190 = vmatprep.subr.mxu0 0.0
    %4191 = vmatpush1.msra.mxu0 0.0
    %4192 = vmatprep.subr.mxu0 0.0
    %4193 = vmatpush1.msra.mxu0 0.0
    %4194 = vmatprep.subr.mxu0 0.0
    %4195 = vmatpush1.msra.mxu0 %v4162
    %4196 = vmatprep.subr.mxu0 0.0
    %4197 = vmatpush2.msra.mxu0 0.0
    %4198 = vmatprep.subr.mxu0 0.0
    %4199 = vmatpush2.msra.mxu0 0.0
    %4200 = vmatprep.subr.mxu0 0.0
    %4201 = vmatpush2.msra.mxu0 0.0
    %4202 = vmatprep.subr.mxu0 0.0
    %4203 = vmatpush2.msra.mxu0 0.0
    %4204 = vmatprep.subr.mxu0 0.0
    %4205 = vmatpush2.msra.mxu0 0.0
    %4206 = vmatprep.subr.mxu0 0.0
    %4207 = vmatpush2.msra.mxu0 0.0
    %4208 = vmatprep.subr.mxu0 0.0
    %4209 = vmatpush2.msra.mxu0 0.0
    %4210 = vmatprep.subr.mxu0 0.0
    %4211 = vmatpush2.msra.mxu0 0.0
    %4212 = vmatprep.subr.mxu0 0.0
    %4213 = vmatpush2.msra.mxu0 0.0
    %4214 = vmatprep.subr.mxu0 0.0
    %4215 = vmatpush2.msra.mxu0 0.0
    %4216 = vmatprep.subr.mxu0 0.0
    %4217 = vmatpush2.msra.mxu0 0.0
    %4218 = vmatprep.subr.mxu0 0.0
    %4219 = vmatpush2.msra.mxu0 0.0
    %4220 = vmatprep.subr.mxu0 0.0
    %4221 = vmatpush2.msra.mxu0 0.0
    %4222 = vmatprep.subr.mxu0 0.0
    %4223 = vmatpush2.msra.mxu0 0.0
    %4224 = vmatprep.subr.mxu0 0.0
    %4225 = vmatpush2.msra.mxu0 0.0
    %4226 = vmatprep.subr.mxu0 0.0
    %4227 = vmatpush2.msra.mxu0 0.0
    %4228 = vmatprep.mubr.f32.mxu0 0.0
    %4229 = vmatmul.mubr.f32.gmra.mxu0 %v4159
    %v4230 = vpop.f32.mrf.mxu0
    %v4231 = vadd.f32 0.0, %v4230
    %v4232 = vpop.f32.mrf.mxu0
    %4233 = vdwg.mxu0
    %v4234 = vsel %vm947, %v4231, 0.0
    %4235 = vadd.xlane.f32.xlu0 %v4234
    %v4236 = vpop.xlane.xlu0 %4235
    %v4237 = vmul.f32 %v4231, %v4231
    %v4238 = vsel %vm947, %v4237, 0.0
    %4239 = vadd.xlane.f32.xlu0 %v4238
    %v4240 = vpop.xlane.xlu0 %4239
    %v4241 = vmul.f32 %v4236, 0.03125
    %v4242 = vmul.f32 %v4240, 0.03125
    %v4243 = vmul.f32 %v4241, %v4241
    %v4244 = vsub.f32 %v4242, %v4243
    %v4245 = vmax.f32 %v4244, 0.0
    %v4246 = vsub.f32 %v4231, %v4241
    %v4247 = vadd.f32 %v4245, 1e-05
    %v4248 = vrsqrt.pop %v4247
    %v4249 = vmul.f32 %v4246, %v4248
    %v4251 = vlaneseq
    %v4252 = vshrl.u32 %v4251, 7
    %v4253 = vsub.s32 0, %v4252
    %v4254 = vrot.slane %v3121, %v4253
    %v4256 = vmul.f32 %v4249, %v4254
    %v4258 = vlaneseq
    %v4259 = vshrl.u32 %v4258, 7
    %v4260 = vsub.s32 0, %v4259
    %v4261 = vrot.slane %v3119, %v4260
    %v4263 = vadd.f32 %v4256, %v4261
    %v4264 = vmax.f32 %v4263, 0.0
    %4266 = vrot.lane.b32.xlu0 %v4264, 64
    %v4267 = vpop.permute.xlu0 %4266
    %v4269 = vsel %vm1021, %v3261, %v4267
    %v4271 = vsel %vm2067, %v4269, 0
    %4273 = vmatprep.subr.mxu0 0.0
    %4274 = vmatpush1.msra.mxu0 0.0
    %4275 = vmatprep.subr.mxu0 0.0
    %4276 = vmatpush1.msra.mxu0 0.0
    %4277 = vmatprep.subr.mxu0 0.0
    %4278 = vmatpush1.msra.mxu0 0.0
    %4279 = vmatprep.subr.mxu0 0.0
    %4280 = vmatpush1.msra.mxu0 0.0
    %4281 = vmatprep.subr.mxu0 0.0
    %4282 = vmatpush1.msra.mxu0 %v3050
    %4283 = vmatprep.subr.mxu0 0.0
    %4284 = vmatpush1.msra.mxu0 %v3049
    %4285 = vmatprep.subr.mxu0 0.0
    %4286 = vmatpush1.msra.mxu0 %v3048
    %4287 = vmatprep.subr.mxu0 0.0
    %4288 = vmatpush1.msra.mxu0 %v3047
    %4289 = vmatprep.subr.mxu0 0.0
    %4290 = vmatpush1.msra.mxu0 %v3046
    %4291 = vmatprep.subr.mxu0 0.0
    %4292 = vmatpush1.msra.mxu0 %v3045
    %4293 = vmatprep.subr.mxu0 0.0
    %4294 = vmatpush1.msra.mxu0 %v3044
    %4295 = vmatprep.subr.mxu0 0.0
    %4296 = vmatpush1.msra.mxu0 %v3043
    %4297 = vmatprep.subr.mxu0 0.0
    %4298 = vmatpush1.msra.mxu0 %v3042
    %4299 = vmatprep.subr.mxu0 0.0
    %4300 = vmatpush1.msra.mxu0 %v3041
    %4301 = vmatprep.subr.mxu0 0.0
    %4302 = vmatpush1.msra.mxu0 %v3040
    %4303 = vmatprep.subr.mxu0 0.0
    %4304 = vmatpush1.msra.mxu0 %v3039
    %4305 = vmatprep.subr.mxu0 0.0
    %4306 = vmatpush2.msra.mxu0 0.0
    %4307 = vmatprep.subr.mxu0 0.0
    %4308 = vmatpush2.msra.mxu0 0.0
    %4309 = vmatprep.subr.mxu0 0.0
    %4310 = vmatpush2.msra.mxu0 0.0
    %4311 = vmatprep.subr.mxu0 0.0
    %4312 = vmatpush2.msra.mxu0 0.0
    %4313 = vmatprep.subr.mxu0 0.0
    %4314 = vmatpush2.msra.mxu0 0.0
    %4315 = vmatprep.subr.mxu0 0.0
    %4316 = vmatpush2.msra.mxu0 0.0
    %4317 = vmatprep.subr.mxu0 0.0
    %4318 = vmatpush2.msra.mxu0 0.0
    %4319 = vmatprep.subr.mxu0 0.0
    %4320 = vmatpush2.msra.mxu0 0.0
    %4321 = vmatprep.subr.mxu0 0.0
    %4322 = vmatpush2.msra.mxu0 0.0
    %4323 = vmatprep.subr.mxu0 0.0
    %4324 = vmatpush2.msra.mxu0 0.0
    %4325 = vmatprep.subr.mxu0 0.0
    %4326 = vmatpush2.msra.mxu0 0.0
    %4327 = vmatprep.subr.mxu0 0.0
    %4328 = vmatpush2.msra.mxu0 0.0
    %4329 = vmatprep.subr.mxu0 0.0
    %4330 = vmatpush2.msra.mxu0 0.0
    %4331 = vmatprep.subr.mxu0 0.0
    %4332 = vmatpush2.msra.mxu0 0.0
    %4333 = vmatprep.subr.mxu0 0.0
    %4334 = vmatpush2.msra.mxu0 0.0
    %4335 = vmatprep.subr.mxu0 0.0
    %4336 = vmatpush2.msra.mxu0 0.0
    %4337 = vmatprep.mubr.f32.mxu0 0.0
    %4338 = vmatmul.mubr.f32.gmra.mxu0 %v4271
    %v4339 = vpop.f32.mrf.mxu0
    %v4340 = vadd.f32 0.0, %v4339
    %v4341 = vpop.f32.mrf.mxu0
    %4342 = vdwg.mxu0
    %v4343 = vsel %vm2067, %v4340, 0.0
    %4344 = vadd.xlane.f32.xlu0 %v4343
    %v4345 = vpop.xlane.xlu0 %4344
    %v4346 = vmul.f32 %v4340, %v4340
    %v4347 = vsel %vm2067, %v4346, 0.0
    %4348 = vadd.xlane.f32.xlu0 %v4347
    %v4349 = vpop.xlane.xlu0 %4348
    %v4350 = vmul.f32 %v4345, 0.010416667
    %v4351 = vmul.f32 %v4349, 0.010416667
    %v4352 = vmul.f32 %v4350, %v4350
    %v4353 = vsub.f32 %v4351, %v4352
    %v4354 = vmax.f32 %v4353, 0.0
    %v4355 = vsub.f32 %v4340, %v4350
    %v4356 = vadd.f32 %v4354, 1e-05
    %v4357 = vrsqrt.pop %v4356
    %v4358 = vmul.f32 %v4355, %v4357
    %v4360 = vlaneseq
    %v4361 = vshrl.u32 %v4360, 7
    %v4362 = vsub.s32 0, %v4361
    %v4363 = vrot.slane %v3037, %v4362
    %v4365 = vmul.f32 %v4358, %v4363
    %v4367 = vlaneseq
    %v4368 = vshrl.u32 %v4367, 7
    %v4369 = vsub.s32 0, %v4368
    %v4370 = vrot.slane %v3035, %v4369
    %v4372 = vadd.f32 %v4365, %v4370
    %v4373 = vmax.f32 %v4372, 0.0
    %v4375 = vsel %vm2067, %v4373, 0
    %4377 = vmatprep.subr.mxu0 0.0
    %4378 = vmatpush1.msra.mxu0 0.0
    %4379 = vmatprep.subr.mxu0 0.0
    %4380 = vmatpush1.msra.mxu0 0.0
    %4381 = vmatprep.subr.mxu0 0.0
    %4382 = vmatpush1.msra.mxu0 0.0
    %4383 = vmatprep.subr.mxu0 0.0
    %4384 = vmatpush1.msra.mxu0 0.0
    %4385 = vmatprep.subr.mxu0 0.0
    %4386 = vmatpush1.msra.mxu0 %v3067
    %4387 = vmatprep.subr.mxu0 0.0
    %4388 = vmatpush1.msra.mxu0 %v3066
    %4389 = vmatprep.subr.mxu0 0.0
    %4390 = vmatpush1.msra.mxu0 %v3065
    %4391 = vmatprep.subr.mxu0 0.0
    %4392 = vmatpush1.msra.mxu0 %v3064
    %4393 = vmatprep.subr.mxu0 0.0
    %4394 = vmatpush1.msra.mxu0 %v3063
    %4395 = vmatprep.subr.mxu0 0.0
    %4396 = vmatpush1.msra.mxu0 %v3062
    %4397 = vmatprep.subr.mxu0 0.0
    %4398 = vmatpush1.msra.mxu0 %v3061
    %4399 = vmatprep.subr.mxu0 0.0
    %4400 = vmatpush1.msra.mxu0 %v3060
    %4401 = vmatprep.subr.mxu0 0.0
    %4402 = vmatpush1.msra.mxu0 %v3059
    %4403 = vmatprep.subr.mxu0 0.0
    %4404 = vmatpush1.msra.mxu0 %v3058
    %4405 = vmatprep.subr.mxu0 0.0
    %4406 = vmatpush1.msra.mxu0 %v3057
    %4407 = vmatprep.subr.mxu0 0.0
    %4408 = vmatpush1.msra.mxu0 %v3056
    %4409 = vmatprep.subr.mxu0 0.0
    %4410 = vmatpush2.msra.mxu0 0.0
    %4411 = vmatprep.subr.mxu0 0.0
    %4412 = vmatpush2.msra.mxu0 0.0
    %4413 = vmatprep.subr.mxu0 0.0
    %4414 = vmatpush2.msra.mxu0 0.0
    %4415 = vmatprep.subr.mxu0 0.0
    %4416 = vmatpush2.msra.mxu0 0.0
    %4417 = vmatprep.subr.mxu0 0.0
    %4418 = vmatpush2.msra.mxu0 0.0
    %4419 = vmatprep.subr.mxu0 0.0
    %4420 = vmatpush2.msra.mxu0 0.0
    %4421 = vmatprep.subr.mxu0 0.0
    %4422 = vmatpush2.msra.mxu0 0.0
    %4423 = vmatprep.subr.mxu0 0.0
    %4424 = vmatpush2.msra.mxu0 0.0
    %4425 = vmatprep.subr.mxu0 0.0
    %4426 = vmatpush2.msra.mxu0 0.0
    %4427 = vmatprep.subr.mxu0 0.0
    %4428 = vmatpush2.msra.mxu0 0.0
    %4429 = vmatprep.subr.mxu0 0.0
    %4430 = vmatpush2.msra.mxu0 0.0
    %4431 = vmatprep.subr.mxu0 0.0
    %4432 = vmatpush2.msra.mxu0 0.0
    %4433 = vmatprep.subr.mxu0 0.0
    %4434 = vmatpush2.msra.mxu0 0.0
    %4435 = vmatprep.subr.mxu0 0.0
    %4436 = vmatpush2.msra.mxu0 0.0
    %4437 = vmatprep.subr.mxu0 0.0
    %4438 = vmatpush2.msra.mxu0 0.0
    %4439 = vmatprep.subr.mxu0 0.0
    %4440 = vmatpush2.msra.mxu0 0.0
    %4441 = vmatprep.mubr.f32.mxu0 0.0
    %4442 = vmatmul.mubr.f32.gmra.mxu0 %v4375
    %v4443 = vpop.f32.mrf.mxu0
    %v4444 = vadd.f32 0.0, %v4443
    %v4445 = vpop.f32.mrf.mxu0
    %4446 = vdwg.mxu0
    %v4447 = vsel %vm2067, %v4444, 0.0
    %4448 = vadd.xlane.f32.xlu0 %v4447
    %v4449 = vpop.xlane.xlu0 %4448
    %v4450 = vmul.f32 %v4444, %v4444
    %v4451 = vsel %vm2067, %v4450, 0.0
    %4452 = vadd.xlane.f32.xlu0 %v4451
    %v4453 = vpop.xlane.xlu0 %4452
    %v4454 = vmul.f32 %v4449, 0.010416667
    %v4455 = vmul.f32 %v4453, 0.010416667
    %v4456 = vmul.f32 %v4454, %v4454
    %v4457 = vsub.f32 %v4455, %v4456
    %v4458 = vmax.f32 %v4457, 0.0
    %v4459 = vsub.f32 %v4444, %v4454
    %v4460 = vadd.f32 %v4458, 1e-05
    %v4461 = vrsqrt.pop %v4460
    %v4462 = vmul.f32 %v4459, %v4461
    %v4464 = vlaneseq
    %v4465 = vshrl.u32 %v4464, 7
    %v4466 = vsub.s32 0, %v4465
    %v4467 = vrot.slane %v3054, %v4466
    %v4469 = vmul.f32 %v4462, %v4467
    %v4471 = vlaneseq
    %v4472 = vshrl.u32 %v4471, 7
    %v4473 = vsub.s32 0, %v4472
    %v4474 = vrot.slane %v3052, %v4473
    %v4476 = vadd.f32 %v4469, %v4474
    %v4477 = vadd.f32 %v4476, %v4269
    %v4478 = vmax.f32 %v4477, 0.0
    %v4480 = vlaneseq
    %v4481 = vshrl.u32 %v4480, 7
    %v4482 = vsub.s32 0, %v4481
    %v4483 = vrot.slane %v3020, %v4482
    %v4486 = vsel %vm2067, %v4478, 0
    %4488 = vmatprep.subr.mxu0 0.0
    %4489 = vmatpush1.msra.mxu0 0.0
    %4490 = vmatprep.subr.mxu0 0.0
    %4491 = vmatpush1.msra.mxu0 0.0
    %4492 = vmatprep.subr.mxu0 0.0
    %4493 = vmatpush1.msra.mxu0 0.0
    %4494 = vmatprep.subr.mxu0 0.0
    %4495 = vmatpush1.msra.mxu0 0.0
    %4496 = vmatprep.subr.mxu0 0.0
    %4497 = vmatpush1.msra.mxu0 %v3033
    %4498 = vmatprep.subr.mxu0 0.0
    %4499 = vmatpush1.msra.mxu0 %v3032
    %4500 = vmatprep.subr.mxu0 0.0
    %4501 = vmatpush1.msra.mxu0 %v3031
    %4502 = vmatprep.subr.mxu0 0.0
    %4503 = vmatpush1.msra.mxu0 %v3030
    %4504 = vmatprep.subr.mxu0 0.0
    %4505 = vmatpush1.msra.mxu0 %v3029
    %4506 = vmatprep.subr.mxu0 0.0
    %4507 = vmatpush1.msra.mxu0 %v3028
    %4508 = vmatprep.subr.mxu0 0.0
    %4509 = vmatpush1.msra.mxu0 %v3027
    %4510 = vmatprep.subr.mxu0 0.0
    %4511 = vmatpush1.msra.mxu0 %v3026
    %4512 = vmatprep.subr.mxu0 0.0
    %4513 = vmatpush1.msra.mxu0 %v3025
    %4514 = vmatprep.subr.mxu0 0.0
    %4515 = vmatpush1.msra.mxu0 %v3024
    %4516 = vmatprep.subr.mxu0 0.0
    %4517 = vmatpush1.msra.mxu0 %v3023
    %4518 = vmatprep.subr.mxu0 0.0
    %4519 = vmatpush1.msra.mxu0 %v3022
    %4520 = vmatprep.subr.mxu0 0.0
    %4521 = vmatpush2.msra.mxu0 0.0
    %4522 = vmatprep.subr.mxu0 0.0
    %4523 = vmatpush2.msra.mxu0 0.0
    %4524 = vmatprep.subr.mxu0 0.0
    %4525 = vmatpush2.msra.mxu0 0.0
    %4526 = vmatprep.subr.mxu0 0.0
    %4527 = vmatpush2.msra.mxu0 0.0
    %4528 = vmatprep.subr.mxu0 0.0
    %4529 = vmatpush2.msra.mxu0 0.0
    %4530 = vmatprep.subr.mxu0 0.0
    %4531 = vmatpush2.msra.mxu0 0.0
    %4532 = vmatprep.subr.mxu0 0.0
    %4533 = vmatpush2.msra.mxu0 0.0
    %4534 = vmatprep.subr.mxu0 0.0
    %4535 = vmatpush2.msra.mxu0 0.0
    %4536 = vmatprep.subr.mxu0 0.0
    %4537 = vmatpush2.msra.mxu0 0.0
    %4538 = vmatprep.subr.mxu0 0.0
    %4539 = vmatpush2.msra.mxu0 0.0
    %4540 = vmatprep.subr.mxu0 0.0
    %4541 = vmatpush2.msra.mxu0 0.0
    %4542 = vmatprep.subr.mxu0 0.0
    %4543 = vmatpush2.msra.mxu0 0.0
    %4544 = vmatprep.subr.mxu0 0.0
    %4545 = vmatpush2.msra.mxu0 0.0
    %4546 = vmatprep.subr.mxu0 0.0
    %4547 = vmatpush2.msra.mxu0 0.0
    %4548 = vmatprep.subr.mxu0 0.0
    %4549 = vmatpush2.msra.mxu0 0.0
    %4550 = vmatprep.subr.mxu0 0.0
    %4551 = vmatpush2.msra.mxu0 0.0
    %4552 = vmatprep.mubr.f32.mxu0 0.0
    %4553 = vmatmul.mubr.f32.gmra.mxu0 %v4486
    %v4554 = vpop.f32.mrf.mxu0
    %v4555 = vadd.f32 %v4483, %v4554
    %v4556 = vpop.f32.mrf.mxu0
    %4557 = vdwg.mxu0
    %4558 = vrot.lane.b32.xlu0 %v4155, 2
    %v4559 = vpop.permute.xlu0 %4558
    %v4561 = vsel %vm1550, %v3755, %v4559
    %v4562 = vadd.f32 %v4555, %v2362
    %4564 = vrot.lane.b32.xlu0 %v4562, 70
    %v4565 = vpop.permute.xlu0 %4564
    %v4567 = vsub.f32 %v808, %v4565
    %v4569 = vsel %vm1550, %v4567, 0
    %4571 = vmatprep.subr.mxu0 0.0
    %4572 = vmatpush1.msra.mxu0 0.0
    %4573 = vmatprep.subr.mxu0 0.0
    %4574 = vmatpush1.msra.mxu0 0.0
    %4575 = vmatprep.subr.mxu0 0.0
    %4576 = vmatpush1.msra.mxu0 0.0
    %4577 = vmatprep.subr.mxu0 0.0
    %4578 = vmatpush1.msra.mxu0 0.0
    %4579 = vmatprep.subr.mxu0 0.0
    %4580 = vmatpush1.msra.mxu0 0.0
    %4581 = vmatprep.subr.mxu0 0.0
    %4582 = vmatpush1.msra.mxu0 0.0
    %4583 = vmatprep.subr.mxu0 0.0
    %4584 = vmatpush1.msra.mxu0 0.0
    %4585 = vmatprep.subr.mxu0 0.0
    %4586 = vmatpush1.msra.mxu0 0.0
    %4587 = vmatprep.subr.mxu0 0.0
    %4588 = vmatpush1.msra.mxu0 0.0
    %4589 = vmatprep.subr.mxu0 0.0
    %4590 = vmatpush1.msra.mxu0 0.0
    %4591 = vmatprep.subr.mxu0 0.0
    %4592 = vmatpush1.msra.mxu0 0.0
    %4593 = vmatprep.subr.mxu0 0.0
    %4594 = vmatpush1.msra.mxu0 0.0
    %4595 = vmatprep.subr.mxu0 0.0
    %4596 = vmatpush1.msra.mxu0 0.0
    %4597 = vmatprep.subr.mxu0 0.0
    %4598 = vmatpush1.msra.mxu0 0.0
    %4599 = vmatprep.subr.mxu0 0.0
    %4600 = vmatpush1.msra.mxu0 0.0
    %4601 = vmatprep.subr.mxu0 0.0
    %4602 = vmatpush1.msra.mxu0 %v2380
    %4603 = vmatprep.subr.mxu0 0.0
    %4604 = vmatpush2.msra.mxu0 0.0
    %4605 = vmatprep.subr.mxu0 0.0
    %4606 = vmatpush2.msra.mxu0 0.0
    %4607 = vmatprep.subr.mxu0 0.0
    %4608 = vmatpush2.msra.mxu0 0.0
    %4609 = vmatprep.subr.mxu0 0.0
    %4610 = vmatpush2.msra.mxu0 0.0
    %4611 = vmatprep.subr.mxu0 0.0
    %4612 = vmatpush2.msra.mxu0 0.0
    %4613 = vmatprep.subr.mxu0 0.0
    %4614 = vmatpush2.msra.mxu0 0.0
    %4615 = vmatprep.subr.mxu0 0.0
    %4616 = vmatpush2.msra.mxu0 0.0
    %4617 = vmatprep.subr.mxu0 0.0
    %4618 = vmatpush2.msra.mxu0 0.0
    %4619 = vmatprep.subr.mxu0 0.0
    %4620 = vmatpush2.msra.mxu0 0.0
    %4621 = vmatprep.subr.mxu0 0.0
    %4622 = vmatpush2.msra.mxu0 0.0
    %4623 = vmatprep.subr.mxu0 0.0
    %4624 = vmatpush2.msra.mxu0 0.0
    %4625 = vmatprep.subr.mxu0 0.0
    %4626 = vmatpush2.msra.mxu0 0.0
    %4627 = vmatprep.subr.mxu0 0.0
    %4628 = vmatpush2.msra.mxu0 0.0
    %4629 = vmatprep.subr.mxu0 0.0
    %4630 = vmatpush2.msra.mxu0 0.0
    %4631 = vmatprep.subr.mxu0 0.0
    %4632 = vmatpush2.msra.mxu0 0.0
    %4633 = vmatprep.subr.mxu0 0.0
    %4634 = vmatpush2.msra.mxu0 0.0
    %4635 = vmatprep.mubr.f32.mxu0 0.0
    %4636 = vmatmul.mubr.f32.gmra.mxu0 %v4569
    %v4637 = vpop.f32.mrf.mxu0
    %v4638 = vadd.f32 %v2374, %v4637
    %v4639 = vpop.f32.mrf.mxu0
    %4640 = vdwg.mxu0
    %v4641 = vmax.f32 %v4638, 0.0
    %v4643 = vsel %vm947, %v4641, 0
    %4645 = vmatprep.subr.mxu0 0.0
    %4646 = vmatpush1.msra.mxu0 0.0
    %4647 = vmatprep.subr.mxu0 0.0
    %4648 = vmatpush1.msra.mxu0 0.0
    %4649 = vmatprep.subr.mxu0 0.0
    %4650 = vmatpush1.msra.mxu0 0.0
    %4651 = vmatprep.subr.mxu0 0.0
    %4652 = vmatpush1.msra.mxu0 0.0
    %4653 = vmatprep.subr.mxu0 0.0
    %4654 = vmatpush1.msra.mxu0 0.0
    %4655 = vmatprep.subr.mxu0 0.0
    %4656 = vmatpush1.msra.mxu0 0.0
    %4657 = vmatprep.subr.mxu0 0.0
    %4658 = vmatpush1.msra.mxu0 0.0
    %4659 = vmatprep.subr.mxu0 0.0
    %4660 = vmatpush1.msra.mxu0 0.0
    %4661 = vmatprep.subr.mxu0 0.0
    %4662 = vmatpush1.msra.mxu0 0.0
    %4663 = vmatprep.subr.mxu0 0.0
    %4664 = vmatpush1.msra.mxu0 0.0
    %4665 = vmatprep.subr.mxu0 0.0
    %4666 = vmatpush1.msra.mxu0 0.0
    %4667 = vmatprep.subr.mxu0 0.0
    %4668 = vmatpush1.msra.mxu0 0.0
    %4669 = vmatprep.subr.mxu0 0.0
    %4670 = vmatpush1.msra.mxu0 %v826
    %4671 = vmatprep.subr.mxu0 0.0
    %4672 = vmatpush1.msra.mxu0 %v825
    %4673 = vmatprep.subr.mxu0 0.0
    %4674 = vmatpush1.msra.mxu0 %v824
    %4675 = vmatprep.subr.mxu0 0.0
    %4676 = vmatpush1.msra.mxu0 %v823
    %4677 = vmatprep.subr.mxu0 0.0
    %4678 = vmatpush2.msra.mxu0 0.0
    %4679 = vmatprep.subr.mxu0 0.0
    %4680 = vmatpush2.msra.mxu0 0.0
    %4681 = vmatprep.subr.mxu0 0.0
    %4682 = vmatpush2.msra.mxu0 0.0
    %4683 = vmatprep.subr.mxu0 0.0
    %4684 = vmatpush2.msra.mxu0 0.0
    %4685 = vmatprep.subr.mxu0 0.0
    %4686 = vmatpush2.msra.mxu0 0.0
    %4687 = vmatprep.subr.mxu0 0.0
    %4688 = vmatpush2.msra.mxu0 0.0
    %4689 = vmatprep.subr.mxu0 0.0
    %4690 = vmatpush2.msra.mxu0 0.0
    %4691 = vmatprep.subr.mxu0 0.0
    %4692 = vmatpush2.msra.mxu0 0.0
    %4693 = vmatprep.subr.mxu0 0.0
    %4694 = vmatpush2.msra.mxu0 0.0
    %4695 = vmatprep.subr.mxu0 0.0
    %4696 = vmatpush2.msra.mxu0 0.0
    %4697 = vmatprep.subr.mxu0 0.0
    %4698 = vmatpush2.msra.mxu0 0.0
    %4699 = vmatprep.subr.mxu0 0.0
    %4700 = vmatpush2.msra.mxu0 0.0
    %4701 = vmatprep.subr.mxu0 0.0
    %4702 = vmatpush2.msra.mxu0 0.0
    %4703 = vmatprep.subr.mxu0 0.0
    %4704 = vmatpush2.msra.mxu0 0.0
    %4705 = vmatprep.subr.mxu0 0.0
    %4706 = vmatpush2.msra.mxu0 0.0
    %4707 = vmatprep.subr.mxu0 0.0
    %4708 = vmatpush2.msra.mxu0 0.0
    %4709 = vmatprep.mubr.f32.mxu0 0.0
    %4710 = vmatmul.mubr.f32.gmra.mxu0 %v4643
    %v4711 = vpop.f32.mrf.mxu0
    %v4712 = vadd.f32 0.0, %v4711
    %v4713 = vpop.f32.mrf.mxu0
    %4714 = vdwg.mxu0
    %v4715 = vsel %vm947, %v4712, 0.0
    %4716 = vadd.xlane.f32.xlu0 %v4715
    %v4717 = vpop.xlane.xlu0 %4716
    %v4718 = vmul.f32 %v4712, %v4712
    %v4719 = vsel %vm947, %v4718, 0.0
    %4720 = vadd.xlane.f32.xlu0 %v4719
    %v4721 = vpop.xlane.xlu0 %4720
    %v4722 = vmul.f32 %v4717, 0.03125
    %v4723 = vmul.f32 %v4721, 0.03125
    %v4724 = vmul.f32 %v4722, %v4722
    %v4725 = vsub.f32 %v4723, %v4724
    %v4726 = vmax.f32 %v4725, 0.0
    %v4727 = vsub.f32 %v4712, %v4722
    %v4728 = vadd.f32 %v4726, 1e-05
    %v4729 = vrsqrt.pop %v4728
    %v4730 = vmul.f32 %v4727, %v4729
    %v4731 = vmul.f32 %v4730, %v2546
    %v4732 = vadd.f32 %v4731, %v2553
    %v4733 = vmax.f32 %v4732, 0.0
    %v4735 = vsel %vm947, %v4733, 0
    %4737 = vmatprep.subr.mxu0 0.0
    %4738 = vmatpush1.msra.mxu0 0.0
    %4739 = vmatprep.subr.mxu0 0.0
    %4740 = vmatpush1.msra.mxu0 0.0
    %4741 = vmatprep.subr.mxu0 0.0
    %4742 = vmatpush1.msra.mxu0 0.0
    %4743 = vmatprep.subr.mxu0 0.0
    %4744 = vmatpush1.msra.mxu0 0.0
    %4745 = vmatprep.subr.mxu0 0.0
    %4746 = vmatpush1.msra.mxu0 0.0
    %4747 = vmatprep.subr.mxu0 0.0
    %4748 = vmatpush1.msra.mxu0 0.0
    %4749 = vmatprep.subr.mxu0 0.0
    %4750 = vmatpush1.msra.mxu0 0.0
    %4751 = vmatprep.subr.mxu0 0.0
    %4752 = vmatpush1.msra.mxu0 0.0
    %4753 = vmatprep.subr.mxu0 0.0
    %4754 = vmatpush1.msra.mxu0 0.0
    %4755 = vmatprep.subr.mxu0 0.0
    %4756 = vmatpush1.msra.mxu0 0.0
    %4757 = vmatprep.subr.mxu0 0.0
    %4758 = vmatpush1.msra.mxu0 0.0
    %4759 = vmatprep.subr.mxu0 0.0
    %4760 = vmatpush1.msra.mxu0 0.0
    %4761 = vmatprep.subr.mxu0 0.0
    %4762 = vmatpush1.msra.mxu0 %v818
    %4763 = vmatprep.subr.mxu0 0.0
    %4764 = vmatpush1.msra.mxu0 %v817
    %4765 = vmatprep.subr.mxu0 0.0
    %4766 = vmatpush1.msra.mxu0 %v816
    %4767 = vmatprep.subr.mxu0 0.0
    %4768 = vmatpush1.msra.mxu0 %v815
    %4769 = vmatprep.subr.mxu0 0.0
    %4770 = vmatpush2.msra.mxu0 0.0
    %4771 = vmatprep.subr.mxu0 0.0
    %4772 = vmatpush2.msra.mxu0 0.0
    %4773 = vmatprep.subr.mxu0 0.0
    %4774 = vmatpush2.msra.mxu0 0.0
    %4775 = vmatprep.subr.mxu0 0.0
    %4776 = vmatpush2.msra.mxu0 0.0
    %4777 = vmatprep.subr.mxu0 0.0
    %4778 = vmatpush2.msra.mxu0 0.0
    %4779 = vmatprep.subr.mxu0 0.0
    %4780 = vmatpush2.msra.mxu0 0.0
    %4781 = vmatprep.subr.mxu0 0.0
    %4782 = vmatpush2.msra.mxu0 0.0
    %4783 = vmatprep.subr.mxu0 0.0
    %4784 = vmatpush2.msra.mxu0 0.0
    %4785 = vmatprep.subr.mxu0 0.0
    %4786 = vmatpush2.msra.mxu0 0.0
    %4787 = vmatprep.subr.mxu0 0.0
    %4788 = vmatpush2.msra.mxu0 0.0
    %4789 = vmatprep.subr.mxu0 0.0
    %4790 = vmatpush2.msra.mxu0 0.0
    %4791 = vmatprep.subr.mxu0 0.0
    %4792 = vmatpush2.msra.mxu0 0.0
    %4793 = vmatprep.subr.mxu0 0.0
    %4794 = vmatpush2.msra.mxu0 0.0
    %4795 = vmatprep.subr.mxu0 0.0
    %4796 = vmatpush2.msra.mxu0 0.0
    %4797 = vmatprep.subr.mxu0 0.0
    %4798 = vmatpush2.msra.mxu0 0.0
    %4799 = vmatprep.subr.mxu0 0.0
    %4800 = vmatpush2.msra.mxu0 0.0
    %4801 = vmatprep.mubr.f32.mxu0 0.0
    %4802 = vmatmul.mubr.f32.gmra.mxu0 %v4735
    %v4803 = vpop.f32.mrf.mxu0
    %v4804 = vadd.f32 %v2624, %v4803
    %v4805 = vpop.f32.mrf.mxu0
    %4806 = vdwg.mxu0
    %v4807 = vsel %vm947, %v4804, 0.0
    %4808 = vadd.xlane.f32.xlu0 %v4807
    %v4809 = vpop.xlane.xlu0 %4808
    %v4810 = vmul.f32 %v4804, %v4804
    %v4811 = vsel %vm947, %v4810, 0.0
    %4812 = vadd.xlane.f32.xlu0 %v4811
    %v4813 = vpop.xlane.xlu0 %4812
    %v4814 = vmul.f32 %v4809, 0.03125
    %v4815 = vmul.f32 %v4813, 0.03125
    %v4816 = vmul.f32 %v4814, %v4814
    %v4817 = vsub.f32 %v4815, %v4816
    %v4818 = vmax.f32 %v4817, 0.0
    %v4819 = vsub.f32 %v4804, %v4814
    %v4820 = vadd.f32 %v4818, 1e-05
    %v4821 = vrsqrt.pop %v4820
    %v4822 = vmul.f32 %v4819, %v4821
    %v4823 = vmul.f32 %v4822, %v2720
    %v4824 = vadd.f32 %v4823, %v2727
    %v4825 = vmax.f32 %v4824, 0.0
    %v4827 = vsel %vm947, %v4825, 0
    %4829 = vmatprep.subr.mxu0 0.0
    %4830 = vmatpush1.msra.mxu0 0.0
    %4831 = vmatprep.subr.mxu0 0.0
    %4832 = vmatpush1.msra.mxu0 0.0
    %4833 = vmatprep.subr.mxu0 0.0
    %4834 = vmatpush1.msra.mxu0 0.0
    %4835 = vmatprep.subr.mxu0 0.0
    %4836 = vmatpush1.msra.mxu0 0.0
    %4837 = vmatprep.subr.mxu0 0.0
    %4838 = vmatpush1.msra.mxu0 0.0
    %4839 = vmatprep.subr.mxu0 0.0
    %4840 = vmatpush1.msra.mxu0 0.0
    %4841 = vmatprep.subr.mxu0 0.0
    %4842 = vmatpush1.msra.mxu0 0.0
    %4843 = vmatprep.subr.mxu0 0.0
    %4844 = vmatpush1.msra.mxu0 0.0
    %4845 = vmatprep.subr.mxu0 0.0
    %4846 = vmatpush1.msra.mxu0 0.0
    %4847 = vmatprep.subr.mxu0 0.0
    %4848 = vmatpush1.msra.mxu0 0.0
    %4849 = vmatprep.subr.mxu0 0.0
    %4850 = vmatpush1.msra.mxu0 0.0
    %4851 = vmatprep.subr.mxu0 0.0
    %4852 = vmatpush1.msra.mxu0 0.0
    %4853 = vmatprep.subr.mxu0 0.0
    %4854 = vmatpush1.msra.mxu0 %v837
    %4855 = vmatprep.subr.mxu0 0.0
    %4856 = vmatpush1.msra.mxu0 %v836
    %4857 = vmatprep.subr.mxu0 0.0
    %4858 = vmatpush1.msra.mxu0 %v835
    %4859 = vmatprep.subr.mxu0 0.0
    %4860 = vmatpush1.msra.mxu0 %v834
    %4861 = vmatprep.subr.mxu0 0.0
    %4862 = vmatpush2.msra.mxu0 0.0
    %4863 = vmatprep.subr.mxu0 0.0
    %4864 = vmatpush2.msra.mxu0 0.0
    %4865 = vmatprep.subr.mxu0 0.0
    %4866 = vmatpush2.msra.mxu0 0.0
    %4867 = vmatprep.subr.mxu0 0.0
    %4868 = vmatpush2.msra.mxu0 0.0
    %4869 = vmatprep.subr.mxu0 0.0
    %4870 = vmatpush2.msra.mxu0 0.0
    %4871 = vmatprep.subr.mxu0 0.0
    %4872 = vmatpush2.msra.mxu0 0.0
    %4873 = vmatprep.subr.mxu0 0.0
    %4874 = vmatpush2.msra.mxu0 0.0
    %4875 = vmatprep.subr.mxu0 0.0
    %4876 = vmatpush2.msra.mxu0 0.0
    %4877 = vmatprep.subr.mxu0 0.0
    %4878 = vmatpush2.msra.mxu0 0.0
    %4879 = vmatprep.subr.mxu0 0.0
    %4880 = vmatpush2.msra.mxu0 0.0
    %4881 = vmatprep.subr.mxu0 0.0
    %4882 = vmatpush2.msra.mxu0 0.0
    %4883 = vmatprep.subr.mxu0 0.0
    %4884 = vmatpush2.msra.mxu0 0.0
    %4885 = vmatprep.subr.mxu0 0.0
    %4886 = vmatpush2.msra.mxu0 0.0
    %4887 = vmatprep.subr.mxu0 0.0
    %4888 = vmatpush2.msra.mxu0 0.0
    %4889 = vmatprep.subr.mxu0 0.0
    %4890 = vmatpush2.msra.mxu0 0.0
    %4891 = vmatprep.subr.mxu0 0.0
    %4892 = vmatpush2.msra.mxu0 0.0
    %4893 = vmatprep.mubr.f32.mxu0 0.0
    %4894 = vmatmul.mubr.f32.gmra.mxu0 %v4827
    %v4895 = vpop.f32.mrf.mxu0
    %v4896 = vadd.f32 0.0, %v4895
    %v4897 = vpop.f32.mrf.mxu0
    %4898 = vdwg.mxu0
    %v4899 = vsel %vm947, %v4896, 0.0
    %4900 = vadd.xlane.f32.xlu0 %v4899
    %v4901 = vpop.xlane.xlu0 %4900
    %v4902 = vmul.f32 %v4896, %v4896
    %v4903 = vsel %vm947, %v4902, 0.0
    %4904 = vadd.xlane.f32.xlu0 %v4903
    %v4905 = vpop.xlane.xlu0 %4904
    %v4906 = vmul.f32 %v4901, 0.03125
    %v4907 = vmul.f32 %v4905, 0.03125
    %v4908 = vmul.f32 %v4906, %v4906
    %v4909 = vsub.f32 %v4907, %v4908
    %v4910 = vmax.f32 %v4909, 0.0
    %v4911 = vsub.f32 %v4896, %v4906
    %v4912 = vadd.f32 %v4910, 1e-05
    %v4913 = vrsqrt.pop %v4912
    %v4914 = vmul.f32 %v4911, %v4913
    %v4915 = vmul.f32 %v4914, %v2824
    %v4916 = vadd.f32 %v4915, %v2831
    %v4917 = vmax.f32 %v4916, 0.0
    %v4919 = vsel %vm947, %v4917, 0
    %4921 = vmatprep.subr.mxu0 0.0
    %4922 = vmatpush1.msra.mxu0 0.0
    %4923 = vmatprep.subr.mxu0 0.0
    %4924 = vmatpush1.msra.mxu0 0.0
    %4925 = vmatprep.subr.mxu0 0.0
    %4926 = vmatpush1.msra.mxu0 0.0
    %4927 = vmatprep.subr.mxu0 0.0
    %4928 = vmatpush1.msra.mxu0 0.0
    %4929 = vmatprep.subr.mxu0 0.0
    %4930 = vmatpush1.msra.mxu0 0.0
    %4931 = vmatprep.subr.mxu0 0.0
    %4932 = vmatpush1.msra.mxu0 0.0
    %4933 = vmatprep.subr.mxu0 0.0
    %4934 = vmatpush1.msra.mxu0 0.0
    %4935 = vmatprep.subr.mxu0 0.0
    %4936 = vmatpush1.msra.mxu0 0.0
    %4937 = vmatprep.subr.mxu0 0.0
    %4938 = vmatpush1.msra.mxu0 0.0
    %4939 = vmatprep.subr.mxu0 0.0
    %4940 = vmatpush1.msra.mxu0 0.0
    %4941 = vmatprep.subr.mxu0 0.0
    %4942 = vmatpush1.msra.mxu0 0.0
    %4943 = vmatprep.subr.mxu0 0.0
    %4944 = vmatpush1.msra.mxu0 0.0
    %4945 = vmatprep.subr.mxu0 0.0
    %4946 = vmatpush1.msra.mxu0 %v843
    %4947 = vmatprep.subr.mxu0 0.0
    %4948 = vmatpush1.msra.mxu0 %v842
    %4949 = vmatprep.subr.mxu0 0.0
    %4950 = vmatpush1.msra.mxu0 %v841
    %4951 = vmatprep.subr.mxu0 0.0
    %4952 = vmatpush1.msra.mxu0 %v840
    %4953 = vmatprep.subr.mxu0 0.0
    %4954 = vmatpush2.msra.mxu0 0.0
    %4955 = vmatprep.subr.mxu0 0.0
    %4956 = vmatpush2.msra.mxu0 0.0
    %4957 = vmatprep.subr.mxu0 0.0
    %4958 = vmatpush2.msra.mxu0 0.0
    %4959 = vmatprep.subr.mxu0 0.0
    %4960 = vmatpush2.msra.mxu0 0.0
    %4961 = vmatprep.subr.mxu0 0.0
    %4962 = vmatpush2.msra.mxu0 0.0
    %4963 = vmatprep.subr.mxu0 0.0
    %4964 = vmatpush2.msra.mxu0 0.0
    %4965 = vmatprep.subr.mxu0 0.0
    %4966 = vmatpush2.msra.mxu0 0.0
    %4967 = vmatprep.subr.mxu0 0.0
    %4968 = vmatpush2.msra.mxu0 0.0
    %4969 = vmatprep.subr.mxu0 0.0
    %4970 = vmatpush2.msra.mxu0 0.0
    %4971 = vmatprep.subr.mxu0 0.0
    %4972 = vmatpush2.msra.mxu0 0.0
    %4973 = vmatprep.subr.mxu0 0.0
    %4974 = vmatpush2.msra.mxu0 0.0
    %4975 = vmatprep.subr.mxu0 0.0
    %4976 = vmatpush2.msra.mxu0 0.0
    %4977 = vmatprep.subr.mxu0 0.0
    %4978 = vmatpush2.msra.mxu0 0.0
    %4979 = vmatprep.subr.mxu0 0.0
    %4980 = vmatpush2.msra.mxu0 0.0
    %4981 = vmatprep.subr.mxu0 0.0
    %4982 = vmatpush2.msra.mxu0 0.0
    %4983 = vmatprep.subr.mxu0 0.0
    %4984 = vmatpush2.msra.mxu0 0.0
    %4985 = vmatprep.mubr.f32.mxu0 0.0
    %4986 = vmatmul.mubr.f32.gmra.mxu0 %v4919
    %v4987 = vpop.f32.mrf.mxu0
    %v4988 = vadd.f32 0.0, %v4987
    %v4989 = vpop.f32.mrf.mxu0
    %4990 = vdwg.mxu0
    %v4991 = vsel %vm947, %v4988, 0.0
    %4992 = vadd.xlane.f32.xlu0 %v4991
    %v4993 = vpop.xlane.xlu0 %4992
    %v4994 = vmul.f32 %v4988, %v4988
    %v4995 = vsel %vm947, %v4994, 0.0
    %4996 = vadd.xlane.f32.xlu0 %v4995
    %v4997 = vpop.xlane.xlu0 %4996
    %v4998 = vmul.f32 %v4993, 0.03125
    %v4999 = vmul.f32 %v4997, 0.03125
    %v5000 = vmul.f32 %v4998, %v4998
    %v5001 = vsub.f32 %v4999, %v5000
    %v5002 = vmax.f32 %v5001, 0.0
    %v5003 = vsub.f32 %v4988, %v4998
    %v5004 = vadd.f32 %v5002, 1e-05
    %v5005 = vrsqrt.pop %v5004
    %v5006 = vmul.f32 %v5003, %v5005
    %v5007 = vmul.f32 %v5006, %v2928
    %v5008 = vadd.f32 %v5007, %v2935
    %v5009 = vadd.f32 %v5008, %v4825
    %v5010 = vmax.f32 %v5009, 0.0
    %v5012 = vsel %vm947, %v5010, 0
    %5014 = vmatprep.subr.mxu0 0.0
    %5015 = vmatpush1.msra.mxu0 0.0
    %5016 = vmatprep.subr.mxu0 0.0
    %5017 = vmatpush1.msra.mxu0 0.0
    %5018 = vmatprep.subr.mxu0 0.0
    %5019 = vmatpush1.msra.mxu0 0.0
    %5020 = vmatprep.subr.mxu0 0.0
    %5021 = vmatpush1.msra.mxu0 0.0
    %5022 = vmatprep.subr.mxu0 0.0
    %5023 = vmatpush1.msra.mxu0 0.0
    %5024 = vmatprep.subr.mxu0 0.0
    %5025 = vmatpush1.msra.mxu0 0.0
    %5026 = vmatprep.subr.mxu0 0.0
    %5027 = vmatpush1.msra.mxu0 0.0
    %5028 = vmatprep.subr.mxu0 0.0
    %5029 = vmatpush1.msra.mxu0 0.0
    %5030 = vmatprep.subr.mxu0 0.0
    %5031 = vmatpush1.msra.mxu0 0.0
    %5032 = vmatprep.subr.mxu0 0.0
    %5033 = vmatpush1.msra.mxu0 0.0
    %5034 = vmatprep.subr.mxu0 0.0
    %5035 = vmatpush1.msra.mxu0 0.0
    %5036 = vmatprep.subr.mxu0 0.0
    %5037 = vmatpush1.msra.mxu0 0.0
    %5038 = vmatprep.subr.mxu0 0.0
    %5039 = vmatpush1.msra.mxu0 %v831
    %5040 = vmatprep.subr.mxu0 0.0
    %5041 = vmatpush1.msra.mxu0 %v830
    %5042 = vmatprep.subr.mxu0 0.0
    %5043 = vmatpush1.msra.mxu0 %v829
    %5044 = vmatprep.subr.mxu0 0.0
    %5045 = vmatpush1.msra.mxu0 %v828
    %5046 = vmatprep.subr.mxu0 0.0
    %5047 = vmatpush2.msra.mxu0 0.0
    %5048 = vmatprep.subr.mxu0 0.0
    %5049 = vmatpush2.msra.mxu0 0.0
    %5050 = vmatprep.subr.mxu0 0.0
    %5051 = vmatpush2.msra.mxu0 0.0
    %5052 = vmatprep.subr.mxu0 0.0
    %5053 = vmatpush2.msra.mxu0 0.0
    %5054 = vmatprep.subr.mxu0 0.0
    %5055 = vmatpush2.msra.mxu0 0.0
    %5056 = vmatprep.subr.mxu0 0.0
    %5057 = vmatpush2.msra.mxu0 0.0
    %5058 = vmatprep.subr.mxu0 0.0
    %5059 = vmatpush2.msra.mxu0 0.0
    %5060 = vmatprep.subr.mxu0 0.0
    %5061 = vmatpush2.msra.mxu0 0.0
    %5062 = vmatprep.subr.mxu0 0.0
    %5063 = vmatpush2.msra.mxu0 0.0
    %5064 = vmatprep.subr.mxu0 0.0
    %5065 = vmatpush2.msra.mxu0 0.0
    %5066 = vmatprep.subr.mxu0 0.0
    %5067 = vmatpush2.msra.mxu0 0.0
    %5068 = vmatprep.subr.mxu0 0.0
    %5069 = vmatpush2.msra.mxu0 0.0
    %5070 = vmatprep.subr.mxu0 0.0
    %5071 = vmatpush2.msra.mxu0 0.0
    %5072 = vmatprep.subr.mxu0 0.0
    %5073 = vmatpush2.msra.mxu0 0.0
    %5074 = vmatprep.subr.mxu0 0.0
    %5075 = vmatpush2.msra.mxu0 0.0
    %5076 = vmatprep.subr.mxu0 0.0
    %5077 = vmatpush2.msra.mxu0 0.0
    %5078 = vmatprep.mubr.f32.mxu0 0.0
    %5079 = vmatmul.mubr.f32.gmra.mxu0 %v5012
    %v5080 = vpop.f32.mrf.mxu0
    %v5081 = vadd.f32 %v2944, %v5080
    %v5082 = vpop.f32.mrf.mxu0
    %5083 = vdwg.mxu0
    %s5084 = scalar_lea.vmem [#allocation27], 2
    %v5085 = vld [vmem:[%s5084] sm:$0x1]
    %s5086 = scalar_lea.vmem %s43, 192
    %v5087 = vld [vmem:[%s5086] sm:$0xff]
    %v5088 = vld [vmem:[%s5086 + $0x8] sm:$0xff]
    %v5089 = vld [vmem:[%s5086 + $0x10] sm:$0xff]
    %v5090 = vld [vmem:[%s5086 + $0x18] sm:$0xff]
    %v5091 = vld [vmem:[%s5086 + $0x20] sm:$0xff]
    %v5092 = vld [vmem:[%s5086 + $0x28] sm:$0xff]
    %v5093 = vld [vmem:[%s5086 + $0x30] sm:$0xff]
    %v5094 = vld [vmem:[%s5086 + $0x38] sm:$0xff]
    %v5095 = vld [vmem:[%s5086 + $0x40] sm:$0xff]
    %v5096 = vld [vmem:[%s5086 + $0x48] sm:$0xff]
    %v5097 = vld [vmem:[%s5086 + $0x50] sm:$0xff]
    %v5098 = vld [vmem:[%s5086 + $0x58] sm:$0xff]
    %s5099 = scalar_lea.vmem [#allocation29], 2
    %v5100 = vld [vmem:[%s5099] sm:$0x1]
    %s5101 = scalar_lea.vmem [#allocation30], 2
    %v5102 = vld [vmem:[%s5101] sm:$0x1]
    %s5103 = scalar_lea.vmem %s49, 192
    %v5104 = vld [vmem:[%s5103] sm:$0xff]
    %v5105 = vld [vmem:[%s5103 + $0x8] sm:$0xff]
    %v5106 = vld [vmem:[%s5103 + $0x10] sm:$0xff]
    %v5107 = vld [vmem:[%s5103 + $0x18] sm:$0xff]
    %v5108 = vld [vmem:[%s5103 + $0x20] sm:$0xff]
    %v5109 = vld [vmem:[%s5103 + $0x28] sm:$0xff]
    %v5110 = vld [vmem:[%s5103 + $0x30] sm:$0xff]
    %v5111 = vld [vmem:[%s5103 + $0x38] sm:$0xff]
    %v5112 = vld [vmem:[%s5103 + $0x40] sm:$0xff]
    %v5113 = vld [vmem:[%s5103 + $0x48] sm:$0xff]
    %v5114 = vld [vmem:[%s5103 + $0x50] sm:$0xff]
    %v5115 = vld [vmem:[%s5103 + $0x58] sm:$0xff]
    %s5116 = scalar_lea.vmem [#allocation32], 2
    %v5117 = vld [vmem:[%s5116] sm:$0x1]
    %s5118 = scalar_lea.vmem [#allocation33], 2
    %v5119 = vld [vmem:[%s5118] sm:$0x1]
    %s5120 = scalar_lea.vmem %s55, 192
    %v5121 = vld [vmem:[%s5120] sm:$0xff]
    %v5122 = vld [vmem:[%s5120 + $0x8] sm:$0xff]
    %v5123 = vld [vmem:[%s5120 + $0x10] sm:$0xff]
    %v5124 = vld [vmem:[%s5120 + $0x18] sm:$0xff]
    %v5125 = vld [vmem:[%s5120 + $0x20] sm:$0xff]
    %v5126 = vld [vmem:[%s5120 + $0x28] sm:$0xff]
    %v5127 = vld [vmem:[%s5120 + $0x30] sm:$0xff]
    %v5128 = vld [vmem:[%s5120 + $0x38] sm:$0xff]
    %v5129 = vld [vmem:[%s5120 + $0x40] sm:$0xff]
    %v5130 = vld [vmem:[%s5120 + $0x48] sm:$0xff]
    %v5131 = vld [vmem:[%s5120 + $0x50] sm:$0xff]
    %v5132 = vld [vmem:[%s5120 + $0x58] sm:$0xff]
    %s5133 = scalar_lea.vmem [#allocation35], 2
    %v5134 = vld [vmem:[%s5133] sm:$0x1]
    %s5135 = scalar_lea.vmem %s59, 96
    %v5136 = vld [vmem:[%s5135] sm:$0xff]
    %v5137 = vld [vmem:[%s5135 + $0x8] sm:$0xff]
    %v5138 = vld [vmem:[%s5135 + $0x10] sm:$0xff]
    %v5139 = vld [vmem:[%s5135 + $0x18] sm:$0xff]
    %v5140 = vld [vmem:[%s5135 + $0x20] sm:$0xff]
    %v5141 = vld [vmem:[%s5135 + $0x28] sm:$0xff]
    %s5142 = scalar_lea.vmem [#allocation36], 2
    %v5143 = vld [vmem:[%s5142] sm:$0x1]
    %s5144 = scalar_lea.vmem [#allocation38], 2
    %v5145 = vld [vmem:[%s5144] sm:$0x1]
    %s5146 = scalar_lea.vmem %s65, 96
    %v5147 = vld [vmem:[%s5146] sm:$0xff]
    %v5148 = vld [vmem:[%s5146 + $0x8] sm:$0xff]
    %v5149 = vld [vmem:[%s5146 + $0x10] sm:$0xff]
    %v5150 = vld [vmem:[%s5146 + $0x18] sm:$0xff]
    %v5151 = vld [vmem:[%s5146 + $0x20] sm:$0xff]
    %v5152 = vld [vmem:[%s5146 + $0x28] sm:$0xff]
    %s5153 = scalar_lea.vmem [#allocation39], 2
    %v5154 = vld [vmem:[%s5153] sm:$0x1]
    %s5155 = scalar_lea.vmem [#allocation41], 2
    %v5156 = vld [vmem:[%s5155] sm:$0x1]
    %s5157 = scalar_lea.vmem %s71, 96
    %v5158 = vld [vmem:[%s5157] sm:$0xff]
    %v5159 = vld [vmem:[%s5157 + $0x8] sm:$0xff]
    %v5160 = vld [vmem:[%s5157 + $0x10] sm:$0xff]
    %v5161 = vld [vmem:[%s5157 + $0x18] sm:$0xff]
    %v5162 = vld [vmem:[%s5157 + $0x20] sm:$0xff]
    %v5163 = vld [vmem:[%s5157 + $0x28] sm:$0xff]
    %s5164 = scalar_lea.vmem %s73, 2
    %v5165 = vld [vmem:[%s5164] sm:$0x1]
    %s5166 = scalar_lea.vmem %s75, 32
    %v5167 = vld [vmem:[%s5166] sm:$0xff]
    %v5168 = vld [vmem:[%s5166 + $0x8] sm:$0xff]
    %s5169 = scalar_lea.vmem [#allocation42], 2
    %v5170 = vld [vmem:[%s5169] sm:$0x1]
    %s5171 = scalar_lea.vmem [#allocation44], 2
    %v5172 = vld [vmem:[%s5171] sm:$0x1]
    %s5173 = scalar_lea.vmem [#allocation45], 32
    %v5174 = vld [vmem:[%s5173] sm:$0xff]
    %v5175 = vld [vmem:[%s5173 + $0x8] sm:$0xff]
    %s5176 = scalar_lea.vmem [#allocation47], 2
    %v5177 = vld [vmem:[%s5176] sm:$0x1]
    %s5178 = scalar_lea.vmem [#allocation48], 2
    %v5179 = vld [vmem:[%s5178] sm:$0x1]
    %s5180 = scalar_lea.vmem [#allocation50], 32
    %v5181 = vld [vmem:[%s5180] sm:$0xff]
    %v5182 = vld [vmem:[%s5180 + $0x8] sm:$0xff]
    %s5183 = scalar_lea.vmem [#allocation51], 2
    %v5184 = vld [vmem:[%s5183] sm:$0x1]
    %s5185 = scalar_lea.vmem [#allocation53], 2
    %v5186 = vld [vmem:[%s5185] sm:$0x1]
    %s5187 = scalar_lea.vmem [#allocation54], 16
    %v5188 = vld [vmem:[%s5187] sm:$0x3f]
    %s5189 = scalar_lea.vmem [#allocation56], 2
    %v5190 = vld [vmem:[%s5189] sm:$0x1]
    %s5191 = scalar_lea.vmem [#allocation57], 2
    %v5192 = vld [vmem:[%s5191] sm:$0x1]
    %s5193 = scalar_lea.vmem [#allocation59], 4
    %v5194 = vld [vmem:[%s5193] sm:$0x3]
    %s5195 = scalar_lea.vmem [#allocation60], 2
    %v5196 = vld [vmem:[%s5195] sm:$0x1]
    %s5197 = scalar_lea.vmem [#allocation62], 2
    %v5198 = vld [vmem:[%s5197] sm:$0x1]
    %s5199 = scalar_lea.vmem %s105, 64
    %v5200 = vld [vmem:[%s5199] sm:$0xff]
    %v5201 = vld [vmem:[%s5199 + $0x8] sm:$0xff]
    %v5202 = vld [vmem:[%s5199 + $0x10] sm:$0xff]
    %v5203 = vld [vmem:[%s5199 + $0x18] sm:$0xff]
    %s5204 = scalar_lea.vmem [#allocation63], 2
    %v5205 = vld [vmem:[%s5204] sm:$0x1]
    %s5206 = scalar_lea.vmem [#allocation65], 2
    %v5207 = vld [vmem:[%s5206] sm:$0x1]
    %s5208 = scalar_lea.vmem %s111, 128
    %v5209 = vld [vmem:[%s5208] sm:$0xff]
    %v5210 = vld [vmem:[%s5208 + $0x8] sm:$0xff]
    %v5211 = vld [vmem:[%s5208 + $0x10] sm:$0xff]
    %v5212 = vld [vmem:[%s5208 + $0x18] sm:$0xff]
    %v5213 = vld [vmem:[%s5208 + $0x20] sm:$0xff]
    %v5214 = vld [vmem:[%s5208 + $0x28] sm:$0xff]
    %v5215 = vld [vmem:[%s5208 + $0x30] sm:$0xff]
    %v5216 = vld [vmem:[%s5208 + $0x38] sm:$0xff]
    %s5217 = scalar_lea.vmem [#allocation66], 2
    %v5218 = vld [vmem:[%s5217] sm:$0x1]
    %s5219 = scalar_lea.vmem [#allocation68], 2
    %v5220 = vld [vmem:[%s5219] sm:$0x1]
    %s5221 = scalar_lea.vmem %s117, 64
    %v5222 = vld [vmem:[%s5221] sm:$0xff]
    %v5223 = vld [vmem:[%s5221 + $0x8] sm:$0xff]
    %v5224 = vld [vmem:[%s5221 + $0x10] sm:$0xff]
    %v5225 = vld [vmem:[%s5221 + $0x18] sm:$0xff]
    %5226 = vmatprep.subr.mxu0 0.0
    %5227 = vmatpush1.msra.mxu0 0.0
    %5228 = vmatprep.subr.mxu0 0.0
    %5229 = vmatpush1.msra.mxu0 0.0
    %5230 = vmatprep.subr.mxu0 0.0
    %5231 = vmatpush1.msra.mxu0 0.0
    %5232 = vmatprep.subr.mxu0 0.0
    %5233 = vmatpush1.msra.mxu0 0.0
    %5234 = vmatprep.subr.mxu0 0.0
    %5235 = vmatpush1.msra.mxu0 0.0
    %5236 = vmatprep.subr.mxu0 0.0
    %5237 = vmatpush1.msra.mxu0 0.0
    %5238 = vmatprep.subr.mxu0 0.0
    %5239 = vmatpush1.msra.mxu0 0.0
    %5240 = vmatprep.subr.mxu0 0.0
    %5241 = vmatpush1.msra.mxu0 0.0
    %5242 = vmatprep.subr.mxu0 0.0
    %5243 = vmatpush1.msra.mxu0 0.0
    %5244 = vmatprep.subr.mxu0 0.0
    %5245 = vmatpush1.msra.mxu0 0.0
    %5246 = vmatprep.subr.mxu0 0.0
    %5247 = vmatpush1.msra.mxu0 0.0
    %5248 = vmatprep.subr.mxu0 0.0
    %5249 = vmatpush1.msra.mxu0 0.0
    %5250 = vmatprep.subr.mxu0 0.0
    %5251 = vmatpush1.msra.mxu0 %v5203
    %5252 = vmatprep.subr.mxu0 0.0
    %5253 = vmatpush1.msra.mxu0 %v5202
    %5254 = vmatprep.subr.mxu0 0.0
    %5255 = vmatpush1.msra.mxu0 %v5201
    %5256 = vmatprep.subr.mxu0 0.0
    %5257 = vmatpush1.msra.mxu0 %v5200
    %5258 = vmatprep.subr.mxu0 0.0
    %5259 = vmatpush2.msra.mxu0 0.0
    %5260 = vmatprep.subr.mxu0 0.0
    %5261 = vmatpush2.msra.mxu0 0.0
    %5262 = vmatprep.subr.mxu0 0.0
    %5263 = vmatpush2.msra.mxu0 0.0
    %5264 = vmatprep.subr.mxu0 0.0
    %5265 = vmatpush2.msra.mxu0 0.0
    %5266 = vmatprep.subr.mxu0 0.0
    %5267 = vmatpush2.msra.mxu0 0.0
    %5268 = vmatprep.subr.mxu0 0.0
    %5269 = vmatpush2.msra.mxu0 0.0
    %5270 = vmatprep.subr.mxu0 0.0
    %5271 = vmatpush2.msra.mxu0 0.0
    %5272 = vmatprep.subr.mxu0 0.0
    %5273 = vmatpush2.msra.mxu0 0.0
    %5274 = vmatprep.subr.mxu0 0.0
    %5275 = vmatpush2.msra.mxu0 0.0
    %5276 = vmatprep.subr.mxu0 0.0
    %5277 = vmatpush2.msra.mxu0 0.0
    %5278 = vmatprep.subr.mxu0 0.0
    %5279 = vmatpush2.msra.mxu0 0.0
    %5280 = vmatprep.subr.mxu0 0.0
    %5281 = vmatpush2.msra.mxu0 0.0
    %5282 = vmatprep.subr.mxu0 0.0
    %5283 = vmatpush2.msra.mxu0 0.0
    %5284 = vmatprep.subr.mxu0 0.0
    %5285 = vmatpush2.msra.mxu0 0.0
    %5286 = vmatprep.subr.mxu0 0.0
    %5287 = vmatpush2.msra.mxu0 0.0
    %5288 = vmatprep.subr.mxu0 0.0
    %5289 = vmatpush2.msra.mxu0 0.0
    %5290 = vmatprep.mubr.f32.mxu0 0.0
    %5291 = vmatmul.mubr.f32.gmra.mxu0 %v949
    %v5292 = vpop.f32.mrf.mxu0
    %v5293 = vadd.f32 0.0, %v5292
    %v5294 = vpop.f32.mrf.mxu0
    %5295 = vdwg.mxu0
    %v5296 = vsel %vm1021, %v5293, 0.0
    %5297 = vadd.xlane.f32.xlu0 %v5296
    %v5298 = vpop.xlane.xlu0 %5297
    %v5299 = vmul.f32 %v5293, %v5293
    %v5300 = vsel %vm1021, %v5299, 0.0
    %5301 = vadd.xlane.f32.xlu0 %v5300
    %v5302 = vpop.xlane.xlu0 %5301
    %v5303 = vmul.f32 %v5298, 0.015625
    %v5304 = vmul.f32 %v5302, 0.015625
    %v5305 = vmul.f32 %v5303, %v5303
    %v5306 = vsub.f32 %v5304, %v5305
    %v5307 = vmax.f32 %v5306, 0.0
    %v5308 = vsub.f32 %v5293, %v5303
    %v5309 = vadd.f32 %v5307, 1e-05
    %v5310 = vrsqrt.pop %v5309
    %v5311 = vmul.f32 %v5308, %v5310
    %v5313 = vlaneseq
    %v5314 = vshrl.u32 %v5313, 7
    %v5315 = vsub.s32 0, %v5314
    %v5316 = vrot.slane %v5198, %v5315
    %v5318 = vmul.f32 %v5311, %v5316
    %v5320 = vlaneseq
    %v5321 = vshrl.u32 %v5320, 7
    %v5322 = vsub.s32 0, %v5321
    %v5323 = vrot.slane %v5196, %v5322
    %v5325 = vadd.f32 %v5318, %v5323
    %v5326 = vmax.f32 %v5325, 0.0
    %v5328 = vsel %vm1021, %v5326, 0
    %5330 = vmatprep.subr.mxu0 0.0
    %5331 = vmatpush1.msra.mxu0 0.0
    %5332 = vmatprep.subr.mxu0 0.0
    %5333 = vmatpush1.msra.mxu0 0.0
    %5334 = vmatprep.subr.mxu0 0.0
    %5335 = vmatpush1.msra.mxu0 0.0
    %5336 = vmatprep.subr.mxu0 0.0
    %5337 = vmatpush1.msra.mxu0 0.0
    %5338 = vmatprep.subr.mxu0 0.0
    %5339 = vmatpush1.msra.mxu0 0.0
    %5340 = vmatprep.subr.mxu0 0.0
    %5341 = vmatpush1.msra.mxu0 0.0
    %5342 = vmatprep.subr.mxu0 0.0
    %5343 = vmatpush1.msra.mxu0 0.0
    %5344 = vmatprep.subr.mxu0 0.0
    %5345 = vmatpush1.msra.mxu0 0.0
    %5346 = vmatprep.subr.mxu0 0.0
    %5347 = vmatpush1.msra.mxu0 %v5216
    %5348 = vmatprep.subr.mxu0 0.0
    %5349 = vmatpush1.msra.mxu0 %v5215
    %5350 = vmatprep.subr.mxu0 0.0
    %5351 = vmatpush1.msra.mxu0 %v5214
    %5352 = vmatprep.subr.mxu0 0.0
    %5353 = vmatpush1.msra.mxu0 %v5213
    %5354 = vmatprep.subr.mxu0 0.0
    %5355 = vmatpush1.msra.mxu0 %v5212
    %5356 = vmatprep.subr.mxu0 0.0
    %5357 = vmatpush1.msra.mxu0 %v5211
    %5358 = vmatprep.subr.mxu0 0.0
    %5359 = vmatpush1.msra.mxu0 %v5210
    %5360 = vmatprep.subr.mxu0 0.0
    %5361 = vmatpush1.msra.mxu0 %v5209
    %5362 = vmatprep.subr.mxu0 0.0
    %5363 = vmatpush2.msra.mxu0 0.0
    %5364 = vmatprep.subr.mxu0 0.0
    %5365 = vmatpush2.msra.mxu0 0.0
    %5366 = vmatprep.subr.mxu0 0.0
    %5367 = vmatpush2.msra.mxu0 0.0
    %5368 = vmatprep.subr.mxu0 0.0
    %5369 = vmatpush2.msra.mxu0 0.0
    %5370 = vmatprep.subr.mxu0 0.0
    %5371 = vmatpush2.msra.mxu0 0.0
    %5372 = vmatprep.subr.mxu0 0.0
    %5373 = vmatpush2.msra.mxu0 0.0
    %5374 = vmatprep.subr.mxu0 0.0
    %5375 = vmatpush2.msra.mxu0 0.0
    %5376 = vmatprep.subr.mxu0 0.0
    %5377 = vmatpush2.msra.mxu0 0.0
    %5378 = vmatprep.subr.mxu0 0.0
    %5379 = vmatpush2.msra.mxu0 0.0
    %5380 = vmatprep.subr.mxu0 0.0
    %5381 = vmatpush2.msra.mxu0 0.0
    %5382 = vmatprep.subr.mxu0 0.0
    %5383 = vmatpush2.msra.mxu0 0.0
    %5384 = vmatprep.subr.mxu0 0.0
    %5385 = vmatpush2.msra.mxu0 0.0
    %5386 = vmatprep.subr.mxu0 0.0
    %5387 = vmatpush2.msra.mxu0 0.0
    %5388 = vmatprep.subr.mxu0 0.0
    %5389 = vmatpush2.msra.mxu0 0.0
    %5390 = vmatprep.subr.mxu0 0.0
    %5391 = vmatpush2.msra.mxu0 0.0
    %5392 = vmatprep.subr.mxu0 0.0
    %5393 = vmatpush2.msra.mxu0 0.0
    %5394 = vmatprep.mubr.f32.mxu0 0.0
    %5395 = vmatmul.mubr.f32.gmra.mxu0 %v5328
    %v5396 = vpop.f32.mrf.mxu0
    %v5397 = vadd.f32 0.0, %v5396
    %v5398 = vpop.f32.mrf.mxu0
    %5399 = vdwg.mxu0
    %v5400 = vsel %vm947, %v5397, 0.0
    %5401 = vadd.xlane.f32.xlu0 %v5400
    %v5402 = vpop.xlane.xlu0 %5401
    %v5403 = vmul.f32 %v5397, %v5397
    %v5404 = vsel %vm947, %v5403, 0.0
    %5405 = vadd.xlane.f32.xlu0 %v5404
    %v5406 = vpop.xlane.xlu0 %5405
    %v5407 = vmul.f32 %v5402, 0.03125
    %v5408 = vmul.f32 %v5406, 0.03125
    %v5409 = vmul.f32 %v5407, %v5407
    %v5410 = vsub.f32 %v5408, %v5409
    %v5411 = vmax.f32 %v5410, 0.0
    %v5412 = vsub.f32 %v5397, %v5407
    %v5413 = vadd.f32 %v5411, 1e-05
    %v5414 = vrsqrt.pop %v5413
    %v5415 = vmul.f32 %v5412, %v5414
    %v5417 = vlaneseq
    %v5418 = vshrl.u32 %v5417, 7
    %v5419 = vsub.s32 0, %v5418
    %v5420 = vrot.slane %v5207, %v5419
    %v5422 = vmul.f32 %v5415, %v5420
    %v5424 = vlaneseq
    %v5425 = vshrl.u32 %v5424, 7
    %v5426 = vsub.s32 0, %v5425
    %v5427 = vrot.slane %v5205, %v5426
    %v5429 = vadd.f32 %v5422, %v5427
    %v5430 = vmax.f32 %v5429, 0.0
    %v5432 = vsel %vm947, %v5430, 0
    %5434 = vmatprep.subr.mxu0 0.0
    %5435 = vmatpush1.msra.mxu0 0.0
    %5436 = vmatprep.subr.mxu0 0.0
    %5437 = vmatpush1.msra.mxu0 0.0
    %5438 = vmatprep.subr.mxu0 0.0
    %5439 = vmatpush1.msra.mxu0 0.0
    %5440 = vmatprep.subr.mxu0 0.0
    %5441 = vmatpush1.msra.mxu0 0.0
    %5442 = vmatprep.subr.mxu0 0.0
    %5443 = vmatpush1.msra.mxu0 0.0
    %5444 = vmatprep.subr.mxu0 0.0
    %5445 = vmatpush1.msra.mxu0 0.0
    %5446 = vmatprep.subr.mxu0 0.0
    %5447 = vmatpush1.msra.mxu0 0.0
    %5448 = vmatprep.subr.mxu0 0.0
    %5449 = vmatpush1.msra.mxu0 0.0
    %5450 = vmatprep.subr.mxu0 0.0
    %5451 = vmatpush1.msra.mxu0 0.0
    %5452 = vmatprep.subr.mxu0 0.0
    %5453 = vmatpush1.msra.mxu0 0.0
    %5454 = vmatprep.subr.mxu0 0.0
    %5455 = vmatpush1.msra.mxu0 0.0
    %5456 = vmatprep.subr.mxu0 0.0
    %5457 = vmatpush1.msra.mxu0 0.0
    %5458 = vmatprep.subr.mxu0 0.0
    %5459 = vmatpush1.msra.mxu0 %v5225
    %5460 = vmatprep.subr.mxu0 0.0
    %5461 = vmatpush1.msra.mxu0 %v5224
    %5462 = vmatprep.subr.mxu0 0.0
    %5463 = vmatpush1.msra.mxu0 %v5223
    %5464 = vmatprep.subr.mxu0 0.0
    %5465 = vmatpush1.msra.mxu0 %v5222
    %5466 = vmatprep.subr.mxu0 0.0
    %5467 = vmatpush2.msra.mxu0 0.0
    %5468 = vmatprep.subr.mxu0 0.0
    %5469 = vmatpush2.msra.mxu0 0.0
    %5470 = vmatprep.subr.mxu0 0.0
    %5471 = vmatpush2.msra.mxu0 0.0
    %5472 = vmatprep.subr.mxu0 0.0
    %5473 = vmatpush2.msra.mxu0 0.0
    %5474 = vmatprep.subr.mxu0 0.0
    %5475 = vmatpush2.msra.mxu0 0.0
    %5476 = vmatprep.subr.mxu0 0.0
    %5477 = vmatpush2.msra.mxu0 0.0
    %5478 = vmatprep.subr.mxu0 0.0
    %5479 = vmatpush2.msra.mxu0 0.0
    %5480 = vmatprep.subr.mxu0 0.0
    %5481 = vmatpush2.msra.mxu0 0.0
    %5482 = vmatprep.subr.mxu0 0.0
    %5483 = vmatpush2.msra.mxu0 0.0
    %5484 = vmatprep.subr.mxu0 0.0
    %5485 = vmatpush2.msra.mxu0 0.0
    %5486 = vmatprep.subr.mxu0 0.0
    %5487 = vmatpush2.msra.mxu0 0.0
    %5488 = vmatprep.subr.mxu0 0.0
    %5489 = vmatpush2.msra.mxu0 0.0
    %5490 = vmatprep.subr.mxu0 0.0
    %5491 = vmatpush2.msra.mxu0 0.0
    %5492 = vmatprep.subr.mxu0 0.0
    %5493 = vmatpush2.msra.mxu0 0.0
    %5494 = vmatprep.subr.mxu0 0.0
    %5495 = vmatpush2.msra.mxu0 0.0
    %5496 = vmatprep.subr.mxu0 0.0
    %5497 = vmatpush2.msra.mxu0 0.0
    %5498 = vmatprep.mubr.f32.mxu0 0.0
    %5499 = vmatmul.mubr.f32.gmra.mxu0 %v5432
    %v5500 = vpop.f32.mrf.mxu0
    %v5501 = vadd.f32 0.0, %v5500
    %v5502 = vpop.f32.mrf.mxu0
    %5503 = vdwg.mxu0
    %v5504 = vsel %vm1230, %v5501, 0.0
    %5505 = vadd.xlane.f32.xlu0 %v5504
    %v5506 = vpop.xlane.xlu0 %5505
    %v5507 = vmul.f32 %v5501, %v5501
    %v5508 = vsel %vm1230, %v5507, 0.0
    %5509 = vadd.xlane.f32.xlu0 %v5508
    %v5510 = vpop.xlane.xlu0 %5509
    %v5511 = vmul.f32 %v5506, 0.0625
    %v5512 = vmul.f32 %v5510, 0.0625
    %v5513 = vmul.f32 %v5511, %v5511
    %v5514 = vsub.f32 %v5512, %v5513
    %v5515 = vmax.f32 %v5514, 0.0
    %v5516 = vsub.f32 %v5501, %v5511
    %v5517 = vadd.f32 %v5515, 1e-05
    %v5518 = vrsqrt.pop %v5517
    %v5519 = vmul.f32 %v5516, %v5518
    %v5521 = vlaneseq
    %v5522 = vshrl.u32 %v5521, 7
    %v5523 = vsub.s32 0, %v5522
    %v5524 = vrot.slane %v5220, %v5523
    %v5526 = vmul.f32 %v5519, %v5524
    %v5528 = vlaneseq
    %v5529 = vshrl.u32 %v5528, 7
    %v5530 = vsub.s32 0, %v5529
    %v5531 = vrot.slane %v5218, %v5530
    %v5533 = vadd.f32 %v5526, %v5531
    %v5534 = vmax.f32 %v5533, 0.0
    %v5536 = vsel %vm1230, %v5534, 0
    %5538 = vmatprep.subr.mxu0 0.0
    %5539 = vmatpush1.msra.mxu0 0.0
    %5540 = vmatprep.subr.mxu0 0.0
    %5541 = vmatpush1.msra.mxu0 0.0
    %5542 = vmatprep.subr.mxu0 0.0
    %5543 = vmatpush1.msra.mxu0 0.0
    %5544 = vmatprep.subr.mxu0 0.0
    %5545 = vmatpush1.msra.mxu0 0.0
    %5546 = vmatprep.subr.mxu0 0.0
    %5547 = vmatpush1.msra.mxu0 0.0
    %5548 = vmatprep.subr.mxu0 0.0
    %5549 = vmatpush1.msra.mxu0 0.0
    %5550 = vmatprep.subr.mxu0 0.0
    %5551 = vmatpush1.msra.mxu0 0.0
    %5552 = vmatprep.subr.mxu0 0.0
    %5553 = vmatpush1.msra.mxu0 0.0
    %5554 = vmatprep.subr.mxu0 0.0
    %5555 = vmatpush1.msra.mxu0 0.0
    %5556 = vmatprep.subr.mxu0 0.0
    %5557 = vmatpush1.msra.mxu0 0.0
    %5558 = vmatprep.subr.mxu0 0.0
    %5559 = vmatpush1.msra.mxu0 0.0
    %5560 = vmatprep.subr.mxu0 0.0
    %5561 = vmatpush1.msra.mxu0 0.0
    %5562 = vmatprep.subr.mxu0 0.0
    %5563 = vmatpush1.msra.mxu0 0.0
    %5564 = vmatprep.subr.mxu0 0.0
    %5565 = vmatpush1.msra.mxu0 0.0
    %5566 = vmatprep.subr.mxu0 0.0
    %5567 = vmatpush1.msra.mxu0 %v5175
    %5568 = vmatprep.subr.mxu0 0.0
    %5569 = vmatpush1.msra.mxu0 %v5174
    %5570 = vmatprep.subr.mxu0 0.0
    %5571 = vmatpush2.msra.mxu0 0.0
    %5572 = vmatprep.subr.mxu0 0.0
    %5573 = vmatpush2.msra.mxu0 0.0
    %5574 = vmatprep.subr.mxu0 0.0
    %5575 = vmatpush2.msra.mxu0 0.0
    %5576 = vmatprep.subr.mxu0 0.0
    %5577 = vmatpush2.msra.mxu0 0.0
    %5578 = vmatprep.subr.mxu0 0.0
    %5579 = vmatpush2.msra.mxu0 0.0
    %5580 = vmatprep.subr.mxu0 0.0
    %5581 = vmatpush2.msra.mxu0 0.0
    %5582 = vmatprep.subr.mxu0 0.0
    %5583 = vmatpush2.msra.mxu0 0.0
    %5584 = vmatprep.subr.mxu0 0.0
    %5585 = vmatpush2.msra.mxu0 0.0
    %5586 = vmatprep.subr.mxu0 0.0
    %5587 = vmatpush2.msra.mxu0 0.0
    %5588 = vmatprep.subr.mxu0 0.0
    %5589 = vmatpush2.msra.mxu0 0.0
    %5590 = vmatprep.subr.mxu0 0.0
    %5591 = vmatpush2.msra.mxu0 0.0
    %5592 = vmatprep.subr.mxu0 0.0
    %5593 = vmatpush2.msra.mxu0 0.0
    %5594 = vmatprep.subr.mxu0 0.0
    %5595 = vmatpush2.msra.mxu0 0.0
    %5596 = vmatprep.subr.mxu0 0.0
    %5597 = vmatpush2.msra.mxu0 0.0
    %5598 = vmatprep.subr.mxu0 0.0
    %5599 = vmatpush2.msra.mxu0 0.0
    %5600 = vmatprep.subr.mxu0 0.0
    %5601 = vmatpush2.msra.mxu0 0.0
    %5602 = vmatprep.mubr.f32.mxu0 0.0
    %5603 = vmatmul.mubr.f32.gmra.mxu0 %v5536
    %v5604 = vpop.f32.mrf.mxu0
    %v5605 = vadd.f32 0.0, %v5604
    %v5606 = vpop.f32.mrf.mxu0
    %5607 = vdwg.mxu0
    %v5608 = vsel %vm1230, %v5605, 0.0
    %5609 = vadd.xlane.f32.xlu0 %v5608
    %v5610 = vpop.xlane.xlu0 %5609
    %v5611 = vmul.f32 %v5605, %v5605
    %v5612 = vsel %vm1230, %v5611, 0.0
    %5613 = vadd.xlane.f32.xlu0 %v5612
    %v5614 = vpop.xlane.xlu0 %5613
    %v5615 = vmul.f32 %v5610, 0.0625
    %v5616 = vmul.f32 %v5614, 0.0625
    %v5617 = vmul.f32 %v5615, %v5615
    %v5618 = vsub.f32 %v5616, %v5617
    %v5619 = vmax.f32 %v5618, 0.0
    %v5620 = vsub.f32 %v5605, %v5615
    %v5621 = vadd.f32 %v5619, 1e-05
    %v5622 = vrsqrt.pop %v5621
    %v5623 = vmul.f32 %v5620, %v5622
    %v5625 = vlaneseq
    %v5626 = vshrl.u32 %v5625, 7
    %v5627 = vsub.s32 0, %v5626
    %v5628 = vrot.slane %v5172, %v5627
    %v5630 = vmul.f32 %v5623, %v5628
    %v5632 = vlaneseq
    %v5633 = vshrl.u32 %v5632, 7
    %v5634 = vsub.s32 0, %v5633
    %v5635 = vrot.slane %v5170, %v5634
    %v5637 = vadd.f32 %v5630, %v5635
    %v5638 = vmax.f32 %v5637, 0.0
    %v5640 = vsel %vm1230, %v5638, 0
    %5642 = vmatprep.subr.mxu0 0.0
    %5643 = vmatpush1.msra.mxu0 0.0
    %5644 = vmatprep.subr.mxu0 0.0
    %5645 = vmatpush1.msra.mxu0 0.0
    %5646 = vmatprep.subr.mxu0 0.0
    %5647 = vmatpush1.msra.mxu0 0.0
    %5648 = vmatprep.subr.mxu0 0.0
    %5649 = vmatpush1.msra.mxu0 0.0
    %5650 = vmatprep.subr.mxu0 0.0
    %5651 = vmatpush1.msra.mxu0 0.0
    %5652 = vmatprep.subr.mxu0 0.0
    %5653 = vmatpush1.msra.mxu0 0.0
    %5654 = vmatprep.subr.mxu0 0.0
    %5655 = vmatpush1.msra.mxu0 0.0
    %5656 = vmatprep.subr.mxu0 0.0
    %5657 = vmatpush1.msra.mxu0 0.0
    %5658 = vmatprep.subr.mxu0 0.0
    %5659 = vmatpush1.msra.mxu0 0.0
    %5660 = vmatprep.subr.mxu0 0.0
    %5661 = vmatpush1.msra.mxu0 0.0
    %5662 = vmatprep.subr.mxu0 0.0
    %5663 = vmatpush1.msra.mxu0 0.0
    %5664 = vmatprep.subr.mxu0 0.0
    %5665 = vmatpush1.msra.mxu0 0.0
    %5666 = vmatprep.subr.mxu0 0.0
    %5667 = vmatpush1.msra.mxu0 0.0
    %5668 = vmatprep.subr.mxu0 0.0
    %5669 = vmatpush1.msra.mxu0 0.0
    %5670 = vmatprep.subr.mxu0 0.0
    %5671 = vmatpush1.msra.mxu0 %v5182
    %5672 = vmatprep.subr.mxu0 0.0
    %5673 = vmatpush1.msra.mxu0 %v5181
    %5674 = vmatprep.subr.mxu0 0.0
    %5675 = vmatpush2.msra.mxu0 0.0
    %5676 = vmatprep.subr.mxu0 0.0
    %5677 = vmatpush2.msra.mxu0 0.0
    %5678 = vmatprep.subr.mxu0 0.0
    %5679 = vmatpush2.msra.mxu0 0.0
    %5680 = vmatprep.subr.mxu0 0.0
    %5681 = vmatpush2.msra.mxu0 0.0
    %5682 = vmatprep.subr.mxu0 0.0
    %5683 = vmatpush2.msra.mxu0 0.0
    %5684 = vmatprep.subr.mxu0 0.0
    %5685 = vmatpush2.msra.mxu0 0.0
    %5686 = vmatprep.subr.mxu0 0.0
    %5687 = vmatpush2.msra.mxu0 0.0
    %5688 = vmatprep.subr.mxu0 0.0
    %5689 = vmatpush2.msra.mxu0 0.0
    %5690 = vmatprep.subr.mxu0 0.0
    %5691 = vmatpush2.msra.mxu0 0.0
    %5692 = vmatprep.subr.mxu0 0.0
    %5693 = vmatpush2.msra.mxu0 0.0
    %5694 = vmatprep.subr.mxu0 0.0
    %5695 = vmatpush2.msra.mxu0 0.0
    %5696 = vmatprep.subr.mxu0 0.0
    %5697 = vmatpush2.msra.mxu0 0.0
    %5698 = vmatprep.subr.mxu0 0.0
    %5699 = vmatpush2.msra.mxu0 0.0
    %5700 = vmatprep.subr.mxu0 0.0
    %5701 = vmatpush2.msra.mxu0 0.0
    %5702 = vmatprep.subr.mxu0 0.0
    %5703 = vmatpush2.msra.mxu0 0.0
    %5704 = vmatprep.subr.mxu0 0.0
    %5705 = vmatpush2.msra.mxu0 0.0
    %5706 = vmatprep.mubr.f32.mxu0 0.0
    %5707 = vmatmul.mubr.f32.gmra.mxu0 %v5640
    %v5708 = vpop.f32.mrf.mxu0
    %v5709 = vadd.f32 0.0, %v5708
    %v5710 = vpop.f32.mrf.mxu0
    %5711 = vdwg.mxu0
    %v5712 = vsel %vm1230, %v5709, 0.0
    %5713 = vadd.xlane.f32.xlu0 %v5712
    %v5714 = vpop.xlane.xlu0 %5713
    %v5715 = vmul.f32 %v5709, %v5709
    %v5716 = vsel %vm1230, %v5715, 0.0
    %5717 = vadd.xlane.f32.xlu0 %v5716
    %v5718 = vpop.xlane.xlu0 %5717
    %v5719 = vmul.f32 %v5714, 0.0625
    %v5720 = vmul.f32 %v5718, 0.0625
    %v5721 = vmul.f32 %v5719, %v5719
    %v5722 = vsub.f32 %v5720, %v5721
    %v5723 = vmax.f32 %v5722, 0.0
    %v5724 = vsub.f32 %v5709, %v5719
    %v5725 = vadd.f32 %v5723, 1e-05
    %v5726 = vrsqrt.pop %v5725
    %v5727 = vmul.f32 %v5724, %v5726
    %v5729 = vlaneseq
    %v5730 = vshrl.u32 %v5729, 7
    %v5731 = vsub.s32 0, %v5730
    %v5732 = vrot.slane %v5179, %v5731
    %v5734 = vmul.f32 %v5727, %v5732
    %v5736 = vlaneseq
    %v5737 = vshrl.u32 %v5736, 7
    %v5738 = vsub.s32 0, %v5737
    %v5739 = vrot.slane %v5177, %v5738
    %v5741 = vadd.f32 %v5734, %v5739
    %v5742 = vadd.f32 %v5741, %v5534
    %v5743 = vmax.f32 %v5742, 0.0
    %v5745 = vlaneseq
    %v5746 = vshrl.u32 %v5745, 7
    %v5747 = vsub.s32 0, %v5746
    %v5748 = vrot.slane %v5165, %v5747
    %v5751 = vsel %vm1230, %v5743, 0
    %5753 = vmatprep.subr.mxu0 0.0
    %5754 = vmatpush1.msra.mxu0 0.0
    %5755 = vmatprep.subr.mxu0 0.0
    %5756 = vmatpush1.msra.mxu0 0.0
    %5757 = vmatprep.subr.mxu0 0.0
    %5758 = vmatpush1.msra.mxu0 0.0
    %5759 = vmatprep.subr.mxu0 0.0
    %5760 = vmatpush1.msra.mxu0 0.0
    %5761 = vmatprep.subr.mxu0 0.0
    %5762 = vmatpush1.msra.mxu0 0.0
    %5763 = vmatprep.subr.mxu0 0.0
    %5764 = vmatpush1.msra.mxu0 0.0
    %5765 = vmatprep.subr.mxu0 0.0
    %5766 = vmatpush1.msra.mxu0 0.0
    %5767 = vmatprep.subr.mxu0 0.0
    %5768 = vmatpush1.msra.mxu0 0.0
    %5769 = vmatprep.subr.mxu0 0.0
    %5770 = vmatpush1.msra.mxu0 0.0
    %5771 = vmatprep.subr.mxu0 0.0
    %5772 = vmatpush1.msra.mxu0 0.0
    %5773 = vmatprep.subr.mxu0 0.0
    %5774 = vmatpush1.msra.mxu0 0.0
    %5775 = vmatprep.subr.mxu0 0.0
    %5776 = vmatpush1.msra.mxu0 0.0
    %5777 = vmatprep.subr.mxu0 0.0
    %5778 = vmatpush1.msra.mxu0 0.0
    %5779 = vmatprep.subr.mxu0 0.0
    %5780 = vmatpush1.msra.mxu0 0.0
    %5781 = vmatprep.subr.mxu0 0.0
    %5782 = vmatpush1.msra.mxu0 %v5168
    %5783 = vmatprep.subr.mxu0 0.0
    %5784 = vmatpush1.msra.mxu0 %v5167
    %5785 = vmatprep.subr.mxu0 0.0
    %5786 = vmatpush2.msra.mxu0 0.0
    %5787 = vmatprep.subr.mxu0 0.0
    %5788 = vmatpush2.msra.mxu0 0.0
    %5789 = vmatprep.subr.mxu0 0.0
    %5790 = vmatpush2.msra.mxu0 0.0
    %5791 = vmatprep.subr.mxu0 0.0
    %5792 = vmatpush2.msra.mxu0 0.0
    %5793 = vmatprep.subr.mxu0 0.0
    %5794 = vmatpush2.msra.mxu0 0.0
    %5795 = vmatprep.subr.mxu0 0.0
    %5796 = vmatpush2.msra.mxu0 0.0
    %5797 = vmatprep.subr.mxu0 0.0
    %5798 = vmatpush2.msra.mxu0 0.0
    %5799 = vmatprep.subr.mxu0 0.0
    %5800 = vmatpush2.msra.mxu0 0.0
    %5801 = vmatprep.subr.mxu0 0.0
    %5802 = vmatpush2.msra.mxu0 0.0
    %5803 = vmatprep.subr.mxu0 0.0
    %5804 = vmatpush2.msra.mxu0 0.0
    %5805 = vmatprep.subr.mxu0 0.0
    %5806 = vmatpush2.msra.mxu0 0.0
    %5807 = vmatprep.subr.mxu0 0.0
    %5808 = vmatpush2.msra.mxu0 0.0
    %5809 = vmatprep.subr.mxu0 0.0
    %5810 = vmatpush2.msra.mxu0 0.0
    %5811 = vmatprep.subr.mxu0 0.0
    %5812 = vmatpush2.msra.mxu0 0.0
    %5813 = vmatprep.subr.mxu0 0.0
    %5814 = vmatpush2.msra.mxu0 0.0
    %5815 = vmatprep.subr.mxu0 0.0
    %5816 = vmatpush2.msra.mxu0 0.0
    %5817 = vmatprep.mubr.f32.mxu0 0.0
    %5818 = vmatmul.mubr.f32.gmra.mxu0 %v5751
    %v5819 = vpop.f32.mrf.mxu0
    %v5820 = vadd.f32 %v5748, %v5819
    %v5821 = vpop.f32.mrf.mxu0
    %5822 = vdwg.mxu0
    %v5824 = vsel %vm1550, %v5820, 0
    %v5827 = vsel %vm1554, %v5194, 0
    %5829 = vmatprep.subr.mxu0 0.0
    %5830 = vmatpush1.msra.mxu0 0.0
    %5831 = vmatprep.subr.mxu0 0.0
    %5832 = vmatpush1.msra.mxu0 0.0
    %5833 = vmatprep.subr.mxu0 0.0
    %5834 = vmatpush1.msra.mxu0 0.0
    %5835 = vmatprep.subr.mxu0 0.0
    %5836 = vmatpush1.msra.mxu0 0.0
    %5837 = vmatprep.subr.mxu0 0.0
    %5838 = vmatpush1.msra.mxu0 0.0
    %5839 = vmatprep.subr.mxu0 0.0
    %5840 = vmatpush1.msra.mxu0 0.0
    %5841 = vmatprep.subr.mxu0 0.0
    %5842 = vmatpush1.msra.mxu0 0.0
    %5843 = vmatprep.subr.mxu0 0.0
    %5844 = vmatpush1.msra.mxu0 0.0
    %5845 = vmatprep.subr.mxu0 0.0
    %5846 = vmatpush1.msra.mxu0 0.0
    %5847 = vmatprep.subr.mxu0 0.0
    %5848 = vmatpush1.msra.mxu0 0.0
    %5849 = vmatprep.subr.mxu0 0.0
    %5850 = vmatpush1.msra.mxu0 0.0
    %5851 = vmatprep.subr.mxu0 0.0
    %5852 = vmatpush1.msra.mxu0 0.0
    %5853 = vmatprep.subr.mxu0 0.0
    %5854 = vmatpush1.msra.mxu0 0.0
    %5855 = vmatprep.subr.mxu0 0.0
    %5856 = vmatpush1.msra.mxu0 0.0
    %5857 = vmatprep.subr.mxu0 0.0
    %5858 = vmatpush1.msra.mxu0 0.0
    %5859 = vmatprep.subr.mxu0 0.0
    %5860 = vmatpush1.msra.mxu0 %v5827
    %5861 = vmatprep.subr.mxu0 0.0
    %5862 = vmatpush2.msra.mxu0 0.0
    %5863 = vmatprep.subr.mxu0 0.0
    %5864 = vmatpush2.msra.mxu0 0.0
    %5865 = vmatprep.subr.mxu0 0.0
    %5866 = vmatpush2.msra.mxu0 0.0
    %5867 = vmatprep.subr.mxu0 0.0
    %5868 = vmatpush2.msra.mxu0 0.0
    %5869 = vmatprep.subr.mxu0 0.0
    %5870 = vmatpush2.msra.mxu0 0.0
    %5871 = vmatprep.subr.mxu0 0.0
    %5872 = vmatpush2.msra.mxu0 0.0
    %5873 = vmatprep.subr.mxu0 0.0
    %5874 = vmatpush2.msra.mxu0 0.0
    %5875 = vmatprep.subr.mxu0 0.0
    %5876 = vmatpush2.msra.mxu0 0.0
    %5877 = vmatprep.subr.mxu0 0.0
    %5878 = vmatpush2.msra.mxu0 0.0
    %5879 = vmatprep.subr.mxu0 0.0
    %5880 = vmatpush2.msra.mxu0 0.0
    %5881 = vmatprep.subr.mxu0 0.0
    %5882 = vmatpush2.msra.mxu0 0.0
    %5883 = vmatprep.subr.mxu0 0.0
    %5884 = vmatpush2.msra.mxu0 0.0
    %5885 = vmatprep.subr.mxu0 0.0
    %5886 = vmatpush2.msra.mxu0 0.0
    %5887 = vmatprep.subr.mxu0 0.0
    %5888 = vmatpush2.msra.mxu0 0.0
    %5889 = vmatprep.subr.mxu0 0.0
    %5890 = vmatpush2.msra.mxu0 0.0
    %5891 = vmatprep.subr.mxu0 0.0
    %5892 = vmatpush2.msra.mxu0 0.0
    %5893 = vmatprep.mubr.f32.mxu0 0.0
    %5894 = vmatmul.mubr.f32.gmra.mxu0 %v5824
    %v5895 = vpop.f32.mrf.mxu0
    %v5896 = vadd.f32 0.0, %v5895
    %v5897 = vpop.f32.mrf.mxu0
    %5898 = vdwg.mxu0
    %v5899 = vsel %vm1230, %v5896, 0.0
    %5900 = vadd.xlane.f32.xlu0 %v5899
    %v5901 = vpop.xlane.xlu0 %5900
    %v5902 = vmul.f32 %v5896, %v5896
    %v5903 = vsel %vm1230, %v5902, 0.0
    %5904 = vadd.xlane.f32.xlu0 %v5903
    %v5905 = vpop.xlane.xlu0 %5904
    %v5906 = vmul.f32 %v5901, 0.0625
    %v5907 = vmul.f32 %v5905, 0.0625
    %v5908 = vmul.f32 %v5906, %v5906
    %v5909 = vsub.f32 %v5907, %v5908
    %v5910 = vmax.f32 %v5909, 0.0
    %v5911 = vsub.f32 %v5896, %v5906
    %v5912 = vadd.f32 %v5910, 1e-05
    %v5913 = vrsqrt.pop %v5912
    %v5914 = vmul.f32 %v5911, %v5913
    %v5916 = vlaneseq
    %v5917 = vshrl.u32 %v5916, 7
    %v5918 = vsub.s32 0, %v5917
    %v5919 = vrot.slane %v5192, %v5918
    %v5921 = vmul.f32 %v5914, %v5919
    %v5923 = vlaneseq
    %v5924 = vshrl.u32 %v5923, 7
    %v5925 = vsub.s32 0, %v5924
    %v5926 = vrot.slane %v5190, %v5925
    %v5928 = vadd.f32 %v5921, %v5926
    %v5929 = vmax.f32 %v5928, 0.0
    %5931 = vrot.lane.b32.xlu0 %v5929, 32
    %v5932 = vpop.permute.xlu0 %5931
    %v5934 = vsel %vm947, %v5430, %v5932
    %v5936 = vsel %vm1664, %v5934, 0
    %5938 = vmatprep.subr.mxu0 0.0
    %5939 = vmatpush1.msra.mxu0 0.0
    %5940 = vmatprep.subr.mxu0 0.0
    %5941 = vmatpush1.msra.mxu0 0.0
    %5942 = vmatprep.subr.mxu0 0.0
    %5943 = vmatpush1.msra.mxu0 0.0
    %5944 = vmatprep.subr.mxu0 0.0
    %5945 = vmatpush1.msra.mxu0 0.0
    %5946 = vmatprep.subr.mxu0 0.0
    %5947 = vmatpush1.msra.mxu0 0.0
    %5948 = vmatprep.subr.mxu0 0.0
    %5949 = vmatpush1.msra.mxu0 0.0
    %5950 = vmatprep.subr.mxu0 0.0
    %5951 = vmatpush1.msra.mxu0 0.0
    %5952 = vmatprep.subr.mxu0 0.0
    %5953 = vmatpush1.msra.mxu0 0.0
    %5954 = vmatprep.subr.mxu0 0.0
    %5955 = vmatpush1.msra.mxu0 0.0
    %5956 = vmatprep.subr.mxu0 0.0
    %5957 = vmatpush1.msra.mxu0 0.0
    %5958 = vmatprep.subr.mxu0 0.0
    %5959 = vmatpush1.msra.mxu0 %v5152
    %5960 = vmatprep.subr.mxu0 0.0
    %5961 = vmatpush1.msra.mxu0 %v5151
    %5962 = vmatprep.subr.mxu0 0.0
    %5963 = vmatpush1.msra.mxu0 %v5150
    %5964 = vmatprep.subr.mxu0 0.0
    %5965 = vmatpush1.msra.mxu0 %v5149
    %5966 = vmatprep.subr.mxu0 0.0
    %5967 = vmatpush1.msra.mxu0 %v5148
    %5968 = vmatprep.subr.mxu0 0.0
    %5969 = vmatpush1.msra.mxu0 %v5147
    %5970 = vmatprep.subr.mxu0 0.0
    %5971 = vmatpush2.msra.mxu0 0.0
    %5972 = vmatprep.subr.mxu0 0.0
    %5973 = vmatpush2.msra.mxu0 0.0
    %5974 = vmatprep.subr.mxu0 0.0
    %5975 = vmatpush2.msra.mxu0 0.0
    %5976 = vmatprep.subr.mxu0 0.0
    %5977 = vmatpush2.msra.mxu0 0.0
    %5978 = vmatprep.subr.mxu0 0.0
    %5979 = vmatpush2.msra.mxu0 0.0
    %5980 = vmatprep.subr.mxu0 0.0
    %5981 = vmatpush2.msra.mxu0 0.0
    %5982 = vmatprep.subr.mxu0 0.0
    %5983 = vmatpush2.msra.mxu0 0.0
    %5984 = vmatprep.subr.mxu0 0.0
    %5985 = vmatpush2.msra.mxu0 0.0
    %5986 = vmatprep.subr.mxu0 0.0
    %5987 = vmatpush2.msra.mxu0 0.0
    %5988 = vmatprep.subr.mxu0 0.0
    %5989 = vmatpush2.msra.mxu0 0.0
    %5990 = vmatprep.subr.mxu0 0.0
    %5991 = vmatpush2.msra.mxu0 0.0
    %5992 = vmatprep.subr.mxu0 0.0
    %5993 = vmatpush2.msra.mxu0 0.0
    %5994 = vmatprep.subr.mxu0 0.0
    %5995 = vmatpush2.msra.mxu0 0.0
    %5996 = vmatprep.subr.mxu0 0.0
    %5997 = vmatpush2.msra.mxu0 0.0
    %5998 = vmatprep.subr.mxu0 0.0
    %5999 = vmatpush2.msra.mxu0 0.0
    %6000 = vmatprep.subr.mxu0 0.0
    %6001 = vmatpush2.msra.mxu0 0.0
    %6002 = vmatprep.mubr.f32.mxu0 0.0
    %6003 = vmatmul.mubr.f32.gmra.mxu0 %v5936
    %v6004 = vpop.f32.mrf.mxu0
    %v6005 = vadd.f32 0.0, %v6004
    %v6006 = vpop.f32.mrf.mxu0
    %6007 = vdwg.mxu0
    %v6008 = vsel %vm1664, %v6005, 0.0
    %6009 = vadd.xlane.f32.xlu0 %v6008
    %v6010 = vpop.xlane.xlu0 %6009
    %v6011 = vmul.f32 %v6005, %v6005
    %v6012 = vsel %vm1664, %v6011, 0.0
    %6013 = vadd.xlane.f32.xlu0 %v6012
    %v6014 = vpop.xlane.xlu0 %6013
    %v6015 = vmul.f32 %v6010, 0.020833334
    %v6016 = vmul.f32 %v6014, 0.020833334
    %v6017 = vmul.f32 %v6015, %v6015
    %v6018 = vsub.f32 %v6016, %v6017
    %v6019 = vmax.f32 %v6018, 0.0
    %v6020 = vsub.f32 %v6005, %v6015
    %v6021 = vadd.f32 %v6019, 1e-05
    %v6022 = vrsqrt.pop %v6021
    %v6023 = vmul.f32 %v6020, %v6022
    %v6025 = vlaneseq
    %v6026 = vshrl.u32 %v6025, 7
    %v6027 = vsub.s32 0, %v6026
    %v6028 = vrot.slane %v5145, %v6027
    %v6030 = vmul.f32 %v6023, %v6028
    %v6032 = vlaneseq
    %v6033 = vshrl.u32 %v6032, 7
    %v6034 = vsub.s32 0, %v6033
    %v6035 = vrot.slane %v5143, %v6034
    %v6037 = vadd.f32 %v6030, %v6035
    %v6038 = vmax.f32 %v6037, 0.0
    %v6040 = vsel %vm1664, %v6038, 0
    %6042 = vmatprep.subr.mxu0 0.0
    %6043 = vmatpush1.msra.mxu0 0.0
    %6044 = vmatprep.subr.mxu0 0.0
    %6045 = vmatpush1.msra.mxu0 0.0
    %6046 = vmatprep.subr.mxu0 0.0
    %6047 = vmatpush1.msra.mxu0 0.0
    %6048 = vmatprep.subr.mxu0 0.0
    %6049 = vmatpush1.msra.mxu0 0.0
    %6050 = vmatprep.subr.mxu0 0.0
    %6051 = vmatpush1.msra.mxu0 0.0
    %6052 = vmatprep.subr.mxu0 0.0
    %6053 = vmatpush1.msra.mxu0 0.0
    %6054 = vmatprep.subr.mxu0 0.0
    %6055 = vmatpush1.msra.mxu0 0.0
    %6056 = vmatprep.subr.mxu0 0.0
    %6057 = vmatpush1.msra.mxu0 0.0
    %6058 = vmatprep.subr.mxu0 0.0
    %6059 = vmatpush1.msra.mxu0 0.0
    %6060 = vmatprep.subr.mxu0 0.0
    %6061 = vmatpush1.msra.mxu0 0.0
    %6062 = vmatprep.subr.mxu0 0.0
    %6063 = vmatpush1.msra.mxu0 %v5163
    %6064 = vmatprep.subr.mxu0 0.0
    %6065 = vmatpush1.msra.mxu0 %v5162
    %6066 = vmatprep.subr.mxu0 0.0
    %6067 = vmatpush1.msra.mxu0 %v5161
    %6068 = vmatprep.subr.mxu0 0.0
    %6069 = vmatpush1.msra.mxu0 %v5160
    %6070 = vmatprep.subr.mxu0 0.0
    %6071 = vmatpush1.msra.mxu0 %v5159
    %6072 = vmatprep.subr.mxu0 0.0
    %6073 = vmatpush1.msra.mxu0 %v5158
    %6074 = vmatprep.subr.mxu0 0.0
    %6075 = vmatpush2.msra.mxu0 0.0
    %6076 = vmatprep.subr.mxu0 0.0
    %6077 = vmatpush2.msra.mxu0 0.0
    %6078 = vmatprep.subr.mxu0 0.0
    %6079 = vmatpush2.msra.mxu0 0.0
    %6080 = vmatprep.subr.mxu0 0.0
    %6081 = vmatpush2.msra.mxu0 0.0
    %6082 = vmatprep.subr.mxu0 0.0
    %6083 = vmatpush2.msra.mxu0 0.0
    %6084 = vmatprep.subr.mxu0 0.0
    %6085 = vmatpush2.msra.mxu0 0.0
    %6086 = vmatprep.subr.mxu0 0.0
    %6087 = vmatpush2.msra.mxu0 0.0
    %6088 = vmatprep.subr.mxu0 0.0
    %6089 = vmatpush2.msra.mxu0 0.0
    %6090 = vmatprep.subr.mxu0 0.0
    %6091 = vmatpush2.msra.mxu0 0.0
    %6092 = vmatprep.subr.mxu0 0.0
    %6093 = vmatpush2.msra.mxu0 0.0
    %6094 = vmatprep.subr.mxu0 0.0
    %6095 = vmatpush2.msra.mxu0 0.0
    %6096 = vmatprep.subr.mxu0 0.0
    %6097 = vmatpush2.msra.mxu0 0.0
    %6098 = vmatprep.subr.mxu0 0.0
    %6099 = vmatpush2.msra.mxu0 0.0
    %6100 = vmatprep.subr.mxu0 0.0
    %6101 = vmatpush2.msra.mxu0 0.0
    %6102 = vmatprep.subr.mxu0 0.0
    %6103 = vmatpush2.msra.mxu0 0.0
    %6104 = vmatprep.subr.mxu0 0.0
    %6105 = vmatpush2.msra.mxu0 0.0
    %6106 = vmatprep.mubr.f32.mxu0 0.0
    %6107 = vmatmul.mubr.f32.gmra.mxu0 %v6040
    %v6108 = vpop.f32.mrf.mxu0
    %v6109 = vadd.f32 0.0, %v6108
    %v6110 = vpop.f32.mrf.mxu0
    %6111 = vdwg.mxu0
    %v6112 = vsel %vm1664, %v6109, 0.0
    %6113 = vadd.xlane.f32.xlu0 %v6112
    %v6114 = vpop.xlane.xlu0 %6113
    %v6115 = vmul.f32 %v6109, %v6109
    %v6116 = vsel %vm1664, %v6115, 0.0
    %6117 = vadd.xlane.f32.xlu0 %v6116
    %v6118 = vpop.xlane.xlu0 %6117
    %v6119 = vmul.f32 %v6114, 0.020833334
    %v6120 = vmul.f32 %v6118, 0.020833334
    %v6121 = vmul.f32 %v6119, %v6119
    %v6122 = vsub.f32 %v6120, %v6121
    %v6123 = vmax.f32 %v6122, 0.0
    %v6124 = vsub.f32 %v6109, %v6119
    %v6125 = vadd.f32 %v6123, 1e-05
    %v6126 = vrsqrt.pop %v6125
    %v6127 = vmul.f32 %v6124, %v6126
    %v6129 = vlaneseq
    %v6130 = vshrl.u32 %v6129, 7
    %v6131 = vsub.s32 0, %v6130
    %v6132 = vrot.slane %v5156, %v6131
    %v6134 = vmul.f32 %v6127, %v6132
    %v6136 = vlaneseq
    %v6137 = vshrl.u32 %v6136, 7
    %v6138 = vsub.s32 0, %v6137
    %v6139 = vrot.slane %v5154, %v6138
    %v6141 = vadd.f32 %v6134, %v6139
    %v6142 = vadd.f32 %v6141, %v5934
    %v6143 = vmax.f32 %v6142, 0.0
    %v6145 = vlaneseq
    %v6146 = vshrl.u32 %v6145, 7
    %v6147 = vsub.s32 0, %v6146
    %v6148 = vrot.slane %v5134, %v6147
    %v6151 = vsel %vm1664, %v6143, 0
    %6153 = vmatprep.subr.mxu0 0.0
    %6154 = vmatpush1.msra.mxu0 0.0
    %6155 = vmatprep.subr.mxu0 0.0
    %6156 = vmatpush1.msra.mxu0 0.0
    %6157 = vmatprep.subr.mxu0 0.0
    %6158 = vmatpush1.msra.mxu0 0.0
    %6159 = vmatprep.subr.mxu0 0.0
    %6160 = vmatpush1.msra.mxu0 0.0
    %6161 = vmatprep.subr.mxu0 0.0
    %6162 = vmatpush1.msra.mxu0 0.0
    %6163 = vmatprep.subr.mxu0 0.0
    %6164 = vmatpush1.msra.mxu0 0.0
    %6165 = vmatprep.subr.mxu0 0.0
    %6166 = vmatpush1.msra.mxu0 0.0
    %6167 = vmatprep.subr.mxu0 0.0
    %6168 = vmatpush1.msra.mxu0 0.0
    %6169 = vmatprep.subr.mxu0 0.0
    %6170 = vmatpush1.msra.mxu0 0.0
    %6171 = vmatprep.subr.mxu0 0.0
    %6172 = vmatpush1.msra.mxu0 0.0
    %6173 = vmatprep.subr.mxu0 0.0
    %6174 = vmatpush1.msra.mxu0 %v5141
    %6175 = vmatprep.subr.mxu0 0.0
    %6176 = vmatpush1.msra.mxu0 %v5140
    %6177 = vmatprep.subr.mxu0 0.0
    %6178 = vmatpush1.msra.mxu0 %v5139
    %6179 = vmatprep.subr.mxu0 0.0
    %6180 = vmatpush1.msra.mxu0 %v5138
    %6181 = vmatprep.subr.mxu0 0.0
    %6182 = vmatpush1.msra.mxu0 %v5137
    %6183 = vmatprep.subr.mxu0 0.0
    %6184 = vmatpush1.msra.mxu0 %v5136
    %6185 = vmatprep.subr.mxu0 0.0
    %6186 = vmatpush2.msra.mxu0 0.0
    %6187 = vmatprep.subr.mxu0 0.0
    %6188 = vmatpush2.msra.mxu0 0.0
    %6189 = vmatprep.subr.mxu0 0.0
    %6190 = vmatpush2.msra.mxu0 0.0
    %6191 = vmatprep.subr.mxu0 0.0
    %6192 = vmatpush2.msra.mxu0 0.0
    %6193 = vmatprep.subr.mxu0 0.0
    %6194 = vmatpush2.msra.mxu0 0.0
    %6195 = vmatprep.subr.mxu0 0.0
    %6196 = vmatpush2.msra.mxu0 0.0
    %6197 = vmatprep.subr.mxu0 0.0
    %6198 = vmatpush2.msra.mxu0 0.0
    %6199 = vmatprep.subr.mxu0 0.0
    %6200 = vmatpush2.msra.mxu0 0.0
    %6201 = vmatprep.subr.mxu0 0.0
    %6202 = vmatpush2.msra.mxu0 0.0
    %6203 = vmatprep.subr.mxu0 0.0
    %6204 = vmatpush2.msra.mxu0 0.0
    %6205 = vmatprep.subr.mxu0 0.0
    %6206 = vmatpush2.msra.mxu0 0.0
    %6207 = vmatprep.subr.mxu0 0.0
    %6208 = vmatpush2.msra.mxu0 0.0
    %6209 = vmatprep.subr.mxu0 0.0
    %6210 = vmatpush2.msra.mxu0 0.0
    %6211 = vmatprep.subr.mxu0 0.0
    %6212 = vmatpush2.msra.mxu0 0.0
    %6213 = vmatprep.subr.mxu0 0.0
    %6214 = vmatpush2.msra.mxu0 0.0
    %6215 = vmatprep.subr.mxu0 0.0
    %6216 = vmatpush2.msra.mxu0 0.0
    %6217 = vmatprep.mubr.f32.mxu0 0.0
    %6218 = vmatmul.mubr.f32.gmra.mxu0 %v6151
    %v6219 = vpop.f32.mrf.mxu0
    %v6220 = vadd.f32 %v6148, %v6219
    %v6221 = vpop.f32.mrf.mxu0
    %6222 = vdwg.mxu0
    %v6224 = vsel %vm1953, %v6220, 0
    %v6227 = vsel %vm1957, %v5188, 0
    %6229 = vmatprep.subr.mxu0 0.0
    %6230 = vmatpush1.msra.mxu0 0.0
    %6231 = vmatprep.subr.mxu0 0.0
    %6232 = vmatpush1.msra.mxu0 0.0
    %6233 = vmatprep.subr.mxu0 0.0
    %6234 = vmatpush1.msra.mxu0 0.0
    %6235 = vmatprep.subr.mxu0 0.0
    %6236 = vmatpush1.msra.mxu0 0.0
    %6237 = vmatprep.subr.mxu0 0.0
    %6238 = vmatpush1.msra.mxu0 0.0
    %6239 = vmatprep.subr.mxu0 0.0
    %6240 = vmatpush1.msra.mxu0 0.0
    %6241 = vmatprep.subr.mxu0 0.0
    %6242 = vmatpush1.msra.mxu0 0.0
    %6243 = vmatprep.subr.mxu0 0.0
    %6244 = vmatpush1.msra.mxu0 0.0
    %6245 = vmatprep.subr.mxu0 0.0
    %6246 = vmatpush1.msra.mxu0 0.0
    %6247 = vmatprep.subr.mxu0 0.0
    %6248 = vmatpush1.msra.mxu0 0.0
    %6249 = vmatprep.subr.mxu0 0.0
    %6250 = vmatpush1.msra.mxu0 0.0
    %6251 = vmatprep.subr.mxu0 0.0
    %6252 = vmatpush1.msra.mxu0 0.0
    %6253 = vmatprep.subr.mxu0 0.0
    %6254 = vmatpush1.msra.mxu0 0.0
    %6255 = vmatprep.subr.mxu0 0.0
    %6256 = vmatpush1.msra.mxu0 0.0
    %6257 = vmatprep.subr.mxu0 0.0
    %6258 = vmatpush1.msra.mxu0 0.0
    %6259 = vmatprep.subr.mxu0 0.0
    %6260 = vmatpush1.msra.mxu0 %v6227
    %6261 = vmatprep.subr.mxu0 0.0
    %6262 = vmatpush2.msra.mxu0 0.0
    %6263 = vmatprep.subr.mxu0 0.0
    %6264 = vmatpush2.msra.mxu0 0.0
    %6265 = vmatprep.subr.mxu0 0.0
    %6266 = vmatpush2.msra.mxu0 0.0
    %6267 = vmatprep.subr.mxu0 0.0
    %6268 = vmatpush2.msra.mxu0 0.0
    %6269 = vmatprep.subr.mxu0 0.0
    %6270 = vmatpush2.msra.mxu0 0.0
    %6271 = vmatprep.subr.mxu0 0.0
    %6272 = vmatpush2.msra.mxu0 0.0
    %6273 = vmatprep.subr.mxu0 0.0
    %6274 = vmatpush2.msra.mxu0 0.0
    %6275 = vmatprep.subr.mxu0 0.0
    %6276 = vmatpush2.msra.mxu0 0.0
    %6277 = vmatprep.subr.mxu0 0.0
    %6278 = vmatpush2.msra.mxu0 0.0
    %6279 = vmatprep.subr.mxu0 0.0
    %6280 = vmatpush2.msra.mxu0 0.0
    %6281 = vmatprep.subr.mxu0 0.0
    %6282 = vmatpush2.msra.mxu0 0.0
    %6283 = vmatprep.subr.mxu0 0.0
    %6284 = vmatpush2.msra.mxu0 0.0
    %6285 = vmatprep.subr.mxu0 0.0
    %6286 = vmatpush2.msra.mxu0 0.0
    %6287 = vmatprep.subr.mxu0 0.0
    %6288 = vmatpush2.msra.mxu0 0.0
    %6289 = vmatprep.subr.mxu0 0.0
    %6290 = vmatpush2.msra.mxu0 0.0
    %6291 = vmatprep.subr.mxu0 0.0
    %6292 = vmatpush2.msra.mxu0 0.0
    %6293 = vmatprep.mubr.f32.mxu0 0.0
    %6294 = vmatmul.mubr.f32.gmra.mxu0 %v6224
    %v6295 = vpop.f32.mrf.mxu0
    %v6296 = vadd.f32 0.0, %v6295
    %v6297 = vpop.f32.mrf.mxu0
    %6298 = vdwg.mxu0
    %v6299 = vsel %vm947, %v6296, 0.0
    %6300 = vadd.xlane.f32.xlu0 %v6299
    %v6301 = vpop.xlane.xlu0 %6300
    %v6302 = vmul.f32 %v6296, %v6296
    %v6303 = vsel %vm947, %v6302, 0.0
    %6304 = vadd.xlane.f32.xlu0 %v6303
    %v6305 = vpop.xlane.xlu0 %6304
    %v6306 = vmul.f32 %v6301, 0.03125
    %v6307 = vmul.f32 %v6305, 0.03125
    %v6308 = vmul.f32 %v6306, %v6306
    %v6309 = vsub.f32 %v6307, %v6308
    %v6310 = vmax.f32 %v6309, 0.0
    %v6311 = vsub.f32 %v6296, %v6306
    %v6312 = vadd.f32 %v6310, 1e-05
    %v6313 = vrsqrt.pop %v6312
    %v6314 = vmul.f32 %v6311, %v6313
    %v6316 = vlaneseq
    %v6317 = vshrl.u32 %v6316, 7
    %v6318 = vsub.s32 0, %v6317
    %v6319 = vrot.slane %v5186, %v6318
    %v6321 = vmul.f32 %v6314, %v6319
    %v6323 = vlaneseq
    %v6324 = vshrl.u32 %v6323, 7
    %v6325 = vsub.s32 0, %v6324
    %v6326 = vrot.slane %v5184, %v6325
    %v6328 = vadd.f32 %v6321, %v6326
    %v6329 = vmax.f32 %v6328, 0.0
    %6331 = vrot.lane.b32.xlu0 %v6329, 64
    %v6332 = vpop.permute.xlu0 %6331
    %v6334 = vsel %vm1021, %v5326, %v6332
    %v6336 = vsel %vm2067, %v6334, 0
    %6338 = vmatprep.subr.mxu0 0.0
    %6339 = vmatpush1.msra.mxu0 0.0
    %6340 = vmatprep.subr.mxu0 0.0
    %6341 = vmatpush1.msra.mxu0 0.0
    %6342 = vmatprep.subr.mxu0 0.0
    %6343 = vmatpush1.msra.mxu0 0.0
    %6344 = vmatprep.subr.mxu0 0.0
    %6345 = vmatpush1.msra.mxu0 0.0
    %6346 = vmatprep.subr.mxu0 0.0
    %6347 = vmatpush1.msra.mxu0 %v5115
    %6348 = vmatprep.subr.mxu0 0.0
    %6349 = vmatpush1.msra.mxu0 %v5114
    %6350 = vmatprep.subr.mxu0 0.0
    %6351 = vmatpush1.msra.mxu0 %v5113
    %6352 = vmatprep.subr.mxu0 0.0
    %6353 = vmatpush1.msra.mxu0 %v5112
    %6354 = vmatprep.subr.mxu0 0.0
    %6355 = vmatpush1.msra.mxu0 %v5111
    %6356 = vmatprep.subr.mxu0 0.0
    %6357 = vmatpush1.msra.mxu0 %v5110
    %6358 = vmatprep.subr.mxu0 0.0
    %6359 = vmatpush1.msra.mxu0 %v5109
    %6360 = vmatprep.subr.mxu0 0.0
    %6361 = vmatpush1.msra.mxu0 %v5108
    %6362 = vmatprep.subr.mxu0 0.0
    %6363 = vmatpush1.msra.mxu0 %v5107
    %6364 = vmatprep.subr.mxu0 0.0
    %6365 = vmatpush1.msra.mxu0 %v5106
    %6366 = vmatprep.subr.mxu0 0.0
    %6367 = vmatpush1.msra.mxu0 %v5105
    %6368 = vmatprep.subr.mxu0 0.0
    %6369 = vmatpush1.msra.mxu0 %v5104
    %6370 = vmatprep.subr.mxu0 0.0
    %6371 = vmatpush2.msra.mxu0 0.0
    %6372 = vmatprep.subr.mxu0 0.0
    %6373 = vmatpush2.msra.mxu0 0.0
    %6374 = vmatprep.subr.mxu0 0.0
    %6375 = vmatpush2.msra.mxu0 0.0
    %6376 = vmatprep.subr.mxu0 0.0
    %6377 = vmatpush2.msra.mxu0 0.0
    %6378 = vmatprep.subr.mxu0 0.0
    %6379 = vmatpush2.msra.mxu0 0.0
    %6380 = vmatprep.subr.mxu0 0.0
    %6381 = vmatpush2.msra.mxu0 0.0
    %6382 = vmatprep.subr.mxu0 0.0
    %6383 = vmatpush2.msra.mxu0 0.0
    %6384 = vmatprep.subr.mxu0 0.0
    %6385 = vmatpush2.msra.mxu0 0.0
    %6386 = vmatprep.subr.mxu0 0.0
    %6387 = vmatpush2.msra.mxu0 0.0
    %6388 = vmatprep.subr.mxu0 0.0
    %6389 = vmatpush2.msra.mxu0 0.0
    %6390 = vmatprep.subr.mxu0 0.0
    %6391 = vmatpush2.msra.mxu0 0.0
    %6392 = vmatprep.subr.mxu0 0.0
    %6393 = vmatpush2.msra.mxu0 0.0
    %6394 = vmatprep.subr.mxu0 0.0
    %6395 = vmatpush2.msra.mxu0 0.0
    %6396 = vmatprep.subr.mxu0 0.0
    %6397 = vmatpush2.msra.mxu0 0.0
    %6398 = vmatprep.subr.mxu0 0.0
    %6399 = vmatpush2.msra.mxu0 0.0
    %6400 = vmatprep.subr.mxu0 0.0
    %6401 = vmatpush2.msra.mxu0 0.0
    %6402 = vmatprep.mubr.f32.mxu0 0.0
    %6403 = vmatmul.mubr.f32.gmra.mxu0 %v6336
    %v6404 = vpop.f32.mrf.mxu0
    %v6405 = vadd.f32 0.0, %v6404
    %v6406 = vpop.f32.mrf.mxu0
    %6407 = vdwg.mxu0
    %v6408 = vsel %vm2067, %v6405, 0.0
    %6409 = vadd.xlane.f32.xlu0 %v6408
    %v6410 = vpop.xlane.xlu0 %6409
    %v6411 = vmul.f32 %v6405, %v6405
    %v6412 = vsel %vm2067, %v6411, 0.0
    %6413 = vadd.xlane.f32.xlu0 %v6412
    %v6414 = vpop.xlane.xlu0 %6413
    %v6415 = vmul.f32 %v6410, 0.010416667
    %v6416 = vmul.f32 %v6414, 0.010416667
    %v6417 = vmul.f32 %v6415, %v6415
    %v6418 = vsub.f32 %v6416, %v6417
    %v6419 = vmax.f32 %v6418, 0.0
    %v6420 = vsub.f32 %v6405, %v6415
    %v6421 = vadd.f32 %v6419, 1e-05
    %v6422 = vrsqrt.pop %v6421
    %v6423 = vmul.f32 %v6420, %v6422
    %v6425 = vlaneseq
    %v6426 = vshrl.u32 %v6425, 7
    %v6427 = vsub.s32 0, %v6426
    %v6428 = vrot.slane %v5102, %v6427
    %v6430 = vmul.f32 %v6423, %v6428
    %v6432 = vlaneseq
    %v6433 = vshrl.u32 %v6432, 7
    %v6434 = vsub.s32 0, %v6433
    %v6435 = vrot.slane %v5100, %v6434
    %v6437 = vadd.f32 %v6430, %v6435
    %v6438 = vmax.f32 %v6437, 0.0
    %v6440 = vsel %vm2067, %v6438, 0
    %6442 = vmatprep.subr.mxu0 0.0
    %6443 = vmatpush1.msra.mxu0 0.0
    %6444 = vmatprep.subr.mxu0 0.0
    %6445 = vmatpush1.msra.mxu0 0.0
    %6446 = vmatprep.subr.mxu0 0.0
    %6447 = vmatpush1.msra.mxu0 0.0
    %6448 = vmatprep.subr.mxu0 0.0
    %6449 = vmatpush1.msra.mxu0 0.0
    %6450 = vmatprep.subr.mxu0 0.0
    %6451 = vmatpush1.msra.mxu0 %v5132
    %6452 = vmatprep.subr.mxu0 0.0
    %6453 = vmatpush1.msra.mxu0 %v5131
    %6454 = vmatprep.subr.mxu0 0.0
    %6455 = vmatpush1.msra.mxu0 %v5130
    %6456 = vmatprep.subr.mxu0 0.0
    %6457 = vmatpush1.msra.mxu0 %v5129
    %6458 = vmatprep.subr.mxu0 0.0
    %6459 = vmatpush1.msra.mxu0 %v5128
    %6460 = vmatprep.subr.mxu0 0.0
    %6461 = vmatpush1.msra.mxu0 %v5127
    %6462 = vmatprep.subr.mxu0 0.0
    %6463 = vmatpush1.msra.mxu0 %v5126
    %6464 = vmatprep.subr.mxu0 0.0
    %6465 = vmatpush1.msra.mxu0 %v5125
    %6466 = vmatprep.subr.mxu0 0.0
    %6467 = vmatpush1.msra.mxu0 %v5124
    %6468 = vmatprep.subr.mxu0 0.0
    %6469 = vmatpush1.msra.mxu0 %v5123
    %6470 = vmatprep.subr.mxu0 0.0
    %6471 = vmatpush1.msra.mxu0 %v5122
    %6472 = vmatprep.subr.mxu0 0.0
    %6473 = vmatpush1.msra.mxu0 %v5121
    %6474 = vmatprep.subr.mxu0 0.0
    %6475 = vmatpush2.msra.mxu0 0.0
    %6476 = vmatprep.subr.mxu0 0.0
    %6477 = vmatpush2.msra.mxu0 0.0
    %6478 = vmatprep.subr.mxu0 0.0
    %6479 = vmatpush2.msra.mxu0 0.0
    %6480 = vmatprep.subr.mxu0 0.0
    %6481 = vmatpush2.msra.mxu0 0.0
    %6482 = vmatprep.subr.mxu0 0.0
    %6483 = vmatpush2.msra.mxu0 0.0
    %6484 = vmatprep.subr.mxu0 0.0
    %6485 = vmatpush2.msra.mxu0 0.0
    %6486 = vmatprep.subr.mxu0 0.0
    %6487 = vmatpush2.msra.mxu0 0.0
    %6488 = vmatprep.subr.mxu0 0.0
    %6489 = vmatpush2.msra.mxu0 0.0
    %6490 = vmatprep.subr.mxu0 0.0
    %6491 = vmatpush2.msra.mxu0 0.0
    %6492 = vmatprep.subr.mxu0 0.0
    %6493 = vmatpush2.msra.mxu0 0.0
    %6494 = vmatprep.subr.mxu0 0.0
    %6495 = vmatpush2.msra.mxu0 0.0
    %6496 = vmatprep.subr.mxu0 0.0
    %6497 = vmatpush2.msra.mxu0 0.0
    %6498 = vmatprep.subr.mxu0 0.0
    %6499 = vmatpush2.msra.mxu0 0.0
    %6500 = vmatprep.subr.mxu0 0.0
    %6501 = vmatpush2.msra.mxu0 0.0
    %6502 = vmatprep.subr.mxu0 0.0
    %6503 = vmatpush2.msra.mxu0 0.0
    %6504 = vmatprep.subr.mxu0 0.0
    %6505 = vmatpush2.msra.mxu0 0.0
    %6506 = vmatprep.mubr.f32.mxu0 0.0
    %6507 = vmatmul.mubr.f32.gmra.mxu0 %v6440
    %v6508 = vpop.f32.mrf.mxu0
    %v6509 = vadd.f32 0.0, %v6508
    %v6510 = vpop.f32.mrf.mxu0
    %6511 = vdwg.mxu0
    %v6512 = vsel %vm2067, %v6509, 0.0
    %6513 = vadd.xlane.f32.xlu0 %v6512
    %v6514 = vpop.xlane.xlu0 %6513
    %v6515 = vmul.f32 %v6509, %v6509
    %v6516 = vsel %vm2067, %v6515, 0.0
    %6517 = vadd.xlane.f32.xlu0 %v6516
    %v6518 = vpop.xlane.xlu0 %6517
    %v6519 = vmul.f32 %v6514, 0.010416667
    %v6520 = vmul.f32 %v6518, 0.010416667
    %v6521 = vmul.f32 %v6519, %v6519
    %v6522 = vsub.f32 %v6520, %v6521
    %v6523 = vmax.f32 %v6522, 0.0
    %v6524 = vsub.f32 %v6509, %v6519
    %v6525 = vadd.f32 %v6523, 1e-05
    %v6526 = vrsqrt.pop %v6525
    %v6527 = vmul.f32 %v6524, %v6526
    %v6529 = vlaneseq
    %v6530 = vshrl.u32 %v6529, 7
    %v6531 = vsub.s32 0, %v6530
    %v6532 = vrot.slane %v5119, %v6531
    %v6534 = vmul.f32 %v6527, %v6532
    %v6536 = vlaneseq
    %v6537 = vshrl.u32 %v6536, 7
    %v6538 = vsub.s32 0, %v6537
    %v6539 = vrot.slane %v5117, %v6538
    %v6541 = vadd.f32 %v6534, %v6539
    %v6542 = vadd.f32 %v6541, %v6334
    %v6543 = vmax.f32 %v6542, 0.0
    %v6545 = vlaneseq
    %v6546 = vshrl.u32 %v6545, 7
    %v6547 = vsub.s32 0, %v6546
    %v6548 = vrot.slane %v5085, %v6547
    %v6551 = vsel %vm2067, %v6543, 0
    %6553 = vmatprep.subr.mxu0 0.0
    %6554 = vmatpush1.msra.mxu0 0.0
    %6555 = vmatprep.subr.mxu0 0.0
    %6556 = vmatpush1.msra.mxu0 0.0
    %6557 = vmatprep.subr.mxu0 0.0
    %6558 = vmatpush1.msra.mxu0 0.0
    %6559 = vmatprep.subr.mxu0 0.0
    %6560 = vmatpush1.msra.mxu0 0.0
    %6561 = vmatprep.subr.mxu0 0.0
    %6562 = vmatpush1.msra.mxu0 %v5098
    %6563 = vmatprep.subr.mxu0 0.0
    %6564 = vmatpush1.msra.mxu0 %v5097
    %6565 = vmatprep.subr.mxu0 0.0
    %6566 = vmatpush1.msra.mxu0 %v5096
    %6567 = vmatprep.subr.mxu0 0.0
    %6568 = vmatpush1.msra.mxu0 %v5095
    %6569 = vmatprep.subr.mxu0 0.0
    %6570 = vmatpush1.msra.mxu0 %v5094
    %6571 = vmatprep.subr.mxu0 0.0
    %6572 = vmatpush1.msra.mxu0 %v5093
    %6573 = vmatprep.subr.mxu0 0.0
    %6574 = vmatpush1.msra.mxu0 %v5092
    %6575 = vmatprep.subr.mxu0 0.0
    %6576 = vmatpush1.msra.mxu0 %v5091
    %6577 = vmatprep.subr.mxu0 0.0
    %6578 = vmatpush1.msra.mxu0 %v5090
    %6579 = vmatprep.subr.mxu0 0.0
    %6580 = vmatpush1.msra.mxu0 %v5089
    %6581 = vmatprep.subr.mxu0 0.0
    %6582 = vmatpush1.msra.mxu0 %v5088
    %6583 = vmatprep.subr.mxu0 0.0
    %6584 = vmatpush1.msra.mxu0 %v5087
    %6585 = vmatprep.subr.mxu0 0.0
    %6586 = vmatpush2.msra.mxu0 0.0
    %6587 = vmatprep.subr.mxu0 0.0
    %6588 = vmatpush2.msra.mxu0 0.0
    %6589 = vmatprep.subr.mxu0 0.0
    %6590 = vmatpush2.msra.mxu0 0.0
    %6591 = vmatprep.subr.mxu0 0.0
    %6592 = vmatpush2.msra.mxu0 0.0
    %6593 = vmatprep.subr.mxu0 0.0
    %6594 = vmatpush2.msra.mxu0 0.0
    %6595 = vmatprep.subr.mxu0 0.0
    %6596 = vmatpush2.msra.mxu0 0.0
    %6597 = vmatprep.subr.mxu0 0.0
    %6598 = vmatpush2.msra.mxu0 0.0
    %6599 = vmatprep.subr.mxu0 0.0
    %6600 = vmatpush2.msra.mxu0 0.0
    %6601 = vmatprep.subr.mxu0 0.0
    %6602 = vmatpush2.msra.mxu0 0.0
    %6603 = vmatprep.subr.mxu0 0.0
    %6604 = vmatpush2.msra.mxu0 0.0
    %6605 = vmatprep.subr.mxu0 0.0
    %6606 = vmatpush2.msra.mxu0 0.0
    %6607 = vmatprep.subr.mxu0 0.0
    %6608 = vmatpush2.msra.mxu0 0.0
    %6609 = vmatprep.subr.mxu0 0.0
    %6610 = vmatpush2.msra.mxu0 0.0
    %6611 = vmatprep.subr.mxu0 0.0
    %6612 = vmatpush2.msra.mxu0 0.0
    %6613 = vmatprep.subr.mxu0 0.0
    %6614 = vmatpush2.msra.mxu0 0.0
    %6615 = vmatprep.subr.mxu0 0.0
    %6616 = vmatpush2.msra.mxu0 0.0
    %6617 = vmatprep.mubr.f32.mxu0 0.0
    %6618 = vmatmul.mubr.f32.gmra.mxu0 %v6551
    %v6619 = vpop.f32.mrf.mxu0
    %v6620 = vadd.f32 %v6548, %v6619
    %v6621 = vpop.f32.mrf.mxu0
    %6622 = vdwg.mxu0
    %6623 = vrot.lane.b32.xlu0 %v6220, 2
    %v6624 = vpop.permute.xlu0 %6623
    %v6626 = vsel %vm1550, %v5820, %v6624
    %v6627 = vadd.f32 %v6620, %v2362
    %6629 = vrot.lane.b32.xlu0 %v6627, 70
    %v6630 = vpop.permute.xlu0 %6629
    %v6632 = vsub.f32 %v808, %v6630
    %v6634 = vsel %vm1550, %v6632, 0
    %6636 = vmatprep.subr.mxu0 0.0
    %6637 = vmatpush1.msra.mxu0 0.0
    %6638 = vmatprep.subr.mxu0 0.0
    %6639 = vmatpush1.msra.mxu0 0.0
    %6640 = vmatprep.subr.mxu0 0.0
    %6641 = vmatpush1.msra.mxu0 0.0
    %6642 = vmatprep.subr.mxu0 0.0
    %6643 = vmatpush1.msra.mxu0 0.0
    %6644 = vmatprep.subr.mxu0 0.0
    %6645 = vmatpush1.msra.mxu0 0.0
    %6646 = vmatprep.subr.mxu0 0.0
    %6647 = vmatpush1.msra.mxu0 0.0
    %6648 = vmatprep.subr.mxu0 0.0
    %6649 = vmatpush1.msra.mxu0 0.0
    %6650 = vmatprep.subr.mxu0 0.0
    %6651 = vmatpush1.msra.mxu0 0.0
    %6652 = vmatprep.subr.mxu0 0.0
    %6653 = vmatpush1.msra.mxu0 0.0
    %6654 = vmatprep.subr.mxu0 0.0
    %6655 = vmatpush1.msra.mxu0 0.0
    %6656 = vmatprep.subr.mxu0 0.0
    %6657 = vmatpush1.msra.mxu0 0.0
    %6658 = vmatprep.subr.mxu0 0.0
    %6659 = vmatpush1.msra.mxu0 0.0
    %6660 = vmatprep.subr.mxu0 0.0
    %6661 = vmatpush1.msra.mxu0 0.0
    %6662 = vmatprep.subr.mxu0 0.0
    %6663 = vmatpush1.msra.mxu0 0.0
    %6664 = vmatprep.subr.mxu0 0.0
    %6665 = vmatpush1.msra.mxu0 0.0
    %6666 = vmatprep.subr.mxu0 0.0
    %6667 = vmatpush1.msra.mxu0 %v2380
    %6668 = vmatprep.subr.mxu0 0.0
    %6669 = vmatpush2.msra.mxu0 0.0
    %6670 = vmatprep.subr.mxu0 0.0
    %6671 = vmatpush2.msra.mxu0 0.0
    %6672 = vmatprep.subr.mxu0 0.0
    %6673 = vmatpush2.msra.mxu0 0.0
    %6674 = vmatprep.subr.mxu0 0.0
    %6675 = vmatpush2.msra.mxu0 0.0
    %6676 = vmatprep.subr.mxu0 0.0
    %6677 = vmatpush2.msra.mxu0 0.0
    %6678 = vmatprep.subr.mxu0 0.0
    %6679 = vmatpush2.msra.mxu0 0.0
    %6680 = vmatprep.subr.mxu0 0.0
    %6681 = vmatpush2.msra.mxu0 0.0
    %6682 = vmatprep.subr.mxu0 0.0
    %6683 = vmatpush2.msra.mxu0 0.0
    %6684 = vmatprep.subr.mxu0 0.0
    %6685 = vmatpush2.msra.mxu0 0.0
    %6686 = vmatprep.subr.mxu0 0.0
    %6687 = vmatpush2.msra.mxu0 0.0
    %6688 = vmatprep.subr.mxu0 0.0
    %6689 = vmatpush2.msra.mxu0 0.0
    %6690 = vmatprep.subr.mxu0 0.0
    %6691 = vmatpush2.msra.mxu0 0.0
    %6692 = vmatprep.subr.mxu0 0.0
    %6693 = vmatpush2.msra.mxu0 0.0
    %6694 = vmatprep.subr.mxu0 0.0
    %6695 = vmatpush2.msra.mxu0 0.0
    %6696 = vmatprep.subr.mxu0 0.0
    %6697 = vmatpush2.msra.mxu0 0.0
    %6698 = vmatprep.subr.mxu0 0.0
    %6699 = vmatpush2.msra.mxu0 0.0
    %6700 = vmatprep.mubr.f32.mxu0 0.0
    %6701 = vmatmul.mubr.f32.gmra.mxu0 %v6634
    %v6702 = vpop.f32.mrf.mxu0
    %v6703 = vadd.f32 %v2374, %v6702
    %v6704 = vpop.f32.mrf.mxu0
    %6705 = vdwg.mxu0
    %v6706 = vmax.f32 %v6703, 0.0
    %v6708 = vsel %vm947, %v6706, 0
    %6710 = vmatprep.subr.mxu0 0.0
    %6711 = vmatpush1.msra.mxu0 0.0
    %6712 = vmatprep.subr.mxu0 0.0
    %6713 = vmatpush1.msra.mxu0 0.0
    %6714 = vmatprep.subr.mxu0 0.0
    %6715 = vmatpush1.msra.mxu0 0.0
    %6716 = vmatprep.subr.mxu0 0.0
    %6717 = vmatpush1.msra.mxu0 0.0
    %6718 = vmatprep.subr.mxu0 0.0
    %6719 = vmatpush1.msra.mxu0 0.0
    %6720 = vmatprep.subr.mxu0 0.0
    %6721 = vmatpush1.msra.mxu0 0.0
    %6722 = vmatprep.subr.mxu0 0.0
    %6723 = vmatpush1.msra.mxu0 0.0
    %6724 = vmatprep.subr.mxu0 0.0
    %6725 = vmatpush1.msra.mxu0 0.0
    %6726 = vmatprep.subr.mxu0 0.0
    %6727 = vmatpush1.msra.mxu0 0.0
    %6728 = vmatprep.subr.mxu0 0.0
    %6729 = vmatpush1.msra.mxu0 0.0
    %6730 = vmatprep.subr.mxu0 0.0
    %6731 = vmatpush1.msra.mxu0 0.0
    %6732 = vmatprep.subr.mxu0 0.0
    %6733 = vmatpush1.msra.mxu0 0.0
    %6734 = vmatprep.subr.mxu0 0.0
    %6735 = vmatpush1.msra.mxu0 %v826
    %6736 = vmatprep.subr.mxu0 0.0
    %6737 = vmatpush1.msra.mxu0 %v825
    %6738 = vmatprep.subr.mxu0 0.0
    %6739 = vmatpush1.msra.mxu0 %v824
    %6740 = vmatprep.subr.mxu0 0.0
    %6741 = vmatpush1.msra.mxu0 %v823
    %6742 = vmatprep.subr.mxu0 0.0
    %6743 = vmatpush2.msra.mxu0 0.0
    %6744 = vmatprep.subr.mxu0 0.0
    %6745 = vmatpush2.msra.mxu0 0.0
    %6746 = vmatprep.subr.mxu0 0.0
    %6747 = vmatpush2.msra.mxu0 0.0
    %6748 = vmatprep.subr.mxu0 0.0
    %6749 = vmatpush2.msra.mxu0 0.0
    %6750 = vmatprep.subr.mxu0 0.0
    %6751 = vmatpush2.msra.mxu0 0.0
    %6752 = vmatprep.subr.mxu0 0.0
    %6753 = vmatpush2.msra.mxu0 0.0
    %6754 = vmatprep.subr.mxu0 0.0
    %6755 = vmatpush2.msra.mxu0 0.0
    %6756 = vmatprep.subr.mxu0 0.0
    %6757 = vmatpush2.msra.mxu0 0.0
    %6758 = vmatprep.subr.mxu0 0.0
    %6759 = vmatpush2.msra.mxu0 0.0
    %6760 = vmatprep.subr.mxu0 0.0
    %6761 = vmatpush2.msra.mxu0 0.0
    %6762 = vmatprep.subr.mxu0 0.0
    %6763 = vmatpush2.msra.mxu0 0.0
    %6764 = vmatprep.subr.mxu0 0.0
    %6765 = vmatpush2.msra.mxu0 0.0
    %6766 = vmatprep.subr.mxu0 0.0
    %6767 = vmatpush2.msra.mxu0 0.0
    %6768 = vmatprep.subr.mxu0 0.0
    %6769 = vmatpush2.msra.mxu0 0.0
    %6770 = vmatprep.subr.mxu0 0.0
    %6771 = vmatpush2.msra.mxu0 0.0
    %6772 = vmatprep.subr.mxu0 0.0
    %6773 = vmatpush2.msra.mxu0 0.0
    %6774 = vmatprep.mubr.f32.mxu0 0.0
    %6775 = vmatmul.mubr.f32.gmra.mxu0 %v6708
    %v6776 = vpop.f32.mrf.mxu0
    %v6777 = vadd.f32 0.0, %v6776
    %v6778 = vpop.f32.mrf.mxu0
    %6779 = vdwg.mxu0
    %v6780 = vsel %vm947, %v6777, 0.0
    %6781 = vadd.xlane.f32.xlu0 %v6780
    %v6782 = vpop.xlane.xlu0 %6781
    %v6783 = vmul.f32 %v6777, %v6777
    %v6784 = vsel %vm947, %v6783, 0.0
    %6785 = vadd.xlane.f32.xlu0 %v6784
    %v6786 = vpop.xlane.xlu0 %6785
    %v6787 = vmul.f32 %v6782, 0.03125
    %v6788 = vmul.f32 %v6786, 0.03125
    %v6789 = vmul.f32 %v6787, %v6787
    %v6790 = vsub.f32 %v6788, %v6789
    %v6791 = vmax.f32 %v6790, 0.0
    %v6792 = vsub.f32 %v6777, %v6787
    %v6793 = vadd.f32 %v6791, 1e-05
    %v6794 = vrsqrt.pop %v6793
    %v6795 = vmul.f32 %v6792, %v6794
    %v6796 = vmul.f32 %v6795, %v2546
    %v6797 = vadd.f32 %v6796, %v2553
    %v6798 = vmax.f32 %v6797, 0.0
    %v6800 = vsel %vm947, %v6798, 0
    %6802 = vmatprep.subr.mxu0 0.0
    %6803 = vmatpush1.msra.mxu0 0.0
    %6804 = vmatprep.subr.mxu0 0.0
    %6805 = vmatpush1.msra.mxu0 0.0
    %6806 = vmatprep.subr.mxu0 0.0
    %6807 = vmatpush1.msra.mxu0 0.0
    %6808 = vmatprep.subr.mxu0 0.0
    %6809 = vmatpush1.msra.mxu0 0.0
    %6810 = vmatprep.subr.mxu0 0.0
    %6811 = vmatpush1.msra.mxu0 0.0
    %6812 = vmatprep.subr.mxu0 0.0
    %6813 = vmatpush1.msra.mxu0 0.0
    %6814 = vmatprep.subr.mxu0 0.0
    %6815 = vmatpush1.msra.mxu0 0.0
    %6816 = vmatprep.subr.mxu0 0.0
    %6817 = vmatpush1.msra.mxu0 0.0
    %6818 = vmatprep.subr.mxu0 0.0
    %6819 = vmatpush1.msra.mxu0 0.0
    %6820 = vmatprep.subr.mxu0 0.0
    %6821 = vmatpush1.msra.mxu0 0.0
    %6822 = vmatprep.subr.mxu0 0.0
    %6823 = vmatpush1.msra.mxu0 0.0
    %6824 = vmatprep.subr.mxu0 0.0
    %6825 = vmatpush1.msra.mxu0 0.0
    %6826 = vmatprep.subr.mxu0 0.0
    %6827 = vmatpush1.msra.mxu0 %v818
    %6828 = vmatprep.subr.mxu0 0.0
    %6829 = vmatpush1.msra.mxu0 %v817
    %6830 = vmatprep.subr.mxu0 0.0
    %6831 = vmatpush1.msra.mxu0 %v816
    %6832 = vmatprep.subr.mxu0 0.0
    %6833 = vmatpush1.msra.mxu0 %v815
    %6834 = vmatprep.subr.mxu0 0.0
    %6835 = vmatpush2.msra.mxu0 0.0
    %6836 = vmatprep.subr.mxu0 0.0
    %6837 = vmatpush2.msra.mxu0 0.0
    %6838 = vmatprep.subr.mxu0 0.0
    %6839 = vmatpush2.msra.mxu0 0.0
    %6840 = vmatprep.subr.mxu0 0.0
    %6841 = vmatpush2.msra.mxu0 0.0
    %6842 = vmatprep.subr.mxu0 0.0
    %6843 = vmatpush2.msra.mxu0 0.0
    %6844 = vmatprep.subr.mxu0 0.0
    %6845 = vmatpush2.msra.mxu0 0.0
    %6846 = vmatprep.subr.mxu0 0.0
    %6847 = vmatpush2.msra.mxu0 0.0
    %6848 = vmatprep.subr.mxu0 0.0
    %6849 = vmatpush2.msra.mxu0 0.0
    %6850 = vmatprep.subr.mxu0 0.0
    %6851 = vmatpush2.msra.mxu0 0.0
    %6852 = vmatprep.subr.mxu0 0.0
    %6853 = vmatpush2.msra.mxu0 0.0
    %6854 = vmatprep.subr.mxu0 0.0
    %6855 = vmatpush2.msra.mxu0 0.0
    %6856 = vmatprep.subr.mxu0 0.0
    %6857 = vmatpush2.msra.mxu0 0.0
    %6858 = vmatprep.subr.mxu0 0.0
    %6859 = vmatpush2.msra.mxu0 0.0
    %6860 = vmatprep.subr.mxu0 0.0
    %6861 = vmatpush2.msra.mxu0 0.0
    %6862 = vmatprep.subr.mxu0 0.0
    %6863 = vmatpush2.msra.mxu0 0.0
    %6864 = vmatprep.subr.mxu0 0.0
    %6865 = vmatpush2.msra.mxu0 0.0
    %6866 = vmatprep.mubr.f32.mxu0 0.0
    %6867 = vmatmul.mubr.f32.gmra.mxu0 %v6800
    %v6868 = vpop.f32.mrf.mxu0
    %v6869 = vadd.f32 %v2624, %v6868
    %v6870 = vpop.f32.mrf.mxu0
    %6871 = vdwg.mxu0
    %v6872 = vsel %vm947, %v6869, 0.0
    %6873 = vadd.xlane.f32.xlu0 %v6872
    %v6874 = vpop.xlane.xlu0 %6873
    %v6875 = vmul.f32 %v6869, %v6869
    %v6876 = vsel %vm947, %v6875, 0.0
    %6877 = vadd.xlane.f32.xlu0 %v6876
    %v6878 = vpop.xlane.xlu0 %6877
    %v6879 = vmul.f32 %v6874, 0.03125
    %v6880 = vmul.f32 %v6878, 0.03125
    %v6881 = vmul.f32 %v6879, %v6879
    %v6882 = vsub.f32 %v6880, %v6881
    %v6883 = vmax.f32 %v6882, 0.0
    %v6884 = vsub.f32 %v6869, %v6879
    %v6885 = vadd.f32 %v6883, 1e-05
    %v6886 = vrsqrt.pop %v6885
    %v6887 = vmul.f32 %v6884, %v6886
    %v6888 = vmul.f32 %v6887, %v2720
    %v6889 = vadd.f32 %v6888, %v2727
    %v6890 = vmax.f32 %v6889, 0.0
    %v6892 = vsel %vm947, %v6890, 0
    %6894 = vmatprep.subr.mxu0 0.0
    %6895 = vmatpush1.msra.mxu0 0.0
    %6896 = vmatprep.subr.mxu0 0.0
    %6897 = vmatpush1.msra.mxu0 0.0
    %6898 = vmatprep.subr.mxu0 0.0
    %6899 = vmatpush1.msra.mxu0 0.0
    %6900 = vmatprep.subr.mxu0 0.0
    %6901 = vmatpush1.msra.mxu0 0.0
    %6902 = vmatprep.subr.mxu0 0.0
    %6903 = vmatpush1.msra.mxu0 0.0
    %6904 = vmatprep.subr.mxu0 0.0
    %6905 = vmatpush1.msra.mxu0 0.0
    %6906 = vmatprep.subr.mxu0 0.0
    %6907 = vmatpush1.msra.mxu0 0.0
    %6908 = vmatprep.subr.mxu0 0.0
    %6909 = vmatpush1.msra.mxu0 0.0
    %6910 = vmatprep.subr.mxu0 0.0
    %6911 = vmatpush1.msra.mxu0 0.0
    %6912 = vmatprep.subr.mxu0 0.0
    %6913 = vmatpush1.msra.mxu0 0.0
    %6914 = vmatprep.subr.mxu0 0.0
    %6915 = vmatpush1.msra.mxu0 0.0
    %6916 = vmatprep.subr.mxu0 0.0
    %6917 = vmatpush1.msra.mxu0 0.0
    %6918 = vmatprep.subr.mxu0 0.0
    %6919 = vmatpush1.msra.mxu0 %v837
    %6920 = vmatprep.subr.mxu0 0.0
    %6921 = vmatpush1.msra.mxu0 %v836
    %6922 = vmatprep.subr.mxu0 0.0
    %6923 = vmatpush1.msra.mxu0 %v835
    %6924 = vmatprep.subr.mxu0 0.0
    %6925 = vmatpush1.msra.mxu0 %v834
    %6926 = vmatprep.subr.mxu0 0.0
    %6927 = vmatpush2.msra.mxu0 0.0
    %6928 = vmatprep.subr.mxu0 0.0
    %6929 = vmatpush2.msra.mxu0 0.0
    %6930 = vmatprep.subr.mxu0 0.0
    %6931 = vmatpush2.msra.mxu0 0.0
    %6932 = vmatprep.subr.mxu0 0.0
    %6933 = vmatpush2.msra.mxu0 0.0
    %6934 = vmatprep.subr.mxu0 0.0
    %6935 = vmatpush2.msra.mxu0 0.0
    %6936 = vmatprep.subr.mxu0 0.0
    %6937 = vmatpush2.msra.mxu0 0.0
    %6938 = vmatprep.subr.mxu0 0.0
    %6939 = vmatpush2.msra.mxu0 0.0
    %6940 = vmatprep.subr.mxu0 0.0
    %6941 = vmatpush2.msra.mxu0 0.0
    %6942 = vmatprep.subr.mxu0 0.0
    %6943 = vmatpush2.msra.mxu0 0.0
    %6944 = vmatprep.subr.mxu0 0.0
    %6945 = vmatpush2.msra.mxu0 0.0
    %6946 = vmatprep.subr.mxu0 0.0
    %6947 = vmatpush2.msra.mxu0 0.0
    %6948 = vmatprep.subr.mxu0 0.0
    %6949 = vmatpush2.msra.mxu0 0.0
    %6950 = vmatprep.subr.mxu0 0.0
    %6951 = vmatpush2.msra.mxu0 0.0
    %6952 = vmatprep.subr.mxu0 0.0
    %6953 = vmatpush2.msra.mxu0 0.0
    %6954 = vmatprep.subr.mxu0 0.0
    %6955 = vmatpush2.msra.mxu0 0.0
    %6956 = vmatprep.subr.mxu0 0.0
    %6957 = vmatpush2.msra.mxu0 0.0
    %6958 = vmatprep.mubr.f32.mxu0 0.0
    %6959 = vmatmul.mubr.f32.gmra.mxu0 %v6892
    %v6960 = vpop.f32.mrf.mxu0
    %v6961 = vadd.f32 0.0, %v6960
    %v6962 = vpop.f32.mrf.mxu0
    %6963 = vdwg.mxu0
    %v6964 = vsel %vm947, %v6961, 0.0
    %6965 = vadd.xlane.f32.xlu0 %v6964
    %v6966 = vpop.xlane.xlu0 %6965
    %v6967 = vmul.f32 %v6961, %v6961
    %v6968 = vsel %vm947, %v6967, 0.0
    %6969 = vadd.xlane.f32.xlu0 %v6968
    %v6970 = vpop.xlane.xlu0 %6969
    %v6971 = vmul.f32 %v6966, 0.03125
    %v6972 = vmul.f32 %v6970, 0.03125
    %v6973 = vmul.f32 %v6971, %v6971
    %v6974 = vsub.f32 %v6972, %v6973
    %v6975 = vmax.f32 %v6974, 0.0
    %v6976 = vsub.f32 %v6961, %v6971
    %v6977 = vadd.f32 %v6975, 1e-05
    %v6978 = vrsqrt.pop %v6977
    %v6979 = vmul.f32 %v6976, %v6978
    %v6980 = vmul.f32 %v6979, %v2824
    %v6981 = vadd.f32 %v6980, %v2831
    %v6982 = vmax.f32 %v6981, 0.0
    %v6984 = vsel %vm947, %v6982, 0
    %6986 = vmatprep.subr.mxu0 0.0
    %6987 = vmatpush1.msra.mxu0 0.0
    %6988 = vmatprep.subr.mxu0 0.0
    %6989 = vmatpush1.msra.mxu0 0.0
    %6990 = vmatprep.subr.mxu0 0.0
    %6991 = vmatpush1.msra.mxu0 0.0
    %6992 = vmatprep.subr.mxu0 0.0
    %6993 = vmatpush1.msra.mxu0 0.0
    %6994 = vmatprep.subr.mxu0 0.0
    %6995 = vmatpush1.msra.mxu0 0.0
    %6996 = vmatprep.subr.mxu0 0.0
    %6997 = vmatpush1.msra.mxu0 0.0
    %6998 = vmatprep.subr.mxu0 0.0
    %6999 = vmatpush1.msra.mxu0 0.0
    %7000 = vmatprep.subr.mxu0 0.0
    %7001 = vmatpush1.msra.mxu0 0.0
    %7002 = vmatprep.subr.mxu0 0.0
    %7003 = vmatpush1.msra.mxu0 0.0
    %7004 = vmatprep.subr.mxu0 0.0
    %7005 = vmatpush1.msra.mxu0 0.0
    %7006 = vmatprep.subr.mxu0 0.0
    %7007 = vmatpush1.msra.mxu0 0.0
    %7008 = vmatprep.subr.mxu0 0.0
    %7009 = vmatpush1.msra.mxu0 0.0
    %7010 = vmatprep.subr.mxu0 0.0
    %7011 = vmatpush1.msra.mxu0 %v843
    %7012 = vmatprep.subr.mxu0 0.0
    %7013 = vmatpush1.msra.mxu0 %v842
    %7014 = vmatprep.subr.mxu0 0.0
    %7015 = vmatpush1.msra.mxu0 %v841
    %7016 = vmatprep.subr.mxu0 0.0
    %7017 = vmatpush1.msra.mxu0 %v840
    %7018 = vmatprep.subr.mxu0 0.0
    %7019 = vmatpush2.msra.mxu0 0.0
    %7020 = vmatprep.subr.mxu0 0.0
    %7021 = vmatpush2.msra.mxu0 0.0
    %7022 = vmatprep.subr.mxu0 0.0
    %7023 = vmatpush2.msra.mxu0 0.0
    %7024 = vmatprep.subr.mxu0 0.0
    %7025 = vmatpush2.msra.mxu0 0.0
    %7026 = vmatprep.subr.mxu0 0.0
    %7027 = vmatpush2.msra.mxu0 0.0
    %7028 = vmatprep.subr.mxu0 0.0
    %7029 = vmatpush2.msra.mxu0 0.0
    %7030 = vmatprep.subr.mxu0 0.0
    %7031 = vmatpush2.msra.mxu0 0.0
    %7032 = vmatprep.subr.mxu0 0.0
    %7033 = vmatpush2.msra.mxu0 0.0
    %7034 = vmatprep.subr.mxu0 0.0
    %7035 = vmatpush2.msra.mxu0 0.0
    %7036 = vmatprep.subr.mxu0 0.0
    %7037 = vmatpush2.msra.mxu0 0.0
    %7038 = vmatprep.subr.mxu0 0.0
    %7039 = vmatpush2.msra.mxu0 0.0
    %7040 = vmatprep.subr.mxu0 0.0
    %7041 = vmatpush2.msra.mxu0 0.0
    %7042 = vmatprep.subr.mxu0 0.0
    %7043 = vmatpush2.msra.mxu0 0.0
    %7044 = vmatprep.subr.mxu0 0.0
    %7045 = vmatpush2.msra.mxu0 0.0
    %7046 = vmatprep.subr.mxu0 0.0
    %7047 = vmatpush2.msra.mxu0 0.0
    %7048 = vmatprep.subr.mxu0 0.0
    %7049 = vmatpush2.msra.mxu0 0.0
    %7050 = vmatprep.mubr.f32.mxu0 0.0
    %7051 = vmatmul.mubr.f32.gmra.mxu0 %v6984
    %v7052 = vpop.f32.mrf.mxu0
    %v7053 = vadd.f32 0.0, %v7052
    %v7054 = vpop.f32.mrf.mxu0
    %7055 = vdwg.mxu0
    %v7056 = vsel %vm947, %v7053, 0.0
    %7057 = vadd.xlane.f32.xlu0 %v7056
    %v7058 = vpop.xlane.xlu0 %7057
    %v7059 = vmul.f32 %v7053, %v7053
    %v7060 = vsel %vm947, %v7059, 0.0
    %7061 = vadd.xlane.f32.xlu0 %v7060
    %v7062 = vpop.xlane.xlu0 %7061
    %v7063 = vmul.f32 %v7058, 0.03125
    %v7064 = vmul.f32 %v7062, 0.03125
    %v7065 = vmul.f32 %v7063, %v7063
    %v7066 = vsub.f32 %v7064, %v7065
    %v7067 = vmax.f32 %v7066, 0.0
    %v7068 = vsub.f32 %v7053, %v7063
    %v7069 = vadd.f32 %v7067, 1e-05
    %v7070 = vrsqrt.pop %v7069
    %v7071 = vmul.f32 %v7068, %v7070
    %v7072 = vmul.f32 %v7071, %v2928
    %v7073 = vadd.f32 %v7072, %v2935
    %v7074 = vadd.f32 %v7073, %v6890
    %v7075 = vmax.f32 %v7074, 0.0
    %v7077 = vsel %vm947, %v7075, 0
    %7079 = vmatprep.subr.mxu0 0.0
    %7080 = vmatpush1.msra.mxu0 0.0
    %7081 = vmatprep.subr.mxu0 0.0
    %7082 = vmatpush1.msra.mxu0 0.0
    %7083 = vmatprep.subr.mxu0 0.0
    %7084 = vmatpush1.msra.mxu0 0.0
    %7085 = vmatprep.subr.mxu0 0.0
    %7086 = vmatpush1.msra.mxu0 0.0
    %7087 = vmatprep.subr.mxu0 0.0
    %7088 = vmatpush1.msra.mxu0 0.0
    %7089 = vmatprep.subr.mxu0 0.0
    %7090 = vmatpush1.msra.mxu0 0.0
    %7091 = vmatprep.subr.mxu0 0.0
    %7092 = vmatpush1.msra.mxu0 0.0
    %7093 = vmatprep.subr.mxu0 0.0
    %7094 = vmatpush1.msra.mxu0 0.0
    %7095 = vmatprep.subr.mxu0 0.0
    %7096 = vmatpush1.msra.mxu0 0.0
    %7097 = vmatprep.subr.mxu0 0.0
    %7098 = vmatpush1.msra.mxu0 0.0
    %7099 = vmatprep.subr.mxu0 0.0
    %7100 = vmatpush1.msra.mxu0 0.0
    %7101 = vmatprep.subr.mxu0 0.0
    %7102 = vmatpush1.msra.mxu0 0.0
    %7103 = vmatprep.subr.mxu0 0.0
    %7104 = vmatpush1.msra.mxu0 %v831
    %7105 = vmatprep.subr.mxu0 0.0
    %7106 = vmatpush1.msra.mxu0 %v830
    %7107 = vmatprep.subr.mxu0 0.0
    %7108 = vmatpush1.msra.mxu0 %v829
    %7109 = vmatprep.subr.mxu0 0.0
    %7110 = vmatpush1.msra.mxu0 %v828
    %7111 = vmatprep.subr.mxu0 0.0
    %7112 = vmatpush2.msra.mxu0 0.0
    %7113 = vmatprep.subr.mxu0 0.0
    %7114 = vmatpush2.msra.mxu0 0.0
    %7115 = vmatprep.subr.mxu0 0.0
    %7116 = vmatpush2.msra.mxu0 0.0
    %7117 = vmatprep.subr.mxu0 0.0
    %7118 = vmatpush2.msra.mxu0 0.0
    %7119 = vmatprep.subr.mxu0 0.0
    %7120 = vmatpush2.msra.mxu0 0.0
    %7121 = vmatprep.subr.mxu0 0.0
    %7122 = vmatpush2.msra.mxu0 0.0
    %7123 = vmatprep.subr.mxu0 0.0
    %7124 = vmatpush2.msra.mxu0 0.0
    %7125 = vmatprep.subr.mxu0 0.0
    %7126 = vmatpush2.msra.mxu0 0.0
    %7127 = vmatprep.subr.mxu0 0.0
    %7128 = vmatpush2.msra.mxu0 0.0
    %7129 = vmatprep.subr.mxu0 0.0
    %7130 = vmatpush2.msra.mxu0 0.0
    %7131 = vmatprep.subr.mxu0 0.0
    %7132 = vmatpush2.msra.mxu0 0.0
    %7133 = vmatprep.subr.mxu0 0.0
    %7134 = vmatpush2.msra.mxu0 0.0
    %7135 = vmatprep.subr.mxu0 0.0
    %7136 = vmatpush2.msra.mxu0 0.0
    %7137 = vmatprep.subr.mxu0 0.0
    %7138 = vmatpush2.msra.mxu0 0.0
    %7139 = vmatprep.subr.mxu0 0.0
    %7140 = vmatpush2.msra.mxu0 0.0
    %7141 = vmatprep.subr.mxu0 0.0
    %7142 = vmatpush2.msra.mxu0 0.0
    %7143 = vmatprep.mubr.f32.mxu0 0.0
    %7144 = vmatmul.mubr.f32.gmra.mxu0 %v7077
    %v7145 = vpop.f32.mrf.mxu0
    %v7146 = vadd.f32 %v2944, %v7145
    %v7147 = vpop.f32.mrf.mxu0
    %7148 = vdwg.mxu0
    %7150 = vrot.lane.b32.xlu0 %v5081, 1
    %v7151 = vpop.permute.xlu0 %7150
    %7154 = vrot.lane.b32.xlu0 %v7146, 2
    %v7155 = vpop.permute.xlu0 %7154
    %vm7157 = vcmask 7168
    %v7158 = vsel %vm7157, %v3016, %v7151
    %v7159 = vsel %vm1550, %v7158, %v7155
    %vm7160 = vcmask 23552
    %v7161 = vsel %vm7160, %v7159, -inf
    %7162 = vmax.xlane.f32.xlu0 %v7161
    %v7163 = vpop.xlane.xlu0 %7162
    %v7164 = vsub.f32 %v7159, %v7163
    %v7165 = vmul.f32 %v7164, 1.442695
    %v7166 = vpow.pop %v7165
    %v7167 = vsel %vm7160, %v7166, 0.0
    %7168 = vadd.xlane.f32.xlu0 %v7167
    %v7169 = vpop.xlane.xlu0 %7168
    %v7170 = vrcp.pop %v7169
    %v7171 = vmul.f32 %v7166, %v7170
    %7173 = vrot.lane.b32.xlu0 %v4555, 60
    %v7174 = vpop.permute.xlu0 %7173
    %7177 = vrot.lane.b32.xlu0 %v6620, 120
    %v7178 = vpop.permute.xlu0 %7177
    %7181 = vrot.lane.b32.xlu0 %v2359, 52
    %v7182 = vpop.permute.xlu0 %7181
    %7185 = vrot.lane.b32.xlu0 %v4561, 60
    %v7186 = vpop.permute.xlu0 %7185
    %7189 = vrot.lane.b32.xlu0 %v6626, 68
    %v7190 = vpop.permute.xlu0 %7189
    %7193 = vrot.lane.b32.xlu0 %v7171, 76
    %v7194 = vpop.permute.xlu0 %7193
    %vm7196 = vcmask 490496
    %v7197 = vsel %vm7196, %v2353, %v7174
    %vm7198 = vcmask 982016
    %v7199 = vsel %vm7198, %v7197, %v7178
    %vm7200 = vcmask 424960
    %v7201 = vsel %vm7200, %v7178, %v7182
    %v7202 = vsel %vm7196, %v7201, %v7186
    %vm7203 = vcmask 556032
    %v7204 = vsel %vm7203, %v7202, %v7190
    %vm7205 = vcmask 621568
    %v7206 = vsel %vm7205, %v7204, %v7194
    %vm7207 = vcmask 646144
    %v7208 = vsel %vm7207, %v7206, 0.0
    %7209 = vst [vmem:[#allocation69] sm:$0xff] %v7199
    %7210 = vst [vmem:[#allocation69 + $0x8] sm:$0xff] %v7208
    // Predicated region
    $region410: #{tpu_custom_call.1} parent=1 // pred_check
      _
    $region411: #{tpu_custom_call.1} parent=1 // pred_check_branch
      %7212 = sbr.rel (0) target = $region413
    $region412: #{tpu_custom_call.1} parent=1 // pred_region
      %s7214 = ssub.s32 256, 256
      %7215 = vsyncadd [#allocation5], %s7214
      %s7217 = sshll.u32 [#allocation69], 4
      %s7218 = int_to_ptr.vmem [resolvable:$true] %s7217
      %7220 = dma.vmem_to_hbm [thread:$0]  %s7218, 256, %s119, [#allocation5]
    $region413: #{tpu_custom_call.1} parent=1 // pred_fallthru
      _
    // Predicated region
    $region414: #{tpu_custom_call.1} parent=1 // pred_check
      _
    $region415: #{tpu_custom_call.1} parent=1 // pred_check_branch
      %7222 = sbr.rel (0) target = $region417
    $region416: #{tpu_custom_call.1} parent=1 // pred_region
      %7223 = dma.done [#allocation5], 256
    $region417: #{tpu_custom_call.1} parent=1 // pred_fallthru
      _
    %7224 = vsyncpa [#allocation4], 1
    %7225 = vsyncpa [#allocation7], 1
    %7226 = vsyncpa [#allocation10], 1
    %7227 = vsyncpa [#allocation13], 1
    %7228 = vsyncpa [#allocation16], 1
    %7229 = vsyncpa [#allocation19], 1
    %7230 = vsyncpa [#allocation22], 1
    %7231 = vsyncpa [#allocation25], 1
    %7232 = vsyncpa [#allocation28], 1
    %7233 = vsyncpa [#allocation31], 1
    %7234 = vsyncpa [#allocation34], 1
    %7235 = vsyncpa [#allocation37], 1
    %7236 = vsyncpa [#allocation40], 1
    %7237 = vsyncpa [#allocation43], 1
    %7238 = vsyncpa [#allocation46], 1
    %7239 = vsyncpa [#allocation49], 1
    %7240 = vsyncpa [#allocation52], 1
    %7241 = vsyncpa [#allocation55], 1
    %7242 = vsyncpa [#allocation58], 1
    %7243 = vsyncpa [#allocation61], 1
    %7244 = vsyncpa [#allocation64], 1
    %7245 = vsyncpa [#allocation67], 1
    %7246 = vsyncpa [#allocation5], 1

</llo_original>
